<compile_context>
chip_gen: v5e
topology: v5e:2x2
jax: 0.10.0
libtpu: 0.0.40
codegen_flags: <defaults>
</compile_context>

<pallas_src>
import functools

import jax
import jax.numpy as jnp
import numpy as np
from jax.experimental import pallas as pl
from jax.experimental.pallas import tpu as pltpu

LN_EPS = 1e-5            # torch.nn.LayerNorm default
_SQRT_HALF = 0.7071067811865476


# ---------------------------------------------------------------------------
# glue: window partition / reverse / bias / mask (pure reshapes, stay in JAX)
# ---------------------------------------------------------------------------
def window_partition(x, ws):
    B, H, W, C = x.shape
    x = x.reshape(B, H // ws, ws, W // ws, ws, C)
    return x.transpose(0, 1, 3, 2, 4, 5).reshape(-1, ws, ws, C)


def window_reverse(windows, ws, H, W):
    B = windows.shape[0] // (H * W // ws // ws)
    x = windows.reshape(B, H // ws, W // ws, ws, ws, -1)
    return x.transpose(0, 1, 3, 2, 4, 5).reshape(B, H, W, -1)


def relative_position_bias(table, ws, num_heads):
    """table: ((2*ws-1)**2, num_heads) -> (num_heads, N, N)."""
    coords_h = jnp.arange(ws)
    coords_w = jnp.arange(ws)
    coords = jnp.stack(jnp.meshgrid(coords_h, coords_w, indexing="ij"))   # (2,ws,ws)
    coords_flatten = coords.reshape(2, -1)                                # (2,N)
    rel = coords_flatten[:, :, None] - coords_flatten[:, None, :]         # (2,N,N)
    rel = rel.transpose(1, 2, 0)                                          # (N,N,2)
    rel = rel.at[:, :, 0].add(ws - 1)
    rel = rel.at[:, :, 1].add(ws - 1)
    rel = rel.at[:, :, 0].multiply(2 * ws - 1)
    idx = rel.sum(-1)                                                     # (N,N)
    bias = table[idx.reshape(-1)].reshape(ws * ws, ws * ws, num_heads)
    return bias.transpose(2, 0, 1).astype(jnp.float32)                    # (nh,N,N)


def build_attn_mask(Hp, Wp, ws, ss):
    """Swin-style shift mask built on the (padded) grid: (nW, N, N), 0 / -100."""
    img = np.zeros((1, Hp, Wp, 1), np.float32)
    cnt = 0
    for hs in (slice(0, -ws), slice(-ws, -ss), slice(-ss, None)):
        for wsl in (slice(0, -ws), slice(-ws, -ss), slice(-ss, None)):
            img[:, hs, wsl, :] = cnt
            cnt += 1
    mw = jnp.asarray(window_partition(img, ws).reshape(-1, ws * ws))
    am = mw[:, None, :] - mw[:, :, None]
    return jnp.where(am != 0, -100.0, 0.0).astype(jnp.float32)


# ---------------------------------------------------------------------------
# generation-aware VMEM budget + tile-size pickers
# ---------------------------------------------------------------------------
@functools.lru_cache(maxsize=None)
def _vmem_limit_bytes():
    cap = 64 * 1024 * 1024                      # conservative fallback (v7x-sized)
    try:
        cap = int(pltpu.get_tpu_info().vmem_capacity_bytes)
    except Exception:
        pass
    # leave headroom for Mosaic scratch: 48 MiB on v7x, ~96 MiB on v5e/v6e
    return min(cap * 3 // 4, 100 * 1024 * 1024)


def _max_tile_rows():
    return 2048 if _vmem_limit_bytes() >= 64 * 1024 * 1024 else 1024


def _pick_window_block(B_, N, nW, has_mask, max_block_rows):
    """Largest WB s.t. WB | B_, WB*N <= max_block_rows, (mask: WB | nW).
    Prefer an even grid length (v7x has 2 TensorCores), then grid >= 2."""
    best = best_multi = best_even = None
    for wb in range(1, B_ + 1):
        if B_ % wb:
            continue
        if has_mask and (wb > nW or nW % wb):
            continue
        if wb * N > max_block_rows:
            continue
        best = wb
        g = B_ // wb
        if g >= 2:
            best_multi = wb
            if g % 2 == 0:
                best_even = wb
    if best is None:
        return 1
    if best_even is not None and (best_multi is None or 2 * best_even >= best_multi):
        return best_even
    return best_multi if best_multi is not None else best


_TM_CANDIDATES = (2048, 1024, 512, 256, 128, 64, 32, 16, 8)


def _pick_tm(R, max_tm):
    """Large token tile that divides R exactly (no pad copies); prefer an even
    grid length when that keeps the tile big (v7x megacore)."""
    cands = [t for t in _TM_CANDIDATES if t <= max_tm]
    for tm in cands:
        if tm <= R and R % tm == 0 and R // tm >= 2:
            if (R // tm) % 2 and tm >= 512 and R % (tm // 2) == 0:
                tm //= 2                      # even grid, still a big tile
            return tm, False
    for tm in cands:
        if tm <= R and R % tm == 0:
            return tm, False
    # rare fallback (R not a multiple of 8): pad
    tm = min(512, max(8, ((R + 7) // 8) * 8))
    return tm, True


# ---------------------------------------------------------------------------
# parameter preparation (one-time, off the hot path)
# ---------------------------------------------------------------------------
def prepare_params(params, *, num_heads, window_size, fast_math=False):
    """Fold the qk scale into the q-half of wqk/bqk, precompute the relative
    position bias, and (under fast_math) pre-cast the big weights to bf16."""
    (g1, b1, wqk, bqk, rel_table, wproj, bproj,
     g2, b2, w1, bb1, w2, bb2) = params
    C = wqk.shape[0]
    hd = C // num_heads
    scale = hd ** (-0.5)
    wqk = wqk.at[:, :C].multiply(scale)
    bqk = bqk.at[:, :C].multiply(scale)
    rel_bias = relative_position_bias(rel_table, window_size, num_heads)
    w_dt = jnp.bfloat16 if fast_math else wqk.dtype
    return dict(
        g1=g1, b1=b1,
        wqk=wqk.astype(w_dt), bqk=bqk,
        rel_bias=rel_bias,
        wproj=wproj.astype(w_dt), bproj=bproj,
        g2=g2, b2=b2,
        w1=w1.astype(w_dt), bb1=bb1,
        w2=w2.astype(w_dt), bb2=bb2,
    )


# ---------------------------------------------------------------------------
# standalone LayerNorm kernel (used only when spatial padding is required, so
# norm1 is applied BEFORE zero padding, matching the reference)
# ---------------------------------------------------------------------------
def _ln_kernel(x_ref, g_ref, b_ref, o_ref):
    x = x_ref[...].astype(jnp.float32)
    mu = jnp.mean(x, axis=-1, keepdims=True)
    var = jnp.mean(jnp.square(x - mu), axis=-1, keepdims=True)
    xn = (x - mu) * jax.lax.rsqrt(var + LN_EPS)
    o_ref[...] = (xn * g_ref[0].astype(jnp.float32)
                  + b_ref[0].astype(jnp.float32)).astype(o_ref.dtype)


def layernorm_pallas(x2d, g, b, out_dtype):
    R, C = x2d.shape
    tm, need_pad = _pick_tm(R, _max_tile_rows())
    if need_pad:
        Rp = ((R + tm - 1) // tm) * tm
        x2d = jnp.pad(x2d, ((0, Rp - R), (0, 0)))
    else:
        Rp = R
    out = pl.pallas_call(
        _ln_kernel,
        out_shape=jax.ShapeDtypeStruct((Rp, C), out_dtype),
        grid=(Rp // tm,),
        in_specs=[pl.BlockSpec((tm, C), lambda i: (i, 0)),
                  pl.BlockSpec((1, C), lambda i: (0, 0)),
                  pl.BlockSpec((1, C), lambda i: (0, 0))],
        out_specs=pl.BlockSpec((tm, C), lambda i: (i, 0)),
        compiler_params=pltpu.CompilerParams(
            dimension_semantics=("parallel",),
            vmem_limit_bytes=_vmem_limit_bytes()),
    )(x2d, g, b)
    return out[:R] if need_pad else out


# ---------------------------------------------------------------------------
# Kernel A: per-window-block attention
#   fused [norm1] + qk + softmax(scores + rel_bias [+ mask]) @ v + output proj
# ---------------------------------------------------------------------------
def _attn_kernel(*refs, num_heads, has_mask, mask_resident, nW, window_block,
                 fuse_norm1, fast_math):
    if has_mask:
        (x_ref, v_ref, bias_ref, mask_ref, g1_ref, b1_ref, wqk_ref, bqk_ref,
         wproj_ref, bproj_ref, out_ref, o_sc) = refs
    else:
        (x_ref, v_ref, bias_ref, g1_ref, b1_ref, wqk_ref, bqk_ref,
         wproj_ref, bproj_ref, out_ref, o_sc) = refs
        mask_ref = None

    R, C = x_ref.shape                      # R = WB * N tokens in this block
    Cv = v_ref.shape[-1]
    N = bias_ref.shape[-1]                  # tokens per window
    WB = R // N                             # windows per grid step
    hd = C // num_heads
    hdv = Cv // num_heads
    mm_dt = wqk_ref.dtype                   # bf16 under fast_math (pre-cast)

    x = x_ref[...].astype(jnp.float32)
    if fuse_norm1:                          # LayerNorm (norm1) in f32
        mu = jnp.mean(x, axis=-1, keepdims=True)
        var = jnp.mean(jnp.square(x - mu), axis=-1, keepdims=True)
        x = (x - mu) * jax.lax.rsqrt(var + LN_EPS)
        x = x * g1_ref[0].astype(jnp.float32) + b1_ref[0].astype(jnp.float32)

    # qk projection for the whole window block: one (WB*N, C) @ (C, 2C) matmul.
    # The q-scale is already folded into wqk / bqk.
    qk = jnp.dot(x.astype(mm_dt), wqk_ref[...],
                 preferred_element_type=jnp.float32) + bqk_ref[0].astype(jnp.float32)

    v = v_ref[...]                                          # already mm_dt
    if has_mask:
        if mask_resident:
            nblk = nW // window_block
            start = pl.multiple_of((pl.program_id(0) % nblk) * window_block,
                                   window_block)
            mask = mask_ref[pl.ds(start, window_block)].astype(jnp.float32)
        else:
            mask = mask_ref[...].astype(jnp.float32)        # (WB, N, N)

    for h in range(num_heads):                              # short, unrolled
        q = qk[:, h * hd:(h + 1) * hd].reshape(WB, N, hd).astype(mm_dt)
        k = qk[:, C + h * hd:C + (h + 1) * hd].reshape(WB, N, hd).astype(mm_dt)
        vh = v[:, h * hdv:(h + 1) * hdv].reshape(WB, N, hdv)
        # windows batched into the dot_general batch dim
        s = jnp.einsum("wnd,wmd->wnm", q, k,
                       preferred_element_type=jnp.float32)  # (WB,N,N)
        s = s + bias_ref[h][None].astype(jnp.float32)
        if has_mask:
            s = s + mask
        s = s - jnp.max(s, axis=-1, keepdims=True)
        p = jnp.exp(s)
        denom = jnp.sum(p, axis=-1, keepdims=True)
        if fast_math:
            p = p * pl.reciprocal(denom, approx=True)       # EUP slot, frees VALU
        else:
            p = p / denom
        o_h = jnp.einsum("wnm,wmd->wnd", p.astype(mm_dt), vh,
                         preferred_element_type=jnp.float32)
        # per-head write into VMEM scratch at a static column slice (no concat)
        o_sc[:, h * hdv:(h + 1) * hdv] = o_h.reshape(R, hdv).astype(o_sc.dtype)

    o = jnp.dot(o_sc[...], wproj_ref[...],
                preferred_element_type=jnp.float32) + bproj_ref[0].astype(jnp.float32)
    out_ref[...] = o.astype(out_ref.dtype)


def window_attention_pallas(x2d, v2d, rel_bias, mask, g1, b1, wqk, bqk,
                            wproj, bproj, *, num_heads, window_block,
                            fuse_norm1, fast_math, out_dtype):
    RT, C = x2d.shape                       # RT = B_ * N tokens total
    Cv = v2d.shape[-1]
    nh, N, _ = rel_bias.shape
    WB = window_block
    rows = WB * N
    grid = (RT // rows,)
    has_mask = mask is not None

    in_specs = [
        pl.BlockSpec((rows, C), lambda g: (g, 0)),          # x windows
        pl.BlockSpec((rows, Cv), lambda g: (g, 0)),         # v windows
        pl.BlockSpec((nh, N, N), lambda g: (0, 0, 0)),      # rel bias (resident)
    ]
    operands = [x2d, v2d, rel_bias]
    mask_resident = False
    nW = 1
    if has_mask:
        nW = mask.shape[0]
        mask_resident = mask.size * mask.dtype.itemsize <= 2 * 1024 * 1024
        if mask_resident:                                   # whole mask resident
            in_specs.append(pl.BlockSpec((nW, N, N), lambda g: (0, 0, 0)))
        else:                                               # streamed per block
            nblk = nW // WB
            in_specs.append(pl.BlockSpec((WB, N, N), lambda g: (g % nblk, 0, 0)))
        operands.append(mask)
    in_specs += [
        pl.BlockSpec((1, C), lambda g: (0, 0)),             # norm1 gamma
        pl.BlockSpec((1, C), lambda g: (0, 0)),             # norm1 beta
        pl.BlockSpec((C, 2 * C), lambda g: (0, 0)),         # qk weight (resident)
        pl.BlockSpec((1, 2 * C), lambda g: (0, 0)),         # qk bias
        pl.BlockSpec((Cv, Cv), lambda g: (0, 0)),           # proj weight
        pl.BlockSpec((1, Cv), lambda g: (0, 0)),            # proj bias
    ]
    operands += [g1, b1, wqk, bqk, wproj, bproj]

    sc_dt = jnp.bfloat16 if fast_math else jnp.float32
    kernel = functools.partial(
        _attn_kernel, num_heads=num_heads, has_mask=has_mask,
        mask_resident=mask_resident, nW=nW, window_block=WB,
        fuse_norm1=fuse_norm1, fast_math=fast_math)
    return pl.pallas_call(
        kernel,
        out_shape=jax.ShapeDtypeStruct((RT, Cv), out_dtype),
        grid=grid,
        in_specs=in_specs,
        out_specs=pl.BlockSpec((rows, Cv), lambda g: (g, 0)),
        scratch_shapes=[pltpu.VMEM((rows, Cv), sc_dt)],
        compiler_params=pltpu.CompilerParams(
            dimension_semantics=("parallel",),
            vmem_limit_bytes=_vmem_limit_bytes()),
    )(*operands)


# ---------------------------------------------------------------------------
# Kernel B: residual + norm2 + MLP (fc1, GELU, fc2) + residual
# ---------------------------------------------------------------------------
def _mlp_kernel(sc_ref, at_ref, g2_ref, b2_ref, w1_ref, bb1_ref, w2_ref, bb2_ref,
                out_ref, *, fast_math):
    mm_dt = w1_ref.dtype                    # bf16 under fast_math (pre-cast)
    y = sc_ref[...].astype(jnp.float32) + at_ref[...].astype(jnp.float32)  # (TM,C)
    mu = jnp.mean(y, axis=-1, keepdims=True)
    var = jnp.mean(jnp.square(y - mu), axis=-1, keepdims=True)
    yn = (y - mu) * jax.lax.rsqrt(var + LN_EPS)
    yn = yn * g2_ref[0].astype(jnp.float32) + b2_ref[0].astype(jnp.float32)
    h = jnp.dot(yn.astype(mm_dt), w1_ref[...],
                preferred_element_type=jnp.float32) + bb1_ref[0].astype(jnp.float32)
    if fast_math:
        h = jax.nn.gelu(h, approximate=True)                # tanh GELU (EUP)
    else:
        h = 0.5 * h * (1.0 + jax.lax.erf(h * _SQRT_HALF))   # torch-exact GELU
    o = jnp.dot(h.astype(mm_dt), w2_ref[...],
                preferred_element_type=jnp.float32) + bb2_ref[0].astype(jnp.float32)
    out_ref[...] = (y + o).astype(out_ref.dtype)


def residual_mlp_pallas(shortcut2d, attn2d, g2, b2, w1, bb1, w2, bb2, *,
                        fast_math=False, out_dtype=None):
    R, C = shortcut2d.shape
    Hd = w1.shape[1]
    out_dtype = out_dtype or shortcut2d.dtype
    tm, need_pad = _pick_tm(R, _max_tile_rows())
    if need_pad:
        # TODO(synk): rare ragged fallback (R not a multiple of 8); costs two
        # extra HBM passes for the pads.
        Rp = ((R + tm - 1) // tm) * tm
        shortcut2d = jnp.pad(shortcut2d, ((0, Rp - R), (0, 0)))
        attn2d = jnp.pad(attn2d, ((0, Rp - R), (0, 0)))
    else:
        Rp = R
    kernel = functools.partial(_mlp_kernel, fast_math=fast_math)
    out = pl.pallas_call(
        kernel,
        out_shape=jax.ShapeDtypeStruct((Rp, C), out_dtype),
        grid=(Rp // tm,),
        in_specs=[
            pl.BlockSpec((tm, C), lambda i: (i, 0)),
            pl.BlockSpec((tm, C), lambda i: (i, 0)),
            pl.BlockSpec((1, C), lambda i: (0, 0)),
            pl.BlockSpec((1, C), lambda i: (0, 0)),
            pl.BlockSpec((C, Hd), lambda i: (0, 0)),
            pl.BlockSpec((1, Hd), lambda i: (0, 0)),
            pl.BlockSpec((Hd, C), lambda i: (0, 0)),
            pl.BlockSpec((1, C), lambda i: (0, 0)),
        ],
        out_specs=pl.BlockSpec((tm, C), lambda i: (i, 0)),
        compiler_params=pltpu.CompilerParams(
            dimension_semantics=("parallel",),
            vmem_limit_bytes=_vmem_limit_bytes()),
    )(shortcut2d, attn2d, g2, b2, w1, bb1, w2, bb2)
    return out[:R] if need_pad else out


# ---------------------------------------------------------------------------
# Full CRFBlock forward
# ---------------------------------------------------------------------------
def crf_block_forward(x, v, prepared, *, H, W, window_size, shift_size,
                      num_heads, mask_matrix=None, fast_math=False):
    p = prepared
    B, L, C = x.shape
    v_dim = v.shape[-1]
    assert L == H * W, "input feature has wrong size"
    assert v_dim == C, "WindowAttention asserts dim == v.shape[-1]"
    act_dt = jnp.bfloat16 if fast_math else x.dtype

    shortcut = x

    pad_r = (window_size - W % window_size) % window_size
    pad_b = (window_size - H % window_size) % window_size
    if pad_r or pad_b:
        # norm1 BEFORE zero padding (matches the PyTorch reference exactly)
        xn = layernorm_pallas(x.reshape(B * L, C), p["g1"], p["b1"], act_dt)
        x4 = jnp.pad(xn.reshape(B, H, W, C),
                     ((0, 0), (0, pad_b), (0, pad_r), (0, 0)))
        v4 = jnp.pad(v.astype(act_dt), ((0, 0), (0, pad_b), (0, pad_r), (0, 0)))
        fuse_norm1 = False
    else:
        x4 = x.reshape(B, H, W, C).astype(act_dt)   # norm1 fused in Kernel A
        v4 = v.astype(act_dt)
        fuse_norm1 = True
    Hp, Wp = H + pad_b, W + pad_r

    if shift_size > 0:
        x4 = jnp.roll(x4, (-shift_size, -shift_size), axis=(1, 2))
        v4 = jnp.roll(v4, (-shift_size, -shift_size), axis=(1, 2))
        attn_mask = mask_matrix
    else:
        attn_mask = None

    # TODO(synk): window_partition / window_reverse stay as XLA transposes; fold
    # them into Kernel A's BlockSpec index maps to remove these HBM passes.
    N = window_size * window_size
    nW = (Hp // window_size) * (Wp // window_size)
    x_win = window_partition(x4, window_size).reshape(-1, N, C)
    v_win = window_partition(v4, window_size).reshape(-1, N, v_dim)
    B_ = x_win.shape[0]

    if attn_mask is not None:
        assert attn_mask.shape == (nW, N, N), \
            "mask_matrix must be built on the padded (Hp, Wp) grid"
        mask = attn_mask.astype(jnp.float32)
    else:
        mask = None

    WB = _pick_window_block(B_, N, nW, has_mask=attn_mask is not None,
                            max_block_rows=_max_tile_rows())

    attn_out = window_attention_pallas(
        x_win.reshape(B_ * N, C), v_win.reshape(B_ * N, v_dim),
        p["rel_bias"], mask, p["g1"], p["b1"], p["wqk"], p["bqk"],
        p["wproj"], p["bproj"],
        num_heads=num_heads, window_block=WB, fuse_norm1=fuse_norm1,
        fast_math=fast_math, out_dtype=act_dt)

    attn_out = attn_out.reshape(-1, window_size, window_size, v_dim)
    shifted = window_reverse(attn_out, window_size, Hp, Wp)
    if shift_size > 0:
        shifted = jnp.roll(shifted, (shift_size, shift_size), axis=(1, 2))
    xo = shifted[:, :H, :W, :].reshape(B * L, v_dim)

    out = residual_mlp_pallas(shortcut.reshape(B * L, C).astype(act_dt), xo,
                              p["g2"], p["b2"], p["w1"], p["bb1"],
                              p["w2"], p["bb2"],
                              fast_math=fast_math, out_dtype=x.dtype)
    return out.reshape(B, L, v_dim)


# ---------------------------------------------------------------------------
# Pure-JAX reference (mirrors the PyTorch forward, incl. padding) for checking
# ---------------------------------------------------------------------------
def _layernorm(x, g, b):
    mu = jnp.mean(x, -1, keepdims=True)
    var = jnp.mean(jnp.square(x - mu), -1, keepdims=True)
    return (x - mu) * jax.lax.rsqrt(var + LN_EPS) * g[0] + b[0]


def reference_forward(x, v, params, *, H, W, window_size, shift_size, num_heads,
                      mask_matrix=None):
    (g1, b1, wqk, bqk, rel_table, wproj, bproj,
     g2, b2, w1, bb1, w2, bb2) = params
    B, L, C = x.shape
    v_dim = v.shape[-1]
    hd = C // num_heads
    scale = hd ** (-0.5)
    N = window_size * window_size

    shortcut = x
    xn = _layernorm(x, g1, b1).reshape(B, H, W, C)
    pad_r = (window_size - W % window_size) % window_size
    pad_b = (window_size - H % window_size) % window_size
    x4 = jnp.pad(xn, ((0, 0), (0, pad_b), (0, pad_r), (0, 0)))
    v4 = jnp.pad(v, ((0, 0), (0, pad_b), (0, pad_r), (0, 0)))
    Hp, Wp = H + pad_b, W + pad_r
    if shift_size > 0:
        x4 = jnp.roll(x4, (-shift_size, -shift_size), axis=(1, 2))
        v4 = jnp.roll(v4, (-shift_size, -shift_size), axis=(1, 2))
    x_win = window_partition(x4, window_size).reshape(-1, N, C)
    v_win = window_partition(v4, window_size).reshape(-1, N, v_dim)
    B_ = x_win.shape[0]

    qk = x_win @ wqk + bqk[0]
    qk = qk.reshape(B_, N, 2, num_heads, hd).transpose(2, 0, 3, 1, 4)
    q, k = qk[0] * scale, qk[1]
    attn = jnp.einsum("bhnd,bhmd->bhnm", q, k)
    attn = attn + relative_position_bias(rel_table, window_size, num_heads)[None]
    if mask_matrix is not None and shift_size > 0:
        nW = mask_matrix.shape[0]
        attn = attn.reshape(B_ // nW, nW, num_heads, N, N) + mask_matrix[None, :, None]
        attn = attn.reshape(B_, num_heads, N, N)
    attn = jax.nn.softmax(attn, axis=-1)
    vv = v_win.reshape(B_, N, num_heads, -1).transpose(0, 2, 1, 3)
    o = jnp.einsum("bhnm,bhmd->bhnd", attn, vv).transpose(0, 2, 1, 3).reshape(B_, N, v_dim)
    o = o @ wproj + bproj[0]

    o = window_reverse(o.reshape(-1, window_size, window_size, v_dim),
                       window_size, Hp, Wp)
    if shift_size > 0:
        o = jnp.roll(o, (shift_size, shift_size), axis=(1, 2))
    o = o[:, :H, :W, :].reshape(B, H * W, v_dim)

    y = shortcut + o
    yn = _layernorm(y, g2, b2)
    h = yn @ w1 + bb1[0]
    h = 0.5 * h * (1.0 + jax.lax.erf(h * _SQRT_HALF))
    return y + (h @ w2 + bb2[0])


# ---------------------------------------------------------------------------
if __name__ == "__main__":
    B, H, W = 2, 16, 16
    dim = 32            # C
    v_dim = 32          # must equal dim
    num_heads = 4
    window_size = 8
    mlp_hidden = int(v_dim * 4.0)

    key = jax.random.PRNGKey(0)
    ks = jax.random.split(key, 14)
    std = 0.02
    f32 = jnp.float32

    params = (
        jnp.ones((1, dim), f32),                                        # norm1 gamma
        jnp.zeros((1, dim), f32),                                       # norm1 beta
        jax.random.normal(ks[0], (dim, 2 * dim), f32) * std,            # qk weight (in,out)
        jax.random.normal(ks[1], (1, 2 * dim), f32) * std,              # qk bias
        jax.random.normal(ks[2], ((2 * window_size - 1) ** 2, num_heads), f32) * std,
        jax.random.normal(ks[3], (v_dim, v_dim), f32) * std,            # proj weight
        jax.random.normal(ks[4], (1, v_dim), f32) * std,                # proj bias
        jnp.ones((1, v_dim), f32),                                      # norm2 gamma
        jnp.zeros((1, v_dim), f32),                                     # norm2 beta
        jax.random.normal(ks[5], (v_dim, mlp_hidden), f32) * std,       # fc1 weight
        jax.random.normal(ks[6], (1, mlp_hidden), f32) * std,           # fc1 bias
        jax.random.normal(ks[7], (mlp_hidden, v_dim), f32) * std,       # fc2 weight
        jax.random.normal(ks[8], (1, v_dim), f32) * std,                # fc2 bias
    )

    x = jax.random.normal(ks[9], (B, H * W, dim), f32)
    v = jax.random.normal(ks[10], (B, H, W, v_dim), f32)

    prep = prepare_params(params, num_heads=num_heads, window_size=window_size)
    prep_fm = prepare_params(params, num_heads=num_heads, window_size=window_size,
                             fast_math=True)

    def run(xx, vv, prepared, *, Hh, Ww, shift, mask, fm):
        fn = jax.jit(functools.partial(
            crf_block_forward, H=Hh, W=Ww, window_size=window_size,
            shift_size=shift, num_heads=num_heads, fast_math=fm))
        out = fn(xx, vv, prepared, mask_matrix=mask)
        jax.block_until_ready(out)
        return out

    # 1) non-shifted windows (exact numerics, norm1 fused into Kernel A)
    out = run(x, v, prep, Hh=H, Ww=W, shift=0, mask=None, fm=False)
    ref = reference_forward(x, v, params, H=H, W=W, window_size=window_size,
                            shift_size=0, num_heads=num_heads, mask_matrix=None)
    assert out.shape == (B, H * W, v_dim)
    assert jnp.allclose(out, ref, atol=1e-3, rtol=1e-3), "mismatch (no shift)"

    # 2) shifted windows + VMEM-resident attention mask (exact numerics)
    shift = window_size // 2
    attn_mask = build_attn_mask(H, W, window_size, shift)
    out_s = run(x, v, prep, Hh=H, Ww=W, shift=shift, mask=attn_mask, fm=False)
    ref_s = reference_forward(x, v, params, H=H, W=W, window_size=window_size,
                              shift_size=shift, num_heads=num_heads,
                              mask_matrix=attn_mask)
    assert jnp.allclose(out_s, ref_s, atol=1e-3, rtol=1e-3), "mismatch (shifted)"

    # 3) spatial padding path: norm1 runs BEFORE zero padding (exact numerics)
    H3 = W3 = 12
    x3 = jax.random.normal(ks[11], (B, H3 * W3, dim), f32)
    v3 = jax.random.normal(ks[12], (B, H3, W3, v_dim), f32)
    out_p = run(x3, v3, prep, Hh=H3, Ww=W3, shift=0, mask=None, fm=False)
    ref_p = reference_forward(x3, v3, params, H=H3, W=W3, window_size=window_size,
                              shift_size=0, num_heads=num_heads, mask_matrix=None)
    assert jnp.allclose(out_p, ref_p, atol=1e-3, rtol=1e-3), "mismatch (padded)"

    # 4) fast-math path: bf16 weights + activations, approx recip, tanh GELU
    out_f = run(x, v, prep_fm, Hh=H, Ww=W, shift=0, mask=None, fm=True)
    assert jnp.allclose(out_f, ref, atol=3e-2, rtol=3e-2), "mismatch (fast_math)"

    print("KERNEL_OK")
</pallas_src>

<mosaic_0001>
module attributes {stable_mosaic.version = 11 : i64} {
  func.func @_attn_kernel(%arg0: i32, %arg1: memref<256x32xf32, #tpu.memory_space<vmem>>, %arg2: memref<256x32xf32, #tpu.memory_space<vmem>>, %arg3: memref<4x64x64xf32, #tpu.memory_space<vmem>>, %arg4: memref<1x32xf32, #tpu.memory_space<vmem>>, %arg5: memref<1x32xf32, #tpu.memory_space<vmem>>, %arg6: memref<32x64xf32, #tpu.memory_space<vmem>>, %arg7: memref<1x64xf32, #tpu.memory_space<vmem>>, %arg8: memref<32x32xf32, #tpu.memory_space<vmem>>, %arg9: memref<1x32xf32, #tpu.memory_space<vmem>>, %arg10: memref<256x32xf32, #tpu.memory_space<vmem>>, %arg11: memref<256x32xf32, #tpu.memory_space<vmem>>) attributes {dimension_semantics = [#tpu.dimension_semantics<parallel>], iteration_bounds = array<i64: 2>, scalar_prefetch = 0 : i64, scratch_operands = 1 : i64, tpu.core_type = #tpu.core_type<tc>, window_params = [{transform_indices = @transform_0, window_bounds = array<i64: 256, 32>}, {transform_indices = @transform_1, window_bounds = array<i64: 256, 32>}, {pipeline_mode = #tpu.pipeline_mode<synchronous>, transform_indices = @transform_2, window_bounds = array<i64: 4, 64, 64>}, {pipeline_mode = #tpu.pipeline_mode<synchronous>, transform_indices = @transform_3, window_bounds = array<i64: 1, 32>}, {pipeline_mode = #tpu.pipeline_mode<synchronous>, transform_indices = @transform_4, window_bounds = array<i64: 1, 32>}, {pipeline_mode = #tpu.pipeline_mode<synchronous>, transform_indices = @transform_5, window_bounds = array<i64: 32, 64>}, {pipeline_mode = #tpu.pipeline_mode<synchronous>, transform_indices = @transform_6, window_bounds = array<i64: 1, 64>}, {pipeline_mode = #tpu.pipeline_mode<synchronous>, transform_indices = @transform_7, window_bounds = array<i64: 32, 32>}, {pipeline_mode = #tpu.pipeline_mode<synchronous>, transform_indices = @transform_8, window_bounds = array<i64: 1, 32>}, {transform_indices = @transform_9, window_bounds = array<i64: 256, 32>}]} {
    %c0 = arith.constant 0 : index
    %c0_0 = arith.constant 0 : index
    %0 = vector.load %arg1[%c0, %c0_0] : memref<256x32xf32, #tpu.memory_space<vmem>>, vector<256x32xf32>
    %cst = arith.constant dense<0.000000e+00> : vector<256xf32>
    %1 = vector.multi_reduction <add>, %0, %cst [1] : vector<256x32xf32> to vector<256xf32>
    %2 = vector.shape_cast %1 : vector<256xf32> to vector<256x1xf32>
    %cst_1 = arith.constant 3.200000e+01 : f32
    %3 = vector.broadcast %cst_1 : f32 to vector<256x1xf32>
    %4 = arith.divf %2, %3 : vector<256x1xf32>
    %5 = vector.broadcast %4 : vector<256x1xf32> to vector<256x32xf32>
    %6 = arith.subf %0, %5 : vector<256x32xf32>
    %7 = arith.mulf %6, %6 : vector<256x32xf32>
    %cst_2 = arith.constant dense<0.000000e+00> : vector<256xf32>
    %8 = vector.multi_reduction <add>, %7, %cst_2 [1] : vector<256x32xf32> to vector<256xf32>
    %9 = vector.shape_cast %8 : vector<256xf32> to vector<256x1xf32>
    %cst_3 = arith.constant 3.200000e+01 : f32
    %10 = vector.broadcast %cst_3 : f32 to vector<256x1xf32>
    %11 = arith.divf %9, %10 : vector<256x1xf32>
    %12 = vector.broadcast %4 : vector<256x1xf32> to vector<256x32xf32>
    %13 = arith.subf %0, %12 : vector<256x32xf32>
    %cst_4 = arith.constant 9.99999974E-6 : f32
    %14 = vector.broadcast %cst_4 : f32 to vector<256x1xf32>
    %15 = arith.addf %11, %14 : vector<256x1xf32>
    %16 = math.rsqrt %15 : vector<256x1xf32>
    %17 = vector.broadcast %16 : vector<256x1xf32> to vector<256x32xf32>
    %18 = arith.mulf %13, %17 : vector<256x32xf32>
    %c0_5 = arith.constant 0 : index
    %c0_6 = arith.constant 0 : index
    %19 = vector.load %arg4[%c0_5, %c0_6] : memref<1x32xf32, #tpu.memory_space<vmem>>, vector<1x32xf32>
    %20 = vector.shape_cast %19 : vector<1x32xf32> to vector<32xf32>
    %21 = vector.shape_cast %20 : vector<32xf32> to vector<1x32xf32>
    %22 = vector.broadcast %21 : vector<1x32xf32> to vector<256x32xf32>
    %23 = arith.mulf %18, %22 : vector<256x32xf32>
    %c0_7 = arith.constant 0 : index
    %c0_8 = arith.constant 0 : index
    %24 = vector.load %arg5[%c0_7, %c0_8] : memref<1x32xf32, #tpu.memory_space<vmem>>, vector<1x32xf32>
    %25 = vector.shape_cast %24 : vector<1x32xf32> to vector<32xf32>
    %26 = vector.shape_cast %25 : vector<32xf32> to vector<1x32xf32>
    %27 = vector.broadcast %26 : vector<1x32xf32> to vector<256x32xf32>
    %28 = arith.addf %23, %27 : vector<256x32xf32>
    %c0_9 = arith.constant 0 : index
    %c0_10 = arith.constant 0 : index
    %29 = vector.load %arg6[%c0_9, %c0_10] : memref<32x64xf32, #tpu.memory_space<vmem>>, vector<32x64xf32>
    %cst_11 = arith.constant dense<0.000000e+00> : vector<256x64xf32>
    %30 = tpu.matmul %28, %29, %cst_11 {dimension_numbers = #tpu.dot_dimension_numbers<[1], [0], [0], [1], [0, 0, 1, 1], [], []>} : vector<256x32xf32>, vector<32x64xf32>, vector<256x64xf32> -> vector<256x64xf32>
    %c0_12 = arith.constant 0 : index
    %c0_13 = arith.constant 0 : index
    %31 = vector.load %arg7[%c0_12, %c0_13] : memref<1x64xf32, #tpu.memory_space<vmem>>, vector<1x64xf32>
    %32 = vector.shape_cast %31 : vector<1x64xf32> to vector<64xf32>
    %33 = vector.shape_cast %32 : vector<64xf32> to vector<1x64xf32>
    %34 = vector.broadcast %33 : vector<1x64xf32> to vector<256x64xf32>
    %35 = arith.addf %30, %34 : vector<256x64xf32>
    %c0_14 = arith.constant 0 : index
    %c0_15 = arith.constant 0 : index
    %36 = vector.load %arg2[%c0_14, %c0_15] : memref<256x32xf32, #tpu.memory_space<vmem>>, vector<256x32xf32>
    %37 = vector.extract_strided_slice %35 {offsets = [0, 0], sizes = [256, 8], strides = [1, 1]} : vector<256x64xf32> to vector<256x8xf32>
    %38 = vector.shape_cast %37 : vector<256x8xf32> to vector<4x64x8xf32>
    %39 = vector.extract_strided_slice %35 {offsets = [0, 32], sizes = [256, 8], strides = [1, 1]} : vector<256x64xf32> to vector<256x8xf32>
    %40 = vector.shape_cast %39 : vector<256x8xf32> to vector<4x64x8xf32>
    %41 = vector.extract_strided_slice %36 {offsets = [0, 0], sizes = [256, 8], strides = [1, 1]} : vector<256x32xf32> to vector<256x8xf32>
    %42 = vector.shape_cast %41 : vector<256x8xf32> to vector<4x64x8xf32>
    "tpu.trace_start"() <{level = 10 : i32, message = "wnd,wmd->wnm"}> : () -> ()
    %cst_16 = arith.constant dense<0.000000e+00> : vector<4x64x64xf32>
    %43 = tpu.matmul %38, %40, %cst_16 {dimension_numbers = #tpu.dot_dimension_numbers<[2], [2], [1], [1], [0, 0, 0, 1, 1, 1], [0], [0]>} : vector<4x64x8xf32>, vector<4x64x8xf32>, vector<4x64x64xf32> -> vector<4x64x64xf32>
    "tpu.trace_stop"() : () -> ()
    %c0_17 = arith.constant 0 : index
    %c0_18 = arith.constant 0 : index
    %c0_19 = arith.constant 0 : index
    %44 = vector.load %arg3[%c0_17, %c0_18, %c0_19] : memref<4x64x64xf32, #tpu.memory_space<vmem>>, vector<1x64x64xf32>
    %45 = vector.shape_cast %44 : vector<1x64x64xf32> to vector<64x64xf32>
    %46 = vector.shape_cast %45 : vector<64x64xf32> to vector<1x64x64xf32>
    %47 = vector.broadcast %46 : vector<1x64x64xf32> to vector<4x64x64xf32>
    %48 = arith.addf %43, %47 : vector<4x64x64xf32>
    %cst_20 = arith.constant dense<0xFF800000> : vector<4x64xf32>
    %49 = vector.multi_reduction <maximumf>, %48, %cst_20 [2] : vector<4x64x64xf32> to vector<4x64xf32>
    %50 = vector.shape_cast %49 : vector<4x64xf32> to vector<4x64x1xf32>
    %51 = vector.broadcast %50 : vector<4x64x1xf32> to vector<4x64x64xf32>
    %52 = arith.subf %48, %51 : vector<4x64x64xf32>
    %53 = math.exp %52 : vector<4x64x64xf32>
    %cst_21 = arith.constant dense<0.000000e+00> : vector<4x64xf32>
    %54 = vector.multi_reduction <add>, %53, %cst_21 [2] : vector<4x64x64xf32> to vector<4x64xf32>
    %55 = vector.shape_cast %54 : vector<4x64xf32> to vector<4x64x1xf32>
    %56 = vector.broadcast %55 : vector<4x64x1xf32> to vector<4x64x64xf32>
    %57 = arith.divf %53, %56 : vector<4x64x64xf32>
    "tpu.trace_start"() <{level = 10 : i32, message = "wnm,wmd->wnd"}> : () -> ()
    %cst_22 = arith.constant dense<0.000000e+00> : vector<4x64x8xf32>
    %58 = tpu.matmul %57, %42, %cst_22 {dimension_numbers = #tpu.dot_dimension_numbers<[2], [1], [1], [2], [0, 0, 0, 1, 1, 2], [0], [0]>} : vector<4x64x64xf32>, vector<4x64x8xf32>, vector<4x64x8xf32> -> vector<4x64x8xf32>
    "tpu.trace_stop"() : () -> ()
    %59 = vector.shape_cast %58 : vector<4x64x8xf32> to vector<256x8xf32>
    %c0_23 = arith.constant 0 : index
    %c0_24 = arith.constant 0 : index
    %60 = vector.load %arg11[%c0_23, %c0_24] : memref<256x32xf32, #tpu.memory_space<vmem>>, vector<256x8xf32>
    tpu.vector_store %arg11[%c0_23, %c0_24], %59 {strides = array<i32>} : memref<256x32xf32, #tpu.memory_space<vmem>>, vector<256x8xf32>,
    %61 = vector.extract_strided_slice %35 {offsets = [0, 8], sizes = [256, 8], strides = [1, 1]} : vector<256x64xf32> to vector<256x8xf32>
    %62 = vector.shape_cast %61 : vector<256x8xf32> to vector<4x64x8xf32>
    %63 = vector.extract_strided_slice %35 {offsets = [0, 40], sizes = [256, 8], strides = [1, 1]} : vector<256x64xf32> to vector<256x8xf32>
    %64 = vector.shape_cast %63 : vector<256x8xf32> to vector<4x64x8xf32>
    %65 = vector.extract_strided_slice %36 {offsets = [0, 8], sizes = [256, 8], strides = [1, 1]} : vector<256x32xf32> to vector<256x8xf32>
    %66 = vector.shape_cast %65 : vector<256x8xf32> to vector<4x64x8xf32>
    "tpu.trace_start"() <{level = 10 : i32, message = "wnd,wmd->wnm"}> : () -> ()
    %cst_25 = arith.constant dense<0.000000e+00> : vector<4x64x64xf32>
    %67 = tpu.matmul %62, %64, %cst_25 {dimension_numbers = #tpu.dot_dimension_numbers<[2], [2], [1], [1], [0, 0, 0, 1, 1, 1], [0], [0]>} : vector<4x64x8xf32>, vector<4x64x8xf32>, vector<4x64x64xf32> -> vector<4x64x64xf32>
    "tpu.trace_stop"() : () -> ()
    %c1 = arith.constant 1 : index
    %c0_26 = arith.constant 0 : index
    %c0_27 = arith.constant 0 : index
    %68 = vector.load %arg3[%c1, %c0_26, %c0_27] : memref<4x64x64xf32, #tpu.memory_space<vmem>>, vector<1x64x64xf32>
    %69 = vector.shape_cast %68 : vector<1x64x64xf32> to vector<64x64xf32>
    %70 = vector.shape_cast %69 : vector<64x64xf32> to vector<1x64x64xf32>
    %71 = vector.broadcast %70 : vector<1x64x64xf32> to vector<4x64x64xf32>
    %72 = arith.addf %67, %71 : vector<4x64x64xf32>
    %cst_28 = arith.constant dense<0xFF800000> : vector<4x64xf32>
    %73 = vector.multi_reduction <maximumf>, %72, %cst_28 [2] : vector<4x64x64xf32> to vector<4x64xf32>
    %74 = vector.shape_cast %73 : vector<4x64xf32> to vector<4x64x1xf32>
    %75 = vector.broadcast %74 : vector<4x64x1xf32> to vector<4x64x64xf32>
    %76 = arith.subf %72, %75 : vector<4x64x64xf32>
    %77 = math.exp %76 : vector<4x64x64xf32>
    %cst_29 = arith.constant dense<0.000000e+00> : vector<4x64xf32>
    %78 = vector.multi_reduction <add>, %77, %cst_29 [2] : vector<4x64x64xf32> to vector<4x64xf32>
    %79 = vector.shape_cast %78 : vector<4x64xf32> to vector<4x64x1xf32>
    %80 = vector.broadcast %79 : vector<4x64x1xf32> to vector<4x64x64xf32>
    %81 = arith.divf %77, %80 : vector<4x64x64xf32>
    "tpu.trace_start"() <{level = 10 : i32, message = "wnm,wmd->wnd"}> : () -> ()
    %cst_30 = arith.constant dense<0.000000e+00> : vector<4x64x8xf32>
    %82 = tpu.matmul %81, %66, %cst_30 {dimension_numbers = #tpu.dot_dimension_numbers<[2], [1], [1], [2], [0, 0, 0, 1, 1, 2], [0], [0]>} : vector<4x64x64xf32>, vector<4x64x8xf32>, vector<4x64x8xf32> -> vector<4x64x8xf32>
    "tpu.trace_stop"() : () -> ()
    %83 = vector.shape_cast %82 : vector<4x64x8xf32> to vector<256x8xf32>
    %c0_31 = arith.constant 0 : index
    %c8 = arith.constant 8 : index
    %84 = vector.load %arg11[%c0_31, %c8] : memref<256x32xf32, #tpu.memory_space<vmem>>, vector<256x8xf32>
    tpu.vector_store %arg11[%c0_31, %c8], %83 {strides = array<i32>} : memref<256x32xf32, #tpu.memory_space<vmem>>, vector<256x8xf32>,
    %85 = vector.extract_strided_slice %35 {offsets = [0, 16], sizes = [256, 8], strides = [1, 1]} : vector<256x64xf32> to vector<256x8xf32>
    %86 = vector.shape_cast %85 : vector<256x8xf32> to vector<4x64x8xf32>
    %87 = vector.extract_strided_slice %35 {offsets = [0, 48], sizes = [256, 8], strides = [1, 1]} : vector<256x64xf32> to vector<256x8xf32>
    %88 = vector.shape_cast %87 : vector<256x8xf32> to vector<4x64x8xf32>
    %89 = vector.extract_strided_slice %36 {offsets = [0, 16], sizes = [256, 8], strides = [1, 1]} : vector<256x32xf32> to vector<256x8xf32>
    %90 = vector.shape_cast %89 : vector<256x8xf32> to vector<4x64x8xf32>
    "tpu.trace_start"() <{level = 10 : i32, message = "wnd,wmd->wnm"}> : () -> ()
    %cst_32 = arith.constant dense<0.000000e+00> : vector<4x64x64xf32>
    %91 = tpu.matmul %86, %88, %cst_32 {dimension_numbers = #tpu.dot_dimension_numbers<[2], [2], [1], [1], [0, 0, 0, 1, 1, 1], [0], [0]>} : vector<4x64x8xf32>, vector<4x64x8xf32>, vector<4x64x64xf32> -> vector<4x64x64xf32>
    "tpu.trace_stop"() : () -> ()
    %c2 = arith.constant 2 : index
    %c0_33 = arith.constant 0 : index
    %c0_34 = arith.constant 0 : index
    %92 = vector.load %arg3[%c2, %c0_33, %c0_34] : memref<4x64x64xf32, #tpu.memory_space<vmem>>, vector<1x64x64xf32>
    %93 = vector.shape_cast %92 : vector<1x64x64xf32> to vector<64x64xf32>
    %94 = vector.shape_cast %93 : vector<64x64xf32> to vector<1x64x64xf32>
    %95 = vector.broadcast %94 : vector<1x64x64xf32> to vector<4x64x64xf32>
    %96 = arith.addf %91, %95 : vector<4x64x64xf32>
    %cst_35 = arith.constant dense<0xFF800000> : vector<4x64xf32>
    %97 = vector.multi_reduction <maximumf>, %96, %cst_35 [2] : vector<4x64x64xf32> to vector<4x64xf32>
    %98 = vector.shape_cast %97 : vector<4x64xf32> to vector<4x64x1xf32>
    %99 = vector.broadcast %98 : vector<4x64x1xf32> to vector<4x64x64xf32>
    %100 = arith.subf %96, %99 : vector<4x64x64xf32>
    %101 = math.exp %100 : vector<4x64x64xf32>
    %cst_36 = arith.constant dense<0.000000e+00> : vector<4x64xf32>
    %102 = vector.multi_reduction <add>, %101, %cst_36 [2] : vector<4x64x64xf32> to vector<4x64xf32>
    %103 = vector.shape_cast %102 : vector<4x64xf32> to vector<4x64x1xf32>
    %104 = vector.broadcast %103 : vector<4x64x1xf32> to vector<4x64x64xf32>
    %105 = arith.divf %101, %104 : vector<4x64x64xf32>
    "tpu.trace_start"() <{level = 10 : i32, message = "wnm,wmd->wnd"}> : () -> ()
    %cst_37 = arith.constant dense<0.000000e+00> : vector<4x64x8xf32>
    %106 = tpu.matmul %105, %90, %cst_37 {dimension_numbers = #tpu.dot_dimension_numbers<[2], [1], [1], [2], [0, 0, 0, 1, 1, 2], [0], [0]>} : vector<4x64x64xf32>, vector<4x64x8xf32>, vector<4x64x8xf32> -> vector<4x64x8xf32>
    "tpu.trace_stop"() : () -> ()
    %107 = vector.shape_cast %106 : vector<4x64x8xf32> to vector<256x8xf32>
    %c0_38 = arith.constant 0 : index
    %c16 = arith.constant 16 : index
    %108 = vector.load %arg11[%c0_38, %c16] : memref<256x32xf32, #tpu.memory_space<vmem>>, vector<256x8xf32>
    tpu.vector_store %arg11[%c0_38, %c16], %107 {strides = array<i32>} : memref<256x32xf32, #tpu.memory_space<vmem>>, vector<256x8xf32>,
    %109 = vector.extract_strided_slice %35 {offsets = [0, 24], sizes = [256, 8], strides = [1, 1]} : vector<256x64xf32> to vector<256x8xf32>
    %110 = vector.shape_cast %109 : vector<256x8xf32> to vector<4x64x8xf32>
    %111 = vector.extract_strided_slice %35 {offsets = [0, 56], sizes = [256, 8], strides = [1, 1]} : vector<256x64xf32> to vector<256x8xf32>
    %112 = vector.shape_cast %111 : vector<256x8xf32> to vector<4x64x8xf32>
    %113 = vector.extract_strided_slice %36 {offsets = [0, 24], sizes = [256, 8], strides = [1, 1]} : vector<256x32xf32> to vector<256x8xf32>
    %114 = vector.shape_cast %113 : vector<256x8xf32> to vector<4x64x8xf32>
    "tpu.trace_start"() <{level = 10 : i32, message = "wnd,wmd->wnm"}> : () -> ()
    %cst_39 = arith.constant dense<0.000000e+00> : vector<4x64x64xf32>
    %115 = tpu.matmul %110, %112, %cst_39 {dimension_numbers = #tpu.dot_dimension_numbers<[2], [2], [1], [1], [0, 0, 0, 1, 1, 1], [0], [0]>} : vector<4x64x8xf32>, vector<4x64x8xf32>, vector<4x64x64xf32> -> vector<4x64x64xf32>
    "tpu.trace_stop"() : () -> ()
    %c3 = arith.constant 3 : index
    %c0_40 = arith.constant 0 : index
    %c0_41 = arith.constant 0 : index
    %116 = vector.load %arg3[%c3, %c0_40, %c0_41] : memref<4x64x64xf32, #tpu.memory_space<vmem>>, vector<1x64x64xf32>
    %117 = vector.shape_cast %116 : vector<1x64x64xf32> to vector<64x64xf32>
    %118 = vector.shape_cast %117 : vector<64x64xf32> to vector<1x64x64xf32>
    %119 = vector.broadcast %118 : vector<1x64x64xf32> to vector<4x64x64xf32>
    %120 = arith.addf %115, %119 : vector<4x64x64xf32>
    %cst_42 = arith.constant dense<0xFF800000> : vector<4x64xf32>
    %121 = vector.multi_reduction <maximumf>, %120, %cst_42 [2] : vector<4x64x64xf32> to vector<4x64xf32>
    %122 = vector.shape_cast %121 : vector<4x64xf32> to vector<4x64x1xf32>
    %123 = vector.broadcast %122 : vector<4x64x1xf32> to vector<4x64x64xf32>
    %124 = arith.subf %120, %123 : vector<4x64x64xf32>
    %125 = math.exp %124 : vector<4x64x64xf32>
    %cst_43 = arith.constant dense<0.000000e+00> : vector<4x64xf32>
    %126 = vector.multi_reduction <add>, %125, %cst_43 [2] : vector<4x64x64xf32> to vector<4x64xf32>
    %127 = vector.shape_cast %126 : vector<4x64xf32> to vector<4x64x1xf32>
    %128 = vector.broadcast %127 : vector<4x64x1xf32> to vector<4x64x64xf32>
    %129 = arith.divf %125, %128 : vector<4x64x64xf32>
    "tpu.trace_start"() <{level = 10 : i32, message = "wnm,wmd->wnd"}> : () -> ()
    %cst_44 = arith.constant dense<0.000000e+00> : vector<4x64x8xf32>
    %130 = tpu.matmul %129, %114, %cst_44 {dimension_numbers = #tpu.dot_dimension_numbers<[2], [1], [1], [2], [0, 0, 0, 1, 1, 2], [0], [0]>} : vector<4x64x64xf32>, vector<4x64x8xf32>, vector<4x64x8xf32> -> vector<4x64x8xf32>
    "tpu.trace_stop"() : () -> ()
    %131 = vector.shape_cast %130 : vector<4x64x8xf32> to vector<256x8xf32>
    %c0_45 = arith.constant 0 : index
    %c24 = arith.constant 24 : index
    %132 = vector.load %arg11[%c0_45, %c24] : memref<256x32xf32, #tpu.memory_space<vmem>>, vector<256x8xf32>
    tpu.vector_store %arg11[%c0_45, %c24], %131 {strides = array<i32>} : memref<256x32xf32, #tpu.memory_space<vmem>>, vector<256x8xf32>,
    %c0_46 = arith.constant 0 : index
    %c0_47 = arith.constant 0 : index
    %133 = vector.load %arg11[%c0_46, %c0_47] : memref<256x32xf32, #tpu.memory_space<vmem>>, vector<256x32xf32>
    %c0_48 = arith.constant 0 : index
    %c0_49 = arith.constant 0 : index
    %134 = vector.load %arg8[%c0_48, %c0_49] : memref<32x32xf32, #tpu.memory_space<vmem>>, vector<32x32xf32>
    %cst_50 = arith.constant dense<0.000000e+00> : vector<256x32xf32>
    %135 = tpu.matmul %133, %134, %cst_50 {dimension_numbers = #tpu.dot_dimension_numbers<[1], [0], [0], [1], [0, 0, 1, 1], [], []>} : vector<256x32xf32>, vector<32x32xf32>, vector<256x32xf32> -> vector<256x32xf32>
    %c0_51 = arith.constant 0 : index
    %c0_52 = arith.constant 0 : index
    %136 = vector.load %arg9[%c0_51, %c0_52] : memref<1x32xf32, #tpu.memory_space<vmem>>, vector<1x32xf32>
    %137 = vector.shape_cast %136 : vector<1x32xf32> to vector<32xf32>
    %138 = vector.shape_cast %137 : vector<32xf32> to vector<1x32xf32>
    %139 = vector.broadcast %138 : vector<1x32xf32> to vector<256x32xf32>
    %140 = arith.addf %135, %139 : vector<256x32xf32>
    %c0_53 = arith.constant 0 : index
    %c0_54 = arith.constant 0 : index
    %141 = vector.load %arg10[%c0_53, %c0_54] : memref<256x32xf32, #tpu.memory_space<vmem>>, vector<256x32xf32>
    tpu.vector_store %arg10[%c0_53, %c0_54], %140 {strides = array<i32>} : memref<256x32xf32, #tpu.memory_space<vmem>>, vector<256x32xf32>,
    return
  }
  func.func @transform_0(%arg0: i32) -> (i32, i32) {
    %c0_i32 = arith.constant 0 : i32
    %c0_i32_0 = arith.constant 0 : i32
    return %arg0, %c0_i32 : i32, i32
  }
  func.func @transform_1(%arg0: i32) -> (i32, i32) {
    %c0_i32 = arith.constant 0 : i32
    %c0_i32_0 = arith.constant 0 : i32
    return %arg0, %c0_i32 : i32, i32
  }
  func.func @transform_2(%arg0: i32) -> (i32, i32, i32) {
    %c0_i32 = arith.constant 0 : i32
    %c0_i32_0 = arith.constant 0 : i32
    %c0_i32_1 = arith.constant 0 : i32
    %c0_i32_2 = arith.constant 0 : i32
    return %c0_i32, %c0_i32_0, %c0_i32_1 : i32, i32, i32
  }
  func.func @transform_3(%arg0: i32) -> (i32, i32) {
    %c0_i32 = arith.constant 0 : i32
    %c0_i32_0 = arith.constant 0 : i32
    %c0_i32_1 = arith.constant 0 : i32
    return %c0_i32, %c0_i32_0 : i32, i32
  }
  func.func @transform_4(%arg0: i32) -> (i32, i32) {
    %c0_i32 = arith.constant 0 : i32
    %c0_i32_0 = arith.constant 0 : i32
    %c0_i32_1 = arith.constant 0 : i32
    return %c0_i32, %c0_i32_0 : i32, i32
  }
  func.func @transform_5(%arg0: i32) -> (i32, i32) {
    %c0_i32 = arith.constant 0 : i32
    %c0_i32_0 = arith.constant 0 : i32
    %c0_i32_1 = arith.constant 0 : i32
    return %c0_i32, %c0_i32_0 : i32, i32
  }
  func.func @transform_6(%arg0: i32) -> (i32, i32) {
    %c0_i32 = arith.constant 0 : i32
    %c0_i32_0 = arith.constant 0 : i32
    %c0_i32_1 = arith.constant 0 : i32
    return %c0_i32, %c0_i32_0 : i32, i32
  }
  func.func @transform_7(%arg0: i32) -> (i32, i32) {
    %c0_i32 = arith.constant 0 : i32
    %c0_i32_0 = arith.constant 0 : i32
    %c0_i32_1 = arith.constant 0 : i32
    return %c0_i32, %c0_i32_0 : i32, i32
  }
  func.func @transform_8(%arg0: i32) -> (i32, i32) {
    %c0_i32 = arith.constant 0 : i32
    %c0_i32_0 = arith.constant 0 : i32
    %c0_i32_1 = arith.constant 0 : i32
    return %c0_i32, %c0_i32_0 : i32, i32
  }
  func.func @transform_9(%arg0: i32) -> (i32, i32) {
    %c0_i32 = arith.constant 0 : i32
    %c0_i32_0 = arith.constant 0 : i32
    return %arg0, %c0_i32 : i32, i32
  }
}

module attributes {stable_mosaic.version = 11 : i64} {
  func.func @_mlp_kernel(%arg0: i32, %arg1: memref<256x32xf32, #tpu.memory_space<vmem>>, %arg2: memref<256x32xf32, #tpu.memory_space<vmem>>, %arg3: memref<1x32xf32, #tpu.memory_space<vmem>>, %arg4: memref<1x32xf32, #tpu.memory_space<vmem>>, %arg5: memref<32x128xf32, #tpu.memory_space<vmem>>, %arg6: memref<1x128xf32, #tpu.memory_space<vmem>>, %arg7: memref<128x32xf32, #tpu.memory_space<vmem>>, %arg8: memref<1x32xf32, #tpu.memory_space<vmem>>, %arg9: memref<256x32xf32, #tpu.memory_space<vmem>>) attributes {dimension_semantics = [#tpu.dimension_semantics<parallel>], iteration_bounds = array<i64: 2>, scalar_prefetch = 0 : i64, scratch_operands = 0 : i64, tpu.core_type = #tpu.core_type<tc>, window_params = [{transform_indices = @transform_0, window_bounds = array<i64: 256, 32>}, {transform_indices = @transform_1, window_bounds = array<i64: 256, 32>}, {pipeline_mode = #tpu.pipeline_mode<synchronous>, transform_indices = @transform_2, window_bounds = array<i64: 1, 32>}, {pipeline_mode = #tpu.pipeline_mode<synchronous>, transform_indices = @transform_3, window_bounds = array<i64: 1, 32>}, {pipeline_mode = #tpu.pipeline_mode<synchronous>, transform_indices = @transform_4, window_bounds = array<i64: 32, 128>}, {pipeline_mode = #tpu.pipeline_mode<synchronous>, transform_indices = @transform_5, window_bounds = array<i64: 1, 128>}, {pipeline_mode = #tpu.pipeline_mode<synchronous>, transform_indices = @transform_6, window_bounds = array<i64: 128, 32>}, {pipeline_mode = #tpu.pipeline_mode<synchronous>, transform_indices = @transform_7, window_bounds = array<i64: 1, 32>}, {transform_indices = @transform_8, window_bounds = array<i64: 256, 32>}]} {
    %c0 = arith.constant 0 : index
    %c0_0 = arith.constant 0 : index
    %0 = vector.load %arg1[%c0, %c0_0] : memref<256x32xf32, #tpu.memory_space<vmem>>, vector<256x32xf32>
    %c0_1 = arith.constant 0 : index
    %c0_2 = arith.constant 0 : index
    %1 = vector.load %arg2[%c0_1, %c0_2] : memref<256x32xf32, #tpu.memory_space<vmem>>, vector<256x32xf32>
    %2 = arith.addf %0, %1 : vector<256x32xf32>
    %cst = arith.constant dense<0.000000e+00> : vector<256xf32>
    %3 = vector.multi_reduction <add>, %2, %cst [1] : vector<256x32xf32> to vector<256xf32>
    %4 = vector.shape_cast %3 : vector<256xf32> to vector<256x1xf32>
    %cst_3 = arith.constant 3.200000e+01 : f32
    %5 = vector.broadcast %cst_3 : f32 to vector<256x1xf32>
    %6 = arith.divf %4, %5 : vector<256x1xf32>
    %7 = vector.broadcast %6 : vector<256x1xf32> to vector<256x32xf32>
    %8 = arith.subf %2, %7 : vector<256x32xf32>
    %9 = arith.mulf %8, %8 : vector<256x32xf32>
    %cst_4 = arith.constant dense<0.000000e+00> : vector<256xf32>
    %10 = vector.multi_reduction <add>, %9, %cst_4 [1] : vector<256x32xf32> to vector<256xf32>
    %11 = vector.shape_cast %10 : vector<256xf32> to vector<256x1xf32>
    %cst_5 = arith.constant 3.200000e+01 : f32
    %12 = vector.broadcast %cst_5 : f32 to vector<256x1xf32>
    %13 = arith.divf %11, %12 : vector<256x1xf32>
    %14 = vector.broadcast %6 : vector<256x1xf32> to vector<256x32xf32>
    %15 = arith.subf %2, %14 : vector<256x32xf32>
    %cst_6 = arith.constant 9.99999974E-6 : f32
    %16 = vector.broadcast %cst_6 : f32 to vector<256x1xf32>
    %17 = arith.addf %13, %16 : vector<256x1xf32>
    %18 = math.rsqrt %17 : vector<256x1xf32>
    %19 = vector.broadcast %18 : vector<256x1xf32> to vector<256x32xf32>
    %20 = arith.mulf %15, %19 : vector<256x32xf32>
    %c0_7 = arith.constant 0 : index
    %c0_8 = arith.constant 0 : index
    %21 = vector.load %arg3[%c0_7, %c0_8] : memref<1x32xf32, #tpu.memory_space<vmem>>, vector<1x32xf32>
    %22 = vector.shape_cast %21 : vector<1x32xf32> to vector<32xf32>
    %23 = vector.shape_cast %22 : vector<32xf32> to vector<1x32xf32>
    %24 = vector.broadcast %23 : vector<1x32xf32> to vector<256x32xf32>
    %25 = arith.mulf %20, %24 : vector<256x32xf32>
    %c0_9 = arith.constant 0 : index
    %c0_10 = arith.constant 0 : index
    %26 = vector.load %arg4[%c0_9, %c0_10] : memref<1x32xf32, #tpu.memory_space<vmem>>, vector<1x32xf32>
    %27 = vector.shape_cast %26 : vector<1x32xf32> to vector<32xf32>
    %28 = vector.shape_cast %27 : vector<32xf32> to vector<1x32xf32>
    %29 = vector.broadcast %28 : vector<1x32xf32> to vector<256x32xf32>
    %30 = arith.addf %25, %29 : vector<256x32xf32>
    %c0_11 = arith.constant 0 : index
    %c0_12 = arith.constant 0 : index
    %31 = vector.load %arg5[%c0_11, %c0_12] : memref<32x128xf32, #tpu.memory_space<vmem>>, vector<32x128xf32>
    %cst_13 = arith.constant dense<0.000000e+00> : vector<256x128xf32>
    %32 = tpu.matmul %30, %31, %cst_13 {dimension_numbers = #tpu.dot_dimension_numbers<[1], [0], [0], [1], [0, 0, 1, 1], [], []>} : vector<256x32xf32>, vector<32x128xf32>, vector<256x128xf32> -> vector<256x128xf32>
    %c0_14 = arith.constant 0 : index
    %c0_15 = arith.constant 0 : index
    %33 = vector.load %arg6[%c0_14, %c0_15] : memref<1x128xf32, #tpu.memory_space<vmem>>, vector<1x128xf32>
    %34 = vector.shape_cast %33 : vector<1x128xf32> to vector<128xf32>
    %35 = vector.shape_cast %34 : vector<128xf32> to vector<1x128xf32>
    %36 = vector.broadcast %35 : vector<1x128xf32> to vector<256x128xf32>
    %37 = arith.addf %32, %36 : vector<256x128xf32>
    %cst_16 = arith.constant 5.000000e-01 : f32
    %38 = vector.broadcast %cst_16 : f32 to vector<256x128xf32>
    %39 = arith.mulf %38, %37 : vector<256x128xf32>
    %cst_17 = arith.constant 0.707106769 : f32
    %40 = vector.broadcast %cst_17 : f32 to vector<256x128xf32>
    %41 = arith.mulf %37, %40 : vector<256x128xf32>
    %42 = math.erf %41 : vector<256x128xf32>
    %cst_18 = arith.constant 1.000000e+00 : f32
    %43 = vector.broadcast %cst_18 : f32 to vector<256x128xf32>
    %44 = arith.addf %43, %42 : vector<256x128xf32>
    %45 = arith.mulf %39, %44 : vector<256x128xf32>
    %c0_19 = arith.constant 0 : index
    %c0_20 = arith.constant 0 : index
    %46 = vector.load %arg7[%c0_19, %c0_20] : memref<128x32xf32, #tpu.memory_space<vmem>>, vector<128x32xf32>
    %cst_21 = arith.constant dense<0.000000e+00> : vector<256x32xf32>
    %47 = tpu.matmul %45, %46, %cst_21 {dimension_numbers = #tpu.dot_dimension_numbers<[1], [0], [0], [1], [0, 0, 1, 1], [], []>} : vector<256x128xf32>, vector<128x32xf32>, vector<256x32xf32> -> vector<256x32xf32>
    %c0_22 = arith.constant 0 : index
    %c0_23 = arith.constant 0 : index
    %48 = vector.load %arg8[%c0_22, %c0_23] : memref<1x32xf32, #tpu.memory_space<vmem>>, vector<1x32xf32>
    %49 = vector.shape_cast %48 : vector<1x32xf32> to vector<32xf32>
    %50 = vector.shape_cast %49 : vector<32xf32> to vector<1x32xf32>
    %51 = vector.broadcast %50 : vector<1x32xf32> to vector<256x32xf32>
    %52 = arith.addf %47, %51 : vector<256x32xf32>
    %53 = arith.addf %2, %52 : vector<256x32xf32>
    %c0_24 = arith.constant 0 : index
    %c0_25 = arith.constant 0 : index
    %54 = vector.load %arg9[%c0_24, %c0_25] : memref<256x32xf32, #tpu.memory_space<vmem>>, vector<256x32xf32>
    tpu.vector_store %arg9[%c0_24, %c0_25], %53 {strides = array<i32>} : memref<256x32xf32, #tpu.memory_space<vmem>>, vector<256x32xf32>,
    return
  }
  func.func @transform_0(%arg0: i32) -> (i32, i32) {
    %c0_i32 = arith.constant 0 : i32
    %c0_i32_0 = arith.constant 0 : i32
    return %arg0, %c0_i32 : i32, i32
  }
  func.func @transform_1(%arg0: i32) -> (i32, i32) {
    %c0_i32 = arith.constant 0 : i32
    %c0_i32_0 = arith.constant 0 : i32
    return %arg0, %c0_i32 : i32, i32
  }
  func.func @transform_2(%arg0: i32) -> (i32, i32) {
    %c0_i32 = arith.constant 0 : i32
    %c0_i32_0 = arith.constant 0 : i32
    %c0_i32_1 = arith.constant 0 : i32
    return %c0_i32, %c0_i32_0 : i32, i32
  }
  func.func @transform_3(%arg0: i32) -> (i32, i32) {
    %c0_i32 = arith.constant 0 : i32
    %c0_i32_0 = arith.constant 0 : i32
    %c0_i32_1 = arith.constant 0 : i32
    return %c0_i32, %c0_i32_0 : i32, i32
  }
  func.func @transform_4(%arg0: i32) -> (i32, i32) {
    %c0_i32 = arith.constant 0 : i32
    %c0_i32_0 = arith.constant 0 : i32
    %c0_i32_1 = arith.constant 0 : i32
    return %c0_i32, %c0_i32_0 : i32, i32
  }
  func.func @transform_5(%arg0: i32) -> (i32, i32) {
    %c0_i32 = arith.constant 0 : i32
    %c0_i32_0 = arith.constant 0 : i32
    %c0_i32_1 = arith.constant 0 : i32
    return %c0_i32, %c0_i32_0 : i32, i32
  }
  func.func @transform_6(%arg0: i32) -> (i32, i32) {
    %c0_i32 = arith.constant 0 : i32
    %c0_i32_0 = arith.constant 0 : i32
    %c0_i32_1 = arith.constant 0 : i32
    return %c0_i32, %c0_i32_0 : i32, i32
  }
  func.func @transform_7(%arg0: i32) -> (i32, i32) {
    %c0_i32 = arith.constant 0 : i32
    %c0_i32_0 = arith.constant 0 : i32
    %c0_i32_1 = arith.constant 0 : i32
    return %c0_i32, %c0_i32_0 : i32, i32
  }
  func.func @transform_8(%arg0: i32) -> (i32, i32) {
    %c0_i32 = arith.constant 0 : i32
    %c0_i32_0 = arith.constant 0 : i32
    return %arg0, %c0_i32 : i32, i32
  }
}

</mosaic_0001>

<llo_original>
// kernel: crf_block_forward.3
$region0: #{crf_block_forward.3}
  #allocation0 [shape = 'u32[]', space=smem, size = 0x4, offset = 0x4, fixed_abs, tag = 'smem constant byte address 0x4 - core index']
  #allocation1 [shape = 'u32[72,128]{1,0:T(1,128)}', space=vmem, size = 0x9000, scoped, tag = 'internal scratch']
  %s0 = inlined_call_operand.vmem [shape: f32[512,32], index: 0, kind: input, shape index: {}]
  %s1 = inlined_call_operand.vmem [shape: f32[512,32], index: 1, kind: input, shape index: {}]
  %s2 = inlined_call_operand.vmem [shape: f32[1,32], index: 2, kind: input, shape index: {}]
  %s3 = inlined_call_operand.vmem [shape: f32[1,32], index: 3, kind: input, shape index: {}]
  %s4 = inlined_call_operand.vmem [shape: f32[32,128], index: 4, kind: input, shape index: {}]
  %s5 = inlined_call_operand.vmem [shape: f32[1,128], index: 5, kind: input, shape index: {}]
  %s6 = inlined_call_operand.vmem [shape: f32[128,32], index: 6, kind: input, shape index: {}]
  %s7 = inlined_call_operand.vmem [shape: f32[1,32], index: 7, kind: input, shape index: {}]
  %s8 = inlined_call_operand.vmem [shape: f32[512,32], index: 8, kind: output, shape index: {}]
  %s9 = sld [smem:[#allocation0]]
  $region65: #{crf_block_forward.3} parent=0
    _
  %s11 = ssub.s32 1, %s9
  %s12 = scalar_select 0, %s11, %s9
  loop: start=0, step=1, limit=4
  $region2: #{crf_block_forward.3} parent=0 // loop_pre_header
    _
  $region3: #{crf_block_forward.3} parent=0 // loop_header
    %s14 = sphi 0, %s18
    %p15 = scmp.ge.s32.totalorder %s14, 4
    %s24 = sphi 0, %s26
    %s27 = sphi 0, %s24
    %s28 = sphi 0, %s27
    %s44 = sphi 0, %s28
    %s50 = sphi 0, %s52
    %s53 = sphi 0, %s50
    %s54 = sphi 0, %s53
    %s70 = sphi 0, %s54
    %s74 = sphi 0, %s74
    %s76 = sphi 0, %s74
    %s77 = sphi 0, %s76
    %s91 = sphi 0, %s77
    %s95 = sphi 0, %s95
    %s97 = sphi 0, %s95
    %s98 = sphi 0, %s97
    %s112 = sphi 0, %s98
    %s116 = sphi 0, %s116
    %s118 = sphi 0, %s116
    %s119 = sphi 0, %s118
    %s133 = sphi 0, %s119
    %s137 = sphi 0, %s137
    %s139 = sphi 0, %s137
    %s140 = sphi 0, %s139
    %s154 = sphi 0, %s140
    %s158 = sphi 0, %s158
    %s160 = sphi 0, %s158
    %s161 = sphi 0, %s160
    %s175 = sphi 0, %s161
    %s179 = sphi 0, %s179
    %s181 = sphi 0, %s179
    %s182 = sphi 0, %s181
    %s196 = sphi 0, %s182
    %s202 = sphi 0, %s204
    %s205 = sphi 0, %s202
    %s206 = sphi 0, %s205
    %s222 = sphi 0, %s206
  $region4: #{crf_block_forward.3} parent=0 // loop_header_branch
    %17 = sbr.rel (%p15) target = $region8
  $region5: #{crf_block_forward.3} parent=0 // loop_body
    %s19 = ssub.s32 %s14, 1
    %s20 = ssub.s32 %s14, 2
    %s21 = sadd.s32 %s14, 1
    %s22 = ssub.s32 %s14, %s21
    %p23 = scmp.eq.s32.totalorder %s22, 0
    %s25 = sadd.s32 %s24, 1
    %s26 = scalar_select %p23, %s24, %s25
    %p29 = pneg %p23
    %p30 = scmp.eq.s32.totalorder %s14, 1
    %p31 = por %p29, %p30
    %p32 = scmp.ne.s32.totalorder %s24, %s27
    %p33 = scmp.eq.s32.totalorder %s14, 0
    %p34 = por %p32, %p33
    %p35 = scmp.ne.s32.totalorder %s24, %s27
    %p36 = scmp.eq.s32.totalorder %s19, 1
    %p37 = por %p35, %p36
    %p38 = scmp.ne.s32.totalorder %s27, %s28
    %p39 = scmp.eq.s32.totalorder %s19, 0
    %p40 = por %p38, %p39
    %p41 = scmp.ne.s32.totalorder %s27, %s28
    %p42 = scmp.eq.s32.totalorder %s20, 1
    %p43 = por %p41, %p42
    %p45 = scmp.ne.s32.totalorder %s28, %s44
    %p46 = scmp.eq.s32.totalorder %s20, 0
    %p47 = por %p45, %p46
    %s48 = ssub.s32 %s14, %s21
    %p49 = scmp.eq.s32.totalorder %s48, 0
    %s51 = sadd.s32 %s50, 1
    %s52 = scalar_select %p49, %s50, %s51
    %p55 = pneg %p49
    %p56 = scmp.eq.s32.totalorder %s14, 1
    %p57 = por %p55, %p56
    %p58 = scmp.ne.s32.totalorder %s50, %s53
    %p59 = scmp.eq.s32.totalorder %s14, 0
    %p60 = por %p58, %p59
    %p61 = scmp.ne.s32.totalorder %s50, %s53
    %p62 = scmp.eq.s32.totalorder %s19, 1
    %p63 = por %p61, %p62
    %p64 = scmp.ne.s32.totalorder %s53, %s54
    %p65 = scmp.eq.s32.totalorder %s19, 0
    %p66 = por %p64, %p65
    %p67 = scmp.ne.s32.totalorder %s53, %s54
    %p68 = scmp.eq.s32.totalorder %s20, 1
    %p69 = por %p67, %p68
    %p71 = scmp.ne.s32.totalorder %s54, %s70
    %p72 = scmp.eq.s32.totalorder %s20, 0
    %p73 = por %p71, %p72
    %s75 = sadd.s32 %s74, 1
    %p78 = scmp.eq.s32.totalorder %s14, 1
    %p79 = scmp.ne.s32.totalorder %s74, %s76
    %p80 = scmp.eq.s32.totalorder %s14, 0
    %p81 = por %p79, %p80
    %p82 = scmp.ne.s32.totalorder %s74, %s76
    %p83 = scmp.eq.s32.totalorder %s19, 1
    %p84 = por %p82, %p83
    %p85 = scmp.ne.s32.totalorder %s76, %s77
    %p86 = scmp.eq.s32.totalorder %s19, 0
    %p87 = por %p85, %p86
    %p88 = scmp.ne.s32.totalorder %s76, %s77
    %p89 = scmp.eq.s32.totalorder %s20, 1
    %p90 = por %p88, %p89
    %p92 = scmp.ne.s32.totalorder %s77, %s91
    %p93 = scmp.eq.s32.totalorder %s20, 0
    %p94 = por %p92, %p93
    %s96 = sadd.s32 %s95, 1
    %p99 = scmp.eq.s32.totalorder %s14, 1
    %p100 = scmp.ne.s32.totalorder %s95, %s97
    %p101 = scmp.eq.s32.totalorder %s14, 0
    %p102 = por %p100, %p101
    %p103 = scmp.ne.s32.totalorder %s95, %s97
    %p104 = scmp.eq.s32.totalorder %s19, 1
    %p105 = por %p103, %p104
    %p106 = scmp.ne.s32.totalorder %s97, %s98
    %p107 = scmp.eq.s32.totalorder %s19, 0
    %p108 = por %p106, %p107
    %p109 = scmp.ne.s32.totalorder %s97, %s98
    %p110 = scmp.eq.s32.totalorder %s20, 1
    %p111 = por %p109, %p110
    %p113 = scmp.ne.s32.totalorder %s98, %s112
    %p114 = scmp.eq.s32.totalorder %s20, 0
    %p115 = por %p113, %p114
    %s117 = sadd.s32 %s116, 1
    %p120 = scmp.eq.s32.totalorder %s14, 1
    %p121 = scmp.ne.s32.totalorder %s116, %s118
    %p122 = scmp.eq.s32.totalorder %s14, 0
    %p123 = por %p121, %p122
    %p124 = scmp.ne.s32.totalorder %s116, %s118
    %p125 = scmp.eq.s32.totalorder %s19, 1
    %p126 = por %p124, %p125
    %p127 = scmp.ne.s32.totalorder %s118, %s119
    %p128 = scmp.eq.s32.totalorder %s19, 0
    %p129 = por %p127, %p128
    %p130 = scmp.ne.s32.totalorder %s118, %s119
    %p131 = scmp.eq.s32.totalorder %s20, 1
    %p132 = por %p130, %p131
    %p134 = scmp.ne.s32.totalorder %s119, %s133
    %p135 = scmp.eq.s32.totalorder %s20, 0
    %p136 = por %p134, %p135
    %s138 = sadd.s32 %s137, 1
    %p141 = scmp.eq.s32.totalorder %s14, 1
    %p142 = scmp.ne.s32.totalorder %s137, %s139
    %p143 = scmp.eq.s32.totalorder %s14, 0
    %p144 = por %p142, %p143
    %p145 = scmp.ne.s32.totalorder %s137, %s139
    %p146 = scmp.eq.s32.totalorder %s19, 1
    %p147 = por %p145, %p146
    %p148 = scmp.ne.s32.totalorder %s139, %s140
    %p149 = scmp.eq.s32.totalorder %s19, 0
    %p150 = por %p148, %p149
    %p151 = scmp.ne.s32.totalorder %s139, %s140
    %p152 = scmp.eq.s32.totalorder %s20, 1
    %p153 = por %p151, %p152
    %p155 = scmp.ne.s32.totalorder %s140, %s154
    %p156 = scmp.eq.s32.totalorder %s20, 0
    %p157 = por %p155, %p156
    %s159 = sadd.s32 %s158, 1
    %p162 = scmp.eq.s32.totalorder %s14, 1
    %p163 = scmp.ne.s32.totalorder %s158, %s160
    %p164 = scmp.eq.s32.totalorder %s14, 0
    %p165 = por %p163, %p164
    %p166 = scmp.ne.s32.totalorder %s158, %s160
    %p167 = scmp.eq.s32.totalorder %s19, 1
    %p168 = por %p166, %p167
    %p169 = scmp.ne.s32.totalorder %s160, %s161
    %p170 = scmp.eq.s32.totalorder %s19, 0
    %p171 = por %p169, %p170
    %p172 = scmp.ne.s32.totalorder %s160, %s161
    %p173 = scmp.eq.s32.totalorder %s20, 1
    %p174 = por %p172, %p173
    %p176 = scmp.ne.s32.totalorder %s161, %s175
    %p177 = scmp.eq.s32.totalorder %s20, 0
    %p178 = por %p176, %p177
    %s180 = sadd.s32 %s179, 1
    %p183 = scmp.eq.s32.totalorder %s14, 1
    %p184 = scmp.ne.s32.totalorder %s179, %s181
    %p185 = scmp.eq.s32.totalorder %s14, 0
    %p186 = por %p184, %p185
    %p187 = scmp.ne.s32.totalorder %s179, %s181
    %p188 = scmp.eq.s32.totalorder %s19, 1
    %p189 = por %p187, %p188
    %p190 = scmp.ne.s32.totalorder %s181, %s182
    %p191 = scmp.eq.s32.totalorder %s19, 0
    %p192 = por %p190, %p191
    %p193 = scmp.ne.s32.totalorder %s181, %s182
    %p194 = scmp.eq.s32.totalorder %s20, 1
    %p195 = por %p193, %p194
    %p197 = scmp.ne.s32.totalorder %s182, %s196
    %p198 = scmp.eq.s32.totalorder %s20, 0
    %p199 = por %p197, %p198
    %s200 = ssub.s32 %s14, %s21
    %p201 = scmp.eq.s32.totalorder %s200, 0
    %s203 = sadd.s32 %s202, 1
    %s204 = scalar_select %p201, %s202, %s203
    %p207 = pneg %p201
    %p208 = scmp.eq.s32.totalorder %s14, 1
    %p209 = por %p207, %p208
    %p210 = scmp.ne.s32.totalorder %s202, %s205
    %p211 = scmp.eq.s32.totalorder %s14, 0
    %p212 = por %p210, %p211
    %p213 = scmp.ne.s32.totalorder %s202, %s205
    %p214 = scmp.eq.s32.totalorder %s19, 1
    %p215 = por %p213, %p214
    %p216 = scmp.ne.s32.totalorder %s205, %s206
    %p217 = scmp.eq.s32.totalorder %s19, 0
    %p218 = por %p216, %p217
    %p219 = scmp.ne.s32.totalorder %s205, %s206
    %p220 = scmp.eq.s32.totalorder %s20, 1
    %p221 = por %p219, %p220
    %p223 = scmp.ne.s32.totalorder %s206, %s222
    %p224 = scmp.eq.s32.totalorder %s20, 0
    %p225 = por %p223, %p224
    %p226 = scmp.le.s32.totalorder 1, %s14
    %p227 = scmp.lt.s32.totalorder %s14, 3
    %p228 = pnand %p226, %p227
    %p229 = pneg %p228
    // Predicated region
    $region9: #{crf_block_forward.3} parent=5 // pred_check
      _
    $region10: #{crf_block_forward.3} parent=5 // pred_check_branch
      %231 = sbr.rel (%p228) target = $region12
    $region11: #{crf_block_forward.3} parent=5 // pred_region
      %s232 = ssub.s32 %s14, 1
      // Predicated region
      $region13: #{crf_block_forward.3} parent=11 // pred_check
        %p233 = pneg %p87
      $region14: #{crf_block_forward.3} parent=11 // pred_check_branch
        %235 = sbr.rel (%p233) target = $region16
      $region15: #{crf_block_forward.3} parent=11 // pred_region
        _
      $region16: #{crf_block_forward.3} parent=11 // pred_fallthru
        _
      // Predicated region
      $region17: #{crf_block_forward.3} parent=11 // pred_check
        %p236 = pneg %p108
      $region18: #{crf_block_forward.3} parent=11 // pred_check_branch
        %238 = sbr.rel (%p236) target = $region20
      $region19: #{crf_block_forward.3} parent=11 // pred_region
        _
      $region20: #{crf_block_forward.3} parent=11 // pred_fallthru
        _
      // Predicated region
      $region21: #{crf_block_forward.3} parent=11 // pred_check
        %p239 = pneg %p129
      $region22: #{crf_block_forward.3} parent=11 // pred_check_branch
        %241 = sbr.rel (%p239) target = $region24
      $region23: #{crf_block_forward.3} parent=11 // pred_region
        _
      $region24: #{crf_block_forward.3} parent=11 // pred_fallthru
        _
      // Predicated region
      $region25: #{crf_block_forward.3} parent=11 // pred_check
        %p242 = pneg %p150
      $region26: #{crf_block_forward.3} parent=11 // pred_check_branch
        %244 = sbr.rel (%p242) target = $region28
      $region27: #{crf_block_forward.3} parent=11 // pred_region
        _
      $region28: #{crf_block_forward.3} parent=11 // pred_fallthru
        _
      // Predicated region
      $region29: #{crf_block_forward.3} parent=11 // pred_check
        %p245 = pneg %p171
      $region30: #{crf_block_forward.3} parent=11 // pred_check_branch
        %247 = sbr.rel (%p245) target = $region32
      $region31: #{crf_block_forward.3} parent=11 // pred_region
        _
      $region32: #{crf_block_forward.3} parent=11 // pred_fallthru
        _
      // Predicated region
      $region33: #{crf_block_forward.3} parent=11 // pred_check
        %p248 = pneg %p192
      $region34: #{crf_block_forward.3} parent=11 // pred_check_branch
        %250 = sbr.rel (%p248) target = $region36
      $region35: #{crf_block_forward.3} parent=11 // pred_region
        _
      $region36: #{crf_block_forward.3} parent=11 // pred_fallthru
        _
    $region12: #{crf_block_forward.3} parent=5 // pred_fallthru
      _
    %p251 = scmp.lt.s32.totalorder %s14, 2
    // Predicated region
    $region37: #{crf_block_forward.3} parent=5 // pred_check
      %p252 = pneg %p251
    $region38: #{crf_block_forward.3} parent=5 // pred_check_branch
      %254 = sbr.rel (%p252) target = $region40
    $region39: #{crf_block_forward.3} parent=5 // pred_region
      // Predicated region
      $region41: #{crf_block_forward.3} parent=39 // pred_check
        %p255 = pneg %p34
      $region42: #{crf_block_forward.3} parent=39 // pred_check_branch
        %257 = sbr.rel (%p255) target = $region44
      $region43: #{crf_block_forward.3} parent=39 // pred_region
        %s258 = smul.u32 32, %s14
        %p259 = scmp.lt.s32.totalorder %s258, 63
        %s260 = scalar_select %p259, %s258, 63
        %s261 = smul.addr %s260, 8
        %s262 = scalar_lea.vmem %s0, %s261
        %s263 = smul.u32 32, %s14
      $region44: #{crf_block_forward.3} parent=39 // pred_fallthru
        _
      // Predicated region
      $region45: #{crf_block_forward.3} parent=39 // pred_check
        %p264 = pneg %p60
      $region46: #{crf_block_forward.3} parent=39 // pred_check_branch
        %266 = sbr.rel (%p264) target = $region48
      $region47: #{crf_block_forward.3} parent=39 // pred_region
        %s267 = smul.u32 32, %s14
        %p268 = scmp.lt.s32.totalorder %s267, 63
        %s269 = scalar_select %p268, %s267, 63
        %s270 = smul.addr %s269, 8
        %s271 = scalar_lea.vmem %s1, %s270
        %s272 = smul.u32 32, %s14
      $region48: #{crf_block_forward.3} parent=39 // pred_fallthru
        _
    $region40: #{crf_block_forward.3} parent=5 // pred_fallthru
      _
    %p273 = scmp.le.s32.totalorder 1, %s14
    %p274 = scmp.lt.s32.totalorder %s14, 3
    %p275 = pnand %p273, %p274
    %p276 = pneg %p275
    // Predicated region
    $region49: #{crf_block_forward.3} parent=5 // pred_check
      _
    $region50: #{crf_block_forward.3} parent=5 // pred_check_branch
      %278 = sbr.rel (%p275) target = $region52
    $region51: #{crf_block_forward.3} parent=5 // pred_region
      %s279 = ssub.s32 %s14, 1
      %s280 = smul.u32 32, %s19
      %p281 = scmp.lt.s32.totalorder %s280, 63
      %s282 = scalar_select %p281, %s280, 63
      %s283 = smul.addr %s282, 8
      %s284 = scalar_lea.vmem %s0, %s283
      %p285 = pneg %p40
      %p286 = pneg %p37
      %s287 = smul.u32 32, %s19
      %p288 = scmp.lt.s32.totalorder %s287, 63
      %s289 = scalar_select %p288, %s287, 63
      %s290 = smul.addr %s289, 8
      %s291 = scalar_lea.vmem %s1, %s290
      %p292 = pneg %p66
      %p293 = pneg %p63
      %p294 = pneg %p87
      %p295 = pneg %p84
      %p296 = pneg %p108
      %p297 = pneg %p105
      %p298 = pneg %p129
      %p299 = pneg %p126
      %p300 = pneg %p150
      %p301 = pneg %p147
      %p302 = pneg %p171
      %p303 = pneg %p168
      %p304 = pneg %p192
      %p305 = pneg %p189
      %p306 = pneg %p218
      %p307 = pneg %p215
      %s308 = smul.u32 32, %s19
      %p309 = scmp.lt.s32.totalorder %s308, 63
      %s310 = scalar_select %p309, %s308, 63
      %s311 = smul.addr %s310, 8
      %s312 = scalar_lea.vmem %s8, %s311
      %s313 = smul.u32 32, %s19
      %p314 = scmp.lt.s32.totalorder %s313, 63
      %s315 = scalar_select %p314, %s313, 63
      %s316 = smul.addr %s315, 8
      %s317 = scalar_lea.vmem %s0, %s316
      %s318 = smul.u32 32, %s19
      %s319 = smul.u32 32, %s19
      %p320 = scmp.lt.s32.totalorder %s319, 63
      %s321 = scalar_select %p320, %s319, 63
      %s322 = smul.addr %s321, 8
      %s323 = scalar_lea.vmem %s1, %s322
      %s324 = smul.u32 32, %s19
      %s325 = smul.u32 32, %s19
      %p326 = scmp.lt.s32.totalorder %s325, 63
      %s327 = scalar_select %p326, %s325, 63
      %s328 = smul.addr %s327, 8
      %s329 = scalar_lea.vmem %s8, %s328
      %s330 = smul.u32 32, %s19
      %v331 = vld [vmem:[%s317] sm:$0xff]
      %v332 = vld [vmem:[%s317 + $0x8] sm:$0xff]
      %v333 = vld [vmem:[%s317 + $0x10] sm:$0xff]
      %v334 = vld [vmem:[%s317 + $0x18] sm:$0xff]
      %v335 = vld [vmem:[%s317 + $0x20] sm:$0xff]
      %v336 = vld [vmem:[%s317 + $0x28] sm:$0xff]
      %v337 = vld [vmem:[%s317 + $0x30] sm:$0xff]
      %v338 = vld [vmem:[%s317 + $0x38] sm:$0xff]
      %v339 = vld [vmem:[%s317 + $0x40] sm:$0xff]
      %v340 = vld [vmem:[%s317 + $0x48] sm:$0xff]
      %v341 = vld [vmem:[%s317 + $0x50] sm:$0xff]
      %v342 = vld [vmem:[%s317 + $0x58] sm:$0xff]
      %v343 = vld [vmem:[%s317 + $0x60] sm:$0xff]
      %v344 = vld [vmem:[%s317 + $0x68] sm:$0xff]
      %v345 = vld [vmem:[%s317 + $0x70] sm:$0xff]
      %v346 = vld [vmem:[%s317 + $0x78] sm:$0xff]
      %v347 = vld [vmem:[%s317 + $0x80] sm:$0xff]
      %v348 = vld [vmem:[%s317 + $0x88] sm:$0xff]
      %v349 = vld [vmem:[%s317 + $0x90] sm:$0xff]
      %v350 = vld [vmem:[%s317 + $0x98] sm:$0xff]
      %v351 = vld [vmem:[%s317 + $0xa0] sm:$0xff]
      %v352 = vld [vmem:[%s317 + $0xa8] sm:$0xff]
      %v353 = vld [vmem:[%s317 + $0xb0] sm:$0xff]
      %v354 = vld [vmem:[%s317 + $0xb8] sm:$0xff]
      %v355 = vld [vmem:[%s317 + $0xc0] sm:$0xff]
      %v356 = vld [vmem:[%s317 + $0xc8] sm:$0xff]
      %v357 = vld [vmem:[%s317 + $0xd0] sm:$0xff]
      %v358 = vld [vmem:[%s317 + $0xd8] sm:$0xff]
      %v359 = vld [vmem:[%s317 + $0xe0] sm:$0xff]
      %v360 = vld [vmem:[%s317 + $0xe8] sm:$0xff]
      %v361 = vld [vmem:[%s317 + $0xf0] sm:$0xff]
      %v362 = vld [vmem:[%s317 + $0xf8] sm:$0xff]
      %v363 = vld [vmem:[%s323] sm:$0xff]
      %v364 = vld [vmem:[%s323 + $0x8] sm:$0xff]
      %v365 = vld [vmem:[%s323 + $0x10] sm:$0xff]
      %v366 = vld [vmem:[%s323 + $0x18] sm:$0xff]
      %v367 = vld [vmem:[%s323 + $0x20] sm:$0xff]
      %v368 = vld [vmem:[%s323 + $0x28] sm:$0xff]
      %v369 = vld [vmem:[%s323 + $0x30] sm:$0xff]
      %v370 = vld [vmem:[%s323 + $0x38] sm:$0xff]
      %v371 = vld [vmem:[%s323 + $0x40] sm:$0xff]
      %v372 = vld [vmem:[%s323 + $0x48] sm:$0xff]
      %v373 = vld [vmem:[%s323 + $0x50] sm:$0xff]
      %v374 = vld [vmem:[%s323 + $0x58] sm:$0xff]
      %v375 = vld [vmem:[%s323 + $0x60] sm:$0xff]
      %v376 = vld [vmem:[%s323 + $0x68] sm:$0xff]
      %v377 = vld [vmem:[%s323 + $0x70] sm:$0xff]
      %v378 = vld [vmem:[%s323 + $0x78] sm:$0xff]
      %v379 = vld [vmem:[%s323 + $0x80] sm:$0xff]
      %v380 = vld [vmem:[%s323 + $0x88] sm:$0xff]
      %v381 = vld [vmem:[%s323 + $0x90] sm:$0xff]
      %v382 = vld [vmem:[%s323 + $0x98] sm:$0xff]
      %v383 = vld [vmem:[%s323 + $0xa0] sm:$0xff]
      %v384 = vld [vmem:[%s323 + $0xa8] sm:$0xff]
      %v385 = vld [vmem:[%s323 + $0xb0] sm:$0xff]
      %v386 = vld [vmem:[%s323 + $0xb8] sm:$0xff]
      %v387 = vld [vmem:[%s323 + $0xc0] sm:$0xff]
      %v388 = vld [vmem:[%s323 + $0xc8] sm:$0xff]
      %v389 = vld [vmem:[%s323 + $0xd0] sm:$0xff]
      %v390 = vld [vmem:[%s323 + $0xd8] sm:$0xff]
      %v391 = vld [vmem:[%s323 + $0xe0] sm:$0xff]
      %v392 = vld [vmem:[%s323 + $0xe8] sm:$0xff]
      %v393 = vld [vmem:[%s323 + $0xf0] sm:$0xff]
      %v394 = vld [vmem:[%s323 + $0xf8] sm:$0xff]
      %v395 = vadd.f32 %v331, %v363
      %v396 = vadd.f32 %v332, %v364
      %v397 = vadd.f32 %v333, %v365
      %v398 = vadd.f32 %v334, %v366
      %v399 = vadd.f32 %v335, %v367
      %v400 = vadd.f32 %v336, %v368
      %v401 = vadd.f32 %v337, %v369
      %v402 = vadd.f32 %v338, %v370
      %v403 = vadd.f32 %v339, %v371
      %v404 = vadd.f32 %v340, %v372
      %v405 = vadd.f32 %v341, %v373
      %v406 = vadd.f32 %v342, %v374
      %v407 = vadd.f32 %v343, %v375
      %v408 = vadd.f32 %v344, %v376
      %v409 = vadd.f32 %v345, %v377
      %v410 = vadd.f32 %v346, %v378
      %v411 = vadd.f32 %v347, %v379
      %v412 = vadd.f32 %v348, %v380
      %v413 = vadd.f32 %v349, %v381
      %v414 = vadd.f32 %v350, %v382
      %v415 = vadd.f32 %v351, %v383
      %v416 = vadd.f32 %v352, %v384
      %v417 = vadd.f32 %v353, %v385
      %v418 = vadd.f32 %v354, %v386
      %v419 = vadd.f32 %v355, %v387
      %v420 = vadd.f32 %v356, %v388
      %v421 = vadd.f32 %v357, %v389
      %v422 = vadd.f32 %v358, %v390
      %v423 = vadd.f32 %v359, %v391
      %v424 = vadd.f32 %v360, %v392
      %v425 = vadd.f32 %v361, %v393
      %v426 = vadd.f32 %v362, %v394
      %vm427 = vcmask 261120
      %v428 = vsel %vm427, %v395, 0.0
      %429 = vadd.xlane.f32.xlu0 %v428
      %v430 = vpop.xlane.xlu0 %429
      %v431 = vsel %vm427, %v396, 0.0
      %432 = vadd.xlane.f32.xlu0 %v431
      %v433 = vpop.xlane.xlu0 %432
      %v434 = vsel %vm427, %v397, 0.0
      %435 = vadd.xlane.f32.xlu0 %v434
      %v436 = vpop.xlane.xlu0 %435
      %v437 = vsel %vm427, %v398, 0.0
      %438 = vadd.xlane.f32.xlu0 %v437
      %v439 = vpop.xlane.xlu0 %438
      %v440 = vsel %vm427, %v399, 0.0
      %441 = vadd.xlane.f32.xlu0 %v440
      %v442 = vpop.xlane.xlu0 %441
      %v443 = vsel %vm427, %v400, 0.0
      %444 = vadd.xlane.f32.xlu0 %v443
      %v445 = vpop.xlane.xlu0 %444
      %v446 = vsel %vm427, %v401, 0.0
      %447 = vadd.xlane.f32.xlu0 %v446
      %v448 = vpop.xlane.xlu0 %447
      %v449 = vsel %vm427, %v402, 0.0
      %450 = vadd.xlane.f32.xlu0 %v449
      %v451 = vpop.xlane.xlu0 %450
      %v452 = vsel %vm427, %v403, 0.0
      %453 = vadd.xlane.f32.xlu0 %v452
      %v454 = vpop.xlane.xlu0 %453
      %v455 = vsel %vm427, %v404, 0.0
      %456 = vadd.xlane.f32.xlu0 %v455
      %v457 = vpop.xlane.xlu0 %456
      %v458 = vsel %vm427, %v405, 0.0
      %459 = vadd.xlane.f32.xlu0 %v458
      %v460 = vpop.xlane.xlu0 %459
      %v461 = vsel %vm427, %v406, 0.0
      %462 = vadd.xlane.f32.xlu0 %v461
      %v463 = vpop.xlane.xlu0 %462
      %v464 = vsel %vm427, %v407, 0.0
      %465 = vadd.xlane.f32.xlu0 %v464
      %v466 = vpop.xlane.xlu0 %465
      %v467 = vsel %vm427, %v408, 0.0
      %468 = vadd.xlane.f32.xlu0 %v467
      %v469 = vpop.xlane.xlu0 %468
      %v470 = vsel %vm427, %v409, 0.0
      %471 = vadd.xlane.f32.xlu0 %v470
      %v472 = vpop.xlane.xlu0 %471
      %v473 = vsel %vm427, %v410, 0.0
      %474 = vadd.xlane.f32.xlu0 %v473
      %v475 = vpop.xlane.xlu0 %474
      %v476 = vsel %vm427, %v411, 0.0
      %477 = vadd.xlane.f32.xlu0 %v476
      %v478 = vpop.xlane.xlu0 %477
      %v479 = vsel %vm427, %v412, 0.0
      %480 = vadd.xlane.f32.xlu0 %v479
      %v481 = vpop.xlane.xlu0 %480
      %v482 = vsel %vm427, %v413, 0.0
      %483 = vadd.xlane.f32.xlu0 %v482
      %v484 = vpop.xlane.xlu0 %483
      %v485 = vsel %vm427, %v414, 0.0
      %486 = vadd.xlane.f32.xlu0 %v485
      %v487 = vpop.xlane.xlu0 %486
      %v488 = vsel %vm427, %v415, 0.0
      %489 = vadd.xlane.f32.xlu0 %v488
      %v490 = vpop.xlane.xlu0 %489
      %v491 = vsel %vm427, %v416, 0.0
      %492 = vadd.xlane.f32.xlu0 %v491
      %v493 = vpop.xlane.xlu0 %492
      %v494 = vsel %vm427, %v417, 0.0
      %495 = vadd.xlane.f32.xlu0 %v494
      %v496 = vpop.xlane.xlu0 %495
      %v497 = vsel %vm427, %v418, 0.0
      %498 = vadd.xlane.f32.xlu0 %v497
      %v499 = vpop.xlane.xlu0 %498
      %v500 = vsel %vm427, %v419, 0.0
      %501 = vadd.xlane.f32.xlu0 %v500
      %v502 = vpop.xlane.xlu0 %501
      %v503 = vsel %vm427, %v420, 0.0
      %504 = vadd.xlane.f32.xlu0 %v503
      %v505 = vpop.xlane.xlu0 %504
      %v506 = vsel %vm427, %v421, 0.0
      %507 = vadd.xlane.f32.xlu0 %v506
      %v508 = vpop.xlane.xlu0 %507
      %v509 = vsel %vm427, %v422, 0.0
      %510 = vadd.xlane.f32.xlu0 %v509
      %v511 = vpop.xlane.xlu0 %510
      %v512 = vsel %vm427, %v423, 0.0
      %513 = vadd.xlane.f32.xlu0 %v512
      %v514 = vpop.xlane.xlu0 %513
      %v515 = vsel %vm427, %v424, 0.0
      %516 = vadd.xlane.f32.xlu0 %v515
      %v517 = vpop.xlane.xlu0 %516
      %v518 = vsel %vm427, %v425, 0.0
      %519 = vadd.xlane.f32.xlu0 %v518
      %v520 = vpop.xlane.xlu0 %519
      %v521 = vsel %vm427, %v426, 0.0
      %522 = vadd.xlane.f32.xlu0 %v521
      %v523 = vpop.xlane.xlu0 %522
      %v524 = vrcp.pop 32.0
      %v525 = vmul.f32 32.0, %v524
      %v526 = vsub.f32 1.0, %v525
      %v527 = vmul.f32 %v524, %v526
      %v528 = vadd.f32 %v524, %v527
      %vm529 = vweird.f32 %v524
      %v530 = vsel %vm529, %v524, %v528
      %v531 = vmul.f32 %v430, %v530
      %v532 = vmul.f32 %v433, %v530
      %v533 = vmul.f32 %v436, %v530
      %v534 = vmul.f32 %v439, %v530
      %v535 = vmul.f32 %v442, %v530
      %v536 = vmul.f32 %v445, %v530
      %v537 = vmul.f32 %v448, %v530
      %v538 = vmul.f32 %v451, %v530
      %v539 = vmul.f32 %v454, %v530
      %v540 = vmul.f32 %v457, %v530
      %v541 = vmul.f32 %v460, %v530
      %v542 = vmul.f32 %v463, %v530
      %v543 = vmul.f32 %v466, %v530
      %v544 = vmul.f32 %v469, %v530
      %v545 = vmul.f32 %v472, %v530
      %v546 = vmul.f32 %v475, %v530
      %v547 = vmul.f32 %v478, %v530
      %v548 = vmul.f32 %v481, %v530
      %v549 = vmul.f32 %v484, %v530
      %v550 = vmul.f32 %v487, %v530
      %v551 = vmul.f32 %v490, %v530
      %v552 = vmul.f32 %v493, %v530
      %v553 = vmul.f32 %v496, %v530
      %v554 = vmul.f32 %v499, %v530
      %v555 = vmul.f32 %v502, %v530
      %v556 = vmul.f32 %v505, %v530
      %v557 = vmul.f32 %v508, %v530
      %v558 = vmul.f32 %v511, %v530
      %v559 = vmul.f32 %v514, %v530
      %v560 = vmul.f32 %v517, %v530
      %v561 = vmul.f32 %v520, %v530
      %v562 = vmul.f32 %v523, %v530
      %v563 = vsub.f32 %v395, %v531
      %v564 = vsub.f32 %v396, %v532
      %v565 = vsub.f32 %v397, %v533
      %v566 = vsub.f32 %v398, %v534
      %v567 = vsub.f32 %v399, %v535
      %v568 = vsub.f32 %v400, %v536
      %v569 = vsub.f32 %v401, %v537
      %v570 = vsub.f32 %v402, %v538
      %v571 = vsub.f32 %v403, %v539
      %v572 = vsub.f32 %v404, %v540
      %v573 = vsub.f32 %v405, %v541
      %v574 = vsub.f32 %v406, %v542
      %v575 = vsub.f32 %v407, %v543
      %v576 = vsub.f32 %v408, %v544
      %v577 = vsub.f32 %v409, %v545
      %v578 = vsub.f32 %v410, %v546
      %v579 = vsub.f32 %v411, %v547
      %v580 = vsub.f32 %v412, %v548
      %v581 = vsub.f32 %v413, %v549
      %v582 = vsub.f32 %v414, %v550
      %v583 = vsub.f32 %v415, %v551
      %v584 = vsub.f32 %v416, %v552
      %v585 = vsub.f32 %v417, %v553
      %v586 = vsub.f32 %v418, %v554
      %v587 = vsub.f32 %v419, %v555
      %v588 = vsub.f32 %v420, %v556
      %v589 = vsub.f32 %v421, %v557
      %v590 = vsub.f32 %v422, %v558
      %v591 = vsub.f32 %v423, %v559
      %v592 = vsub.f32 %v424, %v560
      %v593 = vsub.f32 %v425, %v561
      %v594 = vsub.f32 %v426, %v562
      %v595 = vmul.f32 %v563, %v563
      %v596 = vmul.f32 %v564, %v564
      %v597 = vmul.f32 %v565, %v565
      %v598 = vmul.f32 %v566, %v566
      %v599 = vmul.f32 %v567, %v567
      %v600 = vmul.f32 %v568, %v568
      %v601 = vmul.f32 %v569, %v569
      %v602 = vmul.f32 %v570, %v570
      %v603 = vmul.f32 %v571, %v571
      %v604 = vmul.f32 %v572, %v572
      %v605 = vmul.f32 %v573, %v573
      %v606 = vmul.f32 %v574, %v574
      %v607 = vmul.f32 %v575, %v575
      %v608 = vmul.f32 %v576, %v576
      %v609 = vmul.f32 %v577, %v577
      %v610 = vmul.f32 %v578, %v578
      %v611 = vmul.f32 %v579, %v579
      %v612 = vmul.f32 %v580, %v580
      %v613 = vmul.f32 %v581, %v581
      %v614 = vmul.f32 %v582, %v582
      %v615 = vmul.f32 %v583, %v583
      %v616 = vmul.f32 %v584, %v584
      %v617 = vmul.f32 %v585, %v585
      %v618 = vmul.f32 %v586, %v586
      %v619 = vmul.f32 %v587, %v587
      %v620 = vmul.f32 %v588, %v588
      %v621 = vmul.f32 %v589, %v589
      %v622 = vmul.f32 %v590, %v590
      %v623 = vmul.f32 %v591, %v591
      %v624 = vmul.f32 %v592, %v592
      %v625 = vmul.f32 %v593, %v593
      %v626 = vmul.f32 %v594, %v594
      %v627 = vsel %vm427, %v595, 0.0
      %628 = vadd.xlane.f32.xlu0 %v627
      %v629 = vpop.xlane.xlu0 %628
      %v630 = vsel %vm427, %v596, 0.0
      %631 = vadd.xlane.f32.xlu0 %v630
      %v632 = vpop.xlane.xlu0 %631
      %v633 = vsel %vm427, %v597, 0.0
      %634 = vadd.xlane.f32.xlu0 %v633
      %v635 = vpop.xlane.xlu0 %634
      %v636 = vsel %vm427, %v598, 0.0
      %637 = vadd.xlane.f32.xlu0 %v636
      %v638 = vpop.xlane.xlu0 %637
      %v639 = vsel %vm427, %v599, 0.0
      %640 = vadd.xlane.f32.xlu0 %v639
      %v641 = vpop.xlane.xlu0 %640
      %v642 = vsel %vm427, %v600, 0.0
      %643 = vadd.xlane.f32.xlu0 %v642
      %v644 = vpop.xlane.xlu0 %643
      %v645 = vsel %vm427, %v601, 0.0
      %646 = vadd.xlane.f32.xlu0 %v645
      %v647 = vpop.xlane.xlu0 %646
      %v648 = vsel %vm427, %v602, 0.0
      %649 = vadd.xlane.f32.xlu0 %v648
      %v650 = vpop.xlane.xlu0 %649
      %v651 = vsel %vm427, %v603, 0.0
      %652 = vadd.xlane.f32.xlu0 %v651
      %v653 = vpop.xlane.xlu0 %652
      %v654 = vsel %vm427, %v604, 0.0
      %655 = vadd.xlane.f32.xlu0 %v654
      %v656 = vpop.xlane.xlu0 %655
      %v657 = vsel %vm427, %v605, 0.0
      %658 = vadd.xlane.f32.xlu0 %v657
      %v659 = vpop.xlane.xlu0 %658
      %v660 = vsel %vm427, %v606, 0.0
      %661 = vadd.xlane.f32.xlu0 %v660
      %v662 = vpop.xlane.xlu0 %661
      %v663 = vsel %vm427, %v607, 0.0
      %664 = vadd.xlane.f32.xlu0 %v663
      %v665 = vpop.xlane.xlu0 %664
      %v666 = vsel %vm427, %v608, 0.0
      %667 = vadd.xlane.f32.xlu0 %v666
      %v668 = vpop.xlane.xlu0 %667
      %v669 = vsel %vm427, %v609, 0.0
      %670 = vadd.xlane.f32.xlu0 %v669
      %v671 = vpop.xlane.xlu0 %670
      %v672 = vsel %vm427, %v610, 0.0
      %673 = vadd.xlane.f32.xlu0 %v672
      %v674 = vpop.xlane.xlu0 %673
      %v675 = vsel %vm427, %v611, 0.0
      %676 = vadd.xlane.f32.xlu0 %v675
      %v677 = vpop.xlane.xlu0 %676
      %v678 = vsel %vm427, %v612, 0.0
      %679 = vadd.xlane.f32.xlu0 %v678
      %v680 = vpop.xlane.xlu0 %679
      %v681 = vsel %vm427, %v613, 0.0
      %682 = vadd.xlane.f32.xlu0 %v681
      %v683 = vpop.xlane.xlu0 %682
      %v684 = vsel %vm427, %v614, 0.0
      %685 = vadd.xlane.f32.xlu0 %v684
      %v686 = vpop.xlane.xlu0 %685
      %v687 = vsel %vm427, %v615, 0.0
      %688 = vadd.xlane.f32.xlu0 %v687
      %v689 = vpop.xlane.xlu0 %688
      %v690 = vsel %vm427, %v616, 0.0
      %691 = vadd.xlane.f32.xlu0 %v690
      %v692 = vpop.xlane.xlu0 %691
      %v693 = vsel %vm427, %v617, 0.0
      %694 = vadd.xlane.f32.xlu0 %v693
      %v695 = vpop.xlane.xlu0 %694
      %v696 = vsel %vm427, %v618, 0.0
      %697 = vadd.xlane.f32.xlu0 %v696
      %v698 = vpop.xlane.xlu0 %697
      %v699 = vsel %vm427, %v619, 0.0
      %700 = vadd.xlane.f32.xlu0 %v699
      %v701 = vpop.xlane.xlu0 %700
      %v702 = vsel %vm427, %v620, 0.0
      %703 = vadd.xlane.f32.xlu0 %v702
      %v704 = vpop.xlane.xlu0 %703
      %v705 = vsel %vm427, %v621, 0.0
      %706 = vadd.xlane.f32.xlu0 %v705
      %v707 = vpop.xlane.xlu0 %706
      %v708 = vsel %vm427, %v622, 0.0
      %709 = vadd.xlane.f32.xlu0 %v708
      %v710 = vpop.xlane.xlu0 %709
      %v711 = vsel %vm427, %v623, 0.0
      %712 = vadd.xlane.f32.xlu0 %v711
      %v713 = vpop.xlane.xlu0 %712
      %v714 = vsel %vm427, %v624, 0.0
      %715 = vadd.xlane.f32.xlu0 %v714
      %v716 = vpop.xlane.xlu0 %715
      %v717 = vsel %vm427, %v625, 0.0
      %718 = vadd.xlane.f32.xlu0 %v717
      %v719 = vpop.xlane.xlu0 %718
      %v720 = vsel %vm427, %v626, 0.0
      %721 = vadd.xlane.f32.xlu0 %v720
      %v722 = vpop.xlane.xlu0 %721
      %v723 = vmul.f32 %v629, %v530
      %v724 = vmul.f32 %v632, %v530
      %v725 = vmul.f32 %v635, %v530
      %v726 = vmul.f32 %v638, %v530
      %v727 = vmul.f32 %v641, %v530
      %v728 = vmul.f32 %v644, %v530
      %v729 = vmul.f32 %v647, %v530
      %v730 = vmul.f32 %v650, %v530
      %v731 = vmul.f32 %v653, %v530
      %v732 = vmul.f32 %v656, %v530
      %v733 = vmul.f32 %v659, %v530
      %v734 = vmul.f32 %v662, %v530
      %v735 = vmul.f32 %v665, %v530
      %v736 = vmul.f32 %v668, %v530
      %v737 = vmul.f32 %v671, %v530
      %v738 = vmul.f32 %v674, %v530
      %v739 = vmul.f32 %v677, %v530
      %v740 = vmul.f32 %v680, %v530
      %v741 = vmul.f32 %v683, %v530
      %v742 = vmul.f32 %v686, %v530
      %v743 = vmul.f32 %v689, %v530
      %v744 = vmul.f32 %v692, %v530
      %v745 = vmul.f32 %v695, %v530
      %v746 = vmul.f32 %v698, %v530
      %v747 = vmul.f32 %v701, %v530
      %v748 = vmul.f32 %v704, %v530
      %v749 = vmul.f32 %v707, %v530
      %v750 = vmul.f32 %v710, %v530
      %v751 = vmul.f32 %v713, %v530
      %v752 = vmul.f32 %v716, %v530
      %v753 = vmul.f32 %v719, %v530
      %v754 = vmul.f32 %v722, %v530
      %v755 = vadd.f32 %v723, 1e-05
      %v756 = vadd.f32 %v724, 1e-05
      %v757 = vadd.f32 %v725, 1e-05
      %v758 = vadd.f32 %v726, 1e-05
      %v759 = vadd.f32 %v727, 1e-05
      %v760 = vadd.f32 %v728, 1e-05
      %v761 = vadd.f32 %v729, 1e-05
      %v762 = vadd.f32 %v730, 1e-05
      %v763 = vadd.f32 %v731, 1e-05
      %v764 = vadd.f32 %v732, 1e-05
      %v765 = vadd.f32 %v733, 1e-05
      %v766 = vadd.f32 %v734, 1e-05
      %v767 = vadd.f32 %v735, 1e-05
      %v768 = vadd.f32 %v736, 1e-05
      %v769 = vadd.f32 %v737, 1e-05
      %v770 = vadd.f32 %v738, 1e-05
      %v771 = vadd.f32 %v739, 1e-05
      %v772 = vadd.f32 %v740, 1e-05
      %v773 = vadd.f32 %v741, 1e-05
      %v774 = vadd.f32 %v742, 1e-05
      %v775 = vadd.f32 %v743, 1e-05
      %v776 = vadd.f32 %v744, 1e-05
      %v777 = vadd.f32 %v745, 1e-05
      %v778 = vadd.f32 %v746, 1e-05
      %v779 = vadd.f32 %v747, 1e-05
      %v780 = vadd.f32 %v748, 1e-05
      %v781 = vadd.f32 %v749, 1e-05
      %v782 = vadd.f32 %v750, 1e-05
      %v783 = vadd.f32 %v751, 1e-05
      %v784 = vadd.f32 %v752, 1e-05
      %v785 = vadd.f32 %v753, 1e-05
      %v786 = vadd.f32 %v754, 1e-05
      %v787 = vrsqrt.pop %v755
      %v788 = vmul.f32 %v787, %v755
      %v789 = vmul.f32 %v788, %v787
      %v790 = vmul.f32 0.5, %v789
      %v791 = vsub.f32 1.5, %v790
      %v792 = vmul.f32 %v787, %v791
      %vm793 = vweird.f32 %v755
      %vm794 = vweird.f32 %v787
      %vm795 = vmor %vm793, %vm794
      %v796 = vsel %vm795, %v787, %v792
      %v797 = vrsqrt.pop %v756
      %v798 = vmul.f32 %v797, %v756
      %v799 = vmul.f32 %v798, %v797
      %v800 = vmul.f32 0.5, %v799
      %v801 = vsub.f32 1.5, %v800
      %v802 = vmul.f32 %v797, %v801
      %vm803 = vweird.f32 %v756
      %vm804 = vweird.f32 %v797
      %vm805 = vmor %vm803, %vm804
      %v806 = vsel %vm805, %v797, %v802
      %v807 = vrsqrt.pop %v757
      %v808 = vmul.f32 %v807, %v757
      %v809 = vmul.f32 %v808, %v807
      %v810 = vmul.f32 0.5, %v809
      %v811 = vsub.f32 1.5, %v810
      %v812 = vmul.f32 %v807, %v811
      %vm813 = vweird.f32 %v757
      %vm814 = vweird.f32 %v807
      %vm815 = vmor %vm813, %vm814
      %v816 = vsel %vm815, %v807, %v812
      %v817 = vrsqrt.pop %v758
      %v818 = vmul.f32 %v817, %v758
      %v819 = vmul.f32 %v818, %v817
      %v820 = vmul.f32 0.5, %v819
      %v821 = vsub.f32 1.5, %v820
      %v822 = vmul.f32 %v817, %v821
      %vm823 = vweird.f32 %v758
      %vm824 = vweird.f32 %v817
      %vm825 = vmor %vm823, %vm824
      %v826 = vsel %vm825, %v817, %v822
      %v827 = vrsqrt.pop %v759
      %v828 = vmul.f32 %v827, %v759
      %v829 = vmul.f32 %v828, %v827
      %v830 = vmul.f32 0.5, %v829
      %v831 = vsub.f32 1.5, %v830
      %v832 = vmul.f32 %v827, %v831
      %vm833 = vweird.f32 %v759
      %vm834 = vweird.f32 %v827
      %vm835 = vmor %vm833, %vm834
      %v836 = vsel %vm835, %v827, %v832
      %v837 = vrsqrt.pop %v760
      %v838 = vmul.f32 %v837, %v760
      %v839 = vmul.f32 %v838, %v837
      %v840 = vmul.f32 0.5, %v839
      %v841 = vsub.f32 1.5, %v840
      %v842 = vmul.f32 %v837, %v841
      %vm843 = vweird.f32 %v760
      %vm844 = vweird.f32 %v837
      %vm845 = vmor %vm843, %vm844
      %v846 = vsel %vm845, %v837, %v842
      %v847 = vrsqrt.pop %v761
      %v848 = vmul.f32 %v847, %v761
      %v849 = vmul.f32 %v848, %v847
      %v850 = vmul.f32 0.5, %v849
      %v851 = vsub.f32 1.5, %v850
      %v852 = vmul.f32 %v847, %v851
      %vm853 = vweird.f32 %v761
      %vm854 = vweird.f32 %v847
      %vm855 = vmor %vm853, %vm854
      %v856 = vsel %vm855, %v847, %v852
      %v857 = vrsqrt.pop %v762
      %v858 = vmul.f32 %v857, %v762
      %v859 = vmul.f32 %v858, %v857
      %v860 = vmul.f32 0.5, %v859
      %v861 = vsub.f32 1.5, %v860
      %v862 = vmul.f32 %v857, %v861
      %vm863 = vweird.f32 %v762
      %vm864 = vweird.f32 %v857
      %vm865 = vmor %vm863, %vm864
      %v866 = vsel %vm865, %v857, %v862
      %v867 = vrsqrt.pop %v763
      %v868 = vmul.f32 %v867, %v763
      %v869 = vmul.f32 %v868, %v867
      %v870 = vmul.f32 0.5, %v869
      %v871 = vsub.f32 1.5, %v870
      %v872 = vmul.f32 %v867, %v871
      %vm873 = vweird.f32 %v763
      %vm874 = vweird.f32 %v867
      %vm875 = vmor %vm873, %vm874
      %v876 = vsel %vm875, %v867, %v872
      %v877 = vrsqrt.pop %v764
      %v878 = vmul.f32 %v877, %v764
      %v879 = vmul.f32 %v878, %v877
      %v880 = vmul.f32 0.5, %v879
      %v881 = vsub.f32 1.5, %v880
      %v882 = vmul.f32 %v877, %v881
      %vm883 = vweird.f32 %v764
      %vm884 = vweird.f32 %v877
      %vm885 = vmor %vm883, %vm884
      %v886 = vsel %vm885, %v877, %v882
      %v887 = vrsqrt.pop %v765
      %v888 = vmul.f32 %v887, %v765
      %v889 = vmul.f32 %v888, %v887
      %v890 = vmul.f32 0.5, %v889
      %v891 = vsub.f32 1.5, %v890
      %v892 = vmul.f32 %v887, %v891
      %vm893 = vweird.f32 %v765
      %vm894 = vweird.f32 %v887
      %vm895 = vmor %vm893, %vm894
      %v896 = vsel %vm895, %v887, %v892
      %v897 = vrsqrt.pop %v766
      %v898 = vmul.f32 %v897, %v766
      %v899 = vmul.f32 %v898, %v897
      %v900 = vmul.f32 0.5, %v899
      %v901 = vsub.f32 1.5, %v900
      %v902 = vmul.f32 %v897, %v901
      %vm903 = vweird.f32 %v766
      %vm904 = vweird.f32 %v897
      %vm905 = vmor %vm903, %vm904
      %v906 = vsel %vm905, %v897, %v902
      %v907 = vrsqrt.pop %v767
      %v908 = vmul.f32 %v907, %v767
      %v909 = vmul.f32 %v908, %v907
      %v910 = vmul.f32 0.5, %v909
      %v911 = vsub.f32 1.5, %v910
      %v912 = vmul.f32 %v907, %v911
      %vm913 = vweird.f32 %v767
      %vm914 = vweird.f32 %v907
      %vm915 = vmor %vm913, %vm914
      %v916 = vsel %vm915, %v907, %v912
      %v917 = vrsqrt.pop %v768
      %v918 = vmul.f32 %v917, %v768
      %v919 = vmul.f32 %v918, %v917
      %v920 = vmul.f32 0.5, %v919
      %v921 = vsub.f32 1.5, %v920
      %v922 = vmul.f32 %v917, %v921
      %vm923 = vweird.f32 %v768
      %vm924 = vweird.f32 %v917
      %vm925 = vmor %vm923, %vm924
      %v926 = vsel %vm925, %v917, %v922
      %v927 = vrsqrt.pop %v769
      %v928 = vmul.f32 %v927, %v769
      %v929 = vmul.f32 %v928, %v927
      %v930 = vmul.f32 0.5, %v929
      %v931 = vsub.f32 1.5, %v930
      %v932 = vmul.f32 %v927, %v931
      %vm933 = vweird.f32 %v769
      %vm934 = vweird.f32 %v927
      %vm935 = vmor %vm933, %vm934
      %v936 = vsel %vm935, %v927, %v932
      %v937 = vrsqrt.pop %v770
      %v938 = vmul.f32 %v937, %v770
      %v939 = vmul.f32 %v938, %v937
      %v940 = vmul.f32 0.5, %v939
      %v941 = vsub.f32 1.5, %v940
      %v942 = vmul.f32 %v937, %v941
      %vm943 = vweird.f32 %v770
      %vm944 = vweird.f32 %v937
      %vm945 = vmor %vm943, %vm944
      %v946 = vsel %vm945, %v937, %v942
      %v947 = vrsqrt.pop %v771
      %v948 = vmul.f32 %v947, %v771
      %v949 = vmul.f32 %v948, %v947
      %v950 = vmul.f32 0.5, %v949
      %v951 = vsub.f32 1.5, %v950
      %v952 = vmul.f32 %v947, %v951
      %vm953 = vweird.f32 %v771
      %vm954 = vweird.f32 %v947
      %vm955 = vmor %vm953, %vm954
      %v956 = vsel %vm955, %v947, %v952
      %v957 = vrsqrt.pop %v772
      %v958 = vmul.f32 %v957, %v772
      %v959 = vmul.f32 %v958, %v957
      %v960 = vmul.f32 0.5, %v959
      %v961 = vsub.f32 1.5, %v960
      %v962 = vmul.f32 %v957, %v961
      %vm963 = vweird.f32 %v772
      %vm964 = vweird.f32 %v957
      %vm965 = vmor %vm963, %vm964
      %v966 = vsel %vm965, %v957, %v962
      %v967 = vrsqrt.pop %v773
      %v968 = vmul.f32 %v967, %v773
      %v969 = vmul.f32 %v968, %v967
      %v970 = vmul.f32 0.5, %v969
      %v971 = vsub.f32 1.5, %v970
      %v972 = vmul.f32 %v967, %v971
      %vm973 = vweird.f32 %v773
      %vm974 = vweird.f32 %v967
      %vm975 = vmor %vm973, %vm974
      %v976 = vsel %vm975, %v967, %v972
      %v977 = vrsqrt.pop %v774
      %v978 = vmul.f32 %v977, %v774
      %v979 = vmul.f32 %v978, %v977
      %v980 = vmul.f32 0.5, %v979
      %v981 = vsub.f32 1.5, %v980
      %v982 = vmul.f32 %v977, %v981
      %vm983 = vweird.f32 %v774
      %vm984 = vweird.f32 %v977
      %vm985 = vmor %vm983, %vm984
      %v986 = vsel %vm985, %v977, %v982
      %v987 = vrsqrt.pop %v775
      %v988 = vmul.f32 %v987, %v775
      %v989 = vmul.f32 %v988, %v987
      %v990 = vmul.f32 0.5, %v989
      %v991 = vsub.f32 1.5, %v990
      %v992 = vmul.f32 %v987, %v991
      %vm993 = vweird.f32 %v775
      %vm994 = vweird.f32 %v987
      %vm995 = vmor %vm993, %vm994
      %v996 = vsel %vm995, %v987, %v992
      %v997 = vrsqrt.pop %v776
      %v998 = vmul.f32 %v997, %v776
      %v999 = vmul.f32 %v998, %v997
      %v1000 = vmul.f32 0.5, %v999
      %v1001 = vsub.f32 1.5, %v1000
      %v1002 = vmul.f32 %v997, %v1001
      %vm1003 = vweird.f32 %v776
      %vm1004 = vweird.f32 %v997
      %vm1005 = vmor %vm1003, %vm1004
      %v1006 = vsel %vm1005, %v997, %v1002
      %v1007 = vrsqrt.pop %v777
      %v1008 = vmul.f32 %v1007, %v777
      %v1009 = vmul.f32 %v1008, %v1007
      %v1010 = vmul.f32 0.5, %v1009
      %v1011 = vsub.f32 1.5, %v1010
      %v1012 = vmul.f32 %v1007, %v1011
      %vm1013 = vweird.f32 %v777
      %vm1014 = vweird.f32 %v1007
      %vm1015 = vmor %vm1013, %vm1014
      %v1016 = vsel %vm1015, %v1007, %v1012
      %v1017 = vrsqrt.pop %v778
      %v1018 = vmul.f32 %v1017, %v778
      %v1019 = vmul.f32 %v1018, %v1017
      %v1020 = vmul.f32 0.5, %v1019
      %v1021 = vsub.f32 1.5, %v1020
      %v1022 = vmul.f32 %v1017, %v1021
      %vm1023 = vweird.f32 %v778
      %vm1024 = vweird.f32 %v1017
      %vm1025 = vmor %vm1023, %vm1024
      %v1026 = vsel %vm1025, %v1017, %v1022
      %v1027 = vrsqrt.pop %v779
      %v1028 = vmul.f32 %v1027, %v779
      %v1029 = vmul.f32 %v1028, %v1027
      %v1030 = vmul.f32 0.5, %v1029
      %v1031 = vsub.f32 1.5, %v1030
      %v1032 = vmul.f32 %v1027, %v1031
      %vm1033 = vweird.f32 %v779
      %vm1034 = vweird.f32 %v1027
      %vm1035 = vmor %vm1033, %vm1034
      %v1036 = vsel %vm1035, %v1027, %v1032
      %v1037 = vrsqrt.pop %v780
      %v1038 = vmul.f32 %v1037, %v780
      %v1039 = vmul.f32 %v1038, %v1037
      %v1040 = vmul.f32 0.5, %v1039
      %v1041 = vsub.f32 1.5, %v1040
      %v1042 = vmul.f32 %v1037, %v1041
      %vm1043 = vweird.f32 %v780
      %vm1044 = vweird.f32 %v1037
      %vm1045 = vmor %vm1043, %vm1044
      %v1046 = vsel %vm1045, %v1037, %v1042
      %v1047 = vrsqrt.pop %v781
      %v1048 = vmul.f32 %v1047, %v781
      %v1049 = vmul.f32 %v1048, %v1047
      %v1050 = vmul.f32 0.5, %v1049
      %v1051 = vsub.f32 1.5, %v1050
      %v1052 = vmul.f32 %v1047, %v1051
      %vm1053 = vweird.f32 %v781
      %vm1054 = vweird.f32 %v1047
      %vm1055 = vmor %vm1053, %vm1054
      %v1056 = vsel %vm1055, %v1047, %v1052
      %v1057 = vrsqrt.pop %v782
      %v1058 = vmul.f32 %v1057, %v782
      %v1059 = vmul.f32 %v1058, %v1057
      %v1060 = vmul.f32 0.5, %v1059
      %v1061 = vsub.f32 1.5, %v1060
      %v1062 = vmul.f32 %v1057, %v1061
      %vm1063 = vweird.f32 %v782
      %vm1064 = vweird.f32 %v1057
      %vm1065 = vmor %vm1063, %vm1064
      %v1066 = vsel %vm1065, %v1057, %v1062
      %v1067 = vrsqrt.pop %v783
      %v1068 = vmul.f32 %v1067, %v783
      %v1069 = vmul.f32 %v1068, %v1067
      %v1070 = vmul.f32 0.5, %v1069
      %v1071 = vsub.f32 1.5, %v1070
      %v1072 = vmul.f32 %v1067, %v1071
      %vm1073 = vweird.f32 %v783
      %vm1074 = vweird.f32 %v1067
      %vm1075 = vmor %vm1073, %vm1074
      %v1076 = vsel %vm1075, %v1067, %v1072
      %v1077 = vrsqrt.pop %v784
      %v1078 = vmul.f32 %v1077, %v784
      %v1079 = vmul.f32 %v1078, %v1077
      %v1080 = vmul.f32 0.5, %v1079
      %v1081 = vsub.f32 1.5, %v1080
      %v1082 = vmul.f32 %v1077, %v1081
      %vm1083 = vweird.f32 %v784
      %vm1084 = vweird.f32 %v1077
      %vm1085 = vmor %vm1083, %vm1084
      %v1086 = vsel %vm1085, %v1077, %v1082
      %v1087 = vrsqrt.pop %v785
      %v1088 = vmul.f32 %v1087, %v785
      %v1089 = vmul.f32 %v1088, %v1087
      %v1090 = vmul.f32 0.5, %v1089
      %v1091 = vsub.f32 1.5, %v1090
      %v1092 = vmul.f32 %v1087, %v1091
      %vm1093 = vweird.f32 %v785
      %vm1094 = vweird.f32 %v1087
      %vm1095 = vmor %vm1093, %vm1094
      %v1096 = vsel %vm1095, %v1087, %v1092
      %v1097 = vrsqrt.pop %v786
      %v1098 = vmul.f32 %v1097, %v786
      %v1099 = vmul.f32 %v1098, %v1097
      %v1100 = vmul.f32 0.5, %v1099
      %v1101 = vsub.f32 1.5, %v1100
      %v1102 = vmul.f32 %v1097, %v1101
      %vm1103 = vweird.f32 %v786
      %vm1104 = vweird.f32 %v1097
      %vm1105 = vmor %vm1103, %vm1104
      %v1106 = vsel %vm1105, %v1097, %v1102
      %v1107 = vmul.f32 %v563, %v796
      %v1108 = vmul.f32 %v564, %v806
      %v1109 = vmul.f32 %v565, %v816
      %v1110 = vmul.f32 %v566, %v826
      %v1111 = vmul.f32 %v567, %v836
      %v1112 = vmul.f32 %v568, %v846
      %v1113 = vmul.f32 %v569, %v856
      %v1114 = vmul.f32 %v570, %v866
      %v1115 = vmul.f32 %v571, %v876
      %v1116 = vmul.f32 %v572, %v886
      %v1117 = vmul.f32 %v573, %v896
      %v1118 = vmul.f32 %v574, %v906
      %v1119 = vmul.f32 %v575, %v916
      %v1120 = vmul.f32 %v576, %v926
      %v1121 = vmul.f32 %v577, %v936
      %v1122 = vmul.f32 %v578, %v946
      %v1123 = vmul.f32 %v579, %v956
      %v1124 = vmul.f32 %v580, %v966
      %v1125 = vmul.f32 %v581, %v976
      %v1126 = vmul.f32 %v582, %v986
      %v1127 = vmul.f32 %v583, %v996
      %v1128 = vmul.f32 %v584, %v1006
      %v1129 = vmul.f32 %v585, %v1016
      %v1130 = vmul.f32 %v586, %v1026
      %v1131 = vmul.f32 %v587, %v1036
      %v1132 = vmul.f32 %v588, %v1046
      %v1133 = vmul.f32 %v589, %v1056
      %v1134 = vmul.f32 %v590, %v1066
      %v1135 = vmul.f32 %v591, %v1076
      %v1136 = vmul.f32 %v592, %v1086
      %v1137 = vmul.f32 %v593, %v1096
      %v1138 = vmul.f32 %v594, %v1106
      %v1139 = vld [vmem:[%s2] sm:$0x1]
      %v1141 = vperm.slane %v1139, 0
      %v1143 = vmul.f32 %v1107, %v1141
      %v1144 = vmul.f32 %v1108, %v1141
      %v1145 = vmul.f32 %v1109, %v1141
      %v1146 = vmul.f32 %v1110, %v1141
      %v1147 = vmul.f32 %v1111, %v1141
      %v1148 = vmul.f32 %v1112, %v1141
      %v1149 = vmul.f32 %v1113, %v1141
      %v1150 = vmul.f32 %v1114, %v1141
      %v1151 = vmul.f32 %v1115, %v1141
      %v1152 = vmul.f32 %v1116, %v1141
      %v1153 = vmul.f32 %v1117, %v1141
      %v1154 = vmul.f32 %v1118, %v1141
      %v1155 = vmul.f32 %v1119, %v1141
      %v1156 = vmul.f32 %v1120, %v1141
      %v1157 = vmul.f32 %v1121, %v1141
      %v1158 = vmul.f32 %v1122, %v1141
      %v1159 = vmul.f32 %v1123, %v1141
      %v1160 = vmul.f32 %v1124, %v1141
      %v1161 = vmul.f32 %v1125, %v1141
      %v1162 = vmul.f32 %v1126, %v1141
      %v1163 = vmul.f32 %v1127, %v1141
      %v1164 = vmul.f32 %v1128, %v1141
      %v1165 = vmul.f32 %v1129, %v1141
      %v1166 = vmul.f32 %v1130, %v1141
      %v1167 = vmul.f32 %v1131, %v1141
      %v1168 = vmul.f32 %v1132, %v1141
      %v1169 = vmul.f32 %v1133, %v1141
      %v1170 = vmul.f32 %v1134, %v1141
      %v1171 = vmul.f32 %v1135, %v1141
      %v1172 = vmul.f32 %v1136, %v1141
      %v1173 = vmul.f32 %v1137, %v1141
      %v1174 = vmul.f32 %v1138, %v1141
      %v1175 = vld [vmem:[%s3] sm:$0x1]
      %v1177 = vperm.slane %v1175, 0
      %v1179 = vadd.f32 %v1143, %v1177
      %v1180 = vadd.f32 %v1144, %v1177
      %v1181 = vadd.f32 %v1145, %v1177
      %v1182 = vadd.f32 %v1146, %v1177
      %v1183 = vadd.f32 %v1147, %v1177
      %v1184 = vadd.f32 %v1148, %v1177
      %v1185 = vadd.f32 %v1149, %v1177
      %v1186 = vadd.f32 %v1150, %v1177
      %v1187 = vadd.f32 %v1151, %v1177
      %v1188 = vadd.f32 %v1152, %v1177
      %v1189 = vadd.f32 %v1153, %v1177
      %v1190 = vadd.f32 %v1154, %v1177
      %v1191 = vadd.f32 %v1155, %v1177
      %v1192 = vadd.f32 %v1156, %v1177
      %v1193 = vadd.f32 %v1157, %v1177
      %v1194 = vadd.f32 %v1158, %v1177
      %v1195 = vadd.f32 %v1159, %v1177
      %v1196 = vadd.f32 %v1160, %v1177
      %v1197 = vadd.f32 %v1161, %v1177
      %v1198 = vadd.f32 %v1162, %v1177
      %v1199 = vadd.f32 %v1163, %v1177
      %v1200 = vadd.f32 %v1164, %v1177
      %v1201 = vadd.f32 %v1165, %v1177
      %v1202 = vadd.f32 %v1166, %v1177
      %v1203 = vadd.f32 %v1167, %v1177
      %v1204 = vadd.f32 %v1168, %v1177
      %v1205 = vadd.f32 %v1169, %v1177
      %v1206 = vadd.f32 %v1170, %v1177
      %v1207 = vadd.f32 %v1171, %v1177
      %v1208 = vadd.f32 %v1172, %v1177
      %v1209 = vadd.f32 %v1173, %v1177
      %v1210 = vadd.f32 %v1174, %v1177
      %v1211 = vld [vmem:[%s4] sm:$0xff]
      %v1212 = vld [vmem:[%s4 + $0x8] sm:$0xff]
      %v1213 = vld [vmem:[%s4 + $0x10] sm:$0xff]
      %v1214 = vld [vmem:[%s4 + $0x18] sm:$0xff]
      %v1215 = vld [vmem:[%s5] sm:$0x1]
      %v1217 = vperm.slane %v1215, 0
      %v1220 = vsel %vm427, %v1179, 0
      %v1223 = vsel %vm427, %v1180, 0
      %v1226 = vsel %vm427, %v1181, 0
      %v1229 = vsel %vm427, %v1182, 0
      %v1232 = vsel %vm427, %v1183, 0
      %v1235 = vsel %vm427, %v1184, 0
      %v1238 = vsel %vm427, %v1185, 0
      %v1241 = vsel %vm427, %v1186, 0
      %v1244 = vsel %vm427, %v1187, 0
      %v1247 = vsel %vm427, %v1188, 0
      %v1250 = vsel %vm427, %v1189, 0
      %v1253 = vsel %vm427, %v1190, 0
      %v1256 = vsel %vm427, %v1191, 0
      %v1259 = vsel %vm427, %v1192, 0
      %v1262 = vsel %vm427, %v1193, 0
      %v1265 = vsel %vm427, %v1194, 0
      %v1268 = vsel %vm427, %v1195, 0
      %v1271 = vsel %vm427, %v1196, 0
      %v1274 = vsel %vm427, %v1197, 0
      %v1277 = vsel %vm427, %v1198, 0
      %v1280 = vsel %vm427, %v1199, 0
      %v1283 = vsel %vm427, %v1200, 0
      %v1286 = vsel %vm427, %v1201, 0
      %v1289 = vsel %vm427, %v1202, 0
      %v1292 = vsel %vm427, %v1203, 0
      %v1295 = vsel %vm427, %v1204, 0
      %v1298 = vsel %vm427, %v1205, 0
      %v1301 = vsel %vm427, %v1206, 0
      %v1304 = vsel %vm427, %v1207, 0
      %v1307 = vsel %vm427, %v1208, 0
      %v1310 = vsel %vm427, %v1209, 0
      %v1313 = vsel %vm427, %v1210, 0
      %1315 = vmatpush.msra.mxu0 0.0
      %1316 = vmatpush.msra.mxu0 0.0
      %1317 = vmatpush.msra.mxu0 0.0
      %1318 = vmatpush.msra.mxu0 0.0
      %1319 = vmatpush.msra.mxu0 0.0
      %1320 = vmatpush.msra.mxu0 0.0
      %1321 = vmatpush.msra.mxu0 0.0
      %1322 = vmatpush.msra.mxu0 0.0
      %1323 = vmatpush.msra.mxu0 0.0
      %1324 = vmatpush.msra.mxu0 0.0
      %1325 = vmatpush.msra.mxu0 0.0
      %1326 = vmatpush.msra.mxu0 0.0
      %1327 = vmatpush.msra.mxu0 %v1214
      %1328 = vmatpush.msra.mxu0 %v1213
      %1329 = vmatpush.msra.mxu0 %v1212
      %1330 = vmatpush.msra.mxu0 %v1211
      %1331 = vmatmul.f32.gmra.mxu0 %v1220
      %v1332 = vpop.f32.mrf.mxu0
      %v1333 = vadd.f32 %v1217, %v1332
      %1334 = vmatmul.f32.gmra.mxu0 %v1223
      %v1335 = vpop.f32.mrf.mxu0
      %v1336 = vadd.f32 %v1217, %v1335
      %1337 = vmatmul.f32.gmra.mxu0 %v1226
      %v1338 = vpop.f32.mrf.mxu0
      %v1339 = vadd.f32 %v1217, %v1338
      %1340 = vmatmul.f32.gmra.mxu0 %v1229
      %v1341 = vpop.f32.mrf.mxu0
      %v1342 = vadd.f32 %v1217, %v1341
      %1343 = vmatmul.f32.gmra.mxu0 %v1232
      %v1344 = vpop.f32.mrf.mxu0
      %v1345 = vadd.f32 %v1217, %v1344
      %1346 = vmatmul.f32.gmra.mxu0 %v1235
      %v1347 = vpop.f32.mrf.mxu0
      %v1348 = vadd.f32 %v1217, %v1347
      %1349 = vmatmul.f32.gmra.mxu0 %v1238
      %v1350 = vpop.f32.mrf.mxu0
      %v1351 = vadd.f32 %v1217, %v1350
      %1352 = vmatmul.f32.gmra.mxu0 %v1241
      %v1353 = vpop.f32.mrf.mxu0
      %v1354 = vadd.f32 %v1217, %v1353
      %1355 = vmatmul.f32.gmra.mxu0 %v1244
      %v1356 = vpop.f32.mrf.mxu0
      %v1357 = vadd.f32 %v1217, %v1356
      %1358 = vmatmul.f32.gmra.mxu0 %v1247
      %v1359 = vpop.f32.mrf.mxu0
      %v1360 = vadd.f32 %v1217, %v1359
      %1361 = vmatmul.f32.gmra.mxu0 %v1250
      %v1362 = vpop.f32.mrf.mxu0
      %v1363 = vadd.f32 %v1217, %v1362
      %1364 = vmatmul.f32.gmra.mxu0 %v1253
      %v1365 = vpop.f32.mrf.mxu0
      %v1366 = vadd.f32 %v1217, %v1365
      %1367 = vmatmul.f32.gmra.mxu0 %v1256
      %v1368 = vpop.f32.mrf.mxu0
      %v1369 = vadd.f32 %v1217, %v1368
      %1370 = vmatmul.f32.gmra.mxu0 %v1259
      %v1371 = vpop.f32.mrf.mxu0
      %v1372 = vadd.f32 %v1217, %v1371
      %1373 = vmatmul.f32.gmra.mxu0 %v1262
      %v1374 = vpop.f32.mrf.mxu0
      %v1375 = vadd.f32 %v1217, %v1374
      %1376 = vmatmul.f32.gmra.mxu0 %v1265
      %v1377 = vpop.f32.mrf.mxu0
      %v1378 = vadd.f32 %v1217, %v1377
      %1379 = vmatmul.f32.gmra.mxu0 %v1268
      %v1380 = vpop.f32.mrf.mxu0
      %v1381 = vadd.f32 %v1217, %v1380
      %1382 = vmatmul.f32.gmra.mxu0 %v1271
      %v1383 = vpop.f32.mrf.mxu0
      %v1384 = vadd.f32 %v1217, %v1383
      %1385 = vmatmul.f32.gmra.mxu0 %v1274
      %v1386 = vpop.f32.mrf.mxu0
      %v1387 = vadd.f32 %v1217, %v1386
      %1388 = vmatmul.f32.gmra.mxu0 %v1277
      %v1389 = vpop.f32.mrf.mxu0
      %v1390 = vadd.f32 %v1217, %v1389
      %1391 = vmatmul.f32.gmra.mxu0 %v1280
      %v1392 = vpop.f32.mrf.mxu0
      %v1393 = vadd.f32 %v1217, %v1392
      %1394 = vmatmul.f32.gmra.mxu0 %v1283
      %v1395 = vpop.f32.mrf.mxu0
      %v1396 = vadd.f32 %v1217, %v1395
      %1397 = vmatmul.f32.gmra.mxu0 %v1286
      %v1398 = vpop.f32.mrf.mxu0
      %v1399 = vadd.f32 %v1217, %v1398
      %1400 = vmatmul.f32.gmra.mxu0 %v1289
      %v1401 = vpop.f32.mrf.mxu0
      %v1402 = vadd.f32 %v1217, %v1401
      %1403 = vmatmul.f32.gmra.mxu0 %v1292
      %v1404 = vpop.f32.mrf.mxu0
      %v1405 = vadd.f32 %v1217, %v1404
      %1406 = vmatmul.f32.gmra.mxu0 %v1295
      %v1407 = vpop.f32.mrf.mxu0
      %v1408 = vadd.f32 %v1217, %v1407
      %1409 = vmatmul.f32.gmra.mxu0 %v1298
      %v1410 = vpop.f32.mrf.mxu0
      %v1411 = vadd.f32 %v1217, %v1410
      %1412 = vmatmul.f32.gmra.mxu0 %v1301
      %v1413 = vpop.f32.mrf.mxu0
      %v1414 = vadd.f32 %v1217, %v1413
      %1415 = vmatmul.f32.gmra.mxu0 %v1304
      %v1416 = vpop.f32.mrf.mxu0
      %v1417 = vadd.f32 %v1217, %v1416
      %1418 = vmatmul.f32.gmra.mxu0 %v1307
      %v1419 = vpop.f32.mrf.mxu0
      %v1420 = vadd.f32 %v1217, %v1419
      %1421 = vmatmul.f32.gmra.mxu0 %v1310
      %v1422 = vpop.f32.mrf.mxu0
      %v1423 = vadd.f32 %v1217, %v1422
      %1424 = vmatmul.f32.gmra.mxu0 %v1313
      %v1425 = vpop.f32.mrf.mxu0
      %v1426 = vadd.f32 %v1217, %v1425
      %1427 = vdwg.mxu0
      %v1428 = vmul.f32 %v1333, 0.5
      %v1429 = vmul.f32 %v1336, 0.5
      %v1430 = vmul.f32 %v1339, 0.5
      %v1431 = vmul.f32 %v1342, 0.5
      %v1432 = vmul.f32 %v1345, 0.5
      %v1433 = vmul.f32 %v1348, 0.5
      %v1434 = vmul.f32 %v1351, 0.5
      %v1435 = vmul.f32 %v1354, 0.5
      %v1436 = vmul.f32 %v1357, 0.5
      %v1437 = vmul.f32 %v1360, 0.5
      %v1438 = vmul.f32 %v1363, 0.5
      %v1439 = vmul.f32 %v1366, 0.5
      %v1440 = vmul.f32 %v1369, 0.5
      %v1441 = vmul.f32 %v1372, 0.5
      %v1442 = vmul.f32 %v1375, 0.5
      %v1443 = vmul.f32 %v1378, 0.5
      %v1444 = vmul.f32 %v1381, 0.5
      %v1445 = vmul.f32 %v1384, 0.5
      %v1446 = vmul.f32 %v1387, 0.5
      %v1447 = vmul.f32 %v1390, 0.5
      %v1448 = vmul.f32 %v1393, 0.5
      %v1449 = vmul.f32 %v1396, 0.5
      %v1450 = vmul.f32 %v1399, 0.5
      %v1451 = vmul.f32 %v1402, 0.5
      %v1452 = vmul.f32 %v1405, 0.5
      %v1453 = vmul.f32 %v1408, 0.5
      %v1454 = vmul.f32 %v1411, 0.5
      %v1455 = vmul.f32 %v1414, 0.5
      %v1456 = vmul.f32 %v1417, 0.5
      %v1457 = vmul.f32 %v1420, 0.5
      %v1458 = vmul.f32 %v1423, 0.5
      %v1459 = vmul.f32 %v1426, 0.5
      %v1460 = vmul.f32 %v1333, 0.70710677
      %v1461 = vmul.f32 %v1336, 0.70710677
      %v1462 = vmul.f32 %v1339, 0.70710677
      %v1463 = vmul.f32 %v1342, 0.70710677
      %v1464 = vmul.f32 %v1345, 0.70710677
      %v1465 = vmul.f32 %v1348, 0.70710677
      %v1466 = vmul.f32 %v1351, 0.70710677
      %v1467 = vmul.f32 %v1354, 0.70710677
      %v1468 = vmul.f32 %v1357, 0.70710677
      %v1469 = vmul.f32 %v1360, 0.70710677
      %v1470 = vmul.f32 %v1363, 0.70710677
      %v1471 = vmul.f32 %v1366, 0.70710677
      %v1472 = vmul.f32 %v1369, 0.70710677
      %v1473 = vmul.f32 %v1372, 0.70710677
      %v1474 = vmul.f32 %v1375, 0.70710677
      %v1475 = vmul.f32 %v1378, 0.70710677
      %v1476 = vmul.f32 %v1381, 0.70710677
      %v1477 = vmul.f32 %v1384, 0.70710677
      %v1478 = vmul.f32 %v1387, 0.70710677
      %v1479 = vmul.f32 %v1390, 0.70710677
      %v1480 = vmul.f32 %v1393, 0.70710677
      %v1481 = vmul.f32 %v1396, 0.70710677
      %v1482 = vmul.f32 %v1399, 0.70710677
      %v1483 = vmul.f32 %v1402, 0.70710677
      %v1484 = vmul.f32 %v1405, 0.70710677
      %v1485 = vmul.f32 %v1408, 0.70710677
      %v1486 = vmul.f32 %v1411, 0.70710677
      %v1487 = vmul.f32 %v1414, 0.70710677
      %v1488 = vmul.f32 %v1417, 0.70710677
      %v1489 = vmul.f32 %v1420, 0.70710677
      %v1490 = vmul.f32 %v1423, 0.70710677
      %v1491 = vmul.f32 %v1426, 0.70710677
      %v1492 = vmul.f32 %v1460, %v1460
      %v1493 = vmin.f32 16.0, %v1492
      %v1494 = vmul.f32 %v1493, 2.1237322e-06
      %v1495 = vadd.f32 %v1494, 0.00028619796
      %v1496 = vmul.f32 %v1493, %v1495
      %v1497 = vadd.f32 %v1496, 0.0036580483
      %v1498 = vmul.f32 %v1493, %v1497
      %v1499 = vadd.f32 %v1498, 0.05243302
      %v1500 = vmul.f32 %v1493, %v1499
      %v1501 = vadd.f32 %v1500, 0.18741608
      %v1502 = vmul.f32 %v1493, %v1501
      %v1503 = vadd.f32 %v1502, 1.1283791
      %v1504 = vmul.f32 %v1460, %v1503
      %v1505 = vmul.f32 %v1493, 3.8918573e-05
      %v1506 = vadd.f32 %v1505, 0.001143296
      %v1507 = vmul.f32 %v1493, %v1506
      %v1508 = vadd.f32 %v1507, 0.014752088
      %v1509 = vmul.f32 %v1493, %v1508
      %v1510 = vadd.f32 %v1509, 0.112945676
      %v1511 = vmul.f32 %v1493, %v1510
      %v1512 = vadd.f32 %v1511, 0.4994258
      %v1513 = vmul.f32 %v1493, %v1512
      %v1514 = vadd.f32 %v1513, 1.0
      %v1515 = vrcp.pop %v1514
      %v1516 = vmul.f32 %v1514, %v1515
      %v1517 = vsub.f32 1.0, %v1516
      %v1518 = vmul.f32 %v1515, %v1517
      %v1519 = vadd.f32 %v1515, %v1518
      %vm1520 = vweird.f32 %v1514
      %vm1521 = vweird.f32 %v1515
      %vm1522 = vmor %vm1520, %vm1521
      %v1523 = vsel %vm1522, %v1515, %v1519
      %v1524 = vand.u32 2147483647, %v1514
      %vm1525 = vcmp.eq.f32.partialorder %v1524, 8.507059e+37
      %v1526 = vand.u32 %v1514, 2147483648
      %v1527 = vor.u32 1.1754944e-38, %v1526
      %v1528 = vsel %vm1525, %v1527, %v1523
      %v1529 = vmul.f32 %v1504, %v1528
      %v1530 = vmin.f32 %v1529, 1.0
      %v1531 = vmax.f32 %v1530, -1.0
      %v1532 = vmul.f32 %v1461, %v1461
      %v1533 = vmin.f32 16.0, %v1532
      %v1534 = vmul.f32 %v1533, 2.1237322e-06
      %v1535 = vadd.f32 %v1534, 0.00028619796
      %v1536 = vmul.f32 %v1533, %v1535
      %v1537 = vadd.f32 %v1536, 0.0036580483
      %v1538 = vmul.f32 %v1533, %v1537
      %v1539 = vadd.f32 %v1538, 0.05243302
      %v1540 = vmul.f32 %v1533, %v1539
      %v1541 = vadd.f32 %v1540, 0.18741608
      %v1542 = vmul.f32 %v1533, %v1541
      %v1543 = vadd.f32 %v1542, 1.1283791
      %v1544 = vmul.f32 %v1461, %v1543
      %v1545 = vmul.f32 %v1533, 3.8918573e-05
      %v1546 = vadd.f32 %v1545, 0.001143296
      %v1547 = vmul.f32 %v1533, %v1546
      %v1548 = vadd.f32 %v1547, 0.014752088
      %v1549 = vmul.f32 %v1533, %v1548
      %v1550 = vadd.f32 %v1549, 0.112945676
      %v1551 = vmul.f32 %v1533, %v1550
      %v1552 = vadd.f32 %v1551, 0.4994258
      %v1553 = vmul.f32 %v1533, %v1552
      %v1554 = vadd.f32 %v1553, 1.0
      %v1555 = vrcp.pop %v1554
      %v1556 = vmul.f32 %v1554, %v1555
      %v1557 = vsub.f32 1.0, %v1556
      %v1558 = vmul.f32 %v1555, %v1557
      %v1559 = vadd.f32 %v1555, %v1558
      %vm1560 = vweird.f32 %v1554
      %vm1561 = vweird.f32 %v1555
      %vm1562 = vmor %vm1560, %vm1561
      %v1563 = vsel %vm1562, %v1555, %v1559
      %v1564 = vand.u32 2147483647, %v1554
      %vm1565 = vcmp.eq.f32.partialorder %v1564, 8.507059e+37
      %v1566 = vand.u32 %v1554, 2147483648
      %v1567 = vor.u32 1.1754944e-38, %v1566
      %v1568 = vsel %vm1565, %v1567, %v1563
      %v1569 = vmul.f32 %v1544, %v1568
      %v1570 = vmin.f32 %v1569, 1.0
      %v1571 = vmax.f32 %v1570, -1.0
      %v1572 = vmul.f32 %v1462, %v1462
      %v1573 = vmin.f32 16.0, %v1572
      %v1574 = vmul.f32 %v1573, 2.1237322e-06
      %v1575 = vadd.f32 %v1574, 0.00028619796
      %v1576 = vmul.f32 %v1573, %v1575
      %v1577 = vadd.f32 %v1576, 0.0036580483
      %v1578 = vmul.f32 %v1573, %v1577
      %v1579 = vadd.f32 %v1578, 0.05243302
      %v1580 = vmul.f32 %v1573, %v1579
      %v1581 = vadd.f32 %v1580, 0.18741608
      %v1582 = vmul.f32 %v1573, %v1581
      %v1583 = vadd.f32 %v1582, 1.1283791
      %v1584 = vmul.f32 %v1462, %v1583
      %v1585 = vmul.f32 %v1573, 3.8918573e-05
      %v1586 = vadd.f32 %v1585, 0.001143296
      %v1587 = vmul.f32 %v1573, %v1586
      %v1588 = vadd.f32 %v1587, 0.014752088
      %v1589 = vmul.f32 %v1573, %v1588
      %v1590 = vadd.f32 %v1589, 0.112945676
      %v1591 = vmul.f32 %v1573, %v1590
      %v1592 = vadd.f32 %v1591, 0.4994258
      %v1593 = vmul.f32 %v1573, %v1592
      %v1594 = vadd.f32 %v1593, 1.0
      %v1595 = vrcp.pop %v1594
      %v1596 = vmul.f32 %v1594, %v1595
      %v1597 = vsub.f32 1.0, %v1596
      %v1598 = vmul.f32 %v1595, %v1597
      %v1599 = vadd.f32 %v1595, %v1598
      %vm1600 = vweird.f32 %v1594
      %vm1601 = vweird.f32 %v1595
      %vm1602 = vmor %vm1600, %vm1601
      %v1603 = vsel %vm1602, %v1595, %v1599
      %v1604 = vand.u32 2147483647, %v1594
      %vm1605 = vcmp.eq.f32.partialorder %v1604, 8.507059e+37
      %v1606 = vand.u32 %v1594, 2147483648
      %v1607 = vor.u32 1.1754944e-38, %v1606
      %v1608 = vsel %vm1605, %v1607, %v1603
      %v1609 = vmul.f32 %v1584, %v1608
      %v1610 = vmin.f32 %v1609, 1.0
      %v1611 = vmax.f32 %v1610, -1.0
      %v1612 = vmul.f32 %v1463, %v1463
      %v1613 = vmin.f32 16.0, %v1612
      %v1614 = vmul.f32 %v1613, 2.1237322e-06
      %v1615 = vadd.f32 %v1614, 0.00028619796
      %v1616 = vmul.f32 %v1613, %v1615
      %v1617 = vadd.f32 %v1616, 0.0036580483
      %v1618 = vmul.f32 %v1613, %v1617
      %v1619 = vadd.f32 %v1618, 0.05243302
      %v1620 = vmul.f32 %v1613, %v1619
      %v1621 = vadd.f32 %v1620, 0.18741608
      %v1622 = vmul.f32 %v1613, %v1621
      %v1623 = vadd.f32 %v1622, 1.1283791
      %v1624 = vmul.f32 %v1463, %v1623
      %v1625 = vmul.f32 %v1613, 3.8918573e-05
      %v1626 = vadd.f32 %v1625, 0.001143296
      %v1627 = vmul.f32 %v1613, %v1626
      %v1628 = vadd.f32 %v1627, 0.014752088
      %v1629 = vmul.f32 %v1613, %v1628
      %v1630 = vadd.f32 %v1629, 0.112945676
      %v1631 = vmul.f32 %v1613, %v1630
      %v1632 = vadd.f32 %v1631, 0.4994258
      %v1633 = vmul.f32 %v1613, %v1632
      %v1634 = vadd.f32 %v1633, 1.0
      %v1635 = vrcp.pop %v1634
      %v1636 = vmul.f32 %v1634, %v1635
      %v1637 = vsub.f32 1.0, %v1636
      %v1638 = vmul.f32 %v1635, %v1637
      %v1639 = vadd.f32 %v1635, %v1638
      %vm1640 = vweird.f32 %v1634
      %vm1641 = vweird.f32 %v1635
      %vm1642 = vmor %vm1640, %vm1641
      %v1643 = vsel %vm1642, %v1635, %v1639
      %v1644 = vand.u32 2147483647, %v1634
      %vm1645 = vcmp.eq.f32.partialorder %v1644, 8.507059e+37
      %v1646 = vand.u32 %v1634, 2147483648
      %v1647 = vor.u32 1.1754944e-38, %v1646
      %v1648 = vsel %vm1645, %v1647, %v1643
      %v1649 = vmul.f32 %v1624, %v1648
      %v1650 = vmin.f32 %v1649, 1.0
      %v1651 = vmax.f32 %v1650, -1.0
      %v1652 = vmul.f32 %v1464, %v1464
      %v1653 = vmin.f32 16.0, %v1652
      %v1654 = vmul.f32 %v1653, 2.1237322e-06
      %v1655 = vadd.f32 %v1654, 0.00028619796
      %v1656 = vmul.f32 %v1653, %v1655
      %v1657 = vadd.f32 %v1656, 0.0036580483
      %v1658 = vmul.f32 %v1653, %v1657
      %v1659 = vadd.f32 %v1658, 0.05243302
      %v1660 = vmul.f32 %v1653, %v1659
      %v1661 = vadd.f32 %v1660, 0.18741608
      %v1662 = vmul.f32 %v1653, %v1661
      %v1663 = vadd.f32 %v1662, 1.1283791
      %v1664 = vmul.f32 %v1464, %v1663
      %v1665 = vmul.f32 %v1653, 3.8918573e-05
      %v1666 = vadd.f32 %v1665, 0.001143296
      %v1667 = vmul.f32 %v1653, %v1666
      %v1668 = vadd.f32 %v1667, 0.014752088
      %v1669 = vmul.f32 %v1653, %v1668
      %v1670 = vadd.f32 %v1669, 0.112945676
      %v1671 = vmul.f32 %v1653, %v1670
      %v1672 = vadd.f32 %v1671, 0.4994258
      %v1673 = vmul.f32 %v1653, %v1672
      %v1674 = vadd.f32 %v1673, 1.0
      %v1675 = vrcp.pop %v1674
      %v1676 = vmul.f32 %v1674, %v1675
      %v1677 = vsub.f32 1.0, %v1676
      %v1678 = vmul.f32 %v1675, %v1677
      %v1679 = vadd.f32 %v1675, %v1678
      %vm1680 = vweird.f32 %v1674
      %vm1681 = vweird.f32 %v1675
      %vm1682 = vmor %vm1680, %vm1681
      %v1683 = vsel %vm1682, %v1675, %v1679
      %v1684 = vand.u32 2147483647, %v1674
      %vm1685 = vcmp.eq.f32.partialorder %v1684, 8.507059e+37
      %v1686 = vand.u32 %v1674, 2147483648
      %v1687 = vor.u32 1.1754944e-38, %v1686
      %v1688 = vsel %vm1685, %v1687, %v1683
      %v1689 = vmul.f32 %v1664, %v1688
      %v1690 = vmin.f32 %v1689, 1.0
      %v1691 = vmax.f32 %v1690, -1.0
      %v1692 = vmul.f32 %v1465, %v1465
      %v1693 = vmin.f32 16.0, %v1692
      %v1694 = vmul.f32 %v1693, 2.1237322e-06
      %v1695 = vadd.f32 %v1694, 0.00028619796
      %v1696 = vmul.f32 %v1693, %v1695
      %v1697 = vadd.f32 %v1696, 0.0036580483
      %v1698 = vmul.f32 %v1693, %v1697
      %v1699 = vadd.f32 %v1698, 0.05243302
      %v1700 = vmul.f32 %v1693, %v1699
      %v1701 = vadd.f32 %v1700, 0.18741608
      %v1702 = vmul.f32 %v1693, %v1701
      %v1703 = vadd.f32 %v1702, 1.1283791
      %v1704 = vmul.f32 %v1465, %v1703
      %v1705 = vmul.f32 %v1693, 3.8918573e-05
      %v1706 = vadd.f32 %v1705, 0.001143296
      %v1707 = vmul.f32 %v1693, %v1706
      %v1708 = vadd.f32 %v1707, 0.014752088
      %v1709 = vmul.f32 %v1693, %v1708
      %v1710 = vadd.f32 %v1709, 0.112945676
      %v1711 = vmul.f32 %v1693, %v1710
      %v1712 = vadd.f32 %v1711, 0.4994258
      %v1713 = vmul.f32 %v1693, %v1712
      %v1714 = vadd.f32 %v1713, 1.0
      %v1715 = vrcp.pop %v1714
      %v1716 = vmul.f32 %v1714, %v1715
      %v1717 = vsub.f32 1.0, %v1716
      %v1718 = vmul.f32 %v1715, %v1717
      %v1719 = vadd.f32 %v1715, %v1718
      %vm1720 = vweird.f32 %v1714
      %vm1721 = vweird.f32 %v1715
      %vm1722 = vmor %vm1720, %vm1721
      %v1723 = vsel %vm1722, %v1715, %v1719
      %v1724 = vand.u32 2147483647, %v1714
      %vm1725 = vcmp.eq.f32.partialorder %v1724, 8.507059e+37
      %v1726 = vand.u32 %v1714, 2147483648
      %v1727 = vor.u32 1.1754944e-38, %v1726
      %v1728 = vsel %vm1725, %v1727, %v1723
      %v1729 = vmul.f32 %v1704, %v1728
      %v1730 = vmin.f32 %v1729, 1.0
      %v1731 = vmax.f32 %v1730, -1.0
      %v1732 = vmul.f32 %v1466, %v1466
      %v1733 = vmin.f32 16.0, %v1732
      %v1734 = vmul.f32 %v1733, 2.1237322e-06
      %v1735 = vadd.f32 %v1734, 0.00028619796
      %v1736 = vmul.f32 %v1733, %v1735
      %v1737 = vadd.f32 %v1736, 0.0036580483
      %v1738 = vmul.f32 %v1733, %v1737
      %v1739 = vadd.f32 %v1738, 0.05243302
      %v1740 = vmul.f32 %v1733, %v1739
      %v1741 = vadd.f32 %v1740, 0.18741608
      %v1742 = vmul.f32 %v1733, %v1741
      %v1743 = vadd.f32 %v1742, 1.1283791
      %v1744 = vmul.f32 %v1466, %v1743
      %v1745 = vmul.f32 %v1733, 3.8918573e-05
      %v1746 = vadd.f32 %v1745, 0.001143296
      %v1747 = vmul.f32 %v1733, %v1746
      %v1748 = vadd.f32 %v1747, 0.014752088
      %v1749 = vmul.f32 %v1733, %v1748
      %v1750 = vadd.f32 %v1749, 0.112945676
      %v1751 = vmul.f32 %v1733, %v1750
      %v1752 = vadd.f32 %v1751, 0.4994258
      %v1753 = vmul.f32 %v1733, %v1752
      %v1754 = vadd.f32 %v1753, 1.0
      %v1755 = vrcp.pop %v1754
      %v1756 = vmul.f32 %v1754, %v1755
      %v1757 = vsub.f32 1.0, %v1756
      %v1758 = vmul.f32 %v1755, %v1757
      %v1759 = vadd.f32 %v1755, %v1758
      %vm1760 = vweird.f32 %v1754
      %vm1761 = vweird.f32 %v1755
      %vm1762 = vmor %vm1760, %vm1761
      %v1763 = vsel %vm1762, %v1755, %v1759
      %v1764 = vand.u32 2147483647, %v1754
      %vm1765 = vcmp.eq.f32.partialorder %v1764, 8.507059e+37
      %v1766 = vand.u32 %v1754, 2147483648
      %v1767 = vor.u32 1.1754944e-38, %v1766
      %v1768 = vsel %vm1765, %v1767, %v1763
      %v1769 = vmul.f32 %v1744, %v1768
      %v1770 = vmin.f32 %v1769, 1.0
      %v1771 = vmax.f32 %v1770, -1.0
      %v1772 = vmul.f32 %v1467, %v1467
      %v1773 = vmin.f32 16.0, %v1772
      %v1774 = vmul.f32 %v1773, 2.1237322e-06
      %v1775 = vadd.f32 %v1774, 0.00028619796
      %v1776 = vmul.f32 %v1773, %v1775
      %v1777 = vadd.f32 %v1776, 0.0036580483
      %v1778 = vmul.f32 %v1773, %v1777
      %v1779 = vadd.f32 %v1778, 0.05243302
      %v1780 = vmul.f32 %v1773, %v1779
      %v1781 = vadd.f32 %v1780, 0.18741608
      %v1782 = vmul.f32 %v1773, %v1781
      %v1783 = vadd.f32 %v1782, 1.1283791
      %v1784 = vmul.f32 %v1467, %v1783
      %v1785 = vmul.f32 %v1773, 3.8918573e-05
      %v1786 = vadd.f32 %v1785, 0.001143296
      %v1787 = vmul.f32 %v1773, %v1786
      %v1788 = vadd.f32 %v1787, 0.014752088
      %v1789 = vmul.f32 %v1773, %v1788
      %v1790 = vadd.f32 %v1789, 0.112945676
      %v1791 = vmul.f32 %v1773, %v1790
      %v1792 = vadd.f32 %v1791, 0.4994258
      %v1793 = vmul.f32 %v1773, %v1792
      %v1794 = vadd.f32 %v1793, 1.0
      %v1795 = vrcp.pop %v1794
      %v1796 = vmul.f32 %v1794, %v1795
      %v1797 = vsub.f32 1.0, %v1796
      %v1798 = vmul.f32 %v1795, %v1797
      %v1799 = vadd.f32 %v1795, %v1798
      %vm1800 = vweird.f32 %v1794
      %vm1801 = vweird.f32 %v1795
      %vm1802 = vmor %vm1800, %vm1801
      %v1803 = vsel %vm1802, %v1795, %v1799
      %v1804 = vand.u32 2147483647, %v1794
      %vm1805 = vcmp.eq.f32.partialorder %v1804, 8.507059e+37
      %v1806 = vand.u32 %v1794, 2147483648
      %v1807 = vor.u32 1.1754944e-38, %v1806
      %v1808 = vsel %vm1805, %v1807, %v1803
      %v1809 = vmul.f32 %v1784, %v1808
      %v1810 = vmin.f32 %v1809, 1.0
      %v1811 = vmax.f32 %v1810, -1.0
      %v1812 = vmul.f32 %v1468, %v1468
      %v1813 = vmin.f32 16.0, %v1812
      %v1814 = vmul.f32 %v1813, 2.1237322e-06
      %v1815 = vadd.f32 %v1814, 0.00028619796
      %v1816 = vmul.f32 %v1813, %v1815
      %v1817 = vadd.f32 %v1816, 0.0036580483
      %v1818 = vmul.f32 %v1813, %v1817
      %v1819 = vadd.f32 %v1818, 0.05243302
      %v1820 = vmul.f32 %v1813, %v1819
      %v1821 = vadd.f32 %v1820, 0.18741608
      %v1822 = vmul.f32 %v1813, %v1821
      %v1823 = vadd.f32 %v1822, 1.1283791
      %v1824 = vmul.f32 %v1468, %v1823
      %v1825 = vmul.f32 %v1813, 3.8918573e-05
      %v1826 = vadd.f32 %v1825, 0.001143296
      %v1827 = vmul.f32 %v1813, %v1826
      %v1828 = vadd.f32 %v1827, 0.014752088
      %v1829 = vmul.f32 %v1813, %v1828
      %v1830 = vadd.f32 %v1829, 0.112945676
      %v1831 = vmul.f32 %v1813, %v1830
      %v1832 = vadd.f32 %v1831, 0.4994258
      %v1833 = vmul.f32 %v1813, %v1832
      %v1834 = vadd.f32 %v1833, 1.0
      %v1835 = vrcp.pop %v1834
      %v1836 = vmul.f32 %v1834, %v1835
      %v1837 = vsub.f32 1.0, %v1836
      %v1838 = vmul.f32 %v1835, %v1837
      %v1839 = vadd.f32 %v1835, %v1838
      %vm1840 = vweird.f32 %v1834
      %vm1841 = vweird.f32 %v1835
      %vm1842 = vmor %vm1840, %vm1841
      %v1843 = vsel %vm1842, %v1835, %v1839
      %v1844 = vand.u32 2147483647, %v1834
      %vm1845 = vcmp.eq.f32.partialorder %v1844, 8.507059e+37
      %v1846 = vand.u32 %v1834, 2147483648
      %v1847 = vor.u32 1.1754944e-38, %v1846
      %v1848 = vsel %vm1845, %v1847, %v1843
      %v1849 = vmul.f32 %v1824, %v1848
      %v1850 = vmin.f32 %v1849, 1.0
      %v1851 = vmax.f32 %v1850, -1.0
      %v1852 = vmul.f32 %v1469, %v1469
      %v1853 = vmin.f32 16.0, %v1852
      %v1854 = vmul.f32 %v1853, 2.1237322e-06
      %v1855 = vadd.f32 %v1854, 0.00028619796
      %v1856 = vmul.f32 %v1853, %v1855
      %v1857 = vadd.f32 %v1856, 0.0036580483
      %v1858 = vmul.f32 %v1853, %v1857
      %v1859 = vadd.f32 %v1858, 0.05243302
      %v1860 = vmul.f32 %v1853, %v1859
      %v1861 = vadd.f32 %v1860, 0.18741608
      %v1862 = vmul.f32 %v1853, %v1861
      %v1863 = vadd.f32 %v1862, 1.1283791
      %v1864 = vmul.f32 %v1469, %v1863
      %v1865 = vmul.f32 %v1853, 3.8918573e-05
      %v1866 = vadd.f32 %v1865, 0.001143296
      %v1867 = vmul.f32 %v1853, %v1866
      %v1868 = vadd.f32 %v1867, 0.014752088
      %v1869 = vmul.f32 %v1853, %v1868
      %v1870 = vadd.f32 %v1869, 0.112945676
      %v1871 = vmul.f32 %v1853, %v1870
      %v1872 = vadd.f32 %v1871, 0.4994258
      %v1873 = vmul.f32 %v1853, %v1872
      %v1874 = vadd.f32 %v1873, 1.0
      %v1875 = vrcp.pop %v1874
      %v1876 = vmul.f32 %v1874, %v1875
      %v1877 = vsub.f32 1.0, %v1876
      %v1878 = vmul.f32 %v1875, %v1877
      %v1879 = vadd.f32 %v1875, %v1878
      %vm1880 = vweird.f32 %v1874
      %vm1881 = vweird.f32 %v1875
      %vm1882 = vmor %vm1880, %vm1881
      %v1883 = vsel %vm1882, %v1875, %v1879
      %v1884 = vand.u32 2147483647, %v1874
      %vm1885 = vcmp.eq.f32.partialorder %v1884, 8.507059e+37
      %v1886 = vand.u32 %v1874, 2147483648
      %v1887 = vor.u32 1.1754944e-38, %v1886
      %v1888 = vsel %vm1885, %v1887, %v1883
      %v1889 = vmul.f32 %v1864, %v1888
      %v1890 = vmin.f32 %v1889, 1.0
      %v1891 = vmax.f32 %v1890, -1.0
      %v1892 = vmul.f32 %v1470, %v1470
      %v1893 = vmin.f32 16.0, %v1892
      %v1894 = vmul.f32 %v1893, 2.1237322e-06
      %v1895 = vadd.f32 %v1894, 0.00028619796
      %v1896 = vmul.f32 %v1893, %v1895
      %v1897 = vadd.f32 %v1896, 0.0036580483
      %v1898 = vmul.f32 %v1893, %v1897
      %v1899 = vadd.f32 %v1898, 0.05243302
      %v1900 = vmul.f32 %v1893, %v1899
      %v1901 = vadd.f32 %v1900, 0.18741608
      %v1902 = vmul.f32 %v1893, %v1901
      %v1903 = vadd.f32 %v1902, 1.1283791
      %v1904 = vmul.f32 %v1470, %v1903
      %v1905 = vmul.f32 %v1893, 3.8918573e-05
      %v1906 = vadd.f32 %v1905, 0.001143296
      %v1907 = vmul.f32 %v1893, %v1906
      %v1908 = vadd.f32 %v1907, 0.014752088
      %v1909 = vmul.f32 %v1893, %v1908
      %v1910 = vadd.f32 %v1909, 0.112945676
      %v1911 = vmul.f32 %v1893, %v1910
      %v1912 = vadd.f32 %v1911, 0.4994258
      %v1913 = vmul.f32 %v1893, %v1912
      %v1914 = vadd.f32 %v1913, 1.0
      %v1915 = vrcp.pop %v1914
      %v1916 = vmul.f32 %v1914, %v1915
      %v1917 = vsub.f32 1.0, %v1916
      %v1918 = vmul.f32 %v1915, %v1917
      %v1919 = vadd.f32 %v1915, %v1918
      %vm1920 = vweird.f32 %v1914
      %vm1921 = vweird.f32 %v1915
      %vm1922 = vmor %vm1920, %vm1921
      %v1923 = vsel %vm1922, %v1915, %v1919
      %v1924 = vand.u32 2147483647, %v1914
      %vm1925 = vcmp.eq.f32.partialorder %v1924, 8.507059e+37
      %v1926 = vand.u32 %v1914, 2147483648
      %v1927 = vor.u32 1.1754944e-38, %v1926
      %v1928 = vsel %vm1925, %v1927, %v1923
      %v1929 = vmul.f32 %v1904, %v1928
      %v1930 = vmin.f32 %v1929, 1.0
      %v1931 = vmax.f32 %v1930, -1.0
      %v1932 = vmul.f32 %v1471, %v1471
      %v1933 = vmin.f32 16.0, %v1932
      %v1934 = vmul.f32 %v1933, 2.1237322e-06
      %v1935 = vadd.f32 %v1934, 0.00028619796
      %v1936 = vmul.f32 %v1933, %v1935
      %v1937 = vadd.f32 %v1936, 0.0036580483
      %v1938 = vmul.f32 %v1933, %v1937
      %v1939 = vadd.f32 %v1938, 0.05243302
      %v1940 = vmul.f32 %v1933, %v1939
      %v1941 = vadd.f32 %v1940, 0.18741608
      %v1942 = vmul.f32 %v1933, %v1941
      %v1943 = vadd.f32 %v1942, 1.1283791
      %v1944 = vmul.f32 %v1471, %v1943
      %v1945 = vmul.f32 %v1933, 3.8918573e-05
      %v1946 = vadd.f32 %v1945, 0.001143296
      %v1947 = vmul.f32 %v1933, %v1946
      %v1948 = vadd.f32 %v1947, 0.014752088
      %v1949 = vmul.f32 %v1933, %v1948
      %v1950 = vadd.f32 %v1949, 0.112945676
      %v1951 = vmul.f32 %v1933, %v1950
      %v1952 = vadd.f32 %v1951, 0.4994258
      %v1953 = vmul.f32 %v1933, %v1952
      %v1954 = vadd.f32 %v1953, 1.0
      %v1955 = vrcp.pop %v1954
      %v1956 = vmul.f32 %v1954, %v1955
      %v1957 = vsub.f32 1.0, %v1956
      %v1958 = vmul.f32 %v1955, %v1957
      %v1959 = vadd.f32 %v1955, %v1958
      %vm1960 = vweird.f32 %v1954
      %vm1961 = vweird.f32 %v1955
      %vm1962 = vmor %vm1960, %vm1961
      %v1963 = vsel %vm1962, %v1955, %v1959
      %v1964 = vand.u32 2147483647, %v1954
      %vm1965 = vcmp.eq.f32.partialorder %v1964, 8.507059e+37
      %v1966 = vand.u32 %v1954, 2147483648
      %v1967 = vor.u32 1.1754944e-38, %v1966
      %v1968 = vsel %vm1965, %v1967, %v1963
      %v1969 = vmul.f32 %v1944, %v1968
      %v1970 = vmin.f32 %v1969, 1.0
      %v1971 = vmax.f32 %v1970, -1.0
      %v1972 = vmul.f32 %v1472, %v1472
      %v1973 = vmin.f32 16.0, %v1972
      %v1974 = vmul.f32 %v1973, 2.1237322e-06
      %v1975 = vadd.f32 %v1974, 0.00028619796
      %v1976 = vmul.f32 %v1973, %v1975
      %v1977 = vadd.f32 %v1976, 0.0036580483
      %v1978 = vmul.f32 %v1973, %v1977
      %v1979 = vadd.f32 %v1978, 0.05243302
      %v1980 = vmul.f32 %v1973, %v1979
      %v1981 = vadd.f32 %v1980, 0.18741608
      %v1982 = vmul.f32 %v1973, %v1981
      %v1983 = vadd.f32 %v1982, 1.1283791
      %v1984 = vmul.f32 %v1472, %v1983
      %v1985 = vmul.f32 %v1973, 3.8918573e-05
      %v1986 = vadd.f32 %v1985, 0.001143296
      %v1987 = vmul.f32 %v1973, %v1986
      %v1988 = vadd.f32 %v1987, 0.014752088
      %v1989 = vmul.f32 %v1973, %v1988
      %v1990 = vadd.f32 %v1989, 0.112945676
      %v1991 = vmul.f32 %v1973, %v1990
      %v1992 = vadd.f32 %v1991, 0.4994258
      %v1993 = vmul.f32 %v1973, %v1992
      %v1994 = vadd.f32 %v1993, 1.0
      %v1995 = vrcp.pop %v1994
      %v1996 = vmul.f32 %v1994, %v1995
      %v1997 = vsub.f32 1.0, %v1996
      %v1998 = vmul.f32 %v1995, %v1997
      %v1999 = vadd.f32 %v1995, %v1998
      %vm2000 = vweird.f32 %v1994
      %vm2001 = vweird.f32 %v1995
      %vm2002 = vmor %vm2000, %vm2001
      %v2003 = vsel %vm2002, %v1995, %v1999
      %v2004 = vand.u32 2147483647, %v1994
      %vm2005 = vcmp.eq.f32.partialorder %v2004, 8.507059e+37
      %v2006 = vand.u32 %v1994, 2147483648
      %v2007 = vor.u32 1.1754944e-38, %v2006
      %v2008 = vsel %vm2005, %v2007, %v2003
      %v2009 = vmul.f32 %v1984, %v2008
      %v2010 = vmin.f32 %v2009, 1.0
      %v2011 = vmax.f32 %v2010, -1.0
      %v2012 = vmul.f32 %v1473, %v1473
      %v2013 = vmin.f32 16.0, %v2012
      %v2014 = vmul.f32 %v2013, 2.1237322e-06
      %v2015 = vadd.f32 %v2014, 0.00028619796
      %v2016 = vmul.f32 %v2013, %v2015
      %v2017 = vadd.f32 %v2016, 0.0036580483
      %v2018 = vmul.f32 %v2013, %v2017
      %v2019 = vadd.f32 %v2018, 0.05243302
      %v2020 = vmul.f32 %v2013, %v2019
      %v2021 = vadd.f32 %v2020, 0.18741608
      %v2022 = vmul.f32 %v2013, %v2021
      %v2023 = vadd.f32 %v2022, 1.1283791
      %v2024 = vmul.f32 %v1473, %v2023
      %v2025 = vmul.f32 %v2013, 3.8918573e-05
      %v2026 = vadd.f32 %v2025, 0.001143296
      %v2027 = vmul.f32 %v2013, %v2026
      %v2028 = vadd.f32 %v2027, 0.014752088
      %v2029 = vmul.f32 %v2013, %v2028
      %v2030 = vadd.f32 %v2029, 0.112945676
      %v2031 = vmul.f32 %v2013, %v2030
      %v2032 = vadd.f32 %v2031, 0.4994258
      %v2033 = vmul.f32 %v2013, %v2032
      %v2034 = vadd.f32 %v2033, 1.0
      %v2035 = vrcp.pop %v2034
      %v2036 = vmul.f32 %v2034, %v2035
      %v2037 = vsub.f32 1.0, %v2036
      %v2038 = vmul.f32 %v2035, %v2037
      %v2039 = vadd.f32 %v2035, %v2038
      %vm2040 = vweird.f32 %v2034
      %vm2041 = vweird.f32 %v2035
      %vm2042 = vmor %vm2040, %vm2041
      %v2043 = vsel %vm2042, %v2035, %v2039
      %v2044 = vand.u32 2147483647, %v2034
      %vm2045 = vcmp.eq.f32.partialorder %v2044, 8.507059e+37
      %v2046 = vand.u32 %v2034, 2147483648
      %v2047 = vor.u32 1.1754944e-38, %v2046
      %v2048 = vsel %vm2045, %v2047, %v2043
      %v2049 = vmul.f32 %v2024, %v2048
      %v2050 = vmin.f32 %v2049, 1.0
      %v2051 = vmax.f32 %v2050, -1.0
      %v2052 = vmul.f32 %v1474, %v1474
      %v2053 = vmin.f32 16.0, %v2052
      %v2054 = vmul.f32 %v2053, 2.1237322e-06
      %v2055 = vadd.f32 %v2054, 0.00028619796
      %v2056 = vmul.f32 %v2053, %v2055
      %v2057 = vadd.f32 %v2056, 0.0036580483
      %v2058 = vmul.f32 %v2053, %v2057
      %v2059 = vadd.f32 %v2058, 0.05243302
      %v2060 = vmul.f32 %v2053, %v2059
      %v2061 = vadd.f32 %v2060, 0.18741608
      %v2062 = vmul.f32 %v2053, %v2061
      %v2063 = vadd.f32 %v2062, 1.1283791
      %v2064 = vmul.f32 %v1474, %v2063
      %v2065 = vmul.f32 %v2053, 3.8918573e-05
      %v2066 = vadd.f32 %v2065, 0.001143296
      %v2067 = vmul.f32 %v2053, %v2066
      %v2068 = vadd.f32 %v2067, 0.014752088
      %v2069 = vmul.f32 %v2053, %v2068
      %v2070 = vadd.f32 %v2069, 0.112945676
      %v2071 = vmul.f32 %v2053, %v2070
      %v2072 = vadd.f32 %v2071, 0.4994258
      %v2073 = vmul.f32 %v2053, %v2072
      %v2074 = vadd.f32 %v2073, 1.0
      %v2075 = vrcp.pop %v2074
      %v2076 = vmul.f32 %v2074, %v2075
      %v2077 = vsub.f32 1.0, %v2076
      %v2078 = vmul.f32 %v2075, %v2077
      %v2079 = vadd.f32 %v2075, %v2078
      %vm2080 = vweird.f32 %v2074
      %vm2081 = vweird.f32 %v2075
      %vm2082 = vmor %vm2080, %vm2081
      %v2083 = vsel %vm2082, %v2075, %v2079
      %v2084 = vand.u32 2147483647, %v2074
      %vm2085 = vcmp.eq.f32.partialorder %v2084, 8.507059e+37
      %v2086 = vand.u32 %v2074, 2147483648
      %v2087 = vor.u32 1.1754944e-38, %v2086
      %v2088 = vsel %vm2085, %v2087, %v2083
      %v2089 = vmul.f32 %v2064, %v2088
      %v2090 = vmin.f32 %v2089, 1.0
      %v2091 = vmax.f32 %v2090, -1.0
      %v2092 = vmul.f32 %v1475, %v1475
      %v2093 = vmin.f32 16.0, %v2092
      %v2094 = vmul.f32 %v2093, 2.1237322e-06
      %v2095 = vadd.f32 %v2094, 0.00028619796
      %v2096 = vmul.f32 %v2093, %v2095
      %v2097 = vadd.f32 %v2096, 0.0036580483
      %v2098 = vmul.f32 %v2093, %v2097
      %v2099 = vadd.f32 %v2098, 0.05243302
      %v2100 = vmul.f32 %v2093, %v2099
      %v2101 = vadd.f32 %v2100, 0.18741608
      %v2102 = vmul.f32 %v2093, %v2101
      %v2103 = vadd.f32 %v2102, 1.1283791
      %v2104 = vmul.f32 %v1475, %v2103
      %v2105 = vmul.f32 %v2093, 3.8918573e-05
      %v2106 = vadd.f32 %v2105, 0.001143296
      %v2107 = vmul.f32 %v2093, %v2106
      %v2108 = vadd.f32 %v2107, 0.014752088
      %v2109 = vmul.f32 %v2093, %v2108
      %v2110 = vadd.f32 %v2109, 0.112945676
      %v2111 = vmul.f32 %v2093, %v2110
      %v2112 = vadd.f32 %v2111, 0.4994258
      %v2113 = vmul.f32 %v2093, %v2112
      %v2114 = vadd.f32 %v2113, 1.0
      %v2115 = vrcp.pop %v2114
      %v2116 = vmul.f32 %v2114, %v2115
      %v2117 = vsub.f32 1.0, %v2116
      %v2118 = vmul.f32 %v2115, %v2117
      %v2119 = vadd.f32 %v2115, %v2118
      %vm2120 = vweird.f32 %v2114
      %vm2121 = vweird.f32 %v2115
      %vm2122 = vmor %vm2120, %vm2121
      %v2123 = vsel %vm2122, %v2115, %v2119
      %v2124 = vand.u32 2147483647, %v2114
      %vm2125 = vcmp.eq.f32.partialorder %v2124, 8.507059e+37
      %v2126 = vand.u32 %v2114, 2147483648
      %v2127 = vor.u32 1.1754944e-38, %v2126
      %v2128 = vsel %vm2125, %v2127, %v2123
      %v2129 = vmul.f32 %v2104, %v2128
      %v2130 = vmin.f32 %v2129, 1.0
      %v2131 = vmax.f32 %v2130, -1.0
      %v2132 = vmul.f32 %v1476, %v1476
      %v2133 = vmin.f32 16.0, %v2132
      %v2134 = vmul.f32 %v2133, 2.1237322e-06
      %v2135 = vadd.f32 %v2134, 0.00028619796
      %v2136 = vmul.f32 %v2133, %v2135
      %v2137 = vadd.f32 %v2136, 0.0036580483
      %v2138 = vmul.f32 %v2133, %v2137
      %v2139 = vadd.f32 %v2138, 0.05243302
      %v2140 = vmul.f32 %v2133, %v2139
      %v2141 = vadd.f32 %v2140, 0.18741608
      %v2142 = vmul.f32 %v2133, %v2141
      %v2143 = vadd.f32 %v2142, 1.1283791
      %v2144 = vmul.f32 %v1476, %v2143
      %v2145 = vmul.f32 %v2133, 3.8918573e-05
      %v2146 = vadd.f32 %v2145, 0.001143296
      %v2147 = vmul.f32 %v2133, %v2146
      %v2148 = vadd.f32 %v2147, 0.014752088
      %v2149 = vmul.f32 %v2133, %v2148
      %v2150 = vadd.f32 %v2149, 0.112945676
      %v2151 = vmul.f32 %v2133, %v2150
      %v2152 = vadd.f32 %v2151, 0.4994258
      %v2153 = vmul.f32 %v2133, %v2152
      %v2154 = vadd.f32 %v2153, 1.0
      %v2155 = vrcp.pop %v2154
      %v2156 = vmul.f32 %v2154, %v2155
      %v2157 = vsub.f32 1.0, %v2156
      %v2158 = vmul.f32 %v2155, %v2157
      %v2159 = vadd.f32 %v2155, %v2158
      %vm2160 = vweird.f32 %v2154
      %vm2161 = vweird.f32 %v2155
      %vm2162 = vmor %vm2160, %vm2161
      %v2163 = vsel %vm2162, %v2155, %v2159
      %v2164 = vand.u32 2147483647, %v2154
      %vm2165 = vcmp.eq.f32.partialorder %v2164, 8.507059e+37
      %v2166 = vand.u32 %v2154, 2147483648
      %v2167 = vor.u32 1.1754944e-38, %v2166
      %v2168 = vsel %vm2165, %v2167, %v2163
      %v2169 = vmul.f32 %v2144, %v2168
      %v2170 = vmin.f32 %v2169, 1.0
      %v2171 = vmax.f32 %v2170, -1.0
      %v2172 = vmul.f32 %v1477, %v1477
      %v2173 = vmin.f32 16.0, %v2172
      %v2174 = vmul.f32 %v2173, 2.1237322e-06
      %v2175 = vadd.f32 %v2174, 0.00028619796
      %v2176 = vmul.f32 %v2173, %v2175
      %v2177 = vadd.f32 %v2176, 0.0036580483
      %v2178 = vmul.f32 %v2173, %v2177
      %v2179 = vadd.f32 %v2178, 0.05243302
      %v2180 = vmul.f32 %v2173, %v2179
      %v2181 = vadd.f32 %v2180, 0.18741608
      %v2182 = vmul.f32 %v2173, %v2181
      %v2183 = vadd.f32 %v2182, 1.1283791
      %v2184 = vmul.f32 %v1477, %v2183
      %v2185 = vmul.f32 %v2173, 3.8918573e-05
      %v2186 = vadd.f32 %v2185, 0.001143296
      %v2187 = vmul.f32 %v2173, %v2186
      %v2188 = vadd.f32 %v2187, 0.014752088
      %v2189 = vmul.f32 %v2173, %v2188
      %v2190 = vadd.f32 %v2189, 0.112945676
      %v2191 = vmul.f32 %v2173, %v2190
      %v2192 = vadd.f32 %v2191, 0.4994258
      %v2193 = vmul.f32 %v2173, %v2192
      %v2194 = vadd.f32 %v2193, 1.0
      %v2195 = vrcp.pop %v2194
      %v2196 = vmul.f32 %v2194, %v2195
      %v2197 = vsub.f32 1.0, %v2196
      %v2198 = vmul.f32 %v2195, %v2197
      %v2199 = vadd.f32 %v2195, %v2198
      %vm2200 = vweird.f32 %v2194
      %vm2201 = vweird.f32 %v2195
      %vm2202 = vmor %vm2200, %vm2201
      %v2203 = vsel %vm2202, %v2195, %v2199
      %v2204 = vand.u32 2147483647, %v2194
      %vm2205 = vcmp.eq.f32.partialorder %v2204, 8.507059e+37
      %v2206 = vand.u32 %v2194, 2147483648
      %v2207 = vor.u32 1.1754944e-38, %v2206
      %v2208 = vsel %vm2205, %v2207, %v2203
      %v2209 = vmul.f32 %v2184, %v2208
      %v2210 = vmin.f32 %v2209, 1.0
      %v2211 = vmax.f32 %v2210, -1.0
      %v2212 = vmul.f32 %v1478, %v1478
      %v2213 = vmin.f32 16.0, %v2212
      %v2214 = vmul.f32 %v2213, 2.1237322e-06
      %v2215 = vadd.f32 %v2214, 0.00028619796
      %v2216 = vmul.f32 %v2213, %v2215
      %v2217 = vadd.f32 %v2216, 0.0036580483
      %v2218 = vmul.f32 %v2213, %v2217
      %v2219 = vadd.f32 %v2218, 0.05243302
      %v2220 = vmul.f32 %v2213, %v2219
      %v2221 = vadd.f32 %v2220, 0.18741608
      %v2222 = vmul.f32 %v2213, %v2221
      %v2223 = vadd.f32 %v2222, 1.1283791
      %v2224 = vmul.f32 %v1478, %v2223
      %v2225 = vmul.f32 %v2213, 3.8918573e-05
      %v2226 = vadd.f32 %v2225, 0.001143296
      %v2227 = vmul.f32 %v2213, %v2226
      %v2228 = vadd.f32 %v2227, 0.014752088
      %v2229 = vmul.f32 %v2213, %v2228
      %v2230 = vadd.f32 %v2229, 0.112945676
      %v2231 = vmul.f32 %v2213, %v2230
      %v2232 = vadd.f32 %v2231, 0.4994258
      %v2233 = vmul.f32 %v2213, %v2232
      %v2234 = vadd.f32 %v2233, 1.0
      %v2235 = vrcp.pop %v2234
      %v2236 = vmul.f32 %v2234, %v2235
      %v2237 = vsub.f32 1.0, %v2236
      %v2238 = vmul.f32 %v2235, %v2237
      %v2239 = vadd.f32 %v2235, %v2238
      %vm2240 = vweird.f32 %v2234
      %vm2241 = vweird.f32 %v2235
      %vm2242 = vmor %vm2240, %vm2241
      %v2243 = vsel %vm2242, %v2235, %v2239
      %v2244 = vand.u32 2147483647, %v2234
      %vm2245 = vcmp.eq.f32.partialorder %v2244, 8.507059e+37
      %v2246 = vand.u32 %v2234, 2147483648
      %v2247 = vor.u32 1.1754944e-38, %v2246
      %v2248 = vsel %vm2245, %v2247, %v2243
      %v2249 = vmul.f32 %v2224, %v2248
      %v2250 = vmin.f32 %v2249, 1.0
      %v2251 = vmax.f32 %v2250, -1.0
      %v2252 = vmul.f32 %v1479, %v1479
      %v2253 = vmin.f32 16.0, %v2252
      %v2254 = vmul.f32 %v2253, 2.1237322e-06
      %v2255 = vadd.f32 %v2254, 0.00028619796
      %v2256 = vmul.f32 %v2253, %v2255
      %v2257 = vadd.f32 %v2256, 0.0036580483
      %v2258 = vmul.f32 %v2253, %v2257
      %v2259 = vadd.f32 %v2258, 0.05243302
      %v2260 = vmul.f32 %v2253, %v2259
      %v2261 = vadd.f32 %v2260, 0.18741608
      %v2262 = vmul.f32 %v2253, %v2261
      %v2263 = vadd.f32 %v2262, 1.1283791
      %v2264 = vmul.f32 %v1479, %v2263
      %v2265 = vmul.f32 %v2253, 3.8918573e-05
      %v2266 = vadd.f32 %v2265, 0.001143296
      %v2267 = vmul.f32 %v2253, %v2266
      %v2268 = vadd.f32 %v2267, 0.014752088
      %v2269 = vmul.f32 %v2253, %v2268
      %v2270 = vadd.f32 %v2269, 0.112945676
      %v2271 = vmul.f32 %v2253, %v2270
      %v2272 = vadd.f32 %v2271, 0.4994258
      %v2273 = vmul.f32 %v2253, %v2272
      %v2274 = vadd.f32 %v2273, 1.0
      %v2275 = vrcp.pop %v2274
      %v2276 = vmul.f32 %v2274, %v2275
      %v2277 = vsub.f32 1.0, %v2276
      %v2278 = vmul.f32 %v2275, %v2277
      %v2279 = vadd.f32 %v2275, %v2278
      %vm2280 = vweird.f32 %v2274
      %vm2281 = vweird.f32 %v2275
      %vm2282 = vmor %vm2280, %vm2281
      %v2283 = vsel %vm2282, %v2275, %v2279
      %v2284 = vand.u32 2147483647, %v2274
      %vm2285 = vcmp.eq.f32.partialorder %v2284, 8.507059e+37
      %v2286 = vand.u32 %v2274, 2147483648
      %v2287 = vor.u32 1.1754944e-38, %v2286
      %v2288 = vsel %vm2285, %v2287, %v2283
      %v2289 = vmul.f32 %v2264, %v2288
      %v2290 = vmin.f32 %v2289, 1.0
      %v2291 = vmax.f32 %v2290, -1.0
      %v2292 = vmul.f32 %v1480, %v1480
      %v2293 = vmin.f32 16.0, %v2292
      %v2294 = vmul.f32 %v2293, 2.1237322e-06
      %v2295 = vadd.f32 %v2294, 0.00028619796
      %v2296 = vmul.f32 %v2293, %v2295
      %v2297 = vadd.f32 %v2296, 0.0036580483
      %v2298 = vmul.f32 %v2293, %v2297
      %v2299 = vadd.f32 %v2298, 0.05243302
      %v2300 = vmul.f32 %v2293, %v2299
      %v2301 = vadd.f32 %v2300, 0.18741608
      %v2302 = vmul.f32 %v2293, %v2301
      %v2303 = vadd.f32 %v2302, 1.1283791
      %v2304 = vmul.f32 %v1480, %v2303
      %v2305 = vmul.f32 %v2293, 3.8918573e-05
      %v2306 = vadd.f32 %v2305, 0.001143296
      %v2307 = vmul.f32 %v2293, %v2306
      %v2308 = vadd.f32 %v2307, 0.014752088
      %v2309 = vmul.f32 %v2293, %v2308
      %v2310 = vadd.f32 %v2309, 0.112945676
      %v2311 = vmul.f32 %v2293, %v2310
      %v2312 = vadd.f32 %v2311, 0.4994258
      %v2313 = vmul.f32 %v2293, %v2312
      %v2314 = vadd.f32 %v2313, 1.0
      %v2315 = vrcp.pop %v2314
      %v2316 = vmul.f32 %v2314, %v2315
      %v2317 = vsub.f32 1.0, %v2316
      %v2318 = vmul.f32 %v2315, %v2317
      %v2319 = vadd.f32 %v2315, %v2318
      %vm2320 = vweird.f32 %v2314
      %vm2321 = vweird.f32 %v2315
      %vm2322 = vmor %vm2320, %vm2321
      %v2323 = vsel %vm2322, %v2315, %v2319
      %v2324 = vand.u32 2147483647, %v2314
      %vm2325 = vcmp.eq.f32.partialorder %v2324, 8.507059e+37
      %v2326 = vand.u32 %v2314, 2147483648
      %v2327 = vor.u32 1.1754944e-38, %v2326
      %v2328 = vsel %vm2325, %v2327, %v2323
      %v2329 = vmul.f32 %v2304, %v2328
      %v2330 = vmin.f32 %v2329, 1.0
      %v2331 = vmax.f32 %v2330, -1.0
      %v2332 = vmul.f32 %v1481, %v1481
      %v2333 = vmin.f32 16.0, %v2332
      %v2334 = vmul.f32 %v2333, 2.1237322e-06
      %v2335 = vadd.f32 %v2334, 0.00028619796
      %v2336 = vmul.f32 %v2333, %v2335
      %v2337 = vadd.f32 %v2336, 0.0036580483
      %v2338 = vmul.f32 %v2333, %v2337
      %v2339 = vadd.f32 %v2338, 0.05243302
      %v2340 = vmul.f32 %v2333, %v2339
      %v2341 = vadd.f32 %v2340, 0.18741608
      %v2342 = vmul.f32 %v2333, %v2341
      %v2343 = vadd.f32 %v2342, 1.1283791
      %v2344 = vmul.f32 %v1481, %v2343
      %v2345 = vmul.f32 %v2333, 3.8918573e-05
      %v2346 = vadd.f32 %v2345, 0.001143296
      %v2347 = vmul.f32 %v2333, %v2346
      %v2348 = vadd.f32 %v2347, 0.014752088
      %v2349 = vmul.f32 %v2333, %v2348
      %v2350 = vadd.f32 %v2349, 0.112945676
      %v2351 = vmul.f32 %v2333, %v2350
      %v2352 = vadd.f32 %v2351, 0.4994258
      %v2353 = vmul.f32 %v2333, %v2352
      %v2354 = vadd.f32 %v2353, 1.0
      %v2355 = vrcp.pop %v2354
      %v2356 = vmul.f32 %v2354, %v2355
      %v2357 = vsub.f32 1.0, %v2356
      %v2358 = vmul.f32 %v2355, %v2357
      %v2359 = vadd.f32 %v2355, %v2358
      %vm2360 = vweird.f32 %v2354
      %vm2361 = vweird.f32 %v2355
      %vm2362 = vmor %vm2360, %vm2361
      %v2363 = vsel %vm2362, %v2355, %v2359
      %v2364 = vand.u32 2147483647, %v2354
      %vm2365 = vcmp.eq.f32.partialorder %v2364, 8.507059e+37
      %v2366 = vand.u32 %v2354, 2147483648
      %v2367 = vor.u32 1.1754944e-38, %v2366
      %v2368 = vsel %vm2365, %v2367, %v2363
      %v2369 = vmul.f32 %v2344, %v2368
      %v2370 = vmin.f32 %v2369, 1.0
      %v2371 = vmax.f32 %v2370, -1.0
      %v2372 = vmul.f32 %v1482, %v1482
      %v2373 = vmin.f32 16.0, %v2372
      %v2374 = vmul.f32 %v2373, 2.1237322e-06
      %v2375 = vadd.f32 %v2374, 0.00028619796
      %v2376 = vmul.f32 %v2373, %v2375
      %v2377 = vadd.f32 %v2376, 0.0036580483
      %v2378 = vmul.f32 %v2373, %v2377
      %v2379 = vadd.f32 %v2378, 0.05243302
      %v2380 = vmul.f32 %v2373, %v2379
      %v2381 = vadd.f32 %v2380, 0.18741608
      %v2382 = vmul.f32 %v2373, %v2381
      %v2383 = vadd.f32 %v2382, 1.1283791
      %v2384 = vmul.f32 %v1482, %v2383
      %v2385 = vmul.f32 %v2373, 3.8918573e-05
      %v2386 = vadd.f32 %v2385, 0.001143296
      %v2387 = vmul.f32 %v2373, %v2386
      %v2388 = vadd.f32 %v2387, 0.014752088
      %v2389 = vmul.f32 %v2373, %v2388
      %v2390 = vadd.f32 %v2389, 0.112945676
      %v2391 = vmul.f32 %v2373, %v2390
      %v2392 = vadd.f32 %v2391, 0.4994258
      %v2393 = vmul.f32 %v2373, %v2392
      %v2394 = vadd.f32 %v2393, 1.0
      %v2395 = vrcp.pop %v2394
      %v2396 = vmul.f32 %v2394, %v2395
      %v2397 = vsub.f32 1.0, %v2396
      %v2398 = vmul.f32 %v2395, %v2397
      %v2399 = vadd.f32 %v2395, %v2398
      %vm2400 = vweird.f32 %v2394
      %vm2401 = vweird.f32 %v2395
      %vm2402 = vmor %vm2400, %vm2401
      %v2403 = vsel %vm2402, %v2395, %v2399
      %v2404 = vand.u32 2147483647, %v2394
      %vm2405 = vcmp.eq.f32.partialorder %v2404, 8.507059e+37
      %v2406 = vand.u32 %v2394, 2147483648
      %v2407 = vor.u32 1.1754944e-38, %v2406
      %v2408 = vsel %vm2405, %v2407, %v2403
      %v2409 = vmul.f32 %v2384, %v2408
      %v2410 = vmin.f32 %v2409, 1.0
      %v2411 = vmax.f32 %v2410, -1.0
      %v2412 = vmul.f32 %v1483, %v1483
      %v2413 = vmin.f32 16.0, %v2412
      %v2414 = vmul.f32 %v2413, 2.1237322e-06
      %v2415 = vadd.f32 %v2414, 0.00028619796
      %v2416 = vmul.f32 %v2413, %v2415
      %v2417 = vadd.f32 %v2416, 0.0036580483
      %v2418 = vmul.f32 %v2413, %v2417
      %v2419 = vadd.f32 %v2418, 0.05243302
      %v2420 = vmul.f32 %v2413, %v2419
      %v2421 = vadd.f32 %v2420, 0.18741608
      %v2422 = vmul.f32 %v2413, %v2421
      %v2423 = vadd.f32 %v2422, 1.1283791
      %v2424 = vmul.f32 %v1483, %v2423
      %v2425 = vmul.f32 %v2413, 3.8918573e-05
      %v2426 = vadd.f32 %v2425, 0.001143296
      %v2427 = vmul.f32 %v2413, %v2426
      %v2428 = vadd.f32 %v2427, 0.014752088
      %v2429 = vmul.f32 %v2413, %v2428
      %v2430 = vadd.f32 %v2429, 0.112945676
      %v2431 = vmul.f32 %v2413, %v2430
      %v2432 = vadd.f32 %v2431, 0.4994258
      %v2433 = vmul.f32 %v2413, %v2432
      %v2434 = vadd.f32 %v2433, 1.0
      %v2435 = vrcp.pop %v2434
      %v2436 = vmul.f32 %v2434, %v2435
      %v2437 = vsub.f32 1.0, %v2436
      %v2438 = vmul.f32 %v2435, %v2437
      %v2439 = vadd.f32 %v2435, %v2438
      %vm2440 = vweird.f32 %v2434
      %vm2441 = vweird.f32 %v2435
      %vm2442 = vmor %vm2440, %vm2441
      %v2443 = vsel %vm2442, %v2435, %v2439
      %v2444 = vand.u32 2147483647, %v2434
      %vm2445 = vcmp.eq.f32.partialorder %v2444, 8.507059e+37
      %v2446 = vand.u32 %v2434, 2147483648
      %v2447 = vor.u32 1.1754944e-38, %v2446
      %v2448 = vsel %vm2445, %v2447, %v2443
      %v2449 = vmul.f32 %v2424, %v2448
      %v2450 = vmin.f32 %v2449, 1.0
      %v2451 = vmax.f32 %v2450, -1.0
      %v2452 = vmul.f32 %v1484, %v1484
      %v2453 = vmin.f32 16.0, %v2452
      %v2454 = vmul.f32 %v2453, 2.1237322e-06
      %v2455 = vadd.f32 %v2454, 0.00028619796
      %v2456 = vmul.f32 %v2453, %v2455
      %v2457 = vadd.f32 %v2456, 0.0036580483
      %v2458 = vmul.f32 %v2453, %v2457
      %v2459 = vadd.f32 %v2458, 0.05243302
      %v2460 = vmul.f32 %v2453, %v2459
      %v2461 = vadd.f32 %v2460, 0.18741608
      %v2462 = vmul.f32 %v2453, %v2461
      %v2463 = vadd.f32 %v2462, 1.1283791
      %v2464 = vmul.f32 %v1484, %v2463
      %v2465 = vmul.f32 %v2453, 3.8918573e-05
      %v2466 = vadd.f32 %v2465, 0.001143296
      %v2467 = vmul.f32 %v2453, %v2466
      %v2468 = vadd.f32 %v2467, 0.014752088
      %v2469 = vmul.f32 %v2453, %v2468
      %v2470 = vadd.f32 %v2469, 0.112945676
      %v2471 = vmul.f32 %v2453, %v2470
      %v2472 = vadd.f32 %v2471, 0.4994258
      %v2473 = vmul.f32 %v2453, %v2472
      %v2474 = vadd.f32 %v2473, 1.0
      %v2475 = vrcp.pop %v2474
      %v2476 = vmul.f32 %v2474, %v2475
      %v2477 = vsub.f32 1.0, %v2476
      %v2478 = vmul.f32 %v2475, %v2477
      %v2479 = vadd.f32 %v2475, %v2478
      %vm2480 = vweird.f32 %v2474
      %vm2481 = vweird.f32 %v2475
      %vm2482 = vmor %vm2480, %vm2481
      %v2483 = vsel %vm2482, %v2475, %v2479
      %v2484 = vand.u32 2147483647, %v2474
      %vm2485 = vcmp.eq.f32.partialorder %v2484, 8.507059e+37
      %v2486 = vand.u32 %v2474, 2147483648
      %v2487 = vor.u32 1.1754944e-38, %v2486
      %v2488 = vsel %vm2485, %v2487, %v2483
      %v2489 = vmul.f32 %v2464, %v2488
      %v2490 = vmin.f32 %v2489, 1.0
      %v2491 = vmax.f32 %v2490, -1.0
      %v2492 = vmul.f32 %v1485, %v1485
      %v2493 = vmin.f32 16.0, %v2492
      %v2494 = vmul.f32 %v2493, 2.1237322e-06
      %v2495 = vadd.f32 %v2494, 0.00028619796
      %v2496 = vmul.f32 %v2493, %v2495
      %v2497 = vadd.f32 %v2496, 0.0036580483
      %v2498 = vmul.f32 %v2493, %v2497
      %v2499 = vadd.f32 %v2498, 0.05243302
      %v2500 = vmul.f32 %v2493, %v2499
      %v2501 = vadd.f32 %v2500, 0.18741608
      %v2502 = vmul.f32 %v2493, %v2501
      %v2503 = vadd.f32 %v2502, 1.1283791
      %v2504 = vmul.f32 %v1485, %v2503
      %v2505 = vmul.f32 %v2493, 3.8918573e-05
      %v2506 = vadd.f32 %v2505, 0.001143296
      %v2507 = vmul.f32 %v2493, %v2506
      %v2508 = vadd.f32 %v2507, 0.014752088
      %v2509 = vmul.f32 %v2493, %v2508
      %v2510 = vadd.f32 %v2509, 0.112945676
      %v2511 = vmul.f32 %v2493, %v2510
      %v2512 = vadd.f32 %v2511, 0.4994258
      %v2513 = vmul.f32 %v2493, %v2512
      %v2514 = vadd.f32 %v2513, 1.0
      %v2515 = vrcp.pop %v2514
      %v2516 = vmul.f32 %v2514, %v2515
      %v2517 = vsub.f32 1.0, %v2516
      %v2518 = vmul.f32 %v2515, %v2517
      %v2519 = vadd.f32 %v2515, %v2518
      %vm2520 = vweird.f32 %v2514
      %vm2521 = vweird.f32 %v2515
      %vm2522 = vmor %vm2520, %vm2521
      %v2523 = vsel %vm2522, %v2515, %v2519
      %v2524 = vand.u32 2147483647, %v2514
      %vm2525 = vcmp.eq.f32.partialorder %v2524, 8.507059e+37
      %v2526 = vand.u32 %v2514, 2147483648
      %v2527 = vor.u32 1.1754944e-38, %v2526
      %v2528 = vsel %vm2525, %v2527, %v2523
      %v2529 = vmul.f32 %v2504, %v2528
      %v2530 = vmin.f32 %v2529, 1.0
      %v2531 = vmax.f32 %v2530, -1.0
      %v2532 = vmul.f32 %v1486, %v1486
      %v2533 = vmin.f32 16.0, %v2532
      %v2534 = vmul.f32 %v2533, 2.1237322e-06
      %v2535 = vadd.f32 %v2534, 0.00028619796
      %v2536 = vmul.f32 %v2533, %v2535
      %v2537 = vadd.f32 %v2536, 0.0036580483
      %v2538 = vmul.f32 %v2533, %v2537
      %v2539 = vadd.f32 %v2538, 0.05243302
      %v2540 = vmul.f32 %v2533, %v2539
      %v2541 = vadd.f32 %v2540, 0.18741608
      %v2542 = vmul.f32 %v2533, %v2541
      %v2543 = vadd.f32 %v2542, 1.1283791
      %v2544 = vmul.f32 %v1486, %v2543
      %v2545 = vmul.f32 %v2533, 3.8918573e-05
      %v2546 = vadd.f32 %v2545, 0.001143296
      %v2547 = vmul.f32 %v2533, %v2546
      %v2548 = vadd.f32 %v2547, 0.014752088
      %v2549 = vmul.f32 %v2533, %v2548
      %v2550 = vadd.f32 %v2549, 0.112945676
      %v2551 = vmul.f32 %v2533, %v2550
      %v2552 = vadd.f32 %v2551, 0.4994258
      %v2553 = vmul.f32 %v2533, %v2552
      %v2554 = vadd.f32 %v2553, 1.0
      %v2555 = vrcp.pop %v2554
      %v2556 = vmul.f32 %v2554, %v2555
      %v2557 = vsub.f32 1.0, %v2556
      %v2558 = vmul.f32 %v2555, %v2557
      %v2559 = vadd.f32 %v2555, %v2558
      %vm2560 = vweird.f32 %v2554
      %vm2561 = vweird.f32 %v2555
      %vm2562 = vmor %vm2560, %vm2561
      %v2563 = vsel %vm2562, %v2555, %v2559
      %v2564 = vand.u32 2147483647, %v2554
      %vm2565 = vcmp.eq.f32.partialorder %v2564, 8.507059e+37
      %v2566 = vand.u32 %v2554, 2147483648
      %v2567 = vor.u32 1.1754944e-38, %v2566
      %v2568 = vsel %vm2565, %v2567, %v2563
      %v2569 = vmul.f32 %v2544, %v2568
      %v2570 = vmin.f32 %v2569, 1.0
      %v2571 = vmax.f32 %v2570, -1.0
      %v2572 = vmul.f32 %v1487, %v1487
      %v2573 = vmin.f32 16.0, %v2572
      %v2574 = vmul.f32 %v2573, 2.1237322e-06
      %v2575 = vadd.f32 %v2574, 0.00028619796
      %v2576 = vmul.f32 %v2573, %v2575
      %v2577 = vadd.f32 %v2576, 0.0036580483
      %v2578 = vmul.f32 %v2573, %v2577
      %v2579 = vadd.f32 %v2578, 0.05243302
      %v2580 = vmul.f32 %v2573, %v2579
      %v2581 = vadd.f32 %v2580, 0.18741608
      %v2582 = vmul.f32 %v2573, %v2581
      %v2583 = vadd.f32 %v2582, 1.1283791
      %v2584 = vmul.f32 %v1487, %v2583
      %v2585 = vmul.f32 %v2573, 3.8918573e-05
      %v2586 = vadd.f32 %v2585, 0.001143296
      %v2587 = vmul.f32 %v2573, %v2586
      %v2588 = vadd.f32 %v2587, 0.014752088
      %v2589 = vmul.f32 %v2573, %v2588
      %v2590 = vadd.f32 %v2589, 0.112945676
      %v2591 = vmul.f32 %v2573, %v2590
      %v2592 = vadd.f32 %v2591, 0.4994258
      %v2593 = vmul.f32 %v2573, %v2592
      %v2594 = vadd.f32 %v2593, 1.0
      %v2595 = vrcp.pop %v2594
      %v2596 = vmul.f32 %v2594, %v2595
      %v2597 = vsub.f32 1.0, %v2596
      %v2598 = vmul.f32 %v2595, %v2597
      %v2599 = vadd.f32 %v2595, %v2598
      %vm2600 = vweird.f32 %v2594
      %vm2601 = vweird.f32 %v2595
      %vm2602 = vmor %vm2600, %vm2601
      %v2603 = vsel %vm2602, %v2595, %v2599
      %v2604 = vand.u32 2147483647, %v2594
      %vm2605 = vcmp.eq.f32.partialorder %v2604, 8.507059e+37
      %v2606 = vand.u32 %v2594, 2147483648
      %v2607 = vor.u32 1.1754944e-38, %v2606
      %v2608 = vsel %vm2605, %v2607, %v2603
      %v2609 = vmul.f32 %v2584, %v2608
      %v2610 = vmin.f32 %v2609, 1.0
      %v2611 = vmax.f32 %v2610, -1.0
      %v2612 = vmul.f32 %v1488, %v1488
      %v2613 = vmin.f32 16.0, %v2612
      %v2614 = vmul.f32 %v2613, 2.1237322e-06
      %v2615 = vadd.f32 %v2614, 0.00028619796
      %v2616 = vmul.f32 %v2613, %v2615
      %v2617 = vadd.f32 %v2616, 0.0036580483
      %v2618 = vmul.f32 %v2613, %v2617
      %v2619 = vadd.f32 %v2618, 0.05243302
      %v2620 = vmul.f32 %v2613, %v2619
      %v2621 = vadd.f32 %v2620, 0.18741608
      %v2622 = vmul.f32 %v2613, %v2621
      %v2623 = vadd.f32 %v2622, 1.1283791
      %v2624 = vmul.f32 %v1488, %v2623
      %v2625 = vmul.f32 %v2613, 3.8918573e-05
      %v2626 = vadd.f32 %v2625, 0.001143296
      %v2627 = vmul.f32 %v2613, %v2626
      %v2628 = vadd.f32 %v2627, 0.014752088
      %v2629 = vmul.f32 %v2613, %v2628
      %v2630 = vadd.f32 %v2629, 0.112945676
      %v2631 = vmul.f32 %v2613, %v2630
      %v2632 = vadd.f32 %v2631, 0.4994258
      %v2633 = vmul.f32 %v2613, %v2632
      %v2634 = vadd.f32 %v2633, 1.0
      %v2635 = vrcp.pop %v2634
      %v2636 = vmul.f32 %v2634, %v2635
      %v2637 = vsub.f32 1.0, %v2636
      %v2638 = vmul.f32 %v2635, %v2637
      %v2639 = vadd.f32 %v2635, %v2638
      %vm2640 = vweird.f32 %v2634
      %vm2641 = vweird.f32 %v2635
      %vm2642 = vmor %vm2640, %vm2641
      %v2643 = vsel %vm2642, %v2635, %v2639
      %v2644 = vand.u32 2147483647, %v2634
      %vm2645 = vcmp.eq.f32.partialorder %v2644, 8.507059e+37
      %v2646 = vand.u32 %v2634, 2147483648
      %v2647 = vor.u32 1.1754944e-38, %v2646
      %v2648 = vsel %vm2645, %v2647, %v2643
      %v2649 = vmul.f32 %v2624, %v2648
      %v2650 = vmin.f32 %v2649, 1.0
      %v2651 = vmax.f32 %v2650, -1.0
      %v2652 = vmul.f32 %v1489, %v1489
      %v2653 = vmin.f32 16.0, %v2652
      %v2654 = vmul.f32 %v2653, 2.1237322e-06
      %v2655 = vadd.f32 %v2654, 0.00028619796
      %v2656 = vmul.f32 %v2653, %v2655
      %v2657 = vadd.f32 %v2656, 0.0036580483
      %v2658 = vmul.f32 %v2653, %v2657
      %v2659 = vadd.f32 %v2658, 0.05243302
      %v2660 = vmul.f32 %v2653, %v2659
      %v2661 = vadd.f32 %v2660, 0.18741608
      %v2662 = vmul.f32 %v2653, %v2661
      %v2663 = vadd.f32 %v2662, 1.1283791
      %v2664 = vmul.f32 %v1489, %v2663
      %v2665 = vmul.f32 %v2653, 3.8918573e-05
      %v2666 = vadd.f32 %v2665, 0.001143296
      %v2667 = vmul.f32 %v2653, %v2666
      %v2668 = vadd.f32 %v2667, 0.014752088
      %v2669 = vmul.f32 %v2653, %v2668
      %v2670 = vadd.f32 %v2669, 0.112945676
      %v2671 = vmul.f32 %v2653, %v2670
      %v2672 = vadd.f32 %v2671, 0.4994258
      %v2673 = vmul.f32 %v2653, %v2672
      %v2674 = vadd.f32 %v2673, 1.0
      %v2675 = vrcp.pop %v2674
      %v2676 = vmul.f32 %v2674, %v2675
      %v2677 = vsub.f32 1.0, %v2676
      %v2678 = vmul.f32 %v2675, %v2677
      %v2679 = vadd.f32 %v2675, %v2678
      %vm2680 = vweird.f32 %v2674
      %vm2681 = vweird.f32 %v2675
      %vm2682 = vmor %vm2680, %vm2681
      %v2683 = vsel %vm2682, %v2675, %v2679
      %v2684 = vand.u32 2147483647, %v2674
      %vm2685 = vcmp.eq.f32.partialorder %v2684, 8.507059e+37
      %v2686 = vand.u32 %v2674, 2147483648
      %v2687 = vor.u32 1.1754944e-38, %v2686
      %v2688 = vsel %vm2685, %v2687, %v2683
      %v2689 = vmul.f32 %v2664, %v2688
      %v2690 = vmin.f32 %v2689, 1.0
      %v2691 = vmax.f32 %v2690, -1.0
      %v2692 = vmul.f32 %v1490, %v1490
      %v2693 = vmin.f32 16.0, %v2692
      %v2694 = vmul.f32 %v2693, 2.1237322e-06
      %v2695 = vadd.f32 %v2694, 0.00028619796
      %v2696 = vmul.f32 %v2693, %v2695
      %v2697 = vadd.f32 %v2696, 0.0036580483
      %v2698 = vmul.f32 %v2693, %v2697
      %v2699 = vadd.f32 %v2698, 0.05243302
      %v2700 = vmul.f32 %v2693, %v2699
      %v2701 = vadd.f32 %v2700, 0.18741608
      %v2702 = vmul.f32 %v2693, %v2701
      %v2703 = vadd.f32 %v2702, 1.1283791
      %v2704 = vmul.f32 %v1490, %v2703
      %v2705 = vmul.f32 %v2693, 3.8918573e-05
      %v2706 = vadd.f32 %v2705, 0.001143296
      %v2707 = vmul.f32 %v2693, %v2706
      %v2708 = vadd.f32 %v2707, 0.014752088
      %v2709 = vmul.f32 %v2693, %v2708
      %v2710 = vadd.f32 %v2709, 0.112945676
      %v2711 = vmul.f32 %v2693, %v2710
      %v2712 = vadd.f32 %v2711, 0.4994258
      %v2713 = vmul.f32 %v2693, %v2712
      %v2714 = vadd.f32 %v2713, 1.0
      %v2715 = vrcp.pop %v2714
      %v2716 = vmul.f32 %v2714, %v2715
      %v2717 = vsub.f32 1.0, %v2716
      %v2718 = vmul.f32 %v2715, %v2717
      %v2719 = vadd.f32 %v2715, %v2718
      %vm2720 = vweird.f32 %v2714
      %vm2721 = vweird.f32 %v2715
      %vm2722 = vmor %vm2720, %vm2721
      %v2723 = vsel %vm2722, %v2715, %v2719
      %v2724 = vand.u32 2147483647, %v2714
      %vm2725 = vcmp.eq.f32.partialorder %v2724, 8.507059e+37
      %v2726 = vand.u32 %v2714, 2147483648
      %v2727 = vor.u32 1.1754944e-38, %v2726
      %v2728 = vsel %vm2725, %v2727, %v2723
      %v2729 = vmul.f32 %v2704, %v2728
      %v2730 = vmin.f32 %v2729, 1.0
      %v2731 = vmax.f32 %v2730, -1.0
      %v2732 = vmul.f32 %v1491, %v1491
      %v2733 = vmin.f32 16.0, %v2732
      %v2734 = vmul.f32 %v2733, 2.1237322e-06
      %v2735 = vadd.f32 %v2734, 0.00028619796
      %v2736 = vmul.f32 %v2733, %v2735
      %v2737 = vadd.f32 %v2736, 0.0036580483
      %v2738 = vmul.f32 %v2733, %v2737
      %v2739 = vadd.f32 %v2738, 0.05243302
      %v2740 = vmul.f32 %v2733, %v2739
      %v2741 = vadd.f32 %v2740, 0.18741608
      %v2742 = vmul.f32 %v2733, %v2741
      %v2743 = vadd.f32 %v2742, 1.1283791
      %v2744 = vmul.f32 %v1491, %v2743
      %v2745 = vmul.f32 %v2733, 3.8918573e-05
      %v2746 = vadd.f32 %v2745, 0.001143296
      %v2747 = vmul.f32 %v2733, %v2746
      %v2748 = vadd.f32 %v2747, 0.014752088
      %v2749 = vmul.f32 %v2733, %v2748
      %v2750 = vadd.f32 %v2749, 0.112945676
      %v2751 = vmul.f32 %v2733, %v2750
      %v2752 = vadd.f32 %v2751, 0.4994258
      %v2753 = vmul.f32 %v2733, %v2752
      %v2754 = vadd.f32 %v2753, 1.0
      %v2755 = vrcp.pop %v2754
      %v2756 = vmul.f32 %v2754, %v2755
      %v2757 = vsub.f32 1.0, %v2756
      %v2758 = vmul.f32 %v2755, %v2757
      %v2759 = vadd.f32 %v2755, %v2758
      %vm2760 = vweird.f32 %v2754
      %vm2761 = vweird.f32 %v2755
      %vm2762 = vmor %vm2760, %vm2761
      %v2763 = vsel %vm2762, %v2755, %v2759
      %v2764 = vand.u32 2147483647, %v2754
      %vm2765 = vcmp.eq.f32.partialorder %v2764, 8.507059e+37
      %v2766 = vand.u32 %v2754, 2147483648
      %v2767 = vor.u32 1.1754944e-38, %v2766
      %v2768 = vsel %vm2765, %v2767, %v2763
      %v2769 = vmul.f32 %v2744, %v2768
      %v2770 = vmin.f32 %v2769, 1.0
      %v2771 = vmax.f32 %v2770, -1.0
      %v2772 = vadd.f32 %v1531, 1.0
      %v2773 = vadd.f32 %v1571, 1.0
      %v2774 = vadd.f32 %v1611, 1.0
      %v2775 = vadd.f32 %v1651, 1.0
      %v2776 = vadd.f32 %v1691, 1.0
      %v2777 = vadd.f32 %v1731, 1.0
      %v2778 = vadd.f32 %v1771, 1.0
      %v2779 = vadd.f32 %v1811, 1.0
      %v2780 = vadd.f32 %v1851, 1.0
      %v2781 = vadd.f32 %v1891, 1.0
      %v2782 = vadd.f32 %v1931, 1.0
      %v2783 = vadd.f32 %v1971, 1.0
      %v2784 = vadd.f32 %v2011, 1.0
      %v2785 = vadd.f32 %v2051, 1.0
      %v2786 = vadd.f32 %v2091, 1.0
      %v2787 = vadd.f32 %v2131, 1.0
      %v2788 = vadd.f32 %v2171, 1.0
      %v2789 = vadd.f32 %v2211, 1.0
      %v2790 = vadd.f32 %v2251, 1.0
      %v2791 = vadd.f32 %v2291, 1.0
      %v2792 = vadd.f32 %v2331, 1.0
      %v2793 = vadd.f32 %v2371, 1.0
      %v2794 = vadd.f32 %v2411, 1.0
      %v2795 = vadd.f32 %v2451, 1.0
      %v2796 = vadd.f32 %v2491, 1.0
      %v2797 = vadd.f32 %v2531, 1.0
      %v2798 = vadd.f32 %v2571, 1.0
      %v2799 = vadd.f32 %v2611, 1.0
      %v2800 = vadd.f32 %v2651, 1.0
      %v2801 = vadd.f32 %v2691, 1.0
      %v2802 = vadd.f32 %v2731, 1.0
      %v2803 = vadd.f32 %v2771, 1.0
      %v2804 = vmul.f32 %v1428, %v2772
      %v2805 = vmul.f32 %v1429, %v2773
      %v2806 = vmul.f32 %v1430, %v2774
      %v2807 = vmul.f32 %v1431, %v2775
      %v2808 = vmul.f32 %v1432, %v2776
      %v2809 = vmul.f32 %v1433, %v2777
      %v2810 = vmul.f32 %v1434, %v2778
      %v2811 = vmul.f32 %v1435, %v2779
      %v2812 = vmul.f32 %v1436, %v2780
      %v2813 = vmul.f32 %v1437, %v2781
      %v2814 = vmul.f32 %v1438, %v2782
      %v2815 = vmul.f32 %v1439, %v2783
      %v2816 = vmul.f32 %v1440, %v2784
      %v2817 = vmul.f32 %v1441, %v2785
      %v2818 = vmul.f32 %v1442, %v2786
      %v2819 = vmul.f32 %v1443, %v2787
      %v2820 = vmul.f32 %v1444, %v2788
      %v2821 = vmul.f32 %v1445, %v2789
      %v2822 = vmul.f32 %v1446, %v2790
      %v2823 = vmul.f32 %v1447, %v2791
      %v2824 = vmul.f32 %v1448, %v2792
      %v2825 = vmul.f32 %v1449, %v2793
      %v2826 = vmul.f32 %v1450, %v2794
      %v2827 = vmul.f32 %v1451, %v2795
      %v2828 = vmul.f32 %v1452, %v2796
      %v2829 = vmul.f32 %v1453, %v2797
      %v2830 = vmul.f32 %v1454, %v2798
      %v2831 = vmul.f32 %v1455, %v2799
      %v2832 = vmul.f32 %v1456, %v2800
      %v2833 = vmul.f32 %v1457, %v2801
      %v2834 = vmul.f32 %v1458, %v2802
      %v2835 = vmul.f32 %v1459, %v2803
      %v2836 = vld [vmem:[%s6] sm:$0xff]
      %v2837 = vld [vmem:[%s6 + $0x8] sm:$0xff]
      %v2838 = vld [vmem:[%s6 + $0x10] sm:$0xff]
      %v2839 = vld [vmem:[%s6 + $0x18] sm:$0xff]
      %v2840 = vld [vmem:[%s6 + $0x20] sm:$0xff]
      %v2841 = vld [vmem:[%s6 + $0x28] sm:$0xff]
      %v2842 = vld [vmem:[%s6 + $0x30] sm:$0xff]
      %v2843 = vld [vmem:[%s6 + $0x38] sm:$0xff]
      %v2844 = vld [vmem:[%s6 + $0x40] sm:$0xff]
      %v2845 = vld [vmem:[%s6 + $0x48] sm:$0xff]
      %v2846 = vld [vmem:[%s6 + $0x50] sm:$0xff]
      %v2847 = vld [vmem:[%s6 + $0x58] sm:$0xff]
      %v2848 = vld [vmem:[%s6 + $0x60] sm:$0xff]
      %v2849 = vld [vmem:[%s6 + $0x68] sm:$0xff]
      %v2850 = vld [vmem:[%s6 + $0x70] sm:$0xff]
      %v2851 = vld [vmem:[%s6 + $0x78] sm:$0xff]
      %v2852 = vld [vmem:[%s7] sm:$0x1]
      %v2854 = vperm.slane %v2852, 0
      %2856 = vmatpush.msra.mxu0 %v2851
      %2857 = vmatpush.msra.mxu0 %v2850
      %2858 = vmatpush.msra.mxu0 %v2849
      %2859 = vmatpush.msra.mxu0 %v2848
      %2860 = vmatpush.msra.mxu0 %v2847
      %2861 = vmatpush.msra.mxu0 %v2846
      %2862 = vmatpush.msra.mxu0 %v2845
      %2863 = vmatpush.msra.mxu0 %v2844
      %2864 = vmatpush.msra.mxu0 %v2843
      %2865 = vmatpush.msra.mxu0 %v2842
      %2866 = vmatpush.msra.mxu0 %v2841
      %2867 = vmatpush.msra.mxu0 %v2840
      %2868 = vmatpush.msra.mxu0 %v2839
      %2869 = vmatpush.msra.mxu0 %v2838
      %2870 = vmatpush.msra.mxu0 %v2837
      %2871 = vmatpush.msra.mxu0 %v2836
      %2872 = vmatmul.f32.gmra.mxu0 %v2804
      %v2873 = vpop.f32.mrf.mxu0
      %v2874 = vadd.f32 %v2854, %v2873
      %2875 = vmatmul.f32.gmra.mxu0 %v2805
      %v2876 = vpop.f32.mrf.mxu0
      %v2877 = vadd.f32 %v2854, %v2876
      %2878 = vmatmul.f32.gmra.mxu0 %v2806
      %v2879 = vpop.f32.mrf.mxu0
      %v2880 = vadd.f32 %v2854, %v2879
      %2881 = vmatmul.f32.gmra.mxu0 %v2807
      %v2882 = vpop.f32.mrf.mxu0
      %v2883 = vadd.f32 %v2854, %v2882
      %2884 = vmatmul.f32.gmra.mxu0 %v2808
      %v2885 = vpop.f32.mrf.mxu0
      %v2886 = vadd.f32 %v2854, %v2885
      %2887 = vmatmul.f32.gmra.mxu0 %v2809
      %v2888 = vpop.f32.mrf.mxu0
      %v2889 = vadd.f32 %v2854, %v2888
      %2890 = vmatmul.f32.gmra.mxu0 %v2810
      %v2891 = vpop.f32.mrf.mxu0
      %v2892 = vadd.f32 %v2854, %v2891
      %2893 = vmatmul.f32.gmra.mxu0 %v2811
      %v2894 = vpop.f32.mrf.mxu0
      %v2895 = vadd.f32 %v2854, %v2894
      %2896 = vmatmul.f32.gmra.mxu0 %v2812
      %v2897 = vpop.f32.mrf.mxu0
      %v2898 = vadd.f32 %v2854, %v2897
      %2899 = vmatmul.f32.gmra.mxu0 %v2813
      %v2900 = vpop.f32.mrf.mxu0
      %v2901 = vadd.f32 %v2854, %v2900
      %2902 = vmatmul.f32.gmra.mxu0 %v2814
      %v2903 = vpop.f32.mrf.mxu0
      %v2904 = vadd.f32 %v2854, %v2903
      %2905 = vmatmul.f32.gmra.mxu0 %v2815
      %v2906 = vpop.f32.mrf.mxu0
      %v2907 = vadd.f32 %v2854, %v2906
      %2908 = vmatmul.f32.gmra.mxu0 %v2816
      %v2909 = vpop.f32.mrf.mxu0
      %v2910 = vadd.f32 %v2854, %v2909
      %2911 = vmatmul.f32.gmra.mxu0 %v2817
      %v2912 = vpop.f32.mrf.mxu0
      %v2913 = vadd.f32 %v2854, %v2912
      %2914 = vmatmul.f32.gmra.mxu0 %v2818
      %v2915 = vpop.f32.mrf.mxu0
      %v2916 = vadd.f32 %v2854, %v2915
      %2917 = vmatmul.f32.gmra.mxu0 %v2819
      %v2918 = vpop.f32.mrf.mxu0
      %v2919 = vadd.f32 %v2854, %v2918
      %2920 = vmatmul.f32.gmra.mxu0 %v2820
      %v2921 = vpop.f32.mrf.mxu0
      %v2922 = vadd.f32 %v2854, %v2921
      %2923 = vmatmul.f32.gmra.mxu0 %v2821
      %v2924 = vpop.f32.mrf.mxu0
      %v2925 = vadd.f32 %v2854, %v2924
      %2926 = vmatmul.f32.gmra.mxu0 %v2822
      %v2927 = vpop.f32.mrf.mxu0
      %v2928 = vadd.f32 %v2854, %v2927
      %2929 = vmatmul.f32.gmra.mxu0 %v2823
      %v2930 = vpop.f32.mrf.mxu0
      %v2931 = vadd.f32 %v2854, %v2930
      %2932 = vmatmul.f32.gmra.mxu0 %v2824
      %v2933 = vpop.f32.mrf.mxu0
      %v2934 = vadd.f32 %v2854, %v2933
      %2935 = vmatmul.f32.gmra.mxu0 %v2825
      %v2936 = vpop.f32.mrf.mxu0
      %v2937 = vadd.f32 %v2854, %v2936
      %2938 = vmatmul.f32.gmra.mxu0 %v2826
      %v2939 = vpop.f32.mrf.mxu0
      %v2940 = vadd.f32 %v2854, %v2939
      %2941 = vmatmul.f32.gmra.mxu0 %v2827
      %v2942 = vpop.f32.mrf.mxu0
      %v2943 = vadd.f32 %v2854, %v2942
      %2944 = vmatmul.f32.gmra.mxu0 %v2828
      %v2945 = vpop.f32.mrf.mxu0
      %v2946 = vadd.f32 %v2854, %v2945
      %2947 = vmatmul.f32.gmra.mxu0 %v2829
      %v2948 = vpop.f32.mrf.mxu0
      %v2949 = vadd.f32 %v2854, %v2948
      %2950 = vmatmul.f32.gmra.mxu0 %v2830
      %v2951 = vpop.f32.mrf.mxu0
      %v2952 = vadd.f32 %v2854, %v2951
      %2953 = vmatmul.f32.gmra.mxu0 %v2831
      %v2954 = vpop.f32.mrf.mxu0
      %v2955 = vadd.f32 %v2854, %v2954
      %2956 = vmatmul.f32.gmra.mxu0 %v2832
      %v2957 = vpop.f32.mrf.mxu0
      %v2958 = vadd.f32 %v2854, %v2957
      %2959 = vmatmul.f32.gmra.mxu0 %v2833
      %v2960 = vpop.f32.mrf.mxu0
      %v2961 = vadd.f32 %v2854, %v2960
      %2962 = vmatmul.f32.gmra.mxu0 %v2834
      %v2963 = vpop.f32.mrf.mxu0
      %v2964 = vadd.f32 %v2854, %v2963
      %2965 = vmatmul.f32.gmra.mxu0 %v2835
      %v2966 = vpop.f32.mrf.mxu0
      %v2967 = vadd.f32 %v2854, %v2966
      %2968 = vdwg.mxu0
      %v2969 = vadd.f32 %v395, %v2874
      %v2970 = vadd.f32 %v396, %v2877
      %v2971 = vadd.f32 %v397, %v2880
      %v2972 = vadd.f32 %v398, %v2883
      %v2973 = vadd.f32 %v399, %v2886
      %v2974 = vadd.f32 %v400, %v2889
      %v2975 = vadd.f32 %v401, %v2892
      %v2976 = vadd.f32 %v402, %v2895
      %v2977 = vadd.f32 %v403, %v2898
      %v2978 = vadd.f32 %v404, %v2901
      %v2979 = vadd.f32 %v405, %v2904
      %v2980 = vadd.f32 %v406, %v2907
      %v2981 = vadd.f32 %v407, %v2910
      %v2982 = vadd.f32 %v408, %v2913
      %v2983 = vadd.f32 %v409, %v2916
      %v2984 = vadd.f32 %v410, %v2919
      %v2985 = vadd.f32 %v411, %v2922
      %v2986 = vadd.f32 %v412, %v2925
      %v2987 = vadd.f32 %v413, %v2928
      %v2988 = vadd.f32 %v414, %v2931
      %v2989 = vadd.f32 %v415, %v2934
      %v2990 = vadd.f32 %v416, %v2937
      %v2991 = vadd.f32 %v417, %v2940
      %v2992 = vadd.f32 %v418, %v2943
      %v2993 = vadd.f32 %v419, %v2946
      %v2994 = vadd.f32 %v420, %v2949
      %v2995 = vadd.f32 %v421, %v2952
      %v2996 = vadd.f32 %v422, %v2955
      %v2997 = vadd.f32 %v423, %v2958
      %v2998 = vadd.f32 %v424, %v2961
      %v2999 = vadd.f32 %v425, %v2964
      %v3000 = vadd.f32 %v426, %v2967
      %3001 = vst.msk [vmem:[%s329] sm:$0xff] %vm427, %v2969
      %3002 = vst.msk [vmem:[%s329 + $0x8] sm:$0xff] %vm427, %v2970
      %3003 = vst.msk [vmem:[%s329 + $0x10] sm:$0xff] %vm427, %v2971
      %3004 = vst.msk [vmem:[%s329 + $0x18] sm:$0xff] %vm427, %v2972
      %3005 = vst.msk [vmem:[%s329 + $0x20] sm:$0xff] %vm427, %v2973
      %3006 = vst.msk [vmem:[%s329 + $0x28] sm:$0xff] %vm427, %v2974
      %3007 = vst.msk [vmem:[%s329 + $0x30] sm:$0xff] %vm427, %v2975
      %3008 = vst.msk [vmem:[%s329 + $0x38] sm:$0xff] %vm427, %v2976
      %3009 = vst.msk [vmem:[%s329 + $0x40] sm:$0xff] %vm427, %v2977
      %3010 = vst.msk [vmem:[%s329 + $0x48] sm:$0xff] %vm427, %v2978
      %3011 = vst.msk [vmem:[%s329 + $0x50] sm:$0xff] %vm427, %v2979
      %3012 = vst.msk [vmem:[%s329 + $0x58] sm:$0xff] %vm427, %v2980
      %3013 = vst.msk [vmem:[%s329 + $0x60] sm:$0xff] %vm427, %v2981
      %3014 = vst.msk [vmem:[%s329 + $0x68] sm:$0xff] %vm427, %v2982
      %3015 = vst.msk [vmem:[%s329 + $0x70] sm:$0xff] %vm427, %v2983
      %3016 = vst.msk [vmem:[%s329 + $0x78] sm:$0xff] %vm427, %v2984
      %3017 = vst.msk [vmem:[%s329 + $0x80] sm:$0xff] %vm427, %v2985
      %3018 = vst.msk [vmem:[%s329 + $0x88] sm:$0xff] %vm427, %v2986
      %3019 = vst.msk [vmem:[%s329 + $0x90] sm:$0xff] %vm427, %v2987
      %3020 = vst.msk [vmem:[%s329 + $0x98] sm:$0xff] %vm427, %v2988
      %3021 = vst.msk [vmem:[%s329 + $0xa0] sm:$0xff] %vm427, %v2989
      %3022 = vst.msk [vmem:[%s329 + $0xa8] sm:$0xff] %vm427, %v2990
      %3023 = vst.msk [vmem:[%s329 + $0xb0] sm:$0xff] %vm427, %v2991
      %3024 = vst.msk [vmem:[%s329 + $0xb8] sm:$0xff] %vm427, %v2992
      %3025 = vst.msk [vmem:[%s329 + $0xc0] sm:$0xff] %vm427, %v2993
      %3026 = vst.msk [vmem:[%s329 + $0xc8] sm:$0xff] %vm427, %v2994
      %3027 = vst.msk [vmem:[%s329 + $0xd0] sm:$0xff] %vm427, %v2995
      %3028 = vst.msk [vmem:[%s329 + $0xd8] sm:$0xff] %vm427, %v2996
      %3029 = vst.msk [vmem:[%s329 + $0xe0] sm:$0xff] %vm427, %v2997
      %3030 = vst.msk [vmem:[%s329 + $0xe8] sm:$0xff] %vm427, %v2998
      %3031 = vst.msk [vmem:[%s329 + $0xf0] sm:$0xff] %vm427, %v2999
      %3032 = vst.msk [vmem:[%s329 + $0xf8] sm:$0xff] %vm427, %v3000
      %s3033 = smul.u32 32, %s19
      %p3034 = scmp.lt.s32.totalorder %s3033, 63
      %s3035 = scalar_select %p3034, %s3033, 63
      %s3036 = smul.addr %s3035, 8
      %s3037 = scalar_lea.vmem %s8, %s3036
      // Predicated region
      $region53: #{crf_block_forward.3} parent=51 // pred_check
        %p3038 = pneg %p215
      $region54: #{crf_block_forward.3} parent=51 // pred_check_branch
        %3040 = sbr.rel (%p3038) target = $region56
      $region55: #{crf_block_forward.3} parent=51 // pred_region
        %s3041 = smul.u32 32, %s19
      $region56: #{crf_block_forward.3} parent=51 // pred_fallthru
        _
    $region52: #{crf_block_forward.3} parent=5 // pred_fallthru
      _
    %p3042 = scmp.le.s32.totalorder 2, %s14
    // Predicated region
    $region57: #{crf_block_forward.3} parent=5 // pred_check
      %p3043 = pneg %p3042
    $region58: #{crf_block_forward.3} parent=5 // pred_check_branch
      %3045 = sbr.rel (%p3043) target = $region60
    $region59: #{crf_block_forward.3} parent=5 // pred_region
      %s3046 = ssub.s32 %s14, 2
      // Predicated region
      $region61: #{crf_block_forward.3} parent=59 // pred_check
        %p3047 = pneg %p221
      $region62: #{crf_block_forward.3} parent=59 // pred_check_branch
        %3049 = sbr.rel (%p3047) target = $region64
      $region63: #{crf_block_forward.3} parent=59 // pred_region
        %s3050 = smul.u32 32, %s20
        %p3051 = scmp.lt.s32.totalorder %s3050, 63
        %s3052 = scalar_select %p3051, %s3050, 63
        %s3053 = smul.addr %s3052, 8
        %s3054 = scalar_lea.vmem %s8, %s3053
      $region64: #{crf_block_forward.3} parent=59 // pred_fallthru
        _
    $region60: #{crf_block_forward.3} parent=5 // pred_fallthru
      _
  $region6: #{crf_block_forward.3} parent=0 // loop_footer
    %s18 = sadd.s32 1, %s14
  $region7: #{crf_block_forward.3} parent=0 // loop_footer_branch
    %13 = sbr.rel target = $region3
  $region8: #{crf_block_forward.3} parent=0 // loop_exit
    _

// kernel: crf_block_forward.2
$region0: #{crf_block_forward.2}
  #allocation0 [shape = 'u32[]', space=smem, size = 0x4, offset = 0x4, fixed_abs, tag = 'smem constant byte address 0x4 - core index']
  #allocation1 [shape = 'u32[72,128]{1,0:T(1,128)}', space=vmem, size = 0x9000, scoped, tag = 'internal scratch']
  #allocation2 [shape = 'f32[256,32]{1,0:T(8,128)}', space=vmem, size = 0x20000, scoped, tag = 'scratch operand']
  %s0 = inlined_call_operand.vmem [shape: f32[512,32], index: 0, kind: input, shape index: {}]
  %s1 = inlined_call_operand.vmem [shape: f32[512,32], index: 1, kind: input, shape index: {}]
  %s2 = inlined_call_operand.vmem [shape: f32[4,64,64], index: 2, kind: input, shape index: {}]
  %s3 = inlined_call_operand.vmem [shape: f32[1,32], index: 3, kind: input, shape index: {}]
  %s4 = inlined_call_operand.vmem [shape: f32[1,32], index: 4, kind: input, shape index: {}]
  %s5 = inlined_call_operand.vmem [shape: f32[32,64], index: 5, kind: input, shape index: {}]
  %s6 = inlined_call_operand.vmem [shape: f32[1,64], index: 6, kind: input, shape index: {}]
  %s7 = inlined_call_operand.vmem [shape: f32[32,32], index: 7, kind: input, shape index: {}]
  %s8 = inlined_call_operand.vmem [shape: f32[1,32], index: 8, kind: input, shape index: {}]
  %s9 = inlined_call_operand.vmem [shape: f32[512,32], index: 9, kind: output, shape index: {}]
  %s10 = sld [smem:[#allocation0]]
  $region69: #{crf_block_forward.2} parent=0
    _
  %s12 = ssub.s32 1, %s10
  %s13 = scalar_select 0, %s12, %s10
  loop: start=0, step=1, limit=4
  $region2: #{crf_block_forward.2} parent=0 // loop_pre_header
    _
  $region3: #{crf_block_forward.2} parent=0 // loop_header
    %s15 = sphi 0, %s19
    %p16 = scmp.ge.s32.totalorder %s15, 4
    %s25 = sphi 0, %s27
    %s28 = sphi 0, %s25
    %s29 = sphi 0, %s28
    %s45 = sphi 0, %s29
    %s51 = sphi 0, %s53
    %s54 = sphi 0, %s51
    %s55 = sphi 0, %s54
    %s71 = sphi 0, %s55
    %s75 = sphi 0, %s75
    %s77 = sphi 0, %s75
    %s78 = sphi 0, %s77
    %s92 = sphi 0, %s78
    %s96 = sphi 0, %s96
    %s98 = sphi 0, %s96
    %s99 = sphi 0, %s98
    %s113 = sphi 0, %s99
    %s117 = sphi 0, %s117
    %s119 = sphi 0, %s117
    %s120 = sphi 0, %s119
    %s134 = sphi 0, %s120
    %s138 = sphi 0, %s138
    %s140 = sphi 0, %s138
    %s141 = sphi 0, %s140
    %s155 = sphi 0, %s141
    %s159 = sphi 0, %s159
    %s161 = sphi 0, %s159
    %s162 = sphi 0, %s161
    %s176 = sphi 0, %s162
    %s180 = sphi 0, %s180
    %s182 = sphi 0, %s180
    %s183 = sphi 0, %s182
    %s197 = sphi 0, %s183
    %s201 = sphi 0, %s201
    %s203 = sphi 0, %s201
    %s204 = sphi 0, %s203
    %s218 = sphi 0, %s204
    %s224 = sphi 0, %s226
    %s227 = sphi 0, %s224
    %s228 = sphi 0, %s227
    %s244 = sphi 0, %s228
  $region4: #{crf_block_forward.2} parent=0 // loop_header_branch
    %18 = sbr.rel (%p16) target = $region8
  $region5: #{crf_block_forward.2} parent=0 // loop_body
    %s20 = ssub.s32 %s15, 1
    %s21 = ssub.s32 %s15, 2
    %s22 = sadd.s32 %s15, 1
    %s23 = ssub.s32 %s15, %s22
    %p24 = scmp.eq.s32.totalorder %s23, 0
    %s26 = sadd.s32 %s25, 1
    %s27 = scalar_select %p24, %s25, %s26
    %p30 = pneg %p24
    %p31 = scmp.eq.s32.totalorder %s15, 1
    %p32 = por %p30, %p31
    %p33 = scmp.ne.s32.totalorder %s25, %s28
    %p34 = scmp.eq.s32.totalorder %s15, 0
    %p35 = por %p33, %p34
    %p36 = scmp.ne.s32.totalorder %s25, %s28
    %p37 = scmp.eq.s32.totalorder %s20, 1
    %p38 = por %p36, %p37
    %p39 = scmp.ne.s32.totalorder %s28, %s29
    %p40 = scmp.eq.s32.totalorder %s20, 0
    %p41 = por %p39, %p40
    %p42 = scmp.ne.s32.totalorder %s28, %s29
    %p43 = scmp.eq.s32.totalorder %s21, 1
    %p44 = por %p42, %p43
    %p46 = scmp.ne.s32.totalorder %s29, %s45
    %p47 = scmp.eq.s32.totalorder %s21, 0
    %p48 = por %p46, %p47
    %s49 = ssub.s32 %s15, %s22
    %p50 = scmp.eq.s32.totalorder %s49, 0
    %s52 = sadd.s32 %s51, 1
    %s53 = scalar_select %p50, %s51, %s52
    %p56 = pneg %p50
    %p57 = scmp.eq.s32.totalorder %s15, 1
    %p58 = por %p56, %p57
    %p59 = scmp.ne.s32.totalorder %s51, %s54
    %p60 = scmp.eq.s32.totalorder %s15, 0
    %p61 = por %p59, %p60
    %p62 = scmp.ne.s32.totalorder %s51, %s54
    %p63 = scmp.eq.s32.totalorder %s20, 1
    %p64 = por %p62, %p63
    %p65 = scmp.ne.s32.totalorder %s54, %s55
    %p66 = scmp.eq.s32.totalorder %s20, 0
    %p67 = por %p65, %p66
    %p68 = scmp.ne.s32.totalorder %s54, %s55
    %p69 = scmp.eq.s32.totalorder %s21, 1
    %p70 = por %p68, %p69
    %p72 = scmp.ne.s32.totalorder %s55, %s71
    %p73 = scmp.eq.s32.totalorder %s21, 0
    %p74 = por %p72, %p73
    %s76 = sadd.s32 %s75, 1
    %p79 = scmp.eq.s32.totalorder %s15, 1
    %p80 = scmp.ne.s32.totalorder %s75, %s77
    %p81 = scmp.eq.s32.totalorder %s15, 0
    %p82 = por %p80, %p81
    %p83 = scmp.ne.s32.totalorder %s75, %s77
    %p84 = scmp.eq.s32.totalorder %s20, 1
    %p85 = por %p83, %p84
    %p86 = scmp.ne.s32.totalorder %s77, %s78
    %p87 = scmp.eq.s32.totalorder %s20, 0
    %p88 = por %p86, %p87
    %p89 = scmp.ne.s32.totalorder %s77, %s78
    %p90 = scmp.eq.s32.totalorder %s21, 1
    %p91 = por %p89, %p90
    %p93 = scmp.ne.s32.totalorder %s78, %s92
    %p94 = scmp.eq.s32.totalorder %s21, 0
    %p95 = por %p93, %p94
    %s97 = sadd.s32 %s96, 1
    %p100 = scmp.eq.s32.totalorder %s15, 1
    %p101 = scmp.ne.s32.totalorder %s96, %s98
    %p102 = scmp.eq.s32.totalorder %s15, 0
    %p103 = por %p101, %p102
    %p104 = scmp.ne.s32.totalorder %s96, %s98
    %p105 = scmp.eq.s32.totalorder %s20, 1
    %p106 = por %p104, %p105
    %p107 = scmp.ne.s32.totalorder %s98, %s99
    %p108 = scmp.eq.s32.totalorder %s20, 0
    %p109 = por %p107, %p108
    %p110 = scmp.ne.s32.totalorder %s98, %s99
    %p111 = scmp.eq.s32.totalorder %s21, 1
    %p112 = por %p110, %p111
    %p114 = scmp.ne.s32.totalorder %s99, %s113
    %p115 = scmp.eq.s32.totalorder %s21, 0
    %p116 = por %p114, %p115
    %s118 = sadd.s32 %s117, 1
    %p121 = scmp.eq.s32.totalorder %s15, 1
    %p122 = scmp.ne.s32.totalorder %s117, %s119
    %p123 = scmp.eq.s32.totalorder %s15, 0
    %p124 = por %p122, %p123
    %p125 = scmp.ne.s32.totalorder %s117, %s119
    %p126 = scmp.eq.s32.totalorder %s20, 1
    %p127 = por %p125, %p126
    %p128 = scmp.ne.s32.totalorder %s119, %s120
    %p129 = scmp.eq.s32.totalorder %s20, 0
    %p130 = por %p128, %p129
    %p131 = scmp.ne.s32.totalorder %s119, %s120
    %p132 = scmp.eq.s32.totalorder %s21, 1
    %p133 = por %p131, %p132
    %p135 = scmp.ne.s32.totalorder %s120, %s134
    %p136 = scmp.eq.s32.totalorder %s21, 0
    %p137 = por %p135, %p136
    %s139 = sadd.s32 %s138, 1
    %p142 = scmp.eq.s32.totalorder %s15, 1
    %p143 = scmp.ne.s32.totalorder %s138, %s140
    %p144 = scmp.eq.s32.totalorder %s15, 0
    %p145 = por %p143, %p144
    %p146 = scmp.ne.s32.totalorder %s138, %s140
    %p147 = scmp.eq.s32.totalorder %s20, 1
    %p148 = por %p146, %p147
    %p149 = scmp.ne.s32.totalorder %s140, %s141
    %p150 = scmp.eq.s32.totalorder %s20, 0
    %p151 = por %p149, %p150
    %p152 = scmp.ne.s32.totalorder %s140, %s141
    %p153 = scmp.eq.s32.totalorder %s21, 1
    %p154 = por %p152, %p153
    %p156 = scmp.ne.s32.totalorder %s141, %s155
    %p157 = scmp.eq.s32.totalorder %s21, 0
    %p158 = por %p156, %p157
    %s160 = sadd.s32 %s159, 1
    %p163 = scmp.eq.s32.totalorder %s15, 1
    %p164 = scmp.ne.s32.totalorder %s159, %s161
    %p165 = scmp.eq.s32.totalorder %s15, 0
    %p166 = por %p164, %p165
    %p167 = scmp.ne.s32.totalorder %s159, %s161
    %p168 = scmp.eq.s32.totalorder %s20, 1
    %p169 = por %p167, %p168
    %p170 = scmp.ne.s32.totalorder %s161, %s162
    %p171 = scmp.eq.s32.totalorder %s20, 0
    %p172 = por %p170, %p171
    %p173 = scmp.ne.s32.totalorder %s161, %s162
    %p174 = scmp.eq.s32.totalorder %s21, 1
    %p175 = por %p173, %p174
    %p177 = scmp.ne.s32.totalorder %s162, %s176
    %p178 = scmp.eq.s32.totalorder %s21, 0
    %p179 = por %p177, %p178
    %s181 = sadd.s32 %s180, 1
    %p184 = scmp.eq.s32.totalorder %s15, 1
    %p185 = scmp.ne.s32.totalorder %s180, %s182
    %p186 = scmp.eq.s32.totalorder %s15, 0
    %p187 = por %p185, %p186
    %p188 = scmp.ne.s32.totalorder %s180, %s182
    %p189 = scmp.eq.s32.totalorder %s20, 1
    %p190 = por %p188, %p189
    %p191 = scmp.ne.s32.totalorder %s182, %s183
    %p192 = scmp.eq.s32.totalorder %s20, 0
    %p193 = por %p191, %p192
    %p194 = scmp.ne.s32.totalorder %s182, %s183
    %p195 = scmp.eq.s32.totalorder %s21, 1
    %p196 = por %p194, %p195
    %p198 = scmp.ne.s32.totalorder %s183, %s197
    %p199 = scmp.eq.s32.totalorder %s21, 0
    %p200 = por %p198, %p199
    %s202 = sadd.s32 %s201, 1
    %p205 = scmp.eq.s32.totalorder %s15, 1
    %p206 = scmp.ne.s32.totalorder %s201, %s203
    %p207 = scmp.eq.s32.totalorder %s15, 0
    %p208 = por %p206, %p207
    %p209 = scmp.ne.s32.totalorder %s201, %s203
    %p210 = scmp.eq.s32.totalorder %s20, 1
    %p211 = por %p209, %p210
    %p212 = scmp.ne.s32.totalorder %s203, %s204
    %p213 = scmp.eq.s32.totalorder %s20, 0
    %p214 = por %p212, %p213
    %p215 = scmp.ne.s32.totalorder %s203, %s204
    %p216 = scmp.eq.s32.totalorder %s21, 1
    %p217 = por %p215, %p216
    %p219 = scmp.ne.s32.totalorder %s204, %s218
    %p220 = scmp.eq.s32.totalorder %s21, 0
    %p221 = por %p219, %p220
    %s222 = ssub.s32 %s15, %s22
    %p223 = scmp.eq.s32.totalorder %s222, 0
    %s225 = sadd.s32 %s224, 1
    %s226 = scalar_select %p223, %s224, %s225
    %p229 = pneg %p223
    %p230 = scmp.eq.s32.totalorder %s15, 1
    %p231 = por %p229, %p230
    %p232 = scmp.ne.s32.totalorder %s224, %s227
    %p233 = scmp.eq.s32.totalorder %s15, 0
    %p234 = por %p232, %p233
    %p235 = scmp.ne.s32.totalorder %s224, %s227
    %p236 = scmp.eq.s32.totalorder %s20, 1
    %p237 = por %p235, %p236
    %p238 = scmp.ne.s32.totalorder %s227, %s228
    %p239 = scmp.eq.s32.totalorder %s20, 0
    %p240 = por %p238, %p239
    %p241 = scmp.ne.s32.totalorder %s227, %s228
    %p242 = scmp.eq.s32.totalorder %s21, 1
    %p243 = por %p241, %p242
    %p245 = scmp.ne.s32.totalorder %s228, %s244
    %p246 = scmp.eq.s32.totalorder %s21, 0
    %p247 = por %p245, %p246
    %p248 = scmp.le.s32.totalorder 1, %s15
    %p249 = scmp.lt.s32.totalorder %s15, 3
    %p250 = pnand %p248, %p249
    %p251 = pneg %p250
    // Predicated region
    $region9: #{crf_block_forward.2} parent=5 // pred_check
      _
    $region10: #{crf_block_forward.2} parent=5 // pred_check_branch
      %253 = sbr.rel (%p250) target = $region12
    $region11: #{crf_block_forward.2} parent=5 // pred_region
      %s254 = ssub.s32 %s15, 1
      // Predicated region
      $region13: #{crf_block_forward.2} parent=11 // pred_check
        %p255 = pneg %p88
      $region14: #{crf_block_forward.2} parent=11 // pred_check_branch
        %257 = sbr.rel (%p255) target = $region16
      $region15: #{crf_block_forward.2} parent=11 // pred_region
        _
      $region16: #{crf_block_forward.2} parent=11 // pred_fallthru
        _
      // Predicated region
      $region17: #{crf_block_forward.2} parent=11 // pred_check
        %p258 = pneg %p109
      $region18: #{crf_block_forward.2} parent=11 // pred_check_branch
        %260 = sbr.rel (%p258) target = $region20
      $region19: #{crf_block_forward.2} parent=11 // pred_region
        _
      $region20: #{crf_block_forward.2} parent=11 // pred_fallthru
        _
      // Predicated region
      $region21: #{crf_block_forward.2} parent=11 // pred_check
        %p261 = pneg %p130
      $region22: #{crf_block_forward.2} parent=11 // pred_check_branch
        %263 = sbr.rel (%p261) target = $region24
      $region23: #{crf_block_forward.2} parent=11 // pred_region
        _
      $region24: #{crf_block_forward.2} parent=11 // pred_fallthru
        _
      // Predicated region
      $region25: #{crf_block_forward.2} parent=11 // pred_check
        %p264 = pneg %p151
      $region26: #{crf_block_forward.2} parent=11 // pred_check_branch
        %266 = sbr.rel (%p264) target = $region28
      $region27: #{crf_block_forward.2} parent=11 // pred_region
        _
      $region28: #{crf_block_forward.2} parent=11 // pred_fallthru
        _
      // Predicated region
      $region29: #{crf_block_forward.2} parent=11 // pred_check
        %p267 = pneg %p172
      $region30: #{crf_block_forward.2} parent=11 // pred_check_branch
        %269 = sbr.rel (%p267) target = $region32
      $region31: #{crf_block_forward.2} parent=11 // pred_region
        _
      $region32: #{crf_block_forward.2} parent=11 // pred_fallthru
        _
      // Predicated region
      $region33: #{crf_block_forward.2} parent=11 // pred_check
        %p270 = pneg %p193
      $region34: #{crf_block_forward.2} parent=11 // pred_check_branch
        %272 = sbr.rel (%p270) target = $region36
      $region35: #{crf_block_forward.2} parent=11 // pred_region
        _
      $region36: #{crf_block_forward.2} parent=11 // pred_fallthru
        _
      // Predicated region
      $region37: #{crf_block_forward.2} parent=11 // pred_check
        %p273 = pneg %p214
      $region38: #{crf_block_forward.2} parent=11 // pred_check_branch
        %275 = sbr.rel (%p273) target = $region40
      $region39: #{crf_block_forward.2} parent=11 // pred_region
        _
      $region40: #{crf_block_forward.2} parent=11 // pred_fallthru
        _
    $region12: #{crf_block_forward.2} parent=5 // pred_fallthru
      _
    %p276 = scmp.lt.s32.totalorder %s15, 2
    // Predicated region
    $region41: #{crf_block_forward.2} parent=5 // pred_check
      %p277 = pneg %p276
    $region42: #{crf_block_forward.2} parent=5 // pred_check_branch
      %279 = sbr.rel (%p277) target = $region44
    $region43: #{crf_block_forward.2} parent=5 // pred_region
      // Predicated region
      $region45: #{crf_block_forward.2} parent=43 // pred_check
        %p280 = pneg %p35
      $region46: #{crf_block_forward.2} parent=43 // pred_check_branch
        %282 = sbr.rel (%p280) target = $region48
      $region47: #{crf_block_forward.2} parent=43 // pred_region
        %s283 = smul.u32 32, %s15
        %p284 = scmp.lt.s32.totalorder %s283, 63
        %s285 = scalar_select %p284, %s283, 63
        %s286 = smul.addr %s285, 8
        %s287 = scalar_lea.vmem %s0, %s286
        %s288 = smul.u32 32, %s15
      $region48: #{crf_block_forward.2} parent=43 // pred_fallthru
        _
      // Predicated region
      $region49: #{crf_block_forward.2} parent=43 // pred_check
        %p289 = pneg %p61
      $region50: #{crf_block_forward.2} parent=43 // pred_check_branch
        %291 = sbr.rel (%p289) target = $region52
      $region51: #{crf_block_forward.2} parent=43 // pred_region
        %s292 = smul.u32 32, %s15
        %p293 = scmp.lt.s32.totalorder %s292, 63
        %s294 = scalar_select %p293, %s292, 63
        %s295 = smul.addr %s294, 8
        %s296 = scalar_lea.vmem %s1, %s295
        %s297 = smul.u32 32, %s15
      $region52: #{crf_block_forward.2} parent=43 // pred_fallthru
        _
    $region44: #{crf_block_forward.2} parent=5 // pred_fallthru
      _
    %p298 = scmp.le.s32.totalorder 1, %s15
    %p299 = scmp.lt.s32.totalorder %s15, 3
    %p300 = pnand %p298, %p299
    %p301 = pneg %p300
    // Predicated region
    $region53: #{crf_block_forward.2} parent=5 // pred_check
      _
    $region54: #{crf_block_forward.2} parent=5 // pred_check_branch
      %303 = sbr.rel (%p300) target = $region56
    $region55: #{crf_block_forward.2} parent=5 // pred_region
      %s304 = ssub.s32 %s15, 1
      %s305 = smul.u32 32, %s20
      %p306 = scmp.lt.s32.totalorder %s305, 63
      %s307 = scalar_select %p306, %s305, 63
      %s308 = smul.addr %s307, 8
      %s309 = scalar_lea.vmem %s0, %s308
      %p310 = pneg %p41
      %p311 = pneg %p38
      %s312 = smul.u32 32, %s20
      %p313 = scmp.lt.s32.totalorder %s312, 63
      %s314 = scalar_select %p313, %s312, 63
      %s315 = smul.addr %s314, 8
      %s316 = scalar_lea.vmem %s1, %s315
      %p317 = pneg %p67
      %p318 = pneg %p64
      %p319 = pneg %p88
      %p320 = pneg %p85
      %p321 = pneg %p109
      %p322 = pneg %p106
      %p323 = pneg %p130
      %p324 = pneg %p127
      %p325 = pneg %p151
      %p326 = pneg %p148
      %p327 = pneg %p172
      %p328 = pneg %p169
      %p329 = pneg %p193
      %p330 = pneg %p190
      %p331 = pneg %p214
      %p332 = pneg %p211
      %p333 = pneg %p240
      %p334 = pneg %p237
      %s335 = smul.u32 32, %s20
      %p336 = scmp.lt.s32.totalorder %s335, 63
      %s337 = scalar_select %p336, %s335, 63
      %s338 = smul.addr %s337, 8
      %s339 = scalar_lea.vmem %s9, %s338
      %s340 = smul.u32 32, %s20
      %p341 = scmp.lt.s32.totalorder %s340, 63
      %s342 = scalar_select %p341, %s340, 63
      %s343 = smul.addr %s342, 8
      %s344 = scalar_lea.vmem %s0, %s343
      %s345 = smul.u32 32, %s20
      %s346 = smul.u32 32, %s20
      %p347 = scmp.lt.s32.totalorder %s346, 63
      %s348 = scalar_select %p347, %s346, 63
      %s349 = smul.addr %s348, 8
      %s350 = scalar_lea.vmem %s1, %s349
      %s351 = smul.u32 32, %s20
      %s352 = smul.u32 32, %s20
      %p353 = scmp.lt.s32.totalorder %s352, 63
      %s354 = scalar_select %p353, %s352, 63
      %s355 = smul.addr %s354, 8
      %s356 = scalar_lea.vmem %s9, %s355
      %s357 = smul.u32 32, %s20
      %v358 = vld [vmem:[%s344] sm:$0xff]
      %v359 = vld [vmem:[%s344 + $0x8] sm:$0xff]
      %v360 = vld [vmem:[%s344 + $0x10] sm:$0xff]
      %v361 = vld [vmem:[%s344 + $0x18] sm:$0xff]
      %v362 = vld [vmem:[%s344 + $0x20] sm:$0xff]
      %v363 = vld [vmem:[%s344 + $0x28] sm:$0xff]
      %v364 = vld [vmem:[%s344 + $0x30] sm:$0xff]
      %v365 = vld [vmem:[%s344 + $0x38] sm:$0xff]
      %v366 = vld [vmem:[%s344 + $0x40] sm:$0xff]
      %v367 = vld [vmem:[%s344 + $0x48] sm:$0xff]
      %v368 = vld [vmem:[%s344 + $0x50] sm:$0xff]
      %v369 = vld [vmem:[%s344 + $0x58] sm:$0xff]
      %v370 = vld [vmem:[%s344 + $0x60] sm:$0xff]
      %v371 = vld [vmem:[%s344 + $0x68] sm:$0xff]
      %v372 = vld [vmem:[%s344 + $0x70] sm:$0xff]
      %v373 = vld [vmem:[%s344 + $0x78] sm:$0xff]
      %v374 = vld [vmem:[%s344 + $0x80] sm:$0xff]
      %v375 = vld [vmem:[%s344 + $0x88] sm:$0xff]
      %v376 = vld [vmem:[%s344 + $0x90] sm:$0xff]
      %v377 = vld [vmem:[%s344 + $0x98] sm:$0xff]
      %v378 = vld [vmem:[%s344 + $0xa0] sm:$0xff]
      %v379 = vld [vmem:[%s344 + $0xa8] sm:$0xff]
      %v380 = vld [vmem:[%s344 + $0xb0] sm:$0xff]
      %v381 = vld [vmem:[%s344 + $0xb8] sm:$0xff]
      %v382 = vld [vmem:[%s344 + $0xc0] sm:$0xff]
      %v383 = vld [vmem:[%s344 + $0xc8] sm:$0xff]
      %v384 = vld [vmem:[%s344 + $0xd0] sm:$0xff]
      %v385 = vld [vmem:[%s344 + $0xd8] sm:$0xff]
      %v386 = vld [vmem:[%s344 + $0xe0] sm:$0xff]
      %v387 = vld [vmem:[%s344 + $0xe8] sm:$0xff]
      %v388 = vld [vmem:[%s344 + $0xf0] sm:$0xff]
      %v389 = vld [vmem:[%s344 + $0xf8] sm:$0xff]
      %vm390 = vcmask 261120
      %v391 = vsel %vm390, %v358, 0.0
      %392 = vadd.xlane.f32.xlu0 %v391
      %v393 = vpop.xlane.xlu0 %392
      %v394 = vsel %vm390, %v359, 0.0
      %395 = vadd.xlane.f32.xlu0 %v394
      %v396 = vpop.xlane.xlu0 %395
      %v397 = vsel %vm390, %v360, 0.0
      %398 = vadd.xlane.f32.xlu0 %v397
      %v399 = vpop.xlane.xlu0 %398
      %v400 = vsel %vm390, %v361, 0.0
      %401 = vadd.xlane.f32.xlu0 %v400
      %v402 = vpop.xlane.xlu0 %401
      %v403 = vsel %vm390, %v362, 0.0
      %404 = vadd.xlane.f32.xlu0 %v403
      %v405 = vpop.xlane.xlu0 %404
      %v406 = vsel %vm390, %v363, 0.0
      %407 = vadd.xlane.f32.xlu0 %v406
      %v408 = vpop.xlane.xlu0 %407
      %v409 = vsel %vm390, %v364, 0.0
      %410 = vadd.xlane.f32.xlu0 %v409
      %v411 = vpop.xlane.xlu0 %410
      %v412 = vsel %vm390, %v365, 0.0
      %413 = vadd.xlane.f32.xlu0 %v412
      %v414 = vpop.xlane.xlu0 %413
      %v415 = vsel %vm390, %v366, 0.0
      %416 = vadd.xlane.f32.xlu0 %v415
      %v417 = vpop.xlane.xlu0 %416
      %v418 = vsel %vm390, %v367, 0.0
      %419 = vadd.xlane.f32.xlu0 %v418
      %v420 = vpop.xlane.xlu0 %419
      %v421 = vsel %vm390, %v368, 0.0
      %422 = vadd.xlane.f32.xlu0 %v421
      %v423 = vpop.xlane.xlu0 %422
      %v424 = vsel %vm390, %v369, 0.0
      %425 = vadd.xlane.f32.xlu0 %v424
      %v426 = vpop.xlane.xlu0 %425
      %v427 = vsel %vm390, %v370, 0.0
      %428 = vadd.xlane.f32.xlu0 %v427
      %v429 = vpop.xlane.xlu0 %428
      %v430 = vsel %vm390, %v371, 0.0
      %431 = vadd.xlane.f32.xlu0 %v430
      %v432 = vpop.xlane.xlu0 %431
      %v433 = vsel %vm390, %v372, 0.0
      %434 = vadd.xlane.f32.xlu0 %v433
      %v435 = vpop.xlane.xlu0 %434
      %v436 = vsel %vm390, %v373, 0.0
      %437 = vadd.xlane.f32.xlu0 %v436
      %v438 = vpop.xlane.xlu0 %437
      %v439 = vsel %vm390, %v374, 0.0
      %440 = vadd.xlane.f32.xlu0 %v439
      %v441 = vpop.xlane.xlu0 %440
      %v442 = vsel %vm390, %v375, 0.0
      %443 = vadd.xlane.f32.xlu0 %v442
      %v444 = vpop.xlane.xlu0 %443
      %v445 = vsel %vm390, %v376, 0.0
      %446 = vadd.xlane.f32.xlu0 %v445
      %v447 = vpop.xlane.xlu0 %446
      %v448 = vsel %vm390, %v377, 0.0
      %449 = vadd.xlane.f32.xlu0 %v448
      %v450 = vpop.xlane.xlu0 %449
      %v451 = vsel %vm390, %v378, 0.0
      %452 = vadd.xlane.f32.xlu0 %v451
      %v453 = vpop.xlane.xlu0 %452
      %v454 = vsel %vm390, %v379, 0.0
      %455 = vadd.xlane.f32.xlu0 %v454
      %v456 = vpop.xlane.xlu0 %455
      %v457 = vsel %vm390, %v380, 0.0
      %458 = vadd.xlane.f32.xlu0 %v457
      %v459 = vpop.xlane.xlu0 %458
      %v460 = vsel %vm390, %v381, 0.0
      %461 = vadd.xlane.f32.xlu0 %v460
      %v462 = vpop.xlane.xlu0 %461
      %v463 = vsel %vm390, %v382, 0.0
      %464 = vadd.xlane.f32.xlu0 %v463
      %v465 = vpop.xlane.xlu0 %464
      %v466 = vsel %vm390, %v383, 0.0
      %467 = vadd.xlane.f32.xlu0 %v466
      %v468 = vpop.xlane.xlu0 %467
      %v469 = vsel %vm390, %v384, 0.0
      %470 = vadd.xlane.f32.xlu0 %v469
      %v471 = vpop.xlane.xlu0 %470
      %v472 = vsel %vm390, %v385, 0.0
      %473 = vadd.xlane.f32.xlu0 %v472
      %v474 = vpop.xlane.xlu0 %473
      %v475 = vsel %vm390, %v386, 0.0
      %476 = vadd.xlane.f32.xlu0 %v475
      %v477 = vpop.xlane.xlu0 %476
      %v478 = vsel %vm390, %v387, 0.0
      %479 = vadd.xlane.f32.xlu0 %v478
      %v480 = vpop.xlane.xlu0 %479
      %v481 = vsel %vm390, %v388, 0.0
      %482 = vadd.xlane.f32.xlu0 %v481
      %v483 = vpop.xlane.xlu0 %482
      %v484 = vsel %vm390, %v389, 0.0
      %485 = vadd.xlane.f32.xlu0 %v484
      %v486 = vpop.xlane.xlu0 %485
      %v487 = vrcp.pop 32.0
      %v488 = vmul.f32 32.0, %v487
      %v489 = vsub.f32 1.0, %v488
      %v490 = vmul.f32 %v487, %v489
      %v491 = vadd.f32 %v487, %v490
      %vm492 = vweird.f32 %v487
      %v493 = vsel %vm492, %v487, %v491
      %v494 = vmul.f32 %v393, %v493
      %v495 = vmul.f32 %v396, %v493
      %v496 = vmul.f32 %v399, %v493
      %v497 = vmul.f32 %v402, %v493
      %v498 = vmul.f32 %v405, %v493
      %v499 = vmul.f32 %v408, %v493
      %v500 = vmul.f32 %v411, %v493
      %v501 = vmul.f32 %v414, %v493
      %v502 = vmul.f32 %v417, %v493
      %v503 = vmul.f32 %v420, %v493
      %v504 = vmul.f32 %v423, %v493
      %v505 = vmul.f32 %v426, %v493
      %v506 = vmul.f32 %v429, %v493
      %v507 = vmul.f32 %v432, %v493
      %v508 = vmul.f32 %v435, %v493
      %v509 = vmul.f32 %v438, %v493
      %v510 = vmul.f32 %v441, %v493
      %v511 = vmul.f32 %v444, %v493
      %v512 = vmul.f32 %v447, %v493
      %v513 = vmul.f32 %v450, %v493
      %v514 = vmul.f32 %v453, %v493
      %v515 = vmul.f32 %v456, %v493
      %v516 = vmul.f32 %v459, %v493
      %v517 = vmul.f32 %v462, %v493
      %v518 = vmul.f32 %v465, %v493
      %v519 = vmul.f32 %v468, %v493
      %v520 = vmul.f32 %v471, %v493
      %v521 = vmul.f32 %v474, %v493
      %v522 = vmul.f32 %v477, %v493
      %v523 = vmul.f32 %v480, %v493
      %v524 = vmul.f32 %v483, %v493
      %v525 = vmul.f32 %v486, %v493
      %v526 = vsub.f32 %v358, %v494
      %v527 = vsub.f32 %v359, %v495
      %v528 = vsub.f32 %v360, %v496
      %v529 = vsub.f32 %v361, %v497
      %v530 = vsub.f32 %v362, %v498
      %v531 = vsub.f32 %v363, %v499
      %v532 = vsub.f32 %v364, %v500
      %v533 = vsub.f32 %v365, %v501
      %v534 = vsub.f32 %v366, %v502
      %v535 = vsub.f32 %v367, %v503
      %v536 = vsub.f32 %v368, %v504
      %v537 = vsub.f32 %v369, %v505
      %v538 = vsub.f32 %v370, %v506
      %v539 = vsub.f32 %v371, %v507
      %v540 = vsub.f32 %v372, %v508
      %v541 = vsub.f32 %v373, %v509
      %v542 = vsub.f32 %v374, %v510
      %v543 = vsub.f32 %v375, %v511
      %v544 = vsub.f32 %v376, %v512
      %v545 = vsub.f32 %v377, %v513
      %v546 = vsub.f32 %v378, %v514
      %v547 = vsub.f32 %v379, %v515
      %v548 = vsub.f32 %v380, %v516
      %v549 = vsub.f32 %v381, %v517
      %v550 = vsub.f32 %v382, %v518
      %v551 = vsub.f32 %v383, %v519
      %v552 = vsub.f32 %v384, %v520
      %v553 = vsub.f32 %v385, %v521
      %v554 = vsub.f32 %v386, %v522
      %v555 = vsub.f32 %v387, %v523
      %v556 = vsub.f32 %v388, %v524
      %v557 = vsub.f32 %v389, %v525
      %v558 = vmul.f32 %v526, %v526
      %v559 = vmul.f32 %v527, %v527
      %v560 = vmul.f32 %v528, %v528
      %v561 = vmul.f32 %v529, %v529
      %v562 = vmul.f32 %v530, %v530
      %v563 = vmul.f32 %v531, %v531
      %v564 = vmul.f32 %v532, %v532
      %v565 = vmul.f32 %v533, %v533
      %v566 = vmul.f32 %v534, %v534
      %v567 = vmul.f32 %v535, %v535
      %v568 = vmul.f32 %v536, %v536
      %v569 = vmul.f32 %v537, %v537
      %v570 = vmul.f32 %v538, %v538
      %v571 = vmul.f32 %v539, %v539
      %v572 = vmul.f32 %v540, %v540
      %v573 = vmul.f32 %v541, %v541
      %v574 = vmul.f32 %v542, %v542
      %v575 = vmul.f32 %v543, %v543
      %v576 = vmul.f32 %v544, %v544
      %v577 = vmul.f32 %v545, %v545
      %v578 = vmul.f32 %v546, %v546
      %v579 = vmul.f32 %v547, %v547
      %v580 = vmul.f32 %v548, %v548
      %v581 = vmul.f32 %v549, %v549
      %v582 = vmul.f32 %v550, %v550
      %v583 = vmul.f32 %v551, %v551
      %v584 = vmul.f32 %v552, %v552
      %v585 = vmul.f32 %v553, %v553
      %v586 = vmul.f32 %v554, %v554
      %v587 = vmul.f32 %v555, %v555
      %v588 = vmul.f32 %v556, %v556
      %v589 = vmul.f32 %v557, %v557
      %v590 = vsel %vm390, %v558, 0.0
      %591 = vadd.xlane.f32.xlu0 %v590
      %v592 = vpop.xlane.xlu0 %591
      %v593 = vsel %vm390, %v559, 0.0
      %594 = vadd.xlane.f32.xlu0 %v593
      %v595 = vpop.xlane.xlu0 %594
      %v596 = vsel %vm390, %v560, 0.0
      %597 = vadd.xlane.f32.xlu0 %v596
      %v598 = vpop.xlane.xlu0 %597
      %v599 = vsel %vm390, %v561, 0.0
      %600 = vadd.xlane.f32.xlu0 %v599
      %v601 = vpop.xlane.xlu0 %600
      %v602 = vsel %vm390, %v562, 0.0
      %603 = vadd.xlane.f32.xlu0 %v602
      %v604 = vpop.xlane.xlu0 %603
      %v605 = vsel %vm390, %v563, 0.0
      %606 = vadd.xlane.f32.xlu0 %v605
      %v607 = vpop.xlane.xlu0 %606
      %v608 = vsel %vm390, %v564, 0.0
      %609 = vadd.xlane.f32.xlu0 %v608
      %v610 = vpop.xlane.xlu0 %609
      %v611 = vsel %vm390, %v565, 0.0
      %612 = vadd.xlane.f32.xlu0 %v611
      %v613 = vpop.xlane.xlu0 %612
      %v614 = vsel %vm390, %v566, 0.0
      %615 = vadd.xlane.f32.xlu0 %v614
      %v616 = vpop.xlane.xlu0 %615
      %v617 = vsel %vm390, %v567, 0.0
      %618 = vadd.xlane.f32.xlu0 %v617
      %v619 = vpop.xlane.xlu0 %618
      %v620 = vsel %vm390, %v568, 0.0
      %621 = vadd.xlane.f32.xlu0 %v620
      %v622 = vpop.xlane.xlu0 %621
      %v623 = vsel %vm390, %v569, 0.0
      %624 = vadd.xlane.f32.xlu0 %v623
      %v625 = vpop.xlane.xlu0 %624
      %v626 = vsel %vm390, %v570, 0.0
      %627 = vadd.xlane.f32.xlu0 %v626
      %v628 = vpop.xlane.xlu0 %627
      %v629 = vsel %vm390, %v571, 0.0
      %630 = vadd.xlane.f32.xlu0 %v629
      %v631 = vpop.xlane.xlu0 %630
      %v632 = vsel %vm390, %v572, 0.0
      %633 = vadd.xlane.f32.xlu0 %v632
      %v634 = vpop.xlane.xlu0 %633
      %v635 = vsel %vm390, %v573, 0.0
      %636 = vadd.xlane.f32.xlu0 %v635
      %v637 = vpop.xlane.xlu0 %636
      %v638 = vsel %vm390, %v574, 0.0
      %639 = vadd.xlane.f32.xlu0 %v638
      %v640 = vpop.xlane.xlu0 %639
      %v641 = vsel %vm390, %v575, 0.0
      %642 = vadd.xlane.f32.xlu0 %v641
      %v643 = vpop.xlane.xlu0 %642
      %v644 = vsel %vm390, %v576, 0.0
      %645 = vadd.xlane.f32.xlu0 %v644
      %v646 = vpop.xlane.xlu0 %645
      %v647 = vsel %vm390, %v577, 0.0
      %648 = vadd.xlane.f32.xlu0 %v647
      %v649 = vpop.xlane.xlu0 %648
      %v650 = vsel %vm390, %v578, 0.0
      %651 = vadd.xlane.f32.xlu0 %v650
      %v652 = vpop.xlane.xlu0 %651
      %v653 = vsel %vm390, %v579, 0.0
      %654 = vadd.xlane.f32.xlu0 %v653
      %v655 = vpop.xlane.xlu0 %654
      %v656 = vsel %vm390, %v580, 0.0
      %657 = vadd.xlane.f32.xlu0 %v656
      %v658 = vpop.xlane.xlu0 %657
      %v659 = vsel %vm390, %v581, 0.0
      %660 = vadd.xlane.f32.xlu0 %v659
      %v661 = vpop.xlane.xlu0 %660
      %v662 = vsel %vm390, %v582, 0.0
      %663 = vadd.xlane.f32.xlu0 %v662
      %v664 = vpop.xlane.xlu0 %663
      %v665 = vsel %vm390, %v583, 0.0
      %666 = vadd.xlane.f32.xlu0 %v665
      %v667 = vpop.xlane.xlu0 %666
      %v668 = vsel %vm390, %v584, 0.0
      %669 = vadd.xlane.f32.xlu0 %v668
      %v670 = vpop.xlane.xlu0 %669
      %v671 = vsel %vm390, %v585, 0.0
      %672 = vadd.xlane.f32.xlu0 %v671
      %v673 = vpop.xlane.xlu0 %672
      %v674 = vsel %vm390, %v586, 0.0
      %675 = vadd.xlane.f32.xlu0 %v674
      %v676 = vpop.xlane.xlu0 %675
      %v677 = vsel %vm390, %v587, 0.0
      %678 = vadd.xlane.f32.xlu0 %v677
      %v679 = vpop.xlane.xlu0 %678
      %v680 = vsel %vm390, %v588, 0.0
      %681 = vadd.xlane.f32.xlu0 %v680
      %v682 = vpop.xlane.xlu0 %681
      %v683 = vsel %vm390, %v589, 0.0
      %684 = vadd.xlane.f32.xlu0 %v683
      %v685 = vpop.xlane.xlu0 %684
      %v686 = vmul.f32 %v592, %v493
      %v687 = vmul.f32 %v595, %v493
      %v688 = vmul.f32 %v598, %v493
      %v689 = vmul.f32 %v601, %v493
      %v690 = vmul.f32 %v604, %v493
      %v691 = vmul.f32 %v607, %v493
      %v692 = vmul.f32 %v610, %v493
      %v693 = vmul.f32 %v613, %v493
      %v694 = vmul.f32 %v616, %v493
      %v695 = vmul.f32 %v619, %v493
      %v696 = vmul.f32 %v622, %v493
      %v697 = vmul.f32 %v625, %v493
      %v698 = vmul.f32 %v628, %v493
      %v699 = vmul.f32 %v631, %v493
      %v700 = vmul.f32 %v634, %v493
      %v701 = vmul.f32 %v637, %v493
      %v702 = vmul.f32 %v640, %v493
      %v703 = vmul.f32 %v643, %v493
      %v704 = vmul.f32 %v646, %v493
      %v705 = vmul.f32 %v649, %v493
      %v706 = vmul.f32 %v652, %v493
      %v707 = vmul.f32 %v655, %v493
      %v708 = vmul.f32 %v658, %v493
      %v709 = vmul.f32 %v661, %v493
      %v710 = vmul.f32 %v664, %v493
      %v711 = vmul.f32 %v667, %v493
      %v712 = vmul.f32 %v670, %v493
      %v713 = vmul.f32 %v673, %v493
      %v714 = vmul.f32 %v676, %v493
      %v715 = vmul.f32 %v679, %v493
      %v716 = vmul.f32 %v682, %v493
      %v717 = vmul.f32 %v685, %v493
      %v718 = vadd.f32 %v686, 1e-05
      %v719 = vadd.f32 %v687, 1e-05
      %v720 = vadd.f32 %v688, 1e-05
      %v721 = vadd.f32 %v689, 1e-05
      %v722 = vadd.f32 %v690, 1e-05
      %v723 = vadd.f32 %v691, 1e-05
      %v724 = vadd.f32 %v692, 1e-05
      %v725 = vadd.f32 %v693, 1e-05
      %v726 = vadd.f32 %v694, 1e-05
      %v727 = vadd.f32 %v695, 1e-05
      %v728 = vadd.f32 %v696, 1e-05
      %v729 = vadd.f32 %v697, 1e-05
      %v730 = vadd.f32 %v698, 1e-05
      %v731 = vadd.f32 %v699, 1e-05
      %v732 = vadd.f32 %v700, 1e-05
      %v733 = vadd.f32 %v701, 1e-05
      %v734 = vadd.f32 %v702, 1e-05
      %v735 = vadd.f32 %v703, 1e-05
      %v736 = vadd.f32 %v704, 1e-05
      %v737 = vadd.f32 %v705, 1e-05
      %v738 = vadd.f32 %v706, 1e-05
      %v739 = vadd.f32 %v707, 1e-05
      %v740 = vadd.f32 %v708, 1e-05
      %v741 = vadd.f32 %v709, 1e-05
      %v742 = vadd.f32 %v710, 1e-05
      %v743 = vadd.f32 %v711, 1e-05
      %v744 = vadd.f32 %v712, 1e-05
      %v745 = vadd.f32 %v713, 1e-05
      %v746 = vadd.f32 %v714, 1e-05
      %v747 = vadd.f32 %v715, 1e-05
      %v748 = vadd.f32 %v716, 1e-05
      %v749 = vadd.f32 %v717, 1e-05
      %v750 = vrsqrt.pop %v718
      %v751 = vmul.f32 %v750, %v718
      %v752 = vmul.f32 %v751, %v750
      %v753 = vmul.f32 0.5, %v752
      %v754 = vsub.f32 1.5, %v753
      %v755 = vmul.f32 %v750, %v754
      %vm756 = vweird.f32 %v718
      %vm757 = vweird.f32 %v750
      %vm758 = vmor %vm756, %vm757
      %v759 = vsel %vm758, %v750, %v755
      %v760 = vrsqrt.pop %v719
      %v761 = vmul.f32 %v760, %v719
      %v762 = vmul.f32 %v761, %v760
      %v763 = vmul.f32 0.5, %v762
      %v764 = vsub.f32 1.5, %v763
      %v765 = vmul.f32 %v760, %v764
      %vm766 = vweird.f32 %v719
      %vm767 = vweird.f32 %v760
      %vm768 = vmor %vm766, %vm767
      %v769 = vsel %vm768, %v760, %v765
      %v770 = vrsqrt.pop %v720
      %v771 = vmul.f32 %v770, %v720
      %v772 = vmul.f32 %v771, %v770
      %v773 = vmul.f32 0.5, %v772
      %v774 = vsub.f32 1.5, %v773
      %v775 = vmul.f32 %v770, %v774
      %vm776 = vweird.f32 %v720
      %vm777 = vweird.f32 %v770
      %vm778 = vmor %vm776, %vm777
      %v779 = vsel %vm778, %v770, %v775
      %v780 = vrsqrt.pop %v721
      %v781 = vmul.f32 %v780, %v721
      %v782 = vmul.f32 %v781, %v780
      %v783 = vmul.f32 0.5, %v782
      %v784 = vsub.f32 1.5, %v783
      %v785 = vmul.f32 %v780, %v784
      %vm786 = vweird.f32 %v721
      %vm787 = vweird.f32 %v780
      %vm788 = vmor %vm786, %vm787
      %v789 = vsel %vm788, %v780, %v785
      %v790 = vrsqrt.pop %v722
      %v791 = vmul.f32 %v790, %v722
      %v792 = vmul.f32 %v791, %v790
      %v793 = vmul.f32 0.5, %v792
      %v794 = vsub.f32 1.5, %v793
      %v795 = vmul.f32 %v790, %v794
      %vm796 = vweird.f32 %v722
      %vm797 = vweird.f32 %v790
      %vm798 = vmor %vm796, %vm797
      %v799 = vsel %vm798, %v790, %v795
      %v800 = vrsqrt.pop %v723
      %v801 = vmul.f32 %v800, %v723
      %v802 = vmul.f32 %v801, %v800
      %v803 = vmul.f32 0.5, %v802
      %v804 = vsub.f32 1.5, %v803
      %v805 = vmul.f32 %v800, %v804
      %vm806 = vweird.f32 %v723
      %vm807 = vweird.f32 %v800
      %vm808 = vmor %vm806, %vm807
      %v809 = vsel %vm808, %v800, %v805
      %v810 = vrsqrt.pop %v724
      %v811 = vmul.f32 %v810, %v724
      %v812 = vmul.f32 %v811, %v810
      %v813 = vmul.f32 0.5, %v812
      %v814 = vsub.f32 1.5, %v813
      %v815 = vmul.f32 %v810, %v814
      %vm816 = vweird.f32 %v724
      %vm817 = vweird.f32 %v810
      %vm818 = vmor %vm816, %vm817
      %v819 = vsel %vm818, %v810, %v815
      %v820 = vrsqrt.pop %v725
      %v821 = vmul.f32 %v820, %v725
      %v822 = vmul.f32 %v821, %v820
      %v823 = vmul.f32 0.5, %v822
      %v824 = vsub.f32 1.5, %v823
      %v825 = vmul.f32 %v820, %v824
      %vm826 = vweird.f32 %v725
      %vm827 = vweird.f32 %v820
      %vm828 = vmor %vm826, %vm827
      %v829 = vsel %vm828, %v820, %v825
      %v830 = vrsqrt.pop %v726
      %v831 = vmul.f32 %v830, %v726
      %v832 = vmul.f32 %v831, %v830
      %v833 = vmul.f32 0.5, %v832
      %v834 = vsub.f32 1.5, %v833
      %v835 = vmul.f32 %v830, %v834
      %vm836 = vweird.f32 %v726
      %vm837 = vweird.f32 %v830
      %vm838 = vmor %vm836, %vm837
      %v839 = vsel %vm838, %v830, %v835
      %v840 = vrsqrt.pop %v727
      %v841 = vmul.f32 %v840, %v727
      %v842 = vmul.f32 %v841, %v840
      %v843 = vmul.f32 0.5, %v842
      %v844 = vsub.f32 1.5, %v843
      %v845 = vmul.f32 %v840, %v844
      %vm846 = vweird.f32 %v727
      %vm847 = vweird.f32 %v840
      %vm848 = vmor %vm846, %vm847
      %v849 = vsel %vm848, %v840, %v845
      %v850 = vrsqrt.pop %v728
      %v851 = vmul.f32 %v850, %v728
      %v852 = vmul.f32 %v851, %v850
      %v853 = vmul.f32 0.5, %v852
      %v854 = vsub.f32 1.5, %v853
      %v855 = vmul.f32 %v850, %v854
      %vm856 = vweird.f32 %v728
      %vm857 = vweird.f32 %v850
      %vm858 = vmor %vm856, %vm857
      %v859 = vsel %vm858, %v850, %v855
      %v860 = vrsqrt.pop %v729
      %v861 = vmul.f32 %v860, %v729
      %v862 = vmul.f32 %v861, %v860
      %v863 = vmul.f32 0.5, %v862
      %v864 = vsub.f32 1.5, %v863
      %v865 = vmul.f32 %v860, %v864
      %vm866 = vweird.f32 %v729
      %vm867 = vweird.f32 %v860
      %vm868 = vmor %vm866, %vm867
      %v869 = vsel %vm868, %v860, %v865
      %v870 = vrsqrt.pop %v730
      %v871 = vmul.f32 %v870, %v730
      %v872 = vmul.f32 %v871, %v870
      %v873 = vmul.f32 0.5, %v872
      %v874 = vsub.f32 1.5, %v873
      %v875 = vmul.f32 %v870, %v874
      %vm876 = vweird.f32 %v730
      %vm877 = vweird.f32 %v870
      %vm878 = vmor %vm876, %vm877
      %v879 = vsel %vm878, %v870, %v875
      %v880 = vrsqrt.pop %v731
      %v881 = vmul.f32 %v880, %v731
      %v882 = vmul.f32 %v881, %v880
      %v883 = vmul.f32 0.5, %v882
      %v884 = vsub.f32 1.5, %v883
      %v885 = vmul.f32 %v880, %v884
      %vm886 = vweird.f32 %v731
      %vm887 = vweird.f32 %v880
      %vm888 = vmor %vm886, %vm887
      %v889 = vsel %vm888, %v880, %v885
      %v890 = vrsqrt.pop %v732
      %v891 = vmul.f32 %v890, %v732
      %v892 = vmul.f32 %v891, %v890
      %v893 = vmul.f32 0.5, %v892
      %v894 = vsub.f32 1.5, %v893
      %v895 = vmul.f32 %v890, %v894
      %vm896 = vweird.f32 %v732
      %vm897 = vweird.f32 %v890
      %vm898 = vmor %vm896, %vm897
      %v899 = vsel %vm898, %v890, %v895
      %v900 = vrsqrt.pop %v733
      %v901 = vmul.f32 %v900, %v733
      %v902 = vmul.f32 %v901, %v900
      %v903 = vmul.f32 0.5, %v902
      %v904 = vsub.f32 1.5, %v903
      %v905 = vmul.f32 %v900, %v904
      %vm906 = vweird.f32 %v733
      %vm907 = vweird.f32 %v900
      %vm908 = vmor %vm906, %vm907
      %v909 = vsel %vm908, %v900, %v905
      %v910 = vrsqrt.pop %v734
      %v911 = vmul.f32 %v910, %v734
      %v912 = vmul.f32 %v911, %v910
      %v913 = vmul.f32 0.5, %v912
      %v914 = vsub.f32 1.5, %v913
      %v915 = vmul.f32 %v910, %v914
      %vm916 = vweird.f32 %v734
      %vm917 = vweird.f32 %v910
      %vm918 = vmor %vm916, %vm917
      %v919 = vsel %vm918, %v910, %v915
      %v920 = vrsqrt.pop %v735
      %v921 = vmul.f32 %v920, %v735
      %v922 = vmul.f32 %v921, %v920
      %v923 = vmul.f32 0.5, %v922
      %v924 = vsub.f32 1.5, %v923
      %v925 = vmul.f32 %v920, %v924
      %vm926 = vweird.f32 %v735
      %vm927 = vweird.f32 %v920
      %vm928 = vmor %vm926, %vm927
      %v929 = vsel %vm928, %v920, %v925
      %v930 = vrsqrt.pop %v736
      %v931 = vmul.f32 %v930, %v736
      %v932 = vmul.f32 %v931, %v930
      %v933 = vmul.f32 0.5, %v932
      %v934 = vsub.f32 1.5, %v933
      %v935 = vmul.f32 %v930, %v934
      %vm936 = vweird.f32 %v736
      %vm937 = vweird.f32 %v930
      %vm938 = vmor %vm936, %vm937
      %v939 = vsel %vm938, %v930, %v935
      %v940 = vrsqrt.pop %v737
      %v941 = vmul.f32 %v940, %v737
      %v942 = vmul.f32 %v941, %v940
      %v943 = vmul.f32 0.5, %v942
      %v944 = vsub.f32 1.5, %v943
      %v945 = vmul.f32 %v940, %v944
      %vm946 = vweird.f32 %v737
      %vm947 = vweird.f32 %v940
      %vm948 = vmor %vm946, %vm947
      %v949 = vsel %vm948, %v940, %v945
      %v950 = vrsqrt.pop %v738
      %v951 = vmul.f32 %v950, %v738
      %v952 = vmul.f32 %v951, %v950
      %v953 = vmul.f32 0.5, %v952
      %v954 = vsub.f32 1.5, %v953
      %v955 = vmul.f32 %v950, %v954
      %vm956 = vweird.f32 %v738
      %vm957 = vweird.f32 %v950
      %vm958 = vmor %vm956, %vm957
      %v959 = vsel %vm958, %v950, %v955
      %v960 = vrsqrt.pop %v739
      %v961 = vmul.f32 %v960, %v739
      %v962 = vmul.f32 %v961, %v960
      %v963 = vmul.f32 0.5, %v962
      %v964 = vsub.f32 1.5, %v963
      %v965 = vmul.f32 %v960, %v964
      %vm966 = vweird.f32 %v739
      %vm967 = vweird.f32 %v960
      %vm968 = vmor %vm966, %vm967
      %v969 = vsel %vm968, %v960, %v965
      %v970 = vrsqrt.pop %v740
      %v971 = vmul.f32 %v970, %v740
      %v972 = vmul.f32 %v971, %v970
      %v973 = vmul.f32 0.5, %v972
      %v974 = vsub.f32 1.5, %v973
      %v975 = vmul.f32 %v970, %v974
      %vm976 = vweird.f32 %v740
      %vm977 = vweird.f32 %v970
      %vm978 = vmor %vm976, %vm977
      %v979 = vsel %vm978, %v970, %v975
      %v980 = vrsqrt.pop %v741
      %v981 = vmul.f32 %v980, %v741
      %v982 = vmul.f32 %v981, %v980
      %v983 = vmul.f32 0.5, %v982
      %v984 = vsub.f32 1.5, %v983
      %v985 = vmul.f32 %v980, %v984
      %vm986 = vweird.f32 %v741
      %vm987 = vweird.f32 %v980
      %vm988 = vmor %vm986, %vm987
      %v989 = vsel %vm988, %v980, %v985
      %v990 = vrsqrt.pop %v742
      %v991 = vmul.f32 %v990, %v742
      %v992 = vmul.f32 %v991, %v990
      %v993 = vmul.f32 0.5, %v992
      %v994 = vsub.f32 1.5, %v993
      %v995 = vmul.f32 %v990, %v994
      %vm996 = vweird.f32 %v742
      %vm997 = vweird.f32 %v990
      %vm998 = vmor %vm996, %vm997
      %v999 = vsel %vm998, %v990, %v995
      %v1000 = vrsqrt.pop %v743
      %v1001 = vmul.f32 %v1000, %v743
      %v1002 = vmul.f32 %v1001, %v1000
      %v1003 = vmul.f32 0.5, %v1002
      %v1004 = vsub.f32 1.5, %v1003
      %v1005 = vmul.f32 %v1000, %v1004
      %vm1006 = vweird.f32 %v743
      %vm1007 = vweird.f32 %v1000
      %vm1008 = vmor %vm1006, %vm1007
      %v1009 = vsel %vm1008, %v1000, %v1005
      %v1010 = vrsqrt.pop %v744
      %v1011 = vmul.f32 %v1010, %v744
      %v1012 = vmul.f32 %v1011, %v1010
      %v1013 = vmul.f32 0.5, %v1012
      %v1014 = vsub.f32 1.5, %v1013
      %v1015 = vmul.f32 %v1010, %v1014
      %vm1016 = vweird.f32 %v744
      %vm1017 = vweird.f32 %v1010
      %vm1018 = vmor %vm1016, %vm1017
      %v1019 = vsel %vm1018, %v1010, %v1015
      %v1020 = vrsqrt.pop %v745
      %v1021 = vmul.f32 %v1020, %v745
      %v1022 = vmul.f32 %v1021, %v1020
      %v1023 = vmul.f32 0.5, %v1022
      %v1024 = vsub.f32 1.5, %v1023
      %v1025 = vmul.f32 %v1020, %v1024
      %vm1026 = vweird.f32 %v745
      %vm1027 = vweird.f32 %v1020
      %vm1028 = vmor %vm1026, %vm1027
      %v1029 = vsel %vm1028, %v1020, %v1025
      %v1030 = vrsqrt.pop %v746
      %v1031 = vmul.f32 %v1030, %v746
      %v1032 = vmul.f32 %v1031, %v1030
      %v1033 = vmul.f32 0.5, %v1032
      %v1034 = vsub.f32 1.5, %v1033
      %v1035 = vmul.f32 %v1030, %v1034
      %vm1036 = vweird.f32 %v746
      %vm1037 = vweird.f32 %v1030
      %vm1038 = vmor %vm1036, %vm1037
      %v1039 = vsel %vm1038, %v1030, %v1035
      %v1040 = vrsqrt.pop %v747
      %v1041 = vmul.f32 %v1040, %v747
      %v1042 = vmul.f32 %v1041, %v1040
      %v1043 = vmul.f32 0.5, %v1042
      %v1044 = vsub.f32 1.5, %v1043
      %v1045 = vmul.f32 %v1040, %v1044
      %vm1046 = vweird.f32 %v747
      %vm1047 = vweird.f32 %v1040
      %vm1048 = vmor %vm1046, %vm1047
      %v1049 = vsel %vm1048, %v1040, %v1045
      %v1050 = vrsqrt.pop %v748
      %v1051 = vmul.f32 %v1050, %v748
      %v1052 = vmul.f32 %v1051, %v1050
      %v1053 = vmul.f32 0.5, %v1052
      %v1054 = vsub.f32 1.5, %v1053
      %v1055 = vmul.f32 %v1050, %v1054
      %vm1056 = vweird.f32 %v748
      %vm1057 = vweird.f32 %v1050
      %vm1058 = vmor %vm1056, %vm1057
      %v1059 = vsel %vm1058, %v1050, %v1055
      %v1060 = vrsqrt.pop %v749
      %v1061 = vmul.f32 %v1060, %v749
      %v1062 = vmul.f32 %v1061, %v1060
      %v1063 = vmul.f32 0.5, %v1062
      %v1064 = vsub.f32 1.5, %v1063
      %v1065 = vmul.f32 %v1060, %v1064
      %vm1066 = vweird.f32 %v749
      %vm1067 = vweird.f32 %v1060
      %vm1068 = vmor %vm1066, %vm1067
      %v1069 = vsel %vm1068, %v1060, %v1065
      %v1070 = vmul.f32 %v526, %v759
      %v1071 = vmul.f32 %v527, %v769
      %v1072 = vmul.f32 %v528, %v779
      %v1073 = vmul.f32 %v529, %v789
      %v1074 = vmul.f32 %v530, %v799
      %v1075 = vmul.f32 %v531, %v809
      %v1076 = vmul.f32 %v532, %v819
      %v1077 = vmul.f32 %v533, %v829
      %v1078 = vmul.f32 %v534, %v839
      %v1079 = vmul.f32 %v535, %v849
      %v1080 = vmul.f32 %v536, %v859
      %v1081 = vmul.f32 %v537, %v869
      %v1082 = vmul.f32 %v538, %v879
      %v1083 = vmul.f32 %v539, %v889
      %v1084 = vmul.f32 %v540, %v899
      %v1085 = vmul.f32 %v541, %v909
      %v1086 = vmul.f32 %v542, %v919
      %v1087 = vmul.f32 %v543, %v929
      %v1088 = vmul.f32 %v544, %v939
      %v1089 = vmul.f32 %v545, %v949
      %v1090 = vmul.f32 %v546, %v959
      %v1091 = vmul.f32 %v547, %v969
      %v1092 = vmul.f32 %v548, %v979
      %v1093 = vmul.f32 %v549, %v989
      %v1094 = vmul.f32 %v550, %v999
      %v1095 = vmul.f32 %v551, %v1009
      %v1096 = vmul.f32 %v552, %v1019
      %v1097 = vmul.f32 %v553, %v1029
      %v1098 = vmul.f32 %v554, %v1039
      %v1099 = vmul.f32 %v555, %v1049
      %v1100 = vmul.f32 %v556, %v1059
      %v1101 = vmul.f32 %v557, %v1069
      %v1102 = vld [vmem:[%s3] sm:$0x1]
      %v1104 = vperm.slane %v1102, 0
      %v1106 = vmul.f32 %v1070, %v1104
      %v1107 = vmul.f32 %v1071, %v1104
      %v1108 = vmul.f32 %v1072, %v1104
      %v1109 = vmul.f32 %v1073, %v1104
      %v1110 = vmul.f32 %v1074, %v1104
      %v1111 = vmul.f32 %v1075, %v1104
      %v1112 = vmul.f32 %v1076, %v1104
      %v1113 = vmul.f32 %v1077, %v1104
      %v1114 = vmul.f32 %v1078, %v1104
      %v1115 = vmul.f32 %v1079, %v1104
      %v1116 = vmul.f32 %v1080, %v1104
      %v1117 = vmul.f32 %v1081, %v1104
      %v1118 = vmul.f32 %v1082, %v1104
      %v1119 = vmul.f32 %v1083, %v1104
      %v1120 = vmul.f32 %v1084, %v1104
      %v1121 = vmul.f32 %v1085, %v1104
      %v1122 = vmul.f32 %v1086, %v1104
      %v1123 = vmul.f32 %v1087, %v1104
      %v1124 = vmul.f32 %v1088, %v1104
      %v1125 = vmul.f32 %v1089, %v1104
      %v1126 = vmul.f32 %v1090, %v1104
      %v1127 = vmul.f32 %v1091, %v1104
      %v1128 = vmul.f32 %v1092, %v1104
      %v1129 = vmul.f32 %v1093, %v1104
      %v1130 = vmul.f32 %v1094, %v1104
      %v1131 = vmul.f32 %v1095, %v1104
      %v1132 = vmul.f32 %v1096, %v1104
      %v1133 = vmul.f32 %v1097, %v1104
      %v1134 = vmul.f32 %v1098, %v1104
      %v1135 = vmul.f32 %v1099, %v1104
      %v1136 = vmul.f32 %v1100, %v1104
      %v1137 = vmul.f32 %v1101, %v1104
      %v1138 = vld [vmem:[%s4] sm:$0x1]
      %v1140 = vperm.slane %v1138, 0
      %v1142 = vadd.f32 %v1106, %v1140
      %v1143 = vadd.f32 %v1107, %v1140
      %v1144 = vadd.f32 %v1108, %v1140
      %v1145 = vadd.f32 %v1109, %v1140
      %v1146 = vadd.f32 %v1110, %v1140
      %v1147 = vadd.f32 %v1111, %v1140
      %v1148 = vadd.f32 %v1112, %v1140
      %v1149 = vadd.f32 %v1113, %v1140
      %v1150 = vadd.f32 %v1114, %v1140
      %v1151 = vadd.f32 %v1115, %v1140
      %v1152 = vadd.f32 %v1116, %v1140
      %v1153 = vadd.f32 %v1117, %v1140
      %v1154 = vadd.f32 %v1118, %v1140
      %v1155 = vadd.f32 %v1119, %v1140
      %v1156 = vadd.f32 %v1120, %v1140
      %v1157 = vadd.f32 %v1121, %v1140
      %v1158 = vadd.f32 %v1122, %v1140
      %v1159 = vadd.f32 %v1123, %v1140
      %v1160 = vadd.f32 %v1124, %v1140
      %v1161 = vadd.f32 %v1125, %v1140
      %v1162 = vadd.f32 %v1126, %v1140
      %v1163 = vadd.f32 %v1127, %v1140
      %v1164 = vadd.f32 %v1128, %v1140
      %v1165 = vadd.f32 %v1129, %v1140
      %v1166 = vadd.f32 %v1130, %v1140
      %v1167 = vadd.f32 %v1131, %v1140
      %v1168 = vadd.f32 %v1132, %v1140
      %v1169 = vadd.f32 %v1133, %v1140
      %v1170 = vadd.f32 %v1134, %v1140
      %v1171 = vadd.f32 %v1135, %v1140
      %v1172 = vadd.f32 %v1136, %v1140
      %v1173 = vadd.f32 %v1137, %v1140
      %v1174 = vld [vmem:[%s5] sm:$0xff]
      %v1175 = vld [vmem:[%s5 + $0x8] sm:$0xff]
      %v1176 = vld [vmem:[%s5 + $0x10] sm:$0xff]
      %v1177 = vld [vmem:[%s5 + $0x18] sm:$0xff]
      %v1178 = vld [vmem:[%s6] sm:$0x1]
      %v1180 = vperm.slane %v1178, 0
      %v1183 = vsel %vm390, %v1142, 0
      %v1186 = vsel %vm390, %v1143, 0
      %v1189 = vsel %vm390, %v1144, 0
      %v1192 = vsel %vm390, %v1145, 0
      %v1195 = vsel %vm390, %v1146, 0
      %v1198 = vsel %vm390, %v1147, 0
      %v1201 = vsel %vm390, %v1148, 0
      %v1204 = vsel %vm390, %v1149, 0
      %v1207 = vsel %vm390, %v1150, 0
      %v1210 = vsel %vm390, %v1151, 0
      %v1213 = vsel %vm390, %v1152, 0
      %v1216 = vsel %vm390, %v1153, 0
      %v1219 = vsel %vm390, %v1154, 0
      %v1222 = vsel %vm390, %v1155, 0
      %v1225 = vsel %vm390, %v1156, 0
      %v1228 = vsel %vm390, %v1157, 0
      %v1231 = vsel %vm390, %v1158, 0
      %v1234 = vsel %vm390, %v1159, 0
      %v1237 = vsel %vm390, %v1160, 0
      %v1240 = vsel %vm390, %v1161, 0
      %v1243 = vsel %vm390, %v1162, 0
      %v1246 = vsel %vm390, %v1163, 0
      %v1249 = vsel %vm390, %v1164, 0
      %v1252 = vsel %vm390, %v1165, 0
      %v1255 = vsel %vm390, %v1166, 0
      %v1258 = vsel %vm390, %v1167, 0
      %v1261 = vsel %vm390, %v1168, 0
      %v1264 = vsel %vm390, %v1169, 0
      %v1267 = vsel %vm390, %v1170, 0
      %v1270 = vsel %vm390, %v1171, 0
      %v1273 = vsel %vm390, %v1172, 0
      %v1276 = vsel %vm390, %v1173, 0
      %1278 = vmatpush.msra.mxu0 0.0
      %1279 = vmatpush.msra.mxu0 0.0
      %1280 = vmatpush.msra.mxu0 0.0
      %1281 = vmatpush.msra.mxu0 0.0
      %1282 = vmatpush.msra.mxu0 0.0
      %1283 = vmatpush.msra.mxu0 0.0
      %1284 = vmatpush.msra.mxu0 0.0
      %1285 = vmatpush.msra.mxu0 0.0
      %1286 = vmatpush.msra.mxu0 0.0
      %1287 = vmatpush.msra.mxu0 0.0
      %1288 = vmatpush.msra.mxu0 0.0
      %1289 = vmatpush.msra.mxu0 0.0
      %1290 = vmatpush.msra.mxu0 %v1177
      %1291 = vmatpush.msra.mxu0 %v1176
      %1292 = vmatpush.msra.mxu0 %v1175
      %1293 = vmatpush.msra.mxu0 %v1174
      %1294 = vmatmul.f32.gmra.mxu0 %v1183
      %v1295 = vpop.f32.mrf.mxu0
      %v1296 = vadd.f32 %v1180, %v1295
      %1297 = vmatmul.f32.gmra.mxu0 %v1186
      %v1298 = vpop.f32.mrf.mxu0
      %v1299 = vadd.f32 %v1180, %v1298
      %1300 = vmatmul.f32.gmra.mxu0 %v1189
      %v1301 = vpop.f32.mrf.mxu0
      %v1302 = vadd.f32 %v1180, %v1301
      %1303 = vmatmul.f32.gmra.mxu0 %v1192
      %v1304 = vpop.f32.mrf.mxu0
      %v1305 = vadd.f32 %v1180, %v1304
      %1306 = vmatmul.f32.gmra.mxu0 %v1195
      %v1307 = vpop.f32.mrf.mxu0
      %v1308 = vadd.f32 %v1180, %v1307
      %1309 = vmatmul.f32.gmra.mxu0 %v1198
      %v1310 = vpop.f32.mrf.mxu0
      %v1311 = vadd.f32 %v1180, %v1310
      %1312 = vmatmul.f32.gmra.mxu0 %v1201
      %v1313 = vpop.f32.mrf.mxu0
      %v1314 = vadd.f32 %v1180, %v1313
      %1315 = vmatmul.f32.gmra.mxu0 %v1204
      %v1316 = vpop.f32.mrf.mxu0
      %v1317 = vadd.f32 %v1180, %v1316
      %1318 = vmatmul.f32.gmra.mxu0 %v1207
      %v1319 = vpop.f32.mrf.mxu0
      %v1320 = vadd.f32 %v1180, %v1319
      %1321 = vmatmul.f32.gmra.mxu0 %v1210
      %v1322 = vpop.f32.mrf.mxu0
      %v1323 = vadd.f32 %v1180, %v1322
      %1324 = vmatmul.f32.gmra.mxu0 %v1213
      %v1325 = vpop.f32.mrf.mxu0
      %v1326 = vadd.f32 %v1180, %v1325
      %1327 = vmatmul.f32.gmra.mxu0 %v1216
      %v1328 = vpop.f32.mrf.mxu0
      %v1329 = vadd.f32 %v1180, %v1328
      %1330 = vmatmul.f32.gmra.mxu0 %v1219
      %v1331 = vpop.f32.mrf.mxu0
      %v1332 = vadd.f32 %v1180, %v1331
      %1333 = vmatmul.f32.gmra.mxu0 %v1222
      %v1334 = vpop.f32.mrf.mxu0
      %v1335 = vadd.f32 %v1180, %v1334
      %1336 = vmatmul.f32.gmra.mxu0 %v1225
      %v1337 = vpop.f32.mrf.mxu0
      %v1338 = vadd.f32 %v1180, %v1337
      %1339 = vmatmul.f32.gmra.mxu0 %v1228
      %v1340 = vpop.f32.mrf.mxu0
      %v1341 = vadd.f32 %v1180, %v1340
      %1342 = vmatmul.f32.gmra.mxu0 %v1231
      %v1343 = vpop.f32.mrf.mxu0
      %v1344 = vadd.f32 %v1180, %v1343
      %1345 = vmatmul.f32.gmra.mxu0 %v1234
      %v1346 = vpop.f32.mrf.mxu0
      %v1347 = vadd.f32 %v1180, %v1346
      %1348 = vmatmul.f32.gmra.mxu0 %v1237
      %v1349 = vpop.f32.mrf.mxu0
      %v1350 = vadd.f32 %v1180, %v1349
      %1351 = vmatmul.f32.gmra.mxu0 %v1240
      %v1352 = vpop.f32.mrf.mxu0
      %v1353 = vadd.f32 %v1180, %v1352
      %1354 = vmatmul.f32.gmra.mxu0 %v1243
      %v1355 = vpop.f32.mrf.mxu0
      %v1356 = vadd.f32 %v1180, %v1355
      %1357 = vmatmul.f32.gmra.mxu0 %v1246
      %v1358 = vpop.f32.mrf.mxu0
      %v1359 = vadd.f32 %v1180, %v1358
      %1360 = vmatmul.f32.gmra.mxu0 %v1249
      %v1361 = vpop.f32.mrf.mxu0
      %v1362 = vadd.f32 %v1180, %v1361
      %1363 = vmatmul.f32.gmra.mxu0 %v1252
      %v1364 = vpop.f32.mrf.mxu0
      %v1365 = vadd.f32 %v1180, %v1364
      %1366 = vmatmul.f32.gmra.mxu0 %v1255
      %v1367 = vpop.f32.mrf.mxu0
      %v1368 = vadd.f32 %v1180, %v1367
      %1369 = vmatmul.f32.gmra.mxu0 %v1258
      %v1370 = vpop.f32.mrf.mxu0
      %v1371 = vadd.f32 %v1180, %v1370
      %1372 = vmatmul.f32.gmra.mxu0 %v1261
      %v1373 = vpop.f32.mrf.mxu0
      %v1374 = vadd.f32 %v1180, %v1373
      %1375 = vmatmul.f32.gmra.mxu0 %v1264
      %v1376 = vpop.f32.mrf.mxu0
      %v1377 = vadd.f32 %v1180, %v1376
      %1378 = vmatmul.f32.gmra.mxu0 %v1267
      %v1379 = vpop.f32.mrf.mxu0
      %v1380 = vadd.f32 %v1180, %v1379
      %1381 = vmatmul.f32.gmra.mxu0 %v1270
      %v1382 = vpop.f32.mrf.mxu0
      %v1383 = vadd.f32 %v1180, %v1382
      %1384 = vmatmul.f32.gmra.mxu0 %v1273
      %v1385 = vpop.f32.mrf.mxu0
      %v1386 = vadd.f32 %v1180, %v1385
      %1387 = vmatmul.f32.gmra.mxu0 %v1276
      %v1388 = vpop.f32.mrf.mxu0
      %v1389 = vadd.f32 %v1180, %v1388
      %1390 = vdwg.mxu0
      %v1391 = vld [vmem:[%s350] sm:$0xff]
      %v1392 = vld [vmem:[%s350 + $0x8] sm:$0xff]
      %v1393 = vld [vmem:[%s350 + $0x10] sm:$0xff]
      %v1394 = vld [vmem:[%s350 + $0x18] sm:$0xff]
      %v1395 = vld [vmem:[%s350 + $0x20] sm:$0xff]
      %v1396 = vld [vmem:[%s350 + $0x28] sm:$0xff]
      %v1397 = vld [vmem:[%s350 + $0x30] sm:$0xff]
      %v1398 = vld [vmem:[%s350 + $0x38] sm:$0xff]
      %v1399 = vld [vmem:[%s350 + $0x40] sm:$0xff]
      %v1400 = vld [vmem:[%s350 + $0x48] sm:$0xff]
      %v1401 = vld [vmem:[%s350 + $0x50] sm:$0xff]
      %v1402 = vld [vmem:[%s350 + $0x58] sm:$0xff]
      %v1403 = vld [vmem:[%s350 + $0x60] sm:$0xff]
      %v1404 = vld [vmem:[%s350 + $0x68] sm:$0xff]
      %v1405 = vld [vmem:[%s350 + $0x70] sm:$0xff]
      %v1406 = vld [vmem:[%s350 + $0x78] sm:$0xff]
      %v1407 = vld [vmem:[%s350 + $0x80] sm:$0xff]
      %v1408 = vld [vmem:[%s350 + $0x88] sm:$0xff]
      %v1409 = vld [vmem:[%s350 + $0x90] sm:$0xff]
      %v1410 = vld [vmem:[%s350 + $0x98] sm:$0xff]
      %v1411 = vld [vmem:[%s350 + $0xa0] sm:$0xff]
      %v1412 = vld [vmem:[%s350 + $0xa8] sm:$0xff]
      %v1413 = vld [vmem:[%s350 + $0xb0] sm:$0xff]
      %v1414 = vld [vmem:[%s350 + $0xb8] sm:$0xff]
      %v1415 = vld [vmem:[%s350 + $0xc0] sm:$0xff]
      %v1416 = vld [vmem:[%s350 + $0xc8] sm:$0xff]
      %v1417 = vld [vmem:[%s350 + $0xd0] sm:$0xff]
      %v1418 = vld [vmem:[%s350 + $0xd8] sm:$0xff]
      %v1419 = vld [vmem:[%s350 + $0xe0] sm:$0xff]
      %v1420 = vld [vmem:[%s350 + $0xe8] sm:$0xff]
      %v1421 = vld [vmem:[%s350 + $0xf0] sm:$0xff]
      %v1422 = vld [vmem:[%s350 + $0xf8] sm:$0xff]
      %v1423 = vld [vmem:[%s2] sm:$0xff]
      %v1424 = vld [vmem:[%s2 + $0x8] sm:$0xff]
      %v1425 = vld [vmem:[%s2 + $0x10] sm:$0xff]
      %v1426 = vld [vmem:[%s2 + $0x18] sm:$0xff]
      %v1427 = vld [vmem:[%s2 + $0x20] sm:$0xff]
      %v1428 = vld [vmem:[%s2 + $0x28] sm:$0xff]
      %v1429 = vld [vmem:[%s2 + $0x30] sm:$0xff]
      %v1430 = vld [vmem:[%s2 + $0x38] sm:$0xff]
      %1439 = vrot.lane.b32.xlu0 %v1296, 96
      %v1440 = vpop.permute.xlu0 %1439
      %1441 = vrot.lane.b32.xlu0 %v1299, 96
      %v1442 = vpop.permute.xlu0 %1441
      %1443 = vrot.lane.b32.xlu0 %v1302, 96
      %v1444 = vpop.permute.xlu0 %1443
      %1445 = vrot.lane.b32.xlu0 %v1305, 96
      %v1446 = vpop.permute.xlu0 %1445
      %1447 = vrot.lane.b32.xlu0 %v1308, 96
      %v1448 = vpop.permute.xlu0 %1447
      %1449 = vrot.lane.b32.xlu0 %v1311, 96
      %v1450 = vpop.permute.xlu0 %1449
      %1451 = vrot.lane.b32.xlu0 %v1314, 96
      %v1452 = vpop.permute.xlu0 %1451
      %1453 = vrot.lane.b32.xlu0 %v1317, 96
      %v1454 = vpop.permute.xlu0 %1453
      %vm1455 = vcmask 64512
      %v1456 = vsel %vm1455, %v1296, 0
      %v1458 = vsel %vm1455, %v1299, 0
      %v1460 = vsel %vm1455, %v1302, 0
      %v1462 = vsel %vm1455, %v1305, 0
      %v1464 = vsel %vm1455, %v1308, 0
      %v1466 = vsel %vm1455, %v1311, 0
      %v1468 = vsel %vm1455, %v1314, 0
      %v1470 = vsel %vm1455, %v1317, 0
      %v1472 = vsel %vm1455, %v1440, 0
      %v1474 = vsel %vm1455, %v1442, 0
      %v1476 = vsel %vm1455, %v1444, 0
      %v1478 = vsel %vm1455, %v1446, 0
      %v1480 = vsel %vm1455, %v1448, 0
      %v1482 = vsel %vm1455, %v1450, 0
      %v1484 = vsel %vm1455, %v1452, 0
      %v1486 = vsel %vm1455, %v1454, 0
      %1488 = vmatpush.xpose.msra.mxu0 0.0
      %1489 = vmatpush.xpose.msra.mxu0 0.0
      %1490 = vmatpush.xpose.msra.mxu0 0.0
      %1491 = vmatpush.xpose.msra.mxu0 0.0
      %1492 = vmatpush.xpose.msra.mxu0 0.0
      %1493 = vmatpush.xpose.msra.mxu0 0.0
      %1494 = vmatpush.xpose.msra.mxu0 0.0
      %1495 = vmatpush.xpose.msra.mxu0 0.0
      %1496 = vmatpush.xpose.msra.mxu0 %v1486
      %1497 = vmatpush.xpose.msra.mxu0 %v1484
      %1498 = vmatpush.xpose.msra.mxu0 %v1482
      %1499 = vmatpush.xpose.msra.mxu0 %v1480
      %1500 = vmatpush.xpose.msra.mxu0 %v1478
      %1501 = vmatpush.xpose.msra.mxu0 %v1476
      %1502 = vmatpush.xpose.msra.mxu0 %v1474
      %1503 = vmatpush.xpose.msra.mxu0 %v1472
      %1504 = vmatmul.f32.gmra.mxu0 %v1456
      %v1505 = vpop.f32.mrf.mxu0
      %v1506 = vadd.f32 %v1423, %v1505
      %1507 = vmatmul.f32.gmra.mxu0 %v1458
      %v1508 = vpop.f32.mrf.mxu0
      %v1509 = vadd.f32 %v1424, %v1508
      %1510 = vmatmul.f32.gmra.mxu0 %v1460
      %v1511 = vpop.f32.mrf.mxu0
      %v1512 = vadd.f32 %v1425, %v1511
      %1513 = vmatmul.f32.gmra.mxu0 %v1462
      %v1514 = vpop.f32.mrf.mxu0
      %v1515 = vadd.f32 %v1426, %v1514
      %1516 = vmatmul.f32.gmra.mxu0 %v1464
      %v1517 = vpop.f32.mrf.mxu0
      %v1518 = vadd.f32 %v1427, %v1517
      %1519 = vmatmul.f32.gmra.mxu0 %v1466
      %v1520 = vpop.f32.mrf.mxu0
      %v1521 = vadd.f32 %v1428, %v1520
      %1522 = vmatmul.f32.gmra.mxu0 %v1468
      %v1523 = vpop.f32.mrf.mxu0
      %v1524 = vadd.f32 %v1429, %v1523
      %1525 = vmatmul.f32.gmra.mxu0 %v1470
      %v1526 = vpop.f32.mrf.mxu0
      %v1527 = vadd.f32 %v1430, %v1526
      %1528 = vdwg.mxu0
      %1537 = vrot.lane.b32.xlu0 %v1320, 96
      %v1538 = vpop.permute.xlu0 %1537
      %1539 = vrot.lane.b32.xlu0 %v1323, 96
      %v1540 = vpop.permute.xlu0 %1539
      %1541 = vrot.lane.b32.xlu0 %v1326, 96
      %v1542 = vpop.permute.xlu0 %1541
      %1543 = vrot.lane.b32.xlu0 %v1329, 96
      %v1544 = vpop.permute.xlu0 %1543
      %1545 = vrot.lane.b32.xlu0 %v1332, 96
      %v1546 = vpop.permute.xlu0 %1545
      %1547 = vrot.lane.b32.xlu0 %v1335, 96
      %v1548 = vpop.permute.xlu0 %1547
      %1549 = vrot.lane.b32.xlu0 %v1338, 96
      %v1550 = vpop.permute.xlu0 %1549
      %1551 = vrot.lane.b32.xlu0 %v1341, 96
      %v1552 = vpop.permute.xlu0 %1551
      %v1553 = vsel %vm1455, %v1320, 0
      %v1555 = vsel %vm1455, %v1323, 0
      %v1557 = vsel %vm1455, %v1326, 0
      %v1559 = vsel %vm1455, %v1329, 0
      %v1561 = vsel %vm1455, %v1332, 0
      %v1563 = vsel %vm1455, %v1335, 0
      %v1565 = vsel %vm1455, %v1338, 0
      %v1567 = vsel %vm1455, %v1341, 0
      %v1569 = vsel %vm1455, %v1538, 0
      %v1571 = vsel %vm1455, %v1540, 0
      %v1573 = vsel %vm1455, %v1542, 0
      %v1575 = vsel %vm1455, %v1544, 0
      %v1577 = vsel %vm1455, %v1546, 0
      %v1579 = vsel %vm1455, %v1548, 0
      %v1581 = vsel %vm1455, %v1550, 0
      %v1583 = vsel %vm1455, %v1552, 0
      %1585 = vmatpush.xpose.msra.mxu0 0.0
      %1586 = vmatpush.xpose.msra.mxu0 0.0
      %1587 = vmatpush.xpose.msra.mxu0 0.0
      %1588 = vmatpush.xpose.msra.mxu0 0.0
      %1589 = vmatpush.xpose.msra.mxu0 0.0
      %1590 = vmatpush.xpose.msra.mxu0 0.0
      %1591 = vmatpush.xpose.msra.mxu0 0.0
      %1592 = vmatpush.xpose.msra.mxu0 0.0
      %1593 = vmatpush.xpose.msra.mxu0 %v1583
      %1594 = vmatpush.xpose.msra.mxu0 %v1581
      %1595 = vmatpush.xpose.msra.mxu0 %v1579
      %1596 = vmatpush.xpose.msra.mxu0 %v1577
      %1597 = vmatpush.xpose.msra.mxu0 %v1575
      %1598 = vmatpush.xpose.msra.mxu0 %v1573
      %1599 = vmatpush.xpose.msra.mxu0 %v1571
      %1600 = vmatpush.xpose.msra.mxu0 %v1569
      %1601 = vmatmul.f32.gmra.mxu0 %v1553
      %v1602 = vpop.f32.mrf.mxu0
      %v1603 = vadd.f32 %v1423, %v1602
      %1604 = vmatmul.f32.gmra.mxu0 %v1555
      %v1605 = vpop.f32.mrf.mxu0
      %v1606 = vadd.f32 %v1424, %v1605
      %1607 = vmatmul.f32.gmra.mxu0 %v1557
      %v1608 = vpop.f32.mrf.mxu0
      %v1609 = vadd.f32 %v1425, %v1608
      %1610 = vmatmul.f32.gmra.mxu0 %v1559
      %v1611 = vpop.f32.mrf.mxu0
      %v1612 = vadd.f32 %v1426, %v1611
      %1613 = vmatmul.f32.gmra.mxu0 %v1561
      %v1614 = vpop.f32.mrf.mxu0
      %v1615 = vadd.f32 %v1427, %v1614
      %1616 = vmatmul.f32.gmra.mxu0 %v1563
      %v1617 = vpop.f32.mrf.mxu0
      %v1618 = vadd.f32 %v1428, %v1617
      %1619 = vmatmul.f32.gmra.mxu0 %v1565
      %v1620 = vpop.f32.mrf.mxu0
      %v1621 = vadd.f32 %v1429, %v1620
      %1622 = vmatmul.f32.gmra.mxu0 %v1567
      %v1623 = vpop.f32.mrf.mxu0
      %v1624 = vadd.f32 %v1430, %v1623
      %1625 = vdwg.mxu0
      %1634 = vrot.lane.b32.xlu0 %v1344, 96
      %v1635 = vpop.permute.xlu0 %1634
      %1636 = vrot.lane.b32.xlu0 %v1347, 96
      %v1637 = vpop.permute.xlu0 %1636
      %1638 = vrot.lane.b32.xlu0 %v1350, 96
      %v1639 = vpop.permute.xlu0 %1638
      %1640 = vrot.lane.b32.xlu0 %v1353, 96
      %v1641 = vpop.permute.xlu0 %1640
      %1642 = vrot.lane.b32.xlu0 %v1356, 96
      %v1643 = vpop.permute.xlu0 %1642
      %1644 = vrot.lane.b32.xlu0 %v1359, 96
      %v1645 = vpop.permute.xlu0 %1644
      %1646 = vrot.lane.b32.xlu0 %v1362, 96
      %v1647 = vpop.permute.xlu0 %1646
      %1648 = vrot.lane.b32.xlu0 %v1365, 96
      %v1649 = vpop.permute.xlu0 %1648
      %v1650 = vsel %vm1455, %v1344, 0
      %v1652 = vsel %vm1455, %v1347, 0
      %v1654 = vsel %vm1455, %v1350, 0
      %v1656 = vsel %vm1455, %v1353, 0
      %v1658 = vsel %vm1455, %v1356, 0
      %v1660 = vsel %vm1455, %v1359, 0
      %v1662 = vsel %vm1455, %v1362, 0
      %v1664 = vsel %vm1455, %v1365, 0
      %v1666 = vsel %vm1455, %v1635, 0
      %v1668 = vsel %vm1455, %v1637, 0
      %v1670 = vsel %vm1455, %v1639, 0
      %v1672 = vsel %vm1455, %v1641, 0
      %v1674 = vsel %vm1455, %v1643, 0
      %v1676 = vsel %vm1455, %v1645, 0
      %v1678 = vsel %vm1455, %v1647, 0
      %v1680 = vsel %vm1455, %v1649, 0
      %1682 = vmatpush.xpose.msra.mxu0 0.0
      %1683 = vmatpush.xpose.msra.mxu0 0.0
      %1684 = vmatpush.xpose.msra.mxu0 0.0
      %1685 = vmatpush.xpose.msra.mxu0 0.0
      %1686 = vmatpush.xpose.msra.mxu0 0.0
      %1687 = vmatpush.xpose.msra.mxu0 0.0
      %1688 = vmatpush.xpose.msra.mxu0 0.0
      %1689 = vmatpush.xpose.msra.mxu0 0.0
      %1690 = vmatpush.xpose.msra.mxu0 %v1680
      %1691 = vmatpush.xpose.msra.mxu0 %v1678
      %1692 = vmatpush.xpose.msra.mxu0 %v1676
      %1693 = vmatpush.xpose.msra.mxu0 %v1674
      %1694 = vmatpush.xpose.msra.mxu0 %v1672
      %1695 = vmatpush.xpose.msra.mxu0 %v1670
      %1696 = vmatpush.xpose.msra.mxu0 %v1668
      %1697 = vmatpush.xpose.msra.mxu0 %v1666
      %1698 = vmatmul.f32.gmra.mxu0 %v1650
      %v1699 = vpop.f32.mrf.mxu0
      %v1700 = vadd.f32 %v1423, %v1699
      %1701 = vmatmul.f32.gmra.mxu0 %v1652
      %v1702 = vpop.f32.mrf.mxu0
      %v1703 = vadd.f32 %v1424, %v1702
      %1704 = vmatmul.f32.gmra.mxu0 %v1654
      %v1705 = vpop.f32.mrf.mxu0
      %v1706 = vadd.f32 %v1425, %v1705
      %1707 = vmatmul.f32.gmra.mxu0 %v1656
      %v1708 = vpop.f32.mrf.mxu0
      %v1709 = vadd.f32 %v1426, %v1708
      %1710 = vmatmul.f32.gmra.mxu0 %v1658
      %v1711 = vpop.f32.mrf.mxu0
      %v1712 = vadd.f32 %v1427, %v1711
      %1713 = vmatmul.f32.gmra.mxu0 %v1660
      %v1714 = vpop.f32.mrf.mxu0
      %v1715 = vadd.f32 %v1428, %v1714
      %1716 = vmatmul.f32.gmra.mxu0 %v1662
      %v1717 = vpop.f32.mrf.mxu0
      %v1718 = vadd.f32 %v1429, %v1717
      %1719 = vmatmul.f32.gmra.mxu0 %v1664
      %v1720 = vpop.f32.mrf.mxu0
      %v1721 = vadd.f32 %v1430, %v1720
      %1722 = vdwg.mxu0
      %1731 = vrot.lane.b32.xlu0 %v1368, 96
      %v1732 = vpop.permute.xlu0 %1731
      %1733 = vrot.lane.b32.xlu0 %v1371, 96
      %v1734 = vpop.permute.xlu0 %1733
      %1735 = vrot.lane.b32.xlu0 %v1374, 96
      %v1736 = vpop.permute.xlu0 %1735
      %1737 = vrot.lane.b32.xlu0 %v1377, 96
      %v1738 = vpop.permute.xlu0 %1737
      %1739 = vrot.lane.b32.xlu0 %v1380, 96
      %v1740 = vpop.permute.xlu0 %1739
      %1741 = vrot.lane.b32.xlu0 %v1383, 96
      %v1742 = vpop.permute.xlu0 %1741
      %1743 = vrot.lane.b32.xlu0 %v1386, 96
      %v1744 = vpop.permute.xlu0 %1743
      %1745 = vrot.lane.b32.xlu0 %v1389, 96
      %v1746 = vpop.permute.xlu0 %1745
      %v1747 = vsel %vm1455, %v1368, 0
      %v1749 = vsel %vm1455, %v1371, 0
      %v1751 = vsel %vm1455, %v1374, 0
      %v1753 = vsel %vm1455, %v1377, 0
      %v1755 = vsel %vm1455, %v1380, 0
      %v1757 = vsel %vm1455, %v1383, 0
      %v1759 = vsel %vm1455, %v1386, 0
      %v1761 = vsel %vm1455, %v1389, 0
      %v1763 = vsel %vm1455, %v1732, 0
      %v1765 = vsel %vm1455, %v1734, 0
      %v1767 = vsel %vm1455, %v1736, 0
      %v1769 = vsel %vm1455, %v1738, 0
      %v1771 = vsel %vm1455, %v1740, 0
      %v1773 = vsel %vm1455, %v1742, 0
      %v1775 = vsel %vm1455, %v1744, 0
      %v1777 = vsel %vm1455, %v1746, 0
      %1779 = vmatpush.xpose.msra.mxu0 0.0
      %1780 = vmatpush.xpose.msra.mxu0 0.0
      %1781 = vmatpush.xpose.msra.mxu0 0.0
      %1782 = vmatpush.xpose.msra.mxu0 0.0
      %1783 = vmatpush.xpose.msra.mxu0 0.0
      %1784 = vmatpush.xpose.msra.mxu0 0.0
      %1785 = vmatpush.xpose.msra.mxu0 0.0
      %1786 = vmatpush.xpose.msra.mxu0 0.0
      %1787 = vmatpush.xpose.msra.mxu0 %v1777
      %1788 = vmatpush.xpose.msra.mxu0 %v1775
      %1789 = vmatpush.xpose.msra.mxu0 %v1773
      %1790 = vmatpush.xpose.msra.mxu0 %v1771
      %1791 = vmatpush.xpose.msra.mxu0 %v1769
      %1792 = vmatpush.xpose.msra.mxu0 %v1767
      %1793 = vmatpush.xpose.msra.mxu0 %v1765
      %1794 = vmatpush.xpose.msra.mxu0 %v1763
      %1795 = vmatmul.f32.gmra.mxu0 %v1747
      %v1796 = vpop.f32.mrf.mxu0
      %v1797 = vadd.f32 %v1423, %v1796
      %1798 = vmatmul.f32.gmra.mxu0 %v1749
      %v1799 = vpop.f32.mrf.mxu0
      %v1800 = vadd.f32 %v1424, %v1799
      %1801 = vmatmul.f32.gmra.mxu0 %v1751
      %v1802 = vpop.f32.mrf.mxu0
      %v1803 = vadd.f32 %v1425, %v1802
      %1804 = vmatmul.f32.gmra.mxu0 %v1753
      %v1805 = vpop.f32.mrf.mxu0
      %v1806 = vadd.f32 %v1426, %v1805
      %1807 = vmatmul.f32.gmra.mxu0 %v1755
      %v1808 = vpop.f32.mrf.mxu0
      %v1809 = vadd.f32 %v1427, %v1808
      %1810 = vmatmul.f32.gmra.mxu0 %v1757
      %v1811 = vpop.f32.mrf.mxu0
      %v1812 = vadd.f32 %v1428, %v1811
      %1813 = vmatmul.f32.gmra.mxu0 %v1759
      %v1814 = vpop.f32.mrf.mxu0
      %v1815 = vadd.f32 %v1429, %v1814
      %1816 = vmatmul.f32.gmra.mxu0 %v1761
      %v1817 = vpop.f32.mrf.mxu0
      %v1818 = vadd.f32 %v1430, %v1817
      %1819 = vdwg.mxu0
      %vm1820 = vcmask 523264
      %v1821 = vsel %vm1820, %v1506, -inf
      %1822 = vmax.xlane.f32.xlu0 %v1821
      %v1823 = vpop.xlane.xlu0 %1822
      %v1824 = vsel %vm1820, %v1509, -inf
      %1825 = vmax.xlane.f32.xlu0 %v1824
      %v1826 = vpop.xlane.xlu0 %1825
      %v1827 = vsel %vm1820, %v1512, -inf
      %1828 = vmax.xlane.f32.xlu0 %v1827
      %v1829 = vpop.xlane.xlu0 %1828
      %v1830 = vsel %vm1820, %v1515, -inf
      %1831 = vmax.xlane.f32.xlu0 %v1830
      %v1832 = vpop.xlane.xlu0 %1831
      %v1833 = vsel %vm1820, %v1518, -inf
      %1834 = vmax.xlane.f32.xlu0 %v1833
      %v1835 = vpop.xlane.xlu0 %1834
      %v1836 = vsel %vm1820, %v1521, -inf
      %1837 = vmax.xlane.f32.xlu0 %v1836
      %v1838 = vpop.xlane.xlu0 %1837
      %v1839 = vsel %vm1820, %v1524, -inf
      %1840 = vmax.xlane.f32.xlu0 %v1839
      %v1841 = vpop.xlane.xlu0 %1840
      %v1842 = vsel %vm1820, %v1527, -inf
      %1843 = vmax.xlane.f32.xlu0 %v1842
      %v1844 = vpop.xlane.xlu0 %1843
      %v1845 = vsel %vm1820, %v1603, -inf
      %1846 = vmax.xlane.f32.xlu0 %v1845
      %v1847 = vpop.xlane.xlu0 %1846
      %v1848 = vsel %vm1820, %v1606, -inf
      %1849 = vmax.xlane.f32.xlu0 %v1848
      %v1850 = vpop.xlane.xlu0 %1849
      %v1851 = vsel %vm1820, %v1609, -inf
      %1852 = vmax.xlane.f32.xlu0 %v1851
      %v1853 = vpop.xlane.xlu0 %1852
      %v1854 = vsel %vm1820, %v1612, -inf
      %1855 = vmax.xlane.f32.xlu0 %v1854
      %v1856 = vpop.xlane.xlu0 %1855
      %v1857 = vsel %vm1820, %v1615, -inf
      %1858 = vmax.xlane.f32.xlu0 %v1857
      %v1859 = vpop.xlane.xlu0 %1858
      %v1860 = vsel %vm1820, %v1618, -inf
      %1861 = vmax.xlane.f32.xlu0 %v1860
      %v1862 = vpop.xlane.xlu0 %1861
      %v1863 = vsel %vm1820, %v1621, -inf
      %1864 = vmax.xlane.f32.xlu0 %v1863
      %v1865 = vpop.xlane.xlu0 %1864
      %v1866 = vsel %vm1820, %v1624, -inf
      %1867 = vmax.xlane.f32.xlu0 %v1866
      %v1868 = vpop.xlane.xlu0 %1867
      %v1869 = vsel %vm1820, %v1700, -inf
      %1870 = vmax.xlane.f32.xlu0 %v1869
      %v1871 = vpop.xlane.xlu0 %1870
      %v1872 = vsel %vm1820, %v1703, -inf
      %1873 = vmax.xlane.f32.xlu0 %v1872
      %v1874 = vpop.xlane.xlu0 %1873
      %v1875 = vsel %vm1820, %v1706, -inf
      %1876 = vmax.xlane.f32.xlu0 %v1875
      %v1877 = vpop.xlane.xlu0 %1876
      %v1878 = vsel %vm1820, %v1709, -inf
      %1879 = vmax.xlane.f32.xlu0 %v1878
      %v1880 = vpop.xlane.xlu0 %1879
      %v1881 = vsel %vm1820, %v1712, -inf
      %1882 = vmax.xlane.f32.xlu0 %v1881
      %v1883 = vpop.xlane.xlu0 %1882
      %v1884 = vsel %vm1820, %v1715, -inf
      %1885 = vmax.xlane.f32.xlu0 %v1884
      %v1886 = vpop.xlane.xlu0 %1885
      %v1887 = vsel %vm1820, %v1718, -inf
      %1888 = vmax.xlane.f32.xlu0 %v1887
      %v1889 = vpop.xlane.xlu0 %1888
      %v1890 = vsel %vm1820, %v1721, -inf
      %1891 = vmax.xlane.f32.xlu0 %v1890
      %v1892 = vpop.xlane.xlu0 %1891
      %v1893 = vsel %vm1820, %v1797, -inf
      %1894 = vmax.xlane.f32.xlu0 %v1893
      %v1895 = vpop.xlane.xlu0 %1894
      %v1896 = vsel %vm1820, %v1800, -inf
      %1897 = vmax.xlane.f32.xlu0 %v1896
      %v1898 = vpop.xlane.xlu0 %1897
      %v1899 = vsel %vm1820, %v1803, -inf
      %1900 = vmax.xlane.f32.xlu0 %v1899
      %v1901 = vpop.xlane.xlu0 %1900
      %v1902 = vsel %vm1820, %v1806, -inf
      %1903 = vmax.xlane.f32.xlu0 %v1902
      %v1904 = vpop.xlane.xlu0 %1903
      %v1905 = vsel %vm1820, %v1809, -inf
      %1906 = vmax.xlane.f32.xlu0 %v1905
      %v1907 = vpop.xlane.xlu0 %1906
      %v1908 = vsel %vm1820, %v1812, -inf
      %1909 = vmax.xlane.f32.xlu0 %v1908
      %v1910 = vpop.xlane.xlu0 %1909
      %v1911 = vsel %vm1820, %v1815, -inf
      %1912 = vmax.xlane.f32.xlu0 %v1911
      %v1913 = vpop.xlane.xlu0 %1912
      %v1914 = vsel %vm1820, %v1818, -inf
      %1915 = vmax.xlane.f32.xlu0 %v1914
      %v1916 = vpop.xlane.xlu0 %1915
      %v1917 = vsub.f32 %v1506, %v1823
      %v1918 = vsub.f32 %v1509, %v1826
      %v1919 = vsub.f32 %v1512, %v1829
      %v1920 = vsub.f32 %v1515, %v1832
      %v1921 = vsub.f32 %v1518, %v1835
      %v1922 = vsub.f32 %v1521, %v1838
      %v1923 = vsub.f32 %v1524, %v1841
      %v1924 = vsub.f32 %v1527, %v1844
      %v1925 = vsub.f32 %v1603, %v1847
      %v1926 = vsub.f32 %v1606, %v1850
      %v1927 = vsub.f32 %v1609, %v1853
      %v1928 = vsub.f32 %v1612, %v1856
      %v1929 = vsub.f32 %v1615, %v1859
      %v1930 = vsub.f32 %v1618, %v1862
      %v1931 = vsub.f32 %v1621, %v1865
      %v1932 = vsub.f32 %v1624, %v1868
      %v1933 = vsub.f32 %v1700, %v1871
      %v1934 = vsub.f32 %v1703, %v1874
      %v1935 = vsub.f32 %v1706, %v1877
      %v1936 = vsub.f32 %v1709, %v1880
      %v1937 = vsub.f32 %v1712, %v1883
      %v1938 = vsub.f32 %v1715, %v1886
      %v1939 = vsub.f32 %v1718, %v1889
      %v1940 = vsub.f32 %v1721, %v1892
      %v1941 = vsub.f32 %v1797, %v1895
      %v1942 = vsub.f32 %v1800, %v1898
      %v1943 = vsub.f32 %v1803, %v1901
      %v1944 = vsub.f32 %v1806, %v1904
      %v1945 = vsub.f32 %v1809, %v1907
      %v1946 = vsub.f32 %v1812, %v1910
      %v1947 = vsub.f32 %v1815, %v1913
      %v1948 = vsub.f32 %v1818, %v1916
      %v1949 = vmul.f32 %v1917, 1.442695
      %v1950 = vpow.pop %v1949
      %v1951 = vmul.f32 %v1918, 1.442695
      %v1952 = vpow.pop %v1951
      %v1953 = vmul.f32 %v1919, 1.442695
      %v1954 = vpow.pop %v1953
      %v1955 = vmul.f32 %v1920, 1.442695
      %v1956 = vpow.pop %v1955
      %v1957 = vmul.f32 %v1921, 1.442695
      %v1958 = vpow.pop %v1957
      %v1959 = vmul.f32 %v1922, 1.442695
      %v1960 = vpow.pop %v1959
      %v1961 = vmul.f32 %v1923, 1.442695
      %v1962 = vpow.pop %v1961
      %v1963 = vmul.f32 %v1924, 1.442695
      %v1964 = vpow.pop %v1963
      %v1965 = vmul.f32 %v1925, 1.442695
      %v1966 = vpow.pop %v1965
      %v1967 = vmul.f32 %v1926, 1.442695
      %v1968 = vpow.pop %v1967
      %v1969 = vmul.f32 %v1927, 1.442695
      %v1970 = vpow.pop %v1969
      %v1971 = vmul.f32 %v1928, 1.442695
      %v1972 = vpow.pop %v1971
      %v1973 = vmul.f32 %v1929, 1.442695
      %v1974 = vpow.pop %v1973
      %v1975 = vmul.f32 %v1930, 1.442695
      %v1976 = vpow.pop %v1975
      %v1977 = vmul.f32 %v1931, 1.442695
      %v1978 = vpow.pop %v1977
      %v1979 = vmul.f32 %v1932, 1.442695
      %v1980 = vpow.pop %v1979
      %v1981 = vmul.f32 %v1933, 1.442695
      %v1982 = vpow.pop %v1981
      %v1983 = vmul.f32 %v1934, 1.442695
      %v1984 = vpow.pop %v1983
      %v1985 = vmul.f32 %v1935, 1.442695
      %v1986 = vpow.pop %v1985
      %v1987 = vmul.f32 %v1936, 1.442695
      %v1988 = vpow.pop %v1987
      %v1989 = vmul.f32 %v1937, 1.442695
      %v1990 = vpow.pop %v1989
      %v1991 = vmul.f32 %v1938, 1.442695
      %v1992 = vpow.pop %v1991
      %v1993 = vmul.f32 %v1939, 1.442695
      %v1994 = vpow.pop %v1993
      %v1995 = vmul.f32 %v1940, 1.442695
      %v1996 = vpow.pop %v1995
      %v1997 = vmul.f32 %v1941, 1.442695
      %v1998 = vpow.pop %v1997
      %v1999 = vmul.f32 %v1942, 1.442695
      %v2000 = vpow.pop %v1999
      %v2001 = vmul.f32 %v1943, 1.442695
      %v2002 = vpow.pop %v2001
      %v2003 = vmul.f32 %v1944, 1.442695
      %v2004 = vpow.pop %v2003
      %v2005 = vmul.f32 %v1945, 1.442695
      %v2006 = vpow.pop %v2005
      %v2007 = vmul.f32 %v1946, 1.442695
      %v2008 = vpow.pop %v2007
      %v2009 = vmul.f32 %v1947, 1.442695
      %v2010 = vpow.pop %v2009
      %v2011 = vmul.f32 %v1948, 1.442695
      %v2012 = vpow.pop %v2011
      %v2013 = vsel %vm1820, %v1950, 0.0
      %2014 = vadd.xlane.f32.xlu0 %v2013
      %v2015 = vpop.xlane.xlu0 %2014
      %v2016 = vsel %vm1820, %v1952, 0.0
      %2017 = vadd.xlane.f32.xlu0 %v2016
      %v2018 = vpop.xlane.xlu0 %2017
      %v2019 = vsel %vm1820, %v1954, 0.0
      %2020 = vadd.xlane.f32.xlu0 %v2019
      %v2021 = vpop.xlane.xlu0 %2020
      %v2022 = vsel %vm1820, %v1956, 0.0
      %2023 = vadd.xlane.f32.xlu0 %v2022
      %v2024 = vpop.xlane.xlu0 %2023
      %v2025 = vsel %vm1820, %v1958, 0.0
      %2026 = vadd.xlane.f32.xlu0 %v2025
      %v2027 = vpop.xlane.xlu0 %2026
      %v2028 = vsel %vm1820, %v1960, 0.0
      %2029 = vadd.xlane.f32.xlu0 %v2028
      %v2030 = vpop.xlane.xlu0 %2029
      %v2031 = vsel %vm1820, %v1962, 0.0
      %2032 = vadd.xlane.f32.xlu0 %v2031
      %v2033 = vpop.xlane.xlu0 %2032
      %v2034 = vsel %vm1820, %v1964, 0.0
      %2035 = vadd.xlane.f32.xlu0 %v2034
      %v2036 = vpop.xlane.xlu0 %2035
      %v2037 = vsel %vm1820, %v1966, 0.0
      %2038 = vadd.xlane.f32.xlu0 %v2037
      %v2039 = vpop.xlane.xlu0 %2038
      %v2040 = vsel %vm1820, %v1968, 0.0
      %2041 = vadd.xlane.f32.xlu0 %v2040
      %v2042 = vpop.xlane.xlu0 %2041
      %v2043 = vsel %vm1820, %v1970, 0.0
      %2044 = vadd.xlane.f32.xlu0 %v2043
      %v2045 = vpop.xlane.xlu0 %2044
      %v2046 = vsel %vm1820, %v1972, 0.0
      %2047 = vadd.xlane.f32.xlu0 %v2046
      %v2048 = vpop.xlane.xlu0 %2047
      %v2049 = vsel %vm1820, %v1974, 0.0
      %2050 = vadd.xlane.f32.xlu0 %v2049
      %v2051 = vpop.xlane.xlu0 %2050
      %v2052 = vsel %vm1820, %v1976, 0.0
      %2053 = vadd.xlane.f32.xlu0 %v2052
      %v2054 = vpop.xlane.xlu0 %2053
      %v2055 = vsel %vm1820, %v1978, 0.0
      %2056 = vadd.xlane.f32.xlu0 %v2055
      %v2057 = vpop.xlane.xlu0 %2056
      %v2058 = vsel %vm1820, %v1980, 0.0
      %2059 = vadd.xlane.f32.xlu0 %v2058
      %v2060 = vpop.xlane.xlu0 %2059
      %v2061 = vsel %vm1820, %v1982, 0.0
      %2062 = vadd.xlane.f32.xlu0 %v2061
      %v2063 = vpop.xlane.xlu0 %2062
      %v2064 = vsel %vm1820, %v1984, 0.0
      %2065 = vadd.xlane.f32.xlu0 %v2064
      %v2066 = vpop.xlane.xlu0 %2065
      %v2067 = vsel %vm1820, %v1986, 0.0
      %2068 = vadd.xlane.f32.xlu0 %v2067
      %v2069 = vpop.xlane.xlu0 %2068
      %v2070 = vsel %vm1820, %v1988, 0.0
      %2071 = vadd.xlane.f32.xlu0 %v2070
      %v2072 = vpop.xlane.xlu0 %2071
      %v2073 = vsel %vm1820, %v1990, 0.0
      %2074 = vadd.xlane.f32.xlu0 %v2073
      %v2075 = vpop.xlane.xlu0 %2074
      %v2076 = vsel %vm1820, %v1992, 0.0
      %2077 = vadd.xlane.f32.xlu0 %v2076
      %v2078 = vpop.xlane.xlu0 %2077
      %v2079 = vsel %vm1820, %v1994, 0.0
      %2080 = vadd.xlane.f32.xlu0 %v2079
      %v2081 = vpop.xlane.xlu0 %2080
      %v2082 = vsel %vm1820, %v1996, 0.0
      %2083 = vadd.xlane.f32.xlu0 %v2082
      %v2084 = vpop.xlane.xlu0 %2083
      %v2085 = vsel %vm1820, %v1998, 0.0
      %2086 = vadd.xlane.f32.xlu0 %v2085
      %v2087 = vpop.xlane.xlu0 %2086
      %v2088 = vsel %vm1820, %v2000, 0.0
      %2089 = vadd.xlane.f32.xlu0 %v2088
      %v2090 = vpop.xlane.xlu0 %2089
      %v2091 = vsel %vm1820, %v2002, 0.0
      %2092 = vadd.xlane.f32.xlu0 %v2091
      %v2093 = vpop.xlane.xlu0 %2092
      %v2094 = vsel %vm1820, %v2004, 0.0
      %2095 = vadd.xlane.f32.xlu0 %v2094
      %v2096 = vpop.xlane.xlu0 %2095
      %v2097 = vsel %vm1820, %v2006, 0.0
      %2098 = vadd.xlane.f32.xlu0 %v2097
      %v2099 = vpop.xlane.xlu0 %2098
      %v2100 = vsel %vm1820, %v2008, 0.0
      %2101 = vadd.xlane.f32.xlu0 %v2100
      %v2102 = vpop.xlane.xlu0 %2101
      %v2103 = vsel %vm1820, %v2010, 0.0
      %2104 = vadd.xlane.f32.xlu0 %v2103
      %v2105 = vpop.xlane.xlu0 %2104
      %v2106 = vsel %vm1820, %v2012, 0.0
      %2107 = vadd.xlane.f32.xlu0 %v2106
      %v2108 = vpop.xlane.xlu0 %2107
      %v2109 = vrcp.pop %v2015
      %v2110 = vmul.f32 %v2015, %v2109
      %v2111 = vsub.f32 1.0, %v2110
      %v2112 = vmul.f32 %v2109, %v2111
      %v2113 = vadd.f32 %v2109, %v2112
      %vm2114 = vweird.f32 %v2015
      %vm2115 = vweird.f32 %v2109
      %vm2116 = vmor %vm2114, %vm2115
      %v2117 = vsel %vm2116, %v2109, %v2113
      %v2118 = vand.u32 2147483647, %v2015
      %vm2119 = vcmp.eq.f32.partialorder %v2118, 8.507059e+37
      %v2120 = vand.u32 %v2015, 2147483648
      %v2121 = vor.u32 1.1754944e-38, %v2120
      %v2122 = vsel %vm2119, %v2121, %v2117
      %v2123 = vmul.f32 %v1950, %v2122
      %v2124 = vrcp.pop %v2018
      %v2125 = vmul.f32 %v2018, %v2124
      %v2126 = vsub.f32 1.0, %v2125
      %v2127 = vmul.f32 %v2124, %v2126
      %v2128 = vadd.f32 %v2124, %v2127
      %vm2129 = vweird.f32 %v2018
      %vm2130 = vweird.f32 %v2124
      %vm2131 = vmor %vm2129, %vm2130
      %v2132 = vsel %vm2131, %v2124, %v2128
      %v2133 = vand.u32 2147483647, %v2018
      %vm2134 = vcmp.eq.f32.partialorder %v2133, 8.507059e+37
      %v2135 = vand.u32 %v2018, 2147483648
      %v2136 = vor.u32 1.1754944e-38, %v2135
      %v2137 = vsel %vm2134, %v2136, %v2132
      %v2138 = vmul.f32 %v1952, %v2137
      %v2139 = vrcp.pop %v2021
      %v2140 = vmul.f32 %v2021, %v2139
      %v2141 = vsub.f32 1.0, %v2140
      %v2142 = vmul.f32 %v2139, %v2141
      %v2143 = vadd.f32 %v2139, %v2142
      %vm2144 = vweird.f32 %v2021
      %vm2145 = vweird.f32 %v2139
      %vm2146 = vmor %vm2144, %vm2145
      %v2147 = vsel %vm2146, %v2139, %v2143
      %v2148 = vand.u32 2147483647, %v2021
      %vm2149 = vcmp.eq.f32.partialorder %v2148, 8.507059e+37
      %v2150 = vand.u32 %v2021, 2147483648
      %v2151 = vor.u32 1.1754944e-38, %v2150
      %v2152 = vsel %vm2149, %v2151, %v2147
      %v2153 = vmul.f32 %v1954, %v2152
      %v2154 = vrcp.pop %v2024
      %v2155 = vmul.f32 %v2024, %v2154
      %v2156 = vsub.f32 1.0, %v2155
      %v2157 = vmul.f32 %v2154, %v2156
      %v2158 = vadd.f32 %v2154, %v2157
      %vm2159 = vweird.f32 %v2024
      %vm2160 = vweird.f32 %v2154
      %vm2161 = vmor %vm2159, %vm2160
      %v2162 = vsel %vm2161, %v2154, %v2158
      %v2163 = vand.u32 2147483647, %v2024
      %vm2164 = vcmp.eq.f32.partialorder %v2163, 8.507059e+37
      %v2165 = vand.u32 %v2024, 2147483648
      %v2166 = vor.u32 1.1754944e-38, %v2165
      %v2167 = vsel %vm2164, %v2166, %v2162
      %v2168 = vmul.f32 %v1956, %v2167
      %v2169 = vrcp.pop %v2027
      %v2170 = vmul.f32 %v2027, %v2169
      %v2171 = vsub.f32 1.0, %v2170
      %v2172 = vmul.f32 %v2169, %v2171
      %v2173 = vadd.f32 %v2169, %v2172
      %vm2174 = vweird.f32 %v2027
      %vm2175 = vweird.f32 %v2169
      %vm2176 = vmor %vm2174, %vm2175
      %v2177 = vsel %vm2176, %v2169, %v2173
      %v2178 = vand.u32 2147483647, %v2027
      %vm2179 = vcmp.eq.f32.partialorder %v2178, 8.507059e+37
      %v2180 = vand.u32 %v2027, 2147483648
      %v2181 = vor.u32 1.1754944e-38, %v2180
      %v2182 = vsel %vm2179, %v2181, %v2177
      %v2183 = vmul.f32 %v1958, %v2182
      %v2184 = vrcp.pop %v2030
      %v2185 = vmul.f32 %v2030, %v2184
      %v2186 = vsub.f32 1.0, %v2185
      %v2187 = vmul.f32 %v2184, %v2186
      %v2188 = vadd.f32 %v2184, %v2187
      %vm2189 = vweird.f32 %v2030
      %vm2190 = vweird.f32 %v2184
      %vm2191 = vmor %vm2189, %vm2190
      %v2192 = vsel %vm2191, %v2184, %v2188
      %v2193 = vand.u32 2147483647, %v2030
      %vm2194 = vcmp.eq.f32.partialorder %v2193, 8.507059e+37
      %v2195 = vand.u32 %v2030, 2147483648
      %v2196 = vor.u32 1.1754944e-38, %v2195
      %v2197 = vsel %vm2194, %v2196, %v2192
      %v2198 = vmul.f32 %v1960, %v2197
      %v2199 = vrcp.pop %v2033
      %v2200 = vmul.f32 %v2033, %v2199
      %v2201 = vsub.f32 1.0, %v2200
      %v2202 = vmul.f32 %v2199, %v2201
      %v2203 = vadd.f32 %v2199, %v2202
      %vm2204 = vweird.f32 %v2033
      %vm2205 = vweird.f32 %v2199
      %vm2206 = vmor %vm2204, %vm2205
      %v2207 = vsel %vm2206, %v2199, %v2203
      %v2208 = vand.u32 2147483647, %v2033
      %vm2209 = vcmp.eq.f32.partialorder %v2208, 8.507059e+37
      %v2210 = vand.u32 %v2033, 2147483648
      %v2211 = vor.u32 1.1754944e-38, %v2210
      %v2212 = vsel %vm2209, %v2211, %v2207
      %v2213 = vmul.f32 %v1962, %v2212
      %v2214 = vrcp.pop %v2036
      %v2215 = vmul.f32 %v2036, %v2214
      %v2216 = vsub.f32 1.0, %v2215
      %v2217 = vmul.f32 %v2214, %v2216
      %v2218 = vadd.f32 %v2214, %v2217
      %vm2219 = vweird.f32 %v2036
      %vm2220 = vweird.f32 %v2214
      %vm2221 = vmor %vm2219, %vm2220
      %v2222 = vsel %vm2221, %v2214, %v2218
      %v2223 = vand.u32 2147483647, %v2036
      %vm2224 = vcmp.eq.f32.partialorder %v2223, 8.507059e+37
      %v2225 = vand.u32 %v2036, 2147483648
      %v2226 = vor.u32 1.1754944e-38, %v2225
      %v2227 = vsel %vm2224, %v2226, %v2222
      %v2228 = vmul.f32 %v1964, %v2227
      %v2229 = vrcp.pop %v2039
      %v2230 = vmul.f32 %v2039, %v2229
      %v2231 = vsub.f32 1.0, %v2230
      %v2232 = vmul.f32 %v2229, %v2231
      %v2233 = vadd.f32 %v2229, %v2232
      %vm2234 = vweird.f32 %v2039
      %vm2235 = vweird.f32 %v2229
      %vm2236 = vmor %vm2234, %vm2235
      %v2237 = vsel %vm2236, %v2229, %v2233
      %v2238 = vand.u32 2147483647, %v2039
      %vm2239 = vcmp.eq.f32.partialorder %v2238, 8.507059e+37
      %v2240 = vand.u32 %v2039, 2147483648
      %v2241 = vor.u32 1.1754944e-38, %v2240
      %v2242 = vsel %vm2239, %v2241, %v2237
      %v2243 = vmul.f32 %v1966, %v2242
      %v2244 = vrcp.pop %v2042
      %v2245 = vmul.f32 %v2042, %v2244
      %v2246 = vsub.f32 1.0, %v2245
      %v2247 = vmul.f32 %v2244, %v2246
      %v2248 = vadd.f32 %v2244, %v2247
      %vm2249 = vweird.f32 %v2042
      %vm2250 = vweird.f32 %v2244
      %vm2251 = vmor %vm2249, %vm2250
      %v2252 = vsel %vm2251, %v2244, %v2248
      %v2253 = vand.u32 2147483647, %v2042
      %vm2254 = vcmp.eq.f32.partialorder %v2253, 8.507059e+37
      %v2255 = vand.u32 %v2042, 2147483648
      %v2256 = vor.u32 1.1754944e-38, %v2255
      %v2257 = vsel %vm2254, %v2256, %v2252
      %v2258 = vmul.f32 %v1968, %v2257
      %v2259 = vrcp.pop %v2045
      %v2260 = vmul.f32 %v2045, %v2259
      %v2261 = vsub.f32 1.0, %v2260
      %v2262 = vmul.f32 %v2259, %v2261
      %v2263 = vadd.f32 %v2259, %v2262
      %vm2264 = vweird.f32 %v2045
      %vm2265 = vweird.f32 %v2259
      %vm2266 = vmor %vm2264, %vm2265
      %v2267 = vsel %vm2266, %v2259, %v2263
      %v2268 = vand.u32 2147483647, %v2045
      %vm2269 = vcmp.eq.f32.partialorder %v2268, 8.507059e+37
      %v2270 = vand.u32 %v2045, 2147483648
      %v2271 = vor.u32 1.1754944e-38, %v2270
      %v2272 = vsel %vm2269, %v2271, %v2267
      %v2273 = vmul.f32 %v1970, %v2272
      %v2274 = vrcp.pop %v2048
      %v2275 = vmul.f32 %v2048, %v2274
      %v2276 = vsub.f32 1.0, %v2275
      %v2277 = vmul.f32 %v2274, %v2276
      %v2278 = vadd.f32 %v2274, %v2277
      %vm2279 = vweird.f32 %v2048
      %vm2280 = vweird.f32 %v2274
      %vm2281 = vmor %vm2279, %vm2280
      %v2282 = vsel %vm2281, %v2274, %v2278
      %v2283 = vand.u32 2147483647, %v2048
      %vm2284 = vcmp.eq.f32.partialorder %v2283, 8.507059e+37
      %v2285 = vand.u32 %v2048, 2147483648
      %v2286 = vor.u32 1.1754944e-38, %v2285
      %v2287 = vsel %vm2284, %v2286, %v2282
      %v2288 = vmul.f32 %v1972, %v2287
      %v2289 = vrcp.pop %v2051
      %v2290 = vmul.f32 %v2051, %v2289
      %v2291 = vsub.f32 1.0, %v2290
      %v2292 = vmul.f32 %v2289, %v2291
      %v2293 = vadd.f32 %v2289, %v2292
      %vm2294 = vweird.f32 %v2051
      %vm2295 = vweird.f32 %v2289
      %vm2296 = vmor %vm2294, %vm2295
      %v2297 = vsel %vm2296, %v2289, %v2293
      %v2298 = vand.u32 2147483647, %v2051
      %vm2299 = vcmp.eq.f32.partialorder %v2298, 8.507059e+37
      %v2300 = vand.u32 %v2051, 2147483648
      %v2301 = vor.u32 1.1754944e-38, %v2300
      %v2302 = vsel %vm2299, %v2301, %v2297
      %v2303 = vmul.f32 %v1974, %v2302
      %v2304 = vrcp.pop %v2054
      %v2305 = vmul.f32 %v2054, %v2304
      %v2306 = vsub.f32 1.0, %v2305
      %v2307 = vmul.f32 %v2304, %v2306
      %v2308 = vadd.f32 %v2304, %v2307
      %vm2309 = vweird.f32 %v2054
      %vm2310 = vweird.f32 %v2304
      %vm2311 = vmor %vm2309, %vm2310
      %v2312 = vsel %vm2311, %v2304, %v2308
      %v2313 = vand.u32 2147483647, %v2054
      %vm2314 = vcmp.eq.f32.partialorder %v2313, 8.507059e+37
      %v2315 = vand.u32 %v2054, 2147483648
      %v2316 = vor.u32 1.1754944e-38, %v2315
      %v2317 = vsel %vm2314, %v2316, %v2312
      %v2318 = vmul.f32 %v1976, %v2317
      %v2319 = vrcp.pop %v2057
      %v2320 = vmul.f32 %v2057, %v2319
      %v2321 = vsub.f32 1.0, %v2320
      %v2322 = vmul.f32 %v2319, %v2321
      %v2323 = vadd.f32 %v2319, %v2322
      %vm2324 = vweird.f32 %v2057
      %vm2325 = vweird.f32 %v2319
      %vm2326 = vmor %vm2324, %vm2325
      %v2327 = vsel %vm2326, %v2319, %v2323
      %v2328 = vand.u32 2147483647, %v2057
      %vm2329 = vcmp.eq.f32.partialorder %v2328, 8.507059e+37
      %v2330 = vand.u32 %v2057, 2147483648
      %v2331 = vor.u32 1.1754944e-38, %v2330
      %v2332 = vsel %vm2329, %v2331, %v2327
      %v2333 = vmul.f32 %v1978, %v2332
      %v2334 = vrcp.pop %v2060
      %v2335 = vmul.f32 %v2060, %v2334
      %v2336 = vsub.f32 1.0, %v2335
      %v2337 = vmul.f32 %v2334, %v2336
      %v2338 = vadd.f32 %v2334, %v2337
      %vm2339 = vweird.f32 %v2060
      %vm2340 = vweird.f32 %v2334
      %vm2341 = vmor %vm2339, %vm2340
      %v2342 = vsel %vm2341, %v2334, %v2338
      %v2343 = vand.u32 2147483647, %v2060
      %vm2344 = vcmp.eq.f32.partialorder %v2343, 8.507059e+37
      %v2345 = vand.u32 %v2060, 2147483648
      %v2346 = vor.u32 1.1754944e-38, %v2345
      %v2347 = vsel %vm2344, %v2346, %v2342
      %v2348 = vmul.f32 %v1980, %v2347
      %v2349 = vrcp.pop %v2063
      %v2350 = vmul.f32 %v2063, %v2349
      %v2351 = vsub.f32 1.0, %v2350
      %v2352 = vmul.f32 %v2349, %v2351
      %v2353 = vadd.f32 %v2349, %v2352
      %vm2354 = vweird.f32 %v2063
      %vm2355 = vweird.f32 %v2349
      %vm2356 = vmor %vm2354, %vm2355
      %v2357 = vsel %vm2356, %v2349, %v2353
      %v2358 = vand.u32 2147483647, %v2063
      %vm2359 = vcmp.eq.f32.partialorder %v2358, 8.507059e+37
      %v2360 = vand.u32 %v2063, 2147483648
      %v2361 = vor.u32 1.1754944e-38, %v2360
      %v2362 = vsel %vm2359, %v2361, %v2357
      %v2363 = vmul.f32 %v1982, %v2362
      %v2364 = vrcp.pop %v2066
      %v2365 = vmul.f32 %v2066, %v2364
      %v2366 = vsub.f32 1.0, %v2365
      %v2367 = vmul.f32 %v2364, %v2366
      %v2368 = vadd.f32 %v2364, %v2367
      %vm2369 = vweird.f32 %v2066
      %vm2370 = vweird.f32 %v2364
      %vm2371 = vmor %vm2369, %vm2370
      %v2372 = vsel %vm2371, %v2364, %v2368
      %v2373 = vand.u32 2147483647, %v2066
      %vm2374 = vcmp.eq.f32.partialorder %v2373, 8.507059e+37
      %v2375 = vand.u32 %v2066, 2147483648
      %v2376 = vor.u32 1.1754944e-38, %v2375
      %v2377 = vsel %vm2374, %v2376, %v2372
      %v2378 = vmul.f32 %v1984, %v2377
      %v2379 = vrcp.pop %v2069
      %v2380 = vmul.f32 %v2069, %v2379
      %v2381 = vsub.f32 1.0, %v2380
      %v2382 = vmul.f32 %v2379, %v2381
      %v2383 = vadd.f32 %v2379, %v2382
      %vm2384 = vweird.f32 %v2069
      %vm2385 = vweird.f32 %v2379
      %vm2386 = vmor %vm2384, %vm2385
      %v2387 = vsel %vm2386, %v2379, %v2383
      %v2388 = vand.u32 2147483647, %v2069
      %vm2389 = vcmp.eq.f32.partialorder %v2388, 8.507059e+37
      %v2390 = vand.u32 %v2069, 2147483648
      %v2391 = vor.u32 1.1754944e-38, %v2390
      %v2392 = vsel %vm2389, %v2391, %v2387
      %v2393 = vmul.f32 %v1986, %v2392
      %v2394 = vrcp.pop %v2072
      %v2395 = vmul.f32 %v2072, %v2394
      %v2396 = vsub.f32 1.0, %v2395
      %v2397 = vmul.f32 %v2394, %v2396
      %v2398 = vadd.f32 %v2394, %v2397
      %vm2399 = vweird.f32 %v2072
      %vm2400 = vweird.f32 %v2394
      %vm2401 = vmor %vm2399, %vm2400
      %v2402 = vsel %vm2401, %v2394, %v2398
      %v2403 = vand.u32 2147483647, %v2072
      %vm2404 = vcmp.eq.f32.partialorder %v2403, 8.507059e+37
      %v2405 = vand.u32 %v2072, 2147483648
      %v2406 = vor.u32 1.1754944e-38, %v2405
      %v2407 = vsel %vm2404, %v2406, %v2402
      %v2408 = vmul.f32 %v1988, %v2407
      %v2409 = vrcp.pop %v2075
      %v2410 = vmul.f32 %v2075, %v2409
      %v2411 = vsub.f32 1.0, %v2410
      %v2412 = vmul.f32 %v2409, %v2411
      %v2413 = vadd.f32 %v2409, %v2412
      %vm2414 = vweird.f32 %v2075
      %vm2415 = vweird.f32 %v2409
      %vm2416 = vmor %vm2414, %vm2415
      %v2417 = vsel %vm2416, %v2409, %v2413
      %v2418 = vand.u32 2147483647, %v2075
      %vm2419 = vcmp.eq.f32.partialorder %v2418, 8.507059e+37
      %v2420 = vand.u32 %v2075, 2147483648
      %v2421 = vor.u32 1.1754944e-38, %v2420
      %v2422 = vsel %vm2419, %v2421, %v2417
      %v2423 = vmul.f32 %v1990, %v2422
      %v2424 = vrcp.pop %v2078
      %v2425 = vmul.f32 %v2078, %v2424
      %v2426 = vsub.f32 1.0, %v2425
      %v2427 = vmul.f32 %v2424, %v2426
      %v2428 = vadd.f32 %v2424, %v2427
      %vm2429 = vweird.f32 %v2078
      %vm2430 = vweird.f32 %v2424
      %vm2431 = vmor %vm2429, %vm2430
      %v2432 = vsel %vm2431, %v2424, %v2428
      %v2433 = vand.u32 2147483647, %v2078
      %vm2434 = vcmp.eq.f32.partialorder %v2433, 8.507059e+37
      %v2435 = vand.u32 %v2078, 2147483648
      %v2436 = vor.u32 1.1754944e-38, %v2435
      %v2437 = vsel %vm2434, %v2436, %v2432
      %v2438 = vmul.f32 %v1992, %v2437
      %v2439 = vrcp.pop %v2081
      %v2440 = vmul.f32 %v2081, %v2439
      %v2441 = vsub.f32 1.0, %v2440
      %v2442 = vmul.f32 %v2439, %v2441
      %v2443 = vadd.f32 %v2439, %v2442
      %vm2444 = vweird.f32 %v2081
      %vm2445 = vweird.f32 %v2439
      %vm2446 = vmor %vm2444, %vm2445
      %v2447 = vsel %vm2446, %v2439, %v2443
      %v2448 = vand.u32 2147483647, %v2081
      %vm2449 = vcmp.eq.f32.partialorder %v2448, 8.507059e+37
      %v2450 = vand.u32 %v2081, 2147483648
      %v2451 = vor.u32 1.1754944e-38, %v2450
      %v2452 = vsel %vm2449, %v2451, %v2447
      %v2453 = vmul.f32 %v1994, %v2452
      %v2454 = vrcp.pop %v2084
      %v2455 = vmul.f32 %v2084, %v2454
      %v2456 = vsub.f32 1.0, %v2455
      %v2457 = vmul.f32 %v2454, %v2456
      %v2458 = vadd.f32 %v2454, %v2457
      %vm2459 = vweird.f32 %v2084
      %vm2460 = vweird.f32 %v2454
      %vm2461 = vmor %vm2459, %vm2460
      %v2462 = vsel %vm2461, %v2454, %v2458
      %v2463 = vand.u32 2147483647, %v2084
      %vm2464 = vcmp.eq.f32.partialorder %v2463, 8.507059e+37
      %v2465 = vand.u32 %v2084, 2147483648
      %v2466 = vor.u32 1.1754944e-38, %v2465
      %v2467 = vsel %vm2464, %v2466, %v2462
      %v2468 = vmul.f32 %v1996, %v2467
      %v2469 = vrcp.pop %v2087
      %v2470 = vmul.f32 %v2087, %v2469
      %v2471 = vsub.f32 1.0, %v2470
      %v2472 = vmul.f32 %v2469, %v2471
      %v2473 = vadd.f32 %v2469, %v2472
      %vm2474 = vweird.f32 %v2087
      %vm2475 = vweird.f32 %v2469
      %vm2476 = vmor %vm2474, %vm2475
      %v2477 = vsel %vm2476, %v2469, %v2473
      %v2478 = vand.u32 2147483647, %v2087
      %vm2479 = vcmp.eq.f32.partialorder %v2478, 8.507059e+37
      %v2480 = vand.u32 %v2087, 2147483648
      %v2481 = vor.u32 1.1754944e-38, %v2480
      %v2482 = vsel %vm2479, %v2481, %v2477
      %v2483 = vmul.f32 %v1998, %v2482
      %v2484 = vrcp.pop %v2090
      %v2485 = vmul.f32 %v2090, %v2484
      %v2486 = vsub.f32 1.0, %v2485
      %v2487 = vmul.f32 %v2484, %v2486
      %v2488 = vadd.f32 %v2484, %v2487
      %vm2489 = vweird.f32 %v2090
      %vm2490 = vweird.f32 %v2484
      %vm2491 = vmor %vm2489, %vm2490
      %v2492 = vsel %vm2491, %v2484, %v2488
      %v2493 = vand.u32 2147483647, %v2090
      %vm2494 = vcmp.eq.f32.partialorder %v2493, 8.507059e+37
      %v2495 = vand.u32 %v2090, 2147483648
      %v2496 = vor.u32 1.1754944e-38, %v2495
      %v2497 = vsel %vm2494, %v2496, %v2492
      %v2498 = vmul.f32 %v2000, %v2497
      %v2499 = vrcp.pop %v2093
      %v2500 = vmul.f32 %v2093, %v2499
      %v2501 = vsub.f32 1.0, %v2500
      %v2502 = vmul.f32 %v2499, %v2501
      %v2503 = vadd.f32 %v2499, %v2502
      %vm2504 = vweird.f32 %v2093
      %vm2505 = vweird.f32 %v2499
      %vm2506 = vmor %vm2504, %vm2505
      %v2507 = vsel %vm2506, %v2499, %v2503
      %v2508 = vand.u32 2147483647, %v2093
      %vm2509 = vcmp.eq.f32.partialorder %v2508, 8.507059e+37
      %v2510 = vand.u32 %v2093, 2147483648
      %v2511 = vor.u32 1.1754944e-38, %v2510
      %v2512 = vsel %vm2509, %v2511, %v2507
      %v2513 = vmul.f32 %v2002, %v2512
      %v2514 = vrcp.pop %v2096
      %v2515 = vmul.f32 %v2096, %v2514
      %v2516 = vsub.f32 1.0, %v2515
      %v2517 = vmul.f32 %v2514, %v2516
      %v2518 = vadd.f32 %v2514, %v2517
      %vm2519 = vweird.f32 %v2096
      %vm2520 = vweird.f32 %v2514
      %vm2521 = vmor %vm2519, %vm2520
      %v2522 = vsel %vm2521, %v2514, %v2518
      %v2523 = vand.u32 2147483647, %v2096
      %vm2524 = vcmp.eq.f32.partialorder %v2523, 8.507059e+37
      %v2525 = vand.u32 %v2096, 2147483648
      %v2526 = vor.u32 1.1754944e-38, %v2525
      %v2527 = vsel %vm2524, %v2526, %v2522
      %v2528 = vmul.f32 %v2004, %v2527
      %v2529 = vrcp.pop %v2099
      %v2530 = vmul.f32 %v2099, %v2529
      %v2531 = vsub.f32 1.0, %v2530
      %v2532 = vmul.f32 %v2529, %v2531
      %v2533 = vadd.f32 %v2529, %v2532
      %vm2534 = vweird.f32 %v2099
      %vm2535 = vweird.f32 %v2529
      %vm2536 = vmor %vm2534, %vm2535
      %v2537 = vsel %vm2536, %v2529, %v2533
      %v2538 = vand.u32 2147483647, %v2099
      %vm2539 = vcmp.eq.f32.partialorder %v2538, 8.507059e+37
      %v2540 = vand.u32 %v2099, 2147483648
      %v2541 = vor.u32 1.1754944e-38, %v2540
      %v2542 = vsel %vm2539, %v2541, %v2537
      %v2543 = vmul.f32 %v2006, %v2542
      %v2544 = vrcp.pop %v2102
      %v2545 = vmul.f32 %v2102, %v2544
      %v2546 = vsub.f32 1.0, %v2545
      %v2547 = vmul.f32 %v2544, %v2546
      %v2548 = vadd.f32 %v2544, %v2547
      %vm2549 = vweird.f32 %v2102
      %vm2550 = vweird.f32 %v2544
      %vm2551 = vmor %vm2549, %vm2550
      %v2552 = vsel %vm2551, %v2544, %v2548
      %v2553 = vand.u32 2147483647, %v2102
      %vm2554 = vcmp.eq.f32.partialorder %v2553, 8.507059e+37
      %v2555 = vand.u32 %v2102, 2147483648
      %v2556 = vor.u32 1.1754944e-38, %v2555
      %v2557 = vsel %vm2554, %v2556, %v2552
      %v2558 = vmul.f32 %v2008, %v2557
      %v2559 = vrcp.pop %v2105
      %v2560 = vmul.f32 %v2105, %v2559
      %v2561 = vsub.f32 1.0, %v2560
      %v2562 = vmul.f32 %v2559, %v2561
      %v2563 = vadd.f32 %v2559, %v2562
      %vm2564 = vweird.f32 %v2105
      %vm2565 = vweird.f32 %v2559
      %vm2566 = vmor %vm2564, %vm2565
      %v2567 = vsel %vm2566, %v2559, %v2563
      %v2568 = vand.u32 2147483647, %v2105
      %vm2569 = vcmp.eq.f32.partialorder %v2568, 8.507059e+37
      %v2570 = vand.u32 %v2105, 2147483648
      %v2571 = vor.u32 1.1754944e-38, %v2570
      %v2572 = vsel %vm2569, %v2571, %v2567
      %v2573 = vmul.f32 %v2010, %v2572
      %v2574 = vrcp.pop %v2108
      %v2575 = vmul.f32 %v2108, %v2574
      %v2576 = vsub.f32 1.0, %v2575
      %v2577 = vmul.f32 %v2574, %v2576
      %v2578 = vadd.f32 %v2574, %v2577
      %vm2579 = vweird.f32 %v2108
      %vm2580 = vweird.f32 %v2574
      %vm2581 = vmor %vm2579, %vm2580
      %v2582 = vsel %vm2581, %v2574, %v2578
      %v2583 = vand.u32 2147483647, %v2108
      %vm2584 = vcmp.eq.f32.partialorder %v2583, 8.507059e+37
      %v2585 = vand.u32 %v2108, 2147483648
      %v2586 = vor.u32 1.1754944e-38, %v2585
      %v2587 = vsel %vm2584, %v2586, %v2582
      %v2588 = vmul.f32 %v2012, %v2587
      %v2590 = vsel %vm1820, %v2123, 0
      %v2593 = vsel %vm1820, %v2138, 0
      %v2596 = vsel %vm1820, %v2153, 0
      %v2599 = vsel %vm1820, %v2168, 0
      %v2602 = vsel %vm1820, %v2183, 0
      %v2605 = vsel %vm1820, %v2198, 0
      %v2608 = vsel %vm1820, %v2213, 0
      %v2611 = vsel %vm1820, %v2228, 0
      %2613 = vmatpush.msra.mxu0 0.0
      %2614 = vmatpush.msra.mxu0 0.0
      %2615 = vmatpush.msra.mxu0 0.0
      %2616 = vmatpush.msra.mxu0 0.0
      %2617 = vmatpush.msra.mxu0 0.0
      %2618 = vmatpush.msra.mxu0 0.0
      %2619 = vmatpush.msra.mxu0 0.0
      %2620 = vmatpush.msra.mxu0 0.0
      %2621 = vmatpush.msra.mxu0 %v1398
      %2622 = vmatpush.msra.mxu0 %v1397
      %2623 = vmatpush.msra.mxu0 %v1396
      %2624 = vmatpush.msra.mxu0 %v1395
      %2625 = vmatpush.msra.mxu0 %v1394
      %2626 = vmatpush.msra.mxu0 %v1393
      %2627 = vmatpush.msra.mxu0 %v1392
      %2628 = vmatpush.msra.mxu0 %v1391
      %2629 = vmatmul.f32.gmra.mxu0 %v2590
      %v2630 = vpop.f32.mrf.mxu0
      %v2631 = vadd.f32 0.0, %v2630
      %2632 = vmatmul.f32.gmra.mxu0 %v2593
      %v2633 = vpop.f32.mrf.mxu0
      %v2634 = vadd.f32 0.0, %v2633
      %2635 = vmatmul.f32.gmra.mxu0 %v2596
      %v2636 = vpop.f32.mrf.mxu0
      %v2637 = vadd.f32 0.0, %v2636
      %2638 = vmatmul.f32.gmra.mxu0 %v2599
      %v2639 = vpop.f32.mrf.mxu0
      %v2640 = vadd.f32 0.0, %v2639
      %2641 = vmatmul.f32.gmra.mxu0 %v2602
      %v2642 = vpop.f32.mrf.mxu0
      %v2643 = vadd.f32 0.0, %v2642
      %2644 = vmatmul.f32.gmra.mxu0 %v2605
      %v2645 = vpop.f32.mrf.mxu0
      %v2646 = vadd.f32 0.0, %v2645
      %2647 = vmatmul.f32.gmra.mxu0 %v2608
      %v2648 = vpop.f32.mrf.mxu0
      %v2649 = vadd.f32 0.0, %v2648
      %2650 = vmatmul.f32.gmra.mxu0 %v2611
      %v2651 = vpop.f32.mrf.mxu0
      %v2652 = vadd.f32 0.0, %v2651
      %2653 = vdwg.mxu0
      %v2655 = vsel %vm1820, %v2243, 0
      %v2658 = vsel %vm1820, %v2258, 0
      %v2661 = vsel %vm1820, %v2273, 0
      %v2664 = vsel %vm1820, %v2288, 0
      %v2667 = vsel %vm1820, %v2303, 0
      %v2670 = vsel %vm1820, %v2318, 0
      %v2673 = vsel %vm1820, %v2333, 0
      %v2676 = vsel %vm1820, %v2348, 0
      %2678 = vmatpush.msra.mxu0 0.0
      %2679 = vmatpush.msra.mxu0 0.0
      %2680 = vmatpush.msra.mxu0 0.0
      %2681 = vmatpush.msra.mxu0 0.0
      %2682 = vmatpush.msra.mxu0 0.0
      %2683 = vmatpush.msra.mxu0 0.0
      %2684 = vmatpush.msra.mxu0 0.0
      %2685 = vmatpush.msra.mxu0 0.0
      %2686 = vmatpush.msra.mxu0 %v1406
      %2687 = vmatpush.msra.mxu0 %v1405
      %2688 = vmatpush.msra.mxu0 %v1404
      %2689 = vmatpush.msra.mxu0 %v1403
      %2690 = vmatpush.msra.mxu0 %v1402
      %2691 = vmatpush.msra.mxu0 %v1401
      %2692 = vmatpush.msra.mxu0 %v1400
      %2693 = vmatpush.msra.mxu0 %v1399
      %2694 = vmatmul.f32.gmra.mxu0 %v2655
      %v2695 = vpop.f32.mrf.mxu0
      %v2696 = vadd.f32 0.0, %v2695
      %2697 = vmatmul.f32.gmra.mxu0 %v2658
      %v2698 = vpop.f32.mrf.mxu0
      %v2699 = vadd.f32 0.0, %v2698
      %2700 = vmatmul.f32.gmra.mxu0 %v2661
      %v2701 = vpop.f32.mrf.mxu0
      %v2702 = vadd.f32 0.0, %v2701
      %2703 = vmatmul.f32.gmra.mxu0 %v2664
      %v2704 = vpop.f32.mrf.mxu0
      %v2705 = vadd.f32 0.0, %v2704
      %2706 = vmatmul.f32.gmra.mxu0 %v2667
      %v2707 = vpop.f32.mrf.mxu0
      %v2708 = vadd.f32 0.0, %v2707
      %2709 = vmatmul.f32.gmra.mxu0 %v2670
      %v2710 = vpop.f32.mrf.mxu0
      %v2711 = vadd.f32 0.0, %v2710
      %2712 = vmatmul.f32.gmra.mxu0 %v2673
      %v2713 = vpop.f32.mrf.mxu0
      %v2714 = vadd.f32 0.0, %v2713
      %2715 = vmatmul.f32.gmra.mxu0 %v2676
      %v2716 = vpop.f32.mrf.mxu0
      %v2717 = vadd.f32 0.0, %v2716
      %2718 = vdwg.mxu0
      %v2720 = vsel %vm1820, %v2363, 0
      %v2723 = vsel %vm1820, %v2378, 0
      %v2726 = vsel %vm1820, %v2393, 0
      %v2729 = vsel %vm1820, %v2408, 0
      %v2732 = vsel %vm1820, %v2423, 0
      %v2735 = vsel %vm1820, %v2438, 0
      %v2738 = vsel %vm1820, %v2453, 0
      %v2741 = vsel %vm1820, %v2468, 0
      %2743 = vmatpush.msra.mxu0 0.0
      %2744 = vmatpush.msra.mxu0 0.0
      %2745 = vmatpush.msra.mxu0 0.0
      %2746 = vmatpush.msra.mxu0 0.0
      %2747 = vmatpush.msra.mxu0 0.0
      %2748 = vmatpush.msra.mxu0 0.0
      %2749 = vmatpush.msra.mxu0 0.0
      %2750 = vmatpush.msra.mxu0 0.0
      %2751 = vmatpush.msra.mxu0 %v1414
      %2752 = vmatpush.msra.mxu0 %v1413
      %2753 = vmatpush.msra.mxu0 %v1412
      %2754 = vmatpush.msra.mxu0 %v1411
      %2755 = vmatpush.msra.mxu0 %v1410
      %2756 = vmatpush.msra.mxu0 %v1409
      %2757 = vmatpush.msra.mxu0 %v1408
      %2758 = vmatpush.msra.mxu0 %v1407
      %2759 = vmatmul.f32.gmra.mxu0 %v2720
      %v2760 = vpop.f32.mrf.mxu0
      %v2761 = vadd.f32 0.0, %v2760
      %2762 = vmatmul.f32.gmra.mxu0 %v2723
      %v2763 = vpop.f32.mrf.mxu0
      %v2764 = vadd.f32 0.0, %v2763
      %2765 = vmatmul.f32.gmra.mxu0 %v2726
      %v2766 = vpop.f32.mrf.mxu0
      %v2767 = vadd.f32 0.0, %v2766
      %2768 = vmatmul.f32.gmra.mxu0 %v2729
      %v2769 = vpop.f32.mrf.mxu0
      %v2770 = vadd.f32 0.0, %v2769
      %2771 = vmatmul.f32.gmra.mxu0 %v2732
      %v2772 = vpop.f32.mrf.mxu0
      %v2773 = vadd.f32 0.0, %v2772
      %2774 = vmatmul.f32.gmra.mxu0 %v2735
      %v2775 = vpop.f32.mrf.mxu0
      %v2776 = vadd.f32 0.0, %v2775
      %2777 = vmatmul.f32.gmra.mxu0 %v2738
      %v2778 = vpop.f32.mrf.mxu0
      %v2779 = vadd.f32 0.0, %v2778
      %2780 = vmatmul.f32.gmra.mxu0 %v2741
      %v2781 = vpop.f32.mrf.mxu0
      %v2782 = vadd.f32 0.0, %v2781
      %2783 = vdwg.mxu0
      %v2785 = vsel %vm1820, %v2483, 0
      %v2788 = vsel %vm1820, %v2498, 0
      %v2791 = vsel %vm1820, %v2513, 0
      %v2794 = vsel %vm1820, %v2528, 0
      %v2797 = vsel %vm1820, %v2543, 0
      %v2800 = vsel %vm1820, %v2558, 0
      %v2803 = vsel %vm1820, %v2573, 0
      %v2806 = vsel %vm1820, %v2588, 0
      %2808 = vmatpush.msra.mxu0 0.0
      %2809 = vmatpush.msra.mxu0 0.0
      %2810 = vmatpush.msra.mxu0 0.0
      %2811 = vmatpush.msra.mxu0 0.0
      %2812 = vmatpush.msra.mxu0 0.0
      %2813 = vmatpush.msra.mxu0 0.0
      %2814 = vmatpush.msra.mxu0 0.0
      %2815 = vmatpush.msra.mxu0 0.0
      %2816 = vmatpush.msra.mxu0 %v1422
      %2817 = vmatpush.msra.mxu0 %v1421
      %2818 = vmatpush.msra.mxu0 %v1420
      %2819 = vmatpush.msra.mxu0 %v1419
      %2820 = vmatpush.msra.mxu0 %v1418
      %2821 = vmatpush.msra.mxu0 %v1417
      %2822 = vmatpush.msra.mxu0 %v1416
      %2823 = vmatpush.msra.mxu0 %v1415
      %2824 = vmatmul.f32.gmra.mxu0 %v2785
      %v2825 = vpop.f32.mrf.mxu0
      %v2826 = vadd.f32 0.0, %v2825
      %2827 = vmatmul.f32.gmra.mxu0 %v2788
      %v2828 = vpop.f32.mrf.mxu0
      %v2829 = vadd.f32 0.0, %v2828
      %2830 = vmatmul.f32.gmra.mxu0 %v2791
      %v2831 = vpop.f32.mrf.mxu0
      %v2832 = vadd.f32 0.0, %v2831
      %2833 = vmatmul.f32.gmra.mxu0 %v2794
      %v2834 = vpop.f32.mrf.mxu0
      %v2835 = vadd.f32 0.0, %v2834
      %2836 = vmatmul.f32.gmra.mxu0 %v2797
      %v2837 = vpop.f32.mrf.mxu0
      %v2838 = vadd.f32 0.0, %v2837
      %2839 = vmatmul.f32.gmra.mxu0 %v2800
      %v2840 = vpop.f32.mrf.mxu0
      %v2841 = vadd.f32 0.0, %v2840
      %2842 = vmatmul.f32.gmra.mxu0 %v2803
      %v2843 = vpop.f32.mrf.mxu0
      %v2844 = vadd.f32 0.0, %v2843
      %2845 = vmatmul.f32.gmra.mxu0 %v2806
      %v2846 = vpop.f32.mrf.mxu0
      %v2847 = vadd.f32 0.0, %v2846
      %2848 = vdwg.mxu0
      %2849 = vst.msk [vmem:[#allocation2] sm:$0xff] %vm1455, %v2631
      %2850 = vst.msk [vmem:[#allocation2 + $0x8] sm:$0xff] %vm1455, %v2634
      %2851 = vst.msk [vmem:[#allocation2 + $0x10] sm:$0xff] %vm1455, %v2637
      %2852 = vst.msk [vmem:[#allocation2 + $0x18] sm:$0xff] %vm1455, %v2640
      %2853 = vst.msk [vmem:[#allocation2 + $0x20] sm:$0xff] %vm1455, %v2643
      %2854 = vst.msk [vmem:[#allocation2 + $0x28] sm:$0xff] %vm1455, %v2646
      %2855 = vst.msk [vmem:[#allocation2 + $0x30] sm:$0xff] %vm1455, %v2649
      %2856 = vst.msk [vmem:[#allocation2 + $0x38] sm:$0xff] %vm1455, %v2652
      %2857 = vst.msk [vmem:[#allocation2 + $0x40] sm:$0xff] %vm1455, %v2696
      %2858 = vst.msk [vmem:[#allocation2 + $0x48] sm:$0xff] %vm1455, %v2699
      %2859 = vst.msk [vmem:[#allocation2 + $0x50] sm:$0xff] %vm1455, %v2702
      %2860 = vst.msk [vmem:[#allocation2 + $0x58] sm:$0xff] %vm1455, %v2705
      %2861 = vst.msk [vmem:[#allocation2 + $0x60] sm:$0xff] %vm1455, %v2708
      %2862 = vst.msk [vmem:[#allocation2 + $0x68] sm:$0xff] %vm1455, %v2711
      %2863 = vst.msk [vmem:[#allocation2 + $0x70] sm:$0xff] %vm1455, %v2714
      %2864 = vst.msk [vmem:[#allocation2 + $0x78] sm:$0xff] %vm1455, %v2717
      %2865 = vst.msk [vmem:[#allocation2 + $0x80] sm:$0xff] %vm1455, %v2761
      %2866 = vst.msk [vmem:[#allocation2 + $0x88] sm:$0xff] %vm1455, %v2764
      %2867 = vst.msk [vmem:[#allocation2 + $0x90] sm:$0xff] %vm1455, %v2767
      %2868 = vst.msk [vmem:[#allocation2 + $0x98] sm:$0xff] %vm1455, %v2770
      %2869 = vst.msk [vmem:[#allocation2 + $0xa0] sm:$0xff] %vm1455, %v2773
      %2870 = vst.msk [vmem:[#allocation2 + $0xa8] sm:$0xff] %vm1455, %v2776
      %2871 = vst.msk [vmem:[#allocation2 + $0xb0] sm:$0xff] %vm1455, %v2779
      %2872 = vst.msk [vmem:[#allocation2 + $0xb8] sm:$0xff] %vm1455, %v2782
      %2873 = vst.msk [vmem:[#allocation2 + $0xc0] sm:$0xff] %vm1455, %v2826
      %2874 = vst.msk [vmem:[#allocation2 + $0xc8] sm:$0xff] %vm1455, %v2829
      %2875 = vst.msk [vmem:[#allocation2 + $0xd0] sm:$0xff] %vm1455, %v2832
      %2876 = vst.msk [vmem:[#allocation2 + $0xd8] sm:$0xff] %vm1455, %v2835
      %2877 = vst.msk [vmem:[#allocation2 + $0xe0] sm:$0xff] %vm1455, %v2838
      %2878 = vst.msk [vmem:[#allocation2 + $0xe8] sm:$0xff] %vm1455, %v2841
      %2879 = vst.msk [vmem:[#allocation2 + $0xf0] sm:$0xff] %vm1455, %v2844
      %2880 = vst.msk [vmem:[#allocation2 + $0xf8] sm:$0xff] %vm1455, %v2847
      %s2881 = scalar_lea.vmem %s2, 64
      %v2882 = vld [vmem:[%s2881] sm:$0xff]
      %v2883 = vld [vmem:[%s2881 + $0x8] sm:$0xff]
      %v2884 = vld [vmem:[%s2881 + $0x10] sm:$0xff]
      %v2885 = vld [vmem:[%s2881 + $0x18] sm:$0xff]
      %v2886 = vld [vmem:[%s2881 + $0x20] sm:$0xff]
      %v2887 = vld [vmem:[%s2881 + $0x28] sm:$0xff]
      %v2888 = vld [vmem:[%s2881 + $0x30] sm:$0xff]
      %v2889 = vld [vmem:[%s2881 + $0x38] sm:$0xff]
      %2890 = vrot.lane.b32.xlu0 %v1296, 120
      %v2891 = vpop.permute.xlu0 %2890
      %2892 = vrot.lane.b32.xlu0 %v1299, 120
      %v2893 = vpop.permute.xlu0 %2892
      %2894 = vrot.lane.b32.xlu0 %v1302, 120
      %v2895 = vpop.permute.xlu0 %2894
      %2896 = vrot.lane.b32.xlu0 %v1305, 120
      %v2897 = vpop.permute.xlu0 %2896
      %2898 = vrot.lane.b32.xlu0 %v1308, 120
      %v2899 = vpop.permute.xlu0 %2898
      %2900 = vrot.lane.b32.xlu0 %v1311, 120
      %v2901 = vpop.permute.xlu0 %2900
      %2902 = vrot.lane.b32.xlu0 %v1314, 120
      %v2903 = vpop.permute.xlu0 %2902
      %2904 = vrot.lane.b32.xlu0 %v1317, 120
      %v2905 = vpop.permute.xlu0 %2904
      %2906 = vrot.lane.b32.xlu0 %v1296, 88
      %v2907 = vpop.permute.xlu0 %2906
      %2908 = vrot.lane.b32.xlu0 %v1299, 88
      %v2909 = vpop.permute.xlu0 %2908
      %2910 = vrot.lane.b32.xlu0 %v1302, 88
      %v2911 = vpop.permute.xlu0 %2910
      %2912 = vrot.lane.b32.xlu0 %v1305, 88
      %v2913 = vpop.permute.xlu0 %2912
      %2914 = vrot.lane.b32.xlu0 %v1308, 88
      %v2915 = vpop.permute.xlu0 %2914
      %2916 = vrot.lane.b32.xlu0 %v1311, 88
      %v2917 = vpop.permute.xlu0 %2916
      %2918 = vrot.lane.b32.xlu0 %v1314, 88
      %v2919 = vpop.permute.xlu0 %2918
      %2920 = vrot.lane.b32.xlu0 %v1317, 88
      %v2921 = vpop.permute.xlu0 %2920
      %v2922 = vsel %vm1455, %v2891, 0
      %v2924 = vsel %vm1455, %v2893, 0
      %v2926 = vsel %vm1455, %v2895, 0
      %v2928 = vsel %vm1455, %v2897, 0
      %v2930 = vsel %vm1455, %v2899, 0
      %v2932 = vsel %vm1455, %v2901, 0
      %v2934 = vsel %vm1455, %v2903, 0
      %v2936 = vsel %vm1455, %v2905, 0
      %v2938 = vsel %vm1455, %v2907, 0
      %v2940 = vsel %vm1455, %v2909, 0
      %v2942 = vsel %vm1455, %v2911, 0
      %v2944 = vsel %vm1455, %v2913, 0
      %v2946 = vsel %vm1455, %v2915, 0
      %v2948 = vsel %vm1455, %v2917, 0
      %v2950 = vsel %vm1455, %v2919, 0
      %v2952 = vsel %vm1455, %v2921, 0
      %2954 = vmatpush.xpose.msra.mxu0 0.0
      %2955 = vmatpush.xpose.msra.mxu0 0.0
      %2956 = vmatpush.xpose.msra.mxu0 0.0
      %2957 = vmatpush.xpose.msra.mxu0 0.0
      %2958 = vmatpush.xpose.msra.mxu0 0.0
      %2959 = vmatpush.xpose.msra.mxu0 0.0
      %2960 = vmatpush.xpose.msra.mxu0 0.0
      %2961 = vmatpush.xpose.msra.mxu0 0.0
      %2962 = vmatpush.xpose.msra.mxu0 %v2952
      %2963 = vmatpush.xpose.msra.mxu0 %v2950
      %2964 = vmatpush.xpose.msra.mxu0 %v2948
      %2965 = vmatpush.xpose.msra.mxu0 %v2946
      %2966 = vmatpush.xpose.msra.mxu0 %v2944
      %2967 = vmatpush.xpose.msra.mxu0 %v2942
      %2968 = vmatpush.xpose.msra.mxu0 %v2940
      %2969 = vmatpush.xpose.msra.mxu0 %v2938
      %2970 = vmatmul.f32.gmra.mxu0 %v2922
      %v2971 = vpop.f32.mrf.mxu0
      %v2972 = vadd.f32 %v2882, %v2971
      %2973 = vmatmul.f32.gmra.mxu0 %v2924
      %v2974 = vpop.f32.mrf.mxu0
      %v2975 = vadd.f32 %v2883, %v2974
      %2976 = vmatmul.f32.gmra.mxu0 %v2926
      %v2977 = vpop.f32.mrf.mxu0
      %v2978 = vadd.f32 %v2884, %v2977
      %2979 = vmatmul.f32.gmra.mxu0 %v2928
      %v2980 = vpop.f32.mrf.mxu0
      %v2981 = vadd.f32 %v2885, %v2980
      %2982 = vmatmul.f32.gmra.mxu0 %v2930
      %v2983 = vpop.f32.mrf.mxu0
      %v2984 = vadd.f32 %v2886, %v2983
      %2985 = vmatmul.f32.gmra.mxu0 %v2932
      %v2986 = vpop.f32.mrf.mxu0
      %v2987 = vadd.f32 %v2887, %v2986
      %2988 = vmatmul.f32.gmra.mxu0 %v2934
      %v2989 = vpop.f32.mrf.mxu0
      %v2990 = vadd.f32 %v2888, %v2989
      %2991 = vmatmul.f32.gmra.mxu0 %v2936
      %v2992 = vpop.f32.mrf.mxu0
      %v2993 = vadd.f32 %v2889, %v2992
      %2994 = vdwg.mxu0
      %2995 = vrot.lane.b32.xlu0 %v1320, 120
      %v2996 = vpop.permute.xlu0 %2995
      %2997 = vrot.lane.b32.xlu0 %v1323, 120
      %v2998 = vpop.permute.xlu0 %2997
      %2999 = vrot.lane.b32.xlu0 %v1326, 120
      %v3000 = vpop.permute.xlu0 %2999
      %3001 = vrot.lane.b32.xlu0 %v1329, 120
      %v3002 = vpop.permute.xlu0 %3001
      %3003 = vrot.lane.b32.xlu0 %v1332, 120
      %v3004 = vpop.permute.xlu0 %3003
      %3005 = vrot.lane.b32.xlu0 %v1335, 120
      %v3006 = vpop.permute.xlu0 %3005
      %3007 = vrot.lane.b32.xlu0 %v1338, 120
      %v3008 = vpop.permute.xlu0 %3007
      %3009 = vrot.lane.b32.xlu0 %v1341, 120
      %v3010 = vpop.permute.xlu0 %3009
      %3011 = vrot.lane.b32.xlu0 %v1320, 88
      %v3012 = vpop.permute.xlu0 %3011
      %3013 = vrot.lane.b32.xlu0 %v1323, 88
      %v3014 = vpop.permute.xlu0 %3013
      %3015 = vrot.lane.b32.xlu0 %v1326, 88
      %v3016 = vpop.permute.xlu0 %3015
      %3017 = vrot.lane.b32.xlu0 %v1329, 88
      %v3018 = vpop.permute.xlu0 %3017
      %3019 = vrot.lane.b32.xlu0 %v1332, 88
      %v3020 = vpop.permute.xlu0 %3019
      %3021 = vrot.lane.b32.xlu0 %v1335, 88
      %v3022 = vpop.permute.xlu0 %3021
      %3023 = vrot.lane.b32.xlu0 %v1338, 88
      %v3024 = vpop.permute.xlu0 %3023
      %3025 = vrot.lane.b32.xlu0 %v1341, 88
      %v3026 = vpop.permute.xlu0 %3025
      %v3027 = vsel %vm1455, %v2996, 0
      %v3029 = vsel %vm1455, %v2998, 0
      %v3031 = vsel %vm1455, %v3000, 0
      %v3033 = vsel %vm1455, %v3002, 0
      %v3035 = vsel %vm1455, %v3004, 0
      %v3037 = vsel %vm1455, %v3006, 0
      %v3039 = vsel %vm1455, %v3008, 0
      %v3041 = vsel %vm1455, %v3010, 0
      %v3043 = vsel %vm1455, %v3012, 0
      %v3045 = vsel %vm1455, %v3014, 0
      %v3047 = vsel %vm1455, %v3016, 0
      %v3049 = vsel %vm1455, %v3018, 0
      %v3051 = vsel %vm1455, %v3020, 0
      %v3053 = vsel %vm1455, %v3022, 0
      %v3055 = vsel %vm1455, %v3024, 0
      %v3057 = vsel %vm1455, %v3026, 0
      %3059 = vmatpush.xpose.msra.mxu0 0.0
      %3060 = vmatpush.xpose.msra.mxu0 0.0
      %3061 = vmatpush.xpose.msra.mxu0 0.0
      %3062 = vmatpush.xpose.msra.mxu0 0.0
      %3063 = vmatpush.xpose.msra.mxu0 0.0
      %3064 = vmatpush.xpose.msra.mxu0 0.0
      %3065 = vmatpush.xpose.msra.mxu0 0.0
      %3066 = vmatpush.xpose.msra.mxu0 0.0
      %3067 = vmatpush.xpose.msra.mxu0 %v3057
      %3068 = vmatpush.xpose.msra.mxu0 %v3055
      %3069 = vmatpush.xpose.msra.mxu0 %v3053
      %3070 = vmatpush.xpose.msra.mxu0 %v3051
      %3071 = vmatpush.xpose.msra.mxu0 %v3049
      %3072 = vmatpush.xpose.msra.mxu0 %v3047
      %3073 = vmatpush.xpose.msra.mxu0 %v3045
      %3074 = vmatpush.xpose.msra.mxu0 %v3043
      %3075 = vmatmul.f32.gmra.mxu0 %v3027
      %v3076 = vpop.f32.mrf.mxu0
      %v3077 = vadd.f32 %v2882, %v3076
      %3078 = vmatmul.f32.gmra.mxu0 %v3029
      %v3079 = vpop.f32.mrf.mxu0
      %v3080 = vadd.f32 %v2883, %v3079
      %3081 = vmatmul.f32.gmra.mxu0 %v3031
      %v3082 = vpop.f32.mrf.mxu0
      %v3083 = vadd.f32 %v2884, %v3082
      %3084 = vmatmul.f32.gmra.mxu0 %v3033
      %v3085 = vpop.f32.mrf.mxu0
      %v3086 = vadd.f32 %v2885, %v3085
      %3087 = vmatmul.f32.gmra.mxu0 %v3035
      %v3088 = vpop.f32.mrf.mxu0
      %v3089 = vadd.f32 %v2886, %v3088
      %3090 = vmatmul.f32.gmra.mxu0 %v3037
      %v3091 = vpop.f32.mrf.mxu0
      %v3092 = vadd.f32 %v2887, %v3091
      %3093 = vmatmul.f32.gmra.mxu0 %v3039
      %v3094 = vpop.f32.mrf.mxu0
      %v3095 = vadd.f32 %v2888, %v3094
      %3096 = vmatmul.f32.gmra.mxu0 %v3041
      %v3097 = vpop.f32.mrf.mxu0
      %v3098 = vadd.f32 %v2889, %v3097
      %3099 = vdwg.mxu0
      %3100 = vrot.lane.b32.xlu0 %v1344, 120
      %v3101 = vpop.permute.xlu0 %3100
      %3102 = vrot.lane.b32.xlu0 %v1347, 120
      %v3103 = vpop.permute.xlu0 %3102
      %3104 = vrot.lane.b32.xlu0 %v1350, 120
      %v3105 = vpop.permute.xlu0 %3104
      %3106 = vrot.lane.b32.xlu0 %v1353, 120
      %v3107 = vpop.permute.xlu0 %3106
      %3108 = vrot.lane.b32.xlu0 %v1356, 120
      %v3109 = vpop.permute.xlu0 %3108
      %3110 = vrot.lane.b32.xlu0 %v1359, 120
      %v3111 = vpop.permute.xlu0 %3110
      %3112 = vrot.lane.b32.xlu0 %v1362, 120
      %v3113 = vpop.permute.xlu0 %3112
      %3114 = vrot.lane.b32.xlu0 %v1365, 120
      %v3115 = vpop.permute.xlu0 %3114
      %3116 = vrot.lane.b32.xlu0 %v1344, 88
      %v3117 = vpop.permute.xlu0 %3116
      %3118 = vrot.lane.b32.xlu0 %v1347, 88
      %v3119 = vpop.permute.xlu0 %3118
      %3120 = vrot.lane.b32.xlu0 %v1350, 88
      %v3121 = vpop.permute.xlu0 %3120
      %3122 = vrot.lane.b32.xlu0 %v1353, 88
      %v3123 = vpop.permute.xlu0 %3122
      %3124 = vrot.lane.b32.xlu0 %v1356, 88
      %v3125 = vpop.permute.xlu0 %3124
      %3126 = vrot.lane.b32.xlu0 %v1359, 88
      %v3127 = vpop.permute.xlu0 %3126
      %3128 = vrot.lane.b32.xlu0 %v1362, 88
      %v3129 = vpop.permute.xlu0 %3128
      %3130 = vrot.lane.b32.xlu0 %v1365, 88
      %v3131 = vpop.permute.xlu0 %3130
      %v3132 = vsel %vm1455, %v3101, 0
      %v3134 = vsel %vm1455, %v3103, 0
      %v3136 = vsel %vm1455, %v3105, 0
      %v3138 = vsel %vm1455, %v3107, 0
      %v3140 = vsel %vm1455, %v3109, 0
      %v3142 = vsel %vm1455, %v3111, 0
      %v3144 = vsel %vm1455, %v3113, 0
      %v3146 = vsel %vm1455, %v3115, 0
      %v3148 = vsel %vm1455, %v3117, 0
      %v3150 = vsel %vm1455, %v3119, 0
      %v3152 = vsel %vm1455, %v3121, 0
      %v3154 = vsel %vm1455, %v3123, 0
      %v3156 = vsel %vm1455, %v3125, 0
      %v3158 = vsel %vm1455, %v3127, 0
      %v3160 = vsel %vm1455, %v3129, 0
      %v3162 = vsel %vm1455, %v3131, 0
      %3164 = vmatpush.xpose.msra.mxu0 0.0
      %3165 = vmatpush.xpose.msra.mxu0 0.0
      %3166 = vmatpush.xpose.msra.mxu0 0.0
      %3167 = vmatpush.xpose.msra.mxu0 0.0
      %3168 = vmatpush.xpose.msra.mxu0 0.0
      %3169 = vmatpush.xpose.msra.mxu0 0.0
      %3170 = vmatpush.xpose.msra.mxu0 0.0
      %3171 = vmatpush.xpose.msra.mxu0 0.0
      %3172 = vmatpush.xpose.msra.mxu0 %v3162
      %3173 = vmatpush.xpose.msra.mxu0 %v3160
      %3174 = vmatpush.xpose.msra.mxu0 %v3158
      %3175 = vmatpush.xpose.msra.mxu0 %v3156
      %3176 = vmatpush.xpose.msra.mxu0 %v3154
      %3177 = vmatpush.xpose.msra.mxu0 %v3152
      %3178 = vmatpush.xpose.msra.mxu0 %v3150
      %3179 = vmatpush.xpose.msra.mxu0 %v3148
      %3180 = vmatmul.f32.gmra.mxu0 %v3132
      %v3181 = vpop.f32.mrf.mxu0
      %v3182 = vadd.f32 %v2882, %v3181
      %3183 = vmatmul.f32.gmra.mxu0 %v3134
      %v3184 = vpop.f32.mrf.mxu0
      %v3185 = vadd.f32 %v2883, %v3184
      %3186 = vmatmul.f32.gmra.mxu0 %v3136
      %v3187 = vpop.f32.mrf.mxu0
      %v3188 = vadd.f32 %v2884, %v3187
      %3189 = vmatmul.f32.gmra.mxu0 %v3138
      %v3190 = vpop.f32.mrf.mxu0
      %v3191 = vadd.f32 %v2885, %v3190
      %3192 = vmatmul.f32.gmra.mxu0 %v3140
      %v3193 = vpop.f32.mrf.mxu0
      %v3194 = vadd.f32 %v2886, %v3193
      %3195 = vmatmul.f32.gmra.mxu0 %v3142
      %v3196 = vpop.f32.mrf.mxu0
      %v3197 = vadd.f32 %v2887, %v3196
      %3198 = vmatmul.f32.gmra.mxu0 %v3144
      %v3199 = vpop.f32.mrf.mxu0
      %v3200 = vadd.f32 %v2888, %v3199
      %3201 = vmatmul.f32.gmra.mxu0 %v3146
      %v3202 = vpop.f32.mrf.mxu0
      %v3203 = vadd.f32 %v2889, %v3202
      %3204 = vdwg.mxu0
      %3205 = vrot.lane.b32.xlu0 %v1368, 120
      %v3206 = vpop.permute.xlu0 %3205
      %3207 = vrot.lane.b32.xlu0 %v1371, 120
      %v3208 = vpop.permute.xlu0 %3207
      %3209 = vrot.lane.b32.xlu0 %v1374, 120
      %v3210 = vpop.permute.xlu0 %3209
      %3211 = vrot.lane.b32.xlu0 %v1377, 120
      %v3212 = vpop.permute.xlu0 %3211
      %3213 = vrot.lane.b32.xlu0 %v1380, 120
      %v3214 = vpop.permute.xlu0 %3213
      %3215 = vrot.lane.b32.xlu0 %v1383, 120
      %v3216 = vpop.permute.xlu0 %3215
      %3217 = vrot.lane.b32.xlu0 %v1386, 120
      %v3218 = vpop.permute.xlu0 %3217
      %3219 = vrot.lane.b32.xlu0 %v1389, 120
      %v3220 = vpop.permute.xlu0 %3219
      %3221 = vrot.lane.b32.xlu0 %v1368, 88
      %v3222 = vpop.permute.xlu0 %3221
      %3223 = vrot.lane.b32.xlu0 %v1371, 88
      %v3224 = vpop.permute.xlu0 %3223
      %3225 = vrot.lane.b32.xlu0 %v1374, 88
      %v3226 = vpop.permute.xlu0 %3225
      %3227 = vrot.lane.b32.xlu0 %v1377, 88
      %v3228 = vpop.permute.xlu0 %3227
      %3229 = vrot.lane.b32.xlu0 %v1380, 88
      %v3230 = vpop.permute.xlu0 %3229
      %3231 = vrot.lane.b32.xlu0 %v1383, 88
      %v3232 = vpop.permute.xlu0 %3231
      %3233 = vrot.lane.b32.xlu0 %v1386, 88
      %v3234 = vpop.permute.xlu0 %3233
      %3235 = vrot.lane.b32.xlu0 %v1389, 88
      %v3236 = vpop.permute.xlu0 %3235
      %v3237 = vsel %vm1455, %v3206, 0
      %v3239 = vsel %vm1455, %v3208, 0
      %v3241 = vsel %vm1455, %v3210, 0
      %v3243 = vsel %vm1455, %v3212, 0
      %v3245 = vsel %vm1455, %v3214, 0
      %v3247 = vsel %vm1455, %v3216, 0
      %v3249 = vsel %vm1455, %v3218, 0
      %v3251 = vsel %vm1455, %v3220, 0
      %v3253 = vsel %vm1455, %v3222, 0
      %v3255 = vsel %vm1455, %v3224, 0
      %v3257 = vsel %vm1455, %v3226, 0
      %v3259 = vsel %vm1455, %v3228, 0
      %v3261 = vsel %vm1455, %v3230, 0
      %v3263 = vsel %vm1455, %v3232, 0
      %v3265 = vsel %vm1455, %v3234, 0
      %v3267 = vsel %vm1455, %v3236, 0
      %3269 = vmatpush.xpose.msra.mxu0 0.0
      %3270 = vmatpush.xpose.msra.mxu0 0.0
      %3271 = vmatpush.xpose.msra.mxu0 0.0
      %3272 = vmatpush.xpose.msra.mxu0 0.0
      %3273 = vmatpush.xpose.msra.mxu0 0.0
      %3274 = vmatpush.xpose.msra.mxu0 0.0
      %3275 = vmatpush.xpose.msra.mxu0 0.0
      %3276 = vmatpush.xpose.msra.mxu0 0.0
      %3277 = vmatpush.xpose.msra.mxu0 %v3267
      %3278 = vmatpush.xpose.msra.mxu0 %v3265
      %3279 = vmatpush.xpose.msra.mxu0 %v3263
      %3280 = vmatpush.xpose.msra.mxu0 %v3261
      %3281 = vmatpush.xpose.msra.mxu0 %v3259
      %3282 = vmatpush.xpose.msra.mxu0 %v3257
      %3283 = vmatpush.xpose.msra.mxu0 %v3255
      %3284 = vmatpush.xpose.msra.mxu0 %v3253
      %3285 = vmatmul.f32.gmra.mxu0 %v3237
      %v3286 = vpop.f32.mrf.mxu0
      %v3287 = vadd.f32 %v2882, %v3286
      %3288 = vmatmul.f32.gmra.mxu0 %v3239
      %v3289 = vpop.f32.mrf.mxu0
      %v3290 = vadd.f32 %v2883, %v3289
      %3291 = vmatmul.f32.gmra.mxu0 %v3241
      %v3292 = vpop.f32.mrf.mxu0
      %v3293 = vadd.f32 %v2884, %v3292
      %3294 = vmatmul.f32.gmra.mxu0 %v3243
      %v3295 = vpop.f32.mrf.mxu0
      %v3296 = vadd.f32 %v2885, %v3295
      %3297 = vmatmul.f32.gmra.mxu0 %v3245
      %v3298 = vpop.f32.mrf.mxu0
      %v3299 = vadd.f32 %v2886, %v3298
      %3300 = vmatmul.f32.gmra.mxu0 %v3247
      %v3301 = vpop.f32.mrf.mxu0
      %v3302 = vadd.f32 %v2887, %v3301
      %3303 = vmatmul.f32.gmra.mxu0 %v3249
      %v3304 = vpop.f32.mrf.mxu0
      %v3305 = vadd.f32 %v2888, %v3304
      %3306 = vmatmul.f32.gmra.mxu0 %v3251
      %v3307 = vpop.f32.mrf.mxu0
      %v3308 = vadd.f32 %v2889, %v3307
      %3309 = vdwg.mxu0
      %v3310 = vsel %vm1820, %v2972, -inf
      %3311 = vmax.xlane.f32.xlu0 %v3310
      %v3312 = vpop.xlane.xlu0 %3311
      %v3313 = vsel %vm1820, %v2975, -inf
      %3314 = vmax.xlane.f32.xlu0 %v3313
      %v3315 = vpop.xlane.xlu0 %3314
      %v3316 = vsel %vm1820, %v2978, -inf
      %3317 = vmax.xlane.f32.xlu0 %v3316
      %v3318 = vpop.xlane.xlu0 %3317
      %v3319 = vsel %vm1820, %v2981, -inf
      %3320 = vmax.xlane.f32.xlu0 %v3319
      %v3321 = vpop.xlane.xlu0 %3320
      %v3322 = vsel %vm1820, %v2984, -inf
      %3323 = vmax.xlane.f32.xlu0 %v3322
      %v3324 = vpop.xlane.xlu0 %3323
      %v3325 = vsel %vm1820, %v2987, -inf
      %3326 = vmax.xlane.f32.xlu0 %v3325
      %v3327 = vpop.xlane.xlu0 %3326
      %v3328 = vsel %vm1820, %v2990, -inf
      %3329 = vmax.xlane.f32.xlu0 %v3328
      %v3330 = vpop.xlane.xlu0 %3329
      %v3331 = vsel %vm1820, %v2993, -inf
      %3332 = vmax.xlane.f32.xlu0 %v3331
      %v3333 = vpop.xlane.xlu0 %3332
      %v3334 = vsel %vm1820, %v3077, -inf
      %3335 = vmax.xlane.f32.xlu0 %v3334
      %v3336 = vpop.xlane.xlu0 %3335
      %v3337 = vsel %vm1820, %v3080, -inf
      %3338 = vmax.xlane.f32.xlu0 %v3337
      %v3339 = vpop.xlane.xlu0 %3338
      %v3340 = vsel %vm1820, %v3083, -inf
      %3341 = vmax.xlane.f32.xlu0 %v3340
      %v3342 = vpop.xlane.xlu0 %3341
      %v3343 = vsel %vm1820, %v3086, -inf
      %3344 = vmax.xlane.f32.xlu0 %v3343
      %v3345 = vpop.xlane.xlu0 %3344
      %v3346 = vsel %vm1820, %v3089, -inf
      %3347 = vmax.xlane.f32.xlu0 %v3346
      %v3348 = vpop.xlane.xlu0 %3347
      %v3349 = vsel %vm1820, %v3092, -inf
      %3350 = vmax.xlane.f32.xlu0 %v3349
      %v3351 = vpop.xlane.xlu0 %3350
      %v3352 = vsel %vm1820, %v3095, -inf
      %3353 = vmax.xlane.f32.xlu0 %v3352
      %v3354 = vpop.xlane.xlu0 %3353
      %v3355 = vsel %vm1820, %v3098, -inf
      %3356 = vmax.xlane.f32.xlu0 %v3355
      %v3357 = vpop.xlane.xlu0 %3356
      %v3358 = vsel %vm1820, %v3182, -inf
      %3359 = vmax.xlane.f32.xlu0 %v3358
      %v3360 = vpop.xlane.xlu0 %3359
      %v3361 = vsel %vm1820, %v3185, -inf
      %3362 = vmax.xlane.f32.xlu0 %v3361
      %v3363 = vpop.xlane.xlu0 %3362
      %v3364 = vsel %vm1820, %v3188, -inf
      %3365 = vmax.xlane.f32.xlu0 %v3364
      %v3366 = vpop.xlane.xlu0 %3365
      %v3367 = vsel %vm1820, %v3191, -inf
      %3368 = vmax.xlane.f32.xlu0 %v3367
      %v3369 = vpop.xlane.xlu0 %3368
      %v3370 = vsel %vm1820, %v3194, -inf
      %3371 = vmax.xlane.f32.xlu0 %v3370
      %v3372 = vpop.xlane.xlu0 %3371
      %v3373 = vsel %vm1820, %v3197, -inf
      %3374 = vmax.xlane.f32.xlu0 %v3373
      %v3375 = vpop.xlane.xlu0 %3374
      %v3376 = vsel %vm1820, %v3200, -inf
      %3377 = vmax.xlane.f32.xlu0 %v3376
      %v3378 = vpop.xlane.xlu0 %3377
      %v3379 = vsel %vm1820, %v3203, -inf
      %3380 = vmax.xlane.f32.xlu0 %v3379
      %v3381 = vpop.xlane.xlu0 %3380
      %v3382 = vsel %vm1820, %v3287, -inf
      %3383 = vmax.xlane.f32.xlu0 %v3382
      %v3384 = vpop.xlane.xlu0 %3383
      %v3385 = vsel %vm1820, %v3290, -inf
      %3386 = vmax.xlane.f32.xlu0 %v3385
      %v3387 = vpop.xlane.xlu0 %3386
      %v3388 = vsel %vm1820, %v3293, -inf
      %3389 = vmax.xlane.f32.xlu0 %v3388
      %v3390 = vpop.xlane.xlu0 %3389
      %v3391 = vsel %vm1820, %v3296, -inf
      %3392 = vmax.xlane.f32.xlu0 %v3391
      %v3393 = vpop.xlane.xlu0 %3392
      %v3394 = vsel %vm1820, %v3299, -inf
      %3395 = vmax.xlane.f32.xlu0 %v3394
      %v3396 = vpop.xlane.xlu0 %3395
      %v3397 = vsel %vm1820, %v3302, -inf
      %3398 = vmax.xlane.f32.xlu0 %v3397
      %v3399 = vpop.xlane.xlu0 %3398
      %v3400 = vsel %vm1820, %v3305, -inf
      %3401 = vmax.xlane.f32.xlu0 %v3400
      %v3402 = vpop.xlane.xlu0 %3401
      %v3403 = vsel %vm1820, %v3308, -inf
      %3404 = vmax.xlane.f32.xlu0 %v3403
      %v3405 = vpop.xlane.xlu0 %3404
      %v3406 = vsub.f32 %v2972, %v3312
      %v3407 = vsub.f32 %v2975, %v3315
      %v3408 = vsub.f32 %v2978, %v3318
      %v3409 = vsub.f32 %v2981, %v3321
      %v3410 = vsub.f32 %v2984, %v3324
      %v3411 = vsub.f32 %v2987, %v3327
      %v3412 = vsub.f32 %v2990, %v3330
      %v3413 = vsub.f32 %v2993, %v3333
      %v3414 = vsub.f32 %v3077, %v3336
      %v3415 = vsub.f32 %v3080, %v3339
      %v3416 = vsub.f32 %v3083, %v3342
      %v3417 = vsub.f32 %v3086, %v3345
      %v3418 = vsub.f32 %v3089, %v3348
      %v3419 = vsub.f32 %v3092, %v3351
      %v3420 = vsub.f32 %v3095, %v3354
      %v3421 = vsub.f32 %v3098, %v3357
      %v3422 = vsub.f32 %v3182, %v3360
      %v3423 = vsub.f32 %v3185, %v3363
      %v3424 = vsub.f32 %v3188, %v3366
      %v3425 = vsub.f32 %v3191, %v3369
      %v3426 = vsub.f32 %v3194, %v3372
      %v3427 = vsub.f32 %v3197, %v3375
      %v3428 = vsub.f32 %v3200, %v3378
      %v3429 = vsub.f32 %v3203, %v3381
      %v3430 = vsub.f32 %v3287, %v3384
      %v3431 = vsub.f32 %v3290, %v3387
      %v3432 = vsub.f32 %v3293, %v3390
      %v3433 = vsub.f32 %v3296, %v3393
      %v3434 = vsub.f32 %v3299, %v3396
      %v3435 = vsub.f32 %v3302, %v3399
      %v3436 = vsub.f32 %v3305, %v3402
      %v3437 = vsub.f32 %v3308, %v3405
      %v3438 = vmul.f32 %v3406, 1.442695
      %v3439 = vpow.pop %v3438
      %v3440 = vmul.f32 %v3407, 1.442695
      %v3441 = vpow.pop %v3440
      %v3442 = vmul.f32 %v3408, 1.442695
      %v3443 = vpow.pop %v3442
      %v3444 = vmul.f32 %v3409, 1.442695
      %v3445 = vpow.pop %v3444
      %v3446 = vmul.f32 %v3410, 1.442695
      %v3447 = vpow.pop %v3446
      %v3448 = vmul.f32 %v3411, 1.442695
      %v3449 = vpow.pop %v3448
      %v3450 = vmul.f32 %v3412, 1.442695
      %v3451 = vpow.pop %v3450
      %v3452 = vmul.f32 %v3413, 1.442695
      %v3453 = vpow.pop %v3452
      %v3454 = vmul.f32 %v3414, 1.442695
      %v3455 = vpow.pop %v3454
      %v3456 = vmul.f32 %v3415, 1.442695
      %v3457 = vpow.pop %v3456
      %v3458 = vmul.f32 %v3416, 1.442695
      %v3459 = vpow.pop %v3458
      %v3460 = vmul.f32 %v3417, 1.442695
      %v3461 = vpow.pop %v3460
      %v3462 = vmul.f32 %v3418, 1.442695
      %v3463 = vpow.pop %v3462
      %v3464 = vmul.f32 %v3419, 1.442695
      %v3465 = vpow.pop %v3464
      %v3466 = vmul.f32 %v3420, 1.442695
      %v3467 = vpow.pop %v3466
      %v3468 = vmul.f32 %v3421, 1.442695
      %v3469 = vpow.pop %v3468
      %v3470 = vmul.f32 %v3422, 1.442695
      %v3471 = vpow.pop %v3470
      %v3472 = vmul.f32 %v3423, 1.442695
      %v3473 = vpow.pop %v3472
      %v3474 = vmul.f32 %v3424, 1.442695
      %v3475 = vpow.pop %v3474
      %v3476 = vmul.f32 %v3425, 1.442695
      %v3477 = vpow.pop %v3476
      %v3478 = vmul.f32 %v3426, 1.442695
      %v3479 = vpow.pop %v3478
      %v3480 = vmul.f32 %v3427, 1.442695
      %v3481 = vpow.pop %v3480
      %v3482 = vmul.f32 %v3428, 1.442695
      %v3483 = vpow.pop %v3482
      %v3484 = vmul.f32 %v3429, 1.442695
      %v3485 = vpow.pop %v3484
      %v3486 = vmul.f32 %v3430, 1.442695
      %v3487 = vpow.pop %v3486
      %v3488 = vmul.f32 %v3431, 1.442695
      %v3489 = vpow.pop %v3488
      %v3490 = vmul.f32 %v3432, 1.442695
      %v3491 = vpow.pop %v3490
      %v3492 = vmul.f32 %v3433, 1.442695
      %v3493 = vpow.pop %v3492
      %v3494 = vmul.f32 %v3434, 1.442695
      %v3495 = vpow.pop %v3494
      %v3496 = vmul.f32 %v3435, 1.442695
      %v3497 = vpow.pop %v3496
      %v3498 = vmul.f32 %v3436, 1.442695
      %v3499 = vpow.pop %v3498
      %v3500 = vmul.f32 %v3437, 1.442695
      %v3501 = vpow.pop %v3500
      %v3502 = vsel %vm1820, %v3439, 0.0
      %3503 = vadd.xlane.f32.xlu0 %v3502
      %v3504 = vpop.xlane.xlu0 %3503
      %v3505 = vsel %vm1820, %v3441, 0.0
      %3506 = vadd.xlane.f32.xlu0 %v3505
      %v3507 = vpop.xlane.xlu0 %3506
      %v3508 = vsel %vm1820, %v3443, 0.0
      %3509 = vadd.xlane.f32.xlu0 %v3508
      %v3510 = vpop.xlane.xlu0 %3509
      %v3511 = vsel %vm1820, %v3445, 0.0
      %3512 = vadd.xlane.f32.xlu0 %v3511
      %v3513 = vpop.xlane.xlu0 %3512
      %v3514 = vsel %vm1820, %v3447, 0.0
      %3515 = vadd.xlane.f32.xlu0 %v3514
      %v3516 = vpop.xlane.xlu0 %3515
      %v3517 = vsel %vm1820, %v3449, 0.0
      %3518 = vadd.xlane.f32.xlu0 %v3517
      %v3519 = vpop.xlane.xlu0 %3518
      %v3520 = vsel %vm1820, %v3451, 0.0
      %3521 = vadd.xlane.f32.xlu0 %v3520
      %v3522 = vpop.xlane.xlu0 %3521
      %v3523 = vsel %vm1820, %v3453, 0.0
      %3524 = vadd.xlane.f32.xlu0 %v3523
      %v3525 = vpop.xlane.xlu0 %3524
      %v3526 = vsel %vm1820, %v3455, 0.0
      %3527 = vadd.xlane.f32.xlu0 %v3526
      %v3528 = vpop.xlane.xlu0 %3527
      %v3529 = vsel %vm1820, %v3457, 0.0
      %3530 = vadd.xlane.f32.xlu0 %v3529
      %v3531 = vpop.xlane.xlu0 %3530
      %v3532 = vsel %vm1820, %v3459, 0.0
      %3533 = vadd.xlane.f32.xlu0 %v3532
      %v3534 = vpop.xlane.xlu0 %3533
      %v3535 = vsel %vm1820, %v3461, 0.0
      %3536 = vadd.xlane.f32.xlu0 %v3535
      %v3537 = vpop.xlane.xlu0 %3536
      %v3538 = vsel %vm1820, %v3463, 0.0
      %3539 = vadd.xlane.f32.xlu0 %v3538
      %v3540 = vpop.xlane.xlu0 %3539
      %v3541 = vsel %vm1820, %v3465, 0.0
      %3542 = vadd.xlane.f32.xlu0 %v3541
      %v3543 = vpop.xlane.xlu0 %3542
      %v3544 = vsel %vm1820, %v3467, 0.0
      %3545 = vadd.xlane.f32.xlu0 %v3544
      %v3546 = vpop.xlane.xlu0 %3545
      %v3547 = vsel %vm1820, %v3469, 0.0
      %3548 = vadd.xlane.f32.xlu0 %v3547
      %v3549 = vpop.xlane.xlu0 %3548
      %v3550 = vsel %vm1820, %v3471, 0.0
      %3551 = vadd.xlane.f32.xlu0 %v3550
      %v3552 = vpop.xlane.xlu0 %3551
      %v3553 = vsel %vm1820, %v3473, 0.0
      %3554 = vadd.xlane.f32.xlu0 %v3553
      %v3555 = vpop.xlane.xlu0 %3554
      %v3556 = vsel %vm1820, %v3475, 0.0
      %3557 = vadd.xlane.f32.xlu0 %v3556
      %v3558 = vpop.xlane.xlu0 %3557
      %v3559 = vsel %vm1820, %v3477, 0.0
      %3560 = vadd.xlane.f32.xlu0 %v3559
      %v3561 = vpop.xlane.xlu0 %3560
      %v3562 = vsel %vm1820, %v3479, 0.0
      %3563 = vadd.xlane.f32.xlu0 %v3562
      %v3564 = vpop.xlane.xlu0 %3563
      %v3565 = vsel %vm1820, %v3481, 0.0
      %3566 = vadd.xlane.f32.xlu0 %v3565
      %v3567 = vpop.xlane.xlu0 %3566
      %v3568 = vsel %vm1820, %v3483, 0.0
      %3569 = vadd.xlane.f32.xlu0 %v3568
      %v3570 = vpop.xlane.xlu0 %3569
      %v3571 = vsel %vm1820, %v3485, 0.0
      %3572 = vadd.xlane.f32.xlu0 %v3571
      %v3573 = vpop.xlane.xlu0 %3572
      %v3574 = vsel %vm1820, %v3487, 0.0
      %3575 = vadd.xlane.f32.xlu0 %v3574
      %v3576 = vpop.xlane.xlu0 %3575
      %v3577 = vsel %vm1820, %v3489, 0.0
      %3578 = vadd.xlane.f32.xlu0 %v3577
      %v3579 = vpop.xlane.xlu0 %3578
      %v3580 = vsel %vm1820, %v3491, 0.0
      %3581 = vadd.xlane.f32.xlu0 %v3580
      %v3582 = vpop.xlane.xlu0 %3581
      %v3583 = vsel %vm1820, %v3493, 0.0
      %3584 = vadd.xlane.f32.xlu0 %v3583
      %v3585 = vpop.xlane.xlu0 %3584
      %v3586 = vsel %vm1820, %v3495, 0.0
      %3587 = vadd.xlane.f32.xlu0 %v3586
      %v3588 = vpop.xlane.xlu0 %3587
      %v3589 = vsel %vm1820, %v3497, 0.0
      %3590 = vadd.xlane.f32.xlu0 %v3589
      %v3591 = vpop.xlane.xlu0 %3590
      %v3592 = vsel %vm1820, %v3499, 0.0
      %3593 = vadd.xlane.f32.xlu0 %v3592
      %v3594 = vpop.xlane.xlu0 %3593
      %v3595 = vsel %vm1820, %v3501, 0.0
      %3596 = vadd.xlane.f32.xlu0 %v3595
      %v3597 = vpop.xlane.xlu0 %3596
      %v3598 = vrcp.pop %v3504
      %v3599 = vmul.f32 %v3504, %v3598
      %v3600 = vsub.f32 1.0, %v3599
      %v3601 = vmul.f32 %v3598, %v3600
      %v3602 = vadd.f32 %v3598, %v3601
      %vm3603 = vweird.f32 %v3504
      %vm3604 = vweird.f32 %v3598
      %vm3605 = vmor %vm3603, %vm3604
      %v3606 = vsel %vm3605, %v3598, %v3602
      %v3607 = vand.u32 2147483647, %v3504
      %vm3608 = vcmp.eq.f32.partialorder %v3607, 8.507059e+37
      %v3609 = vand.u32 %v3504, 2147483648
      %v3610 = vor.u32 1.1754944e-38, %v3609
      %v3611 = vsel %vm3608, %v3610, %v3606
      %v3612 = vmul.f32 %v3439, %v3611
      %v3613 = vrcp.pop %v3507
      %v3614 = vmul.f32 %v3507, %v3613
      %v3615 = vsub.f32 1.0, %v3614
      %v3616 = vmul.f32 %v3613, %v3615
      %v3617 = vadd.f32 %v3613, %v3616
      %vm3618 = vweird.f32 %v3507
      %vm3619 = vweird.f32 %v3613
      %vm3620 = vmor %vm3618, %vm3619
      %v3621 = vsel %vm3620, %v3613, %v3617
      %v3622 = vand.u32 2147483647, %v3507
      %vm3623 = vcmp.eq.f32.partialorder %v3622, 8.507059e+37
      %v3624 = vand.u32 %v3507, 2147483648
      %v3625 = vor.u32 1.1754944e-38, %v3624
      %v3626 = vsel %vm3623, %v3625, %v3621
      %v3627 = vmul.f32 %v3441, %v3626
      %v3628 = vrcp.pop %v3510
      %v3629 = vmul.f32 %v3510, %v3628
      %v3630 = vsub.f32 1.0, %v3629
      %v3631 = vmul.f32 %v3628, %v3630
      %v3632 = vadd.f32 %v3628, %v3631
      %vm3633 = vweird.f32 %v3510
      %vm3634 = vweird.f32 %v3628
      %vm3635 = vmor %vm3633, %vm3634
      %v3636 = vsel %vm3635, %v3628, %v3632
      %v3637 = vand.u32 2147483647, %v3510
      %vm3638 = vcmp.eq.f32.partialorder %v3637, 8.507059e+37
      %v3639 = vand.u32 %v3510, 2147483648
      %v3640 = vor.u32 1.1754944e-38, %v3639
      %v3641 = vsel %vm3638, %v3640, %v3636
      %v3642 = vmul.f32 %v3443, %v3641
      %v3643 = vrcp.pop %v3513
      %v3644 = vmul.f32 %v3513, %v3643
      %v3645 = vsub.f32 1.0, %v3644
      %v3646 = vmul.f32 %v3643, %v3645
      %v3647 = vadd.f32 %v3643, %v3646
      %vm3648 = vweird.f32 %v3513
      %vm3649 = vweird.f32 %v3643
      %vm3650 = vmor %vm3648, %vm3649
      %v3651 = vsel %vm3650, %v3643, %v3647
      %v3652 = vand.u32 2147483647, %v3513
      %vm3653 = vcmp.eq.f32.partialorder %v3652, 8.507059e+37
      %v3654 = vand.u32 %v3513, 2147483648
      %v3655 = vor.u32 1.1754944e-38, %v3654
      %v3656 = vsel %vm3653, %v3655, %v3651
      %v3657 = vmul.f32 %v3445, %v3656
      %v3658 = vrcp.pop %v3516
      %v3659 = vmul.f32 %v3516, %v3658
      %v3660 = vsub.f32 1.0, %v3659
      %v3661 = vmul.f32 %v3658, %v3660
      %v3662 = vadd.f32 %v3658, %v3661
      %vm3663 = vweird.f32 %v3516
      %vm3664 = vweird.f32 %v3658
      %vm3665 = vmor %vm3663, %vm3664
      %v3666 = vsel %vm3665, %v3658, %v3662
      %v3667 = vand.u32 2147483647, %v3516
      %vm3668 = vcmp.eq.f32.partialorder %v3667, 8.507059e+37
      %v3669 = vand.u32 %v3516, 2147483648
      %v3670 = vor.u32 1.1754944e-38, %v3669
      %v3671 = vsel %vm3668, %v3670, %v3666
      %v3672 = vmul.f32 %v3447, %v3671
      %v3673 = vrcp.pop %v3519
      %v3674 = vmul.f32 %v3519, %v3673
      %v3675 = vsub.f32 1.0, %v3674
      %v3676 = vmul.f32 %v3673, %v3675
      %v3677 = vadd.f32 %v3673, %v3676
      %vm3678 = vweird.f32 %v3519
      %vm3679 = vweird.f32 %v3673
      %vm3680 = vmor %vm3678, %vm3679
      %v3681 = vsel %vm3680, %v3673, %v3677
      %v3682 = vand.u32 2147483647, %v3519
      %vm3683 = vcmp.eq.f32.partialorder %v3682, 8.507059e+37
      %v3684 = vand.u32 %v3519, 2147483648
      %v3685 = vor.u32 1.1754944e-38, %v3684
      %v3686 = vsel %vm3683, %v3685, %v3681
      %v3687 = vmul.f32 %v3449, %v3686
      %v3688 = vrcp.pop %v3522
      %v3689 = vmul.f32 %v3522, %v3688
      %v3690 = vsub.f32 1.0, %v3689
      %v3691 = vmul.f32 %v3688, %v3690
      %v3692 = vadd.f32 %v3688, %v3691
      %vm3693 = vweird.f32 %v3522
      %vm3694 = vweird.f32 %v3688
      %vm3695 = vmor %vm3693, %vm3694
      %v3696 = vsel %vm3695, %v3688, %v3692
      %v3697 = vand.u32 2147483647, %v3522
      %vm3698 = vcmp.eq.f32.partialorder %v3697, 8.507059e+37
      %v3699 = vand.u32 %v3522, 2147483648
      %v3700 = vor.u32 1.1754944e-38, %v3699
      %v3701 = vsel %vm3698, %v3700, %v3696
      %v3702 = vmul.f32 %v3451, %v3701
      %v3703 = vrcp.pop %v3525
      %v3704 = vmul.f32 %v3525, %v3703
      %v3705 = vsub.f32 1.0, %v3704
      %v3706 = vmul.f32 %v3703, %v3705
      %v3707 = vadd.f32 %v3703, %v3706
      %vm3708 = vweird.f32 %v3525
      %vm3709 = vweird.f32 %v3703
      %vm3710 = vmor %vm3708, %vm3709
      %v3711 = vsel %vm3710, %v3703, %v3707
      %v3712 = vand.u32 2147483647, %v3525
      %vm3713 = vcmp.eq.f32.partialorder %v3712, 8.507059e+37
      %v3714 = vand.u32 %v3525, 2147483648
      %v3715 = vor.u32 1.1754944e-38, %v3714
      %v3716 = vsel %vm3713, %v3715, %v3711
      %v3717 = vmul.f32 %v3453, %v3716
      %v3718 = vrcp.pop %v3528
      %v3719 = vmul.f32 %v3528, %v3718
      %v3720 = vsub.f32 1.0, %v3719
      %v3721 = vmul.f32 %v3718, %v3720
      %v3722 = vadd.f32 %v3718, %v3721
      %vm3723 = vweird.f32 %v3528
      %vm3724 = vweird.f32 %v3718
      %vm3725 = vmor %vm3723, %vm3724
      %v3726 = vsel %vm3725, %v3718, %v3722
      %v3727 = vand.u32 2147483647, %v3528
      %vm3728 = vcmp.eq.f32.partialorder %v3727, 8.507059e+37
      %v3729 = vand.u32 %v3528, 2147483648
      %v3730 = vor.u32 1.1754944e-38, %v3729
      %v3731 = vsel %vm3728, %v3730, %v3726
      %v3732 = vmul.f32 %v3455, %v3731
      %v3733 = vrcp.pop %v3531
      %v3734 = vmul.f32 %v3531, %v3733
      %v3735 = vsub.f32 1.0, %v3734
      %v3736 = vmul.f32 %v3733, %v3735
      %v3737 = vadd.f32 %v3733, %v3736
      %vm3738 = vweird.f32 %v3531
      %vm3739 = vweird.f32 %v3733
      %vm3740 = vmor %vm3738, %vm3739
      %v3741 = vsel %vm3740, %v3733, %v3737
      %v3742 = vand.u32 2147483647, %v3531
      %vm3743 = vcmp.eq.f32.partialorder %v3742, 8.507059e+37
      %v3744 = vand.u32 %v3531, 2147483648
      %v3745 = vor.u32 1.1754944e-38, %v3744
      %v3746 = vsel %vm3743, %v3745, %v3741
      %v3747 = vmul.f32 %v3457, %v3746
      %v3748 = vrcp.pop %v3534
      %v3749 = vmul.f32 %v3534, %v3748
      %v3750 = vsub.f32 1.0, %v3749
      %v3751 = vmul.f32 %v3748, %v3750
      %v3752 = vadd.f32 %v3748, %v3751
      %vm3753 = vweird.f32 %v3534
      %vm3754 = vweird.f32 %v3748
      %vm3755 = vmor %vm3753, %vm3754
      %v3756 = vsel %vm3755, %v3748, %v3752
      %v3757 = vand.u32 2147483647, %v3534
      %vm3758 = vcmp.eq.f32.partialorder %v3757, 8.507059e+37
      %v3759 = vand.u32 %v3534, 2147483648
      %v3760 = vor.u32 1.1754944e-38, %v3759
      %v3761 = vsel %vm3758, %v3760, %v3756
      %v3762 = vmul.f32 %v3459, %v3761
      %v3763 = vrcp.pop %v3537
      %v3764 = vmul.f32 %v3537, %v3763
      %v3765 = vsub.f32 1.0, %v3764
      %v3766 = vmul.f32 %v3763, %v3765
      %v3767 = vadd.f32 %v3763, %v3766
      %vm3768 = vweird.f32 %v3537
      %vm3769 = vweird.f32 %v3763
      %vm3770 = vmor %vm3768, %vm3769
      %v3771 = vsel %vm3770, %v3763, %v3767
      %v3772 = vand.u32 2147483647, %v3537
      %vm3773 = vcmp.eq.f32.partialorder %v3772, 8.507059e+37
      %v3774 = vand.u32 %v3537, 2147483648
      %v3775 = vor.u32 1.1754944e-38, %v3774
      %v3776 = vsel %vm3773, %v3775, %v3771
      %v3777 = vmul.f32 %v3461, %v3776
      %v3778 = vrcp.pop %v3540
      %v3779 = vmul.f32 %v3540, %v3778
      %v3780 = vsub.f32 1.0, %v3779
      %v3781 = vmul.f32 %v3778, %v3780
      %v3782 = vadd.f32 %v3778, %v3781
      %vm3783 = vweird.f32 %v3540
      %vm3784 = vweird.f32 %v3778
      %vm3785 = vmor %vm3783, %vm3784
      %v3786 = vsel %vm3785, %v3778, %v3782
      %v3787 = vand.u32 2147483647, %v3540
      %vm3788 = vcmp.eq.f32.partialorder %v3787, 8.507059e+37
      %v3789 = vand.u32 %v3540, 2147483648
      %v3790 = vor.u32 1.1754944e-38, %v3789
      %v3791 = vsel %vm3788, %v3790, %v3786
      %v3792 = vmul.f32 %v3463, %v3791
      %v3793 = vrcp.pop %v3543
      %v3794 = vmul.f32 %v3543, %v3793
      %v3795 = vsub.f32 1.0, %v3794
      %v3796 = vmul.f32 %v3793, %v3795
      %v3797 = vadd.f32 %v3793, %v3796
      %vm3798 = vweird.f32 %v3543
      %vm3799 = vweird.f32 %v3793
      %vm3800 = vmor %vm3798, %vm3799
      %v3801 = vsel %vm3800, %v3793, %v3797
      %v3802 = vand.u32 2147483647, %v3543
      %vm3803 = vcmp.eq.f32.partialorder %v3802, 8.507059e+37
      %v3804 = vand.u32 %v3543, 2147483648
      %v3805 = vor.u32 1.1754944e-38, %v3804
      %v3806 = vsel %vm3803, %v3805, %v3801
      %v3807 = vmul.f32 %v3465, %v3806
      %v3808 = vrcp.pop %v3546
      %v3809 = vmul.f32 %v3546, %v3808
      %v3810 = vsub.f32 1.0, %v3809
      %v3811 = vmul.f32 %v3808, %v3810
      %v3812 = vadd.f32 %v3808, %v3811
      %vm3813 = vweird.f32 %v3546
      %vm3814 = vweird.f32 %v3808
      %vm3815 = vmor %vm3813, %vm3814
      %v3816 = vsel %vm3815, %v3808, %v3812
      %v3817 = vand.u32 2147483647, %v3546
      %vm3818 = vcmp.eq.f32.partialorder %v3817, 8.507059e+37
      %v3819 = vand.u32 %v3546, 2147483648
      %v3820 = vor.u32 1.1754944e-38, %v3819
      %v3821 = vsel %vm3818, %v3820, %v3816
      %v3822 = vmul.f32 %v3467, %v3821
      %v3823 = vrcp.pop %v3549
      %v3824 = vmul.f32 %v3549, %v3823
      %v3825 = vsub.f32 1.0, %v3824
      %v3826 = vmul.f32 %v3823, %v3825
      %v3827 = vadd.f32 %v3823, %v3826
      %vm3828 = vweird.f32 %v3549
      %vm3829 = vweird.f32 %v3823
      %vm3830 = vmor %vm3828, %vm3829
      %v3831 = vsel %vm3830, %v3823, %v3827
      %v3832 = vand.u32 2147483647, %v3549
      %vm3833 = vcmp.eq.f32.partialorder %v3832, 8.507059e+37
      %v3834 = vand.u32 %v3549, 2147483648
      %v3835 = vor.u32 1.1754944e-38, %v3834
      %v3836 = vsel %vm3833, %v3835, %v3831
      %v3837 = vmul.f32 %v3469, %v3836
      %v3838 = vrcp.pop %v3552
      %v3839 = vmul.f32 %v3552, %v3838
      %v3840 = vsub.f32 1.0, %v3839
      %v3841 = vmul.f32 %v3838, %v3840
      %v3842 = vadd.f32 %v3838, %v3841
      %vm3843 = vweird.f32 %v3552
      %vm3844 = vweird.f32 %v3838
      %vm3845 = vmor %vm3843, %vm3844
      %v3846 = vsel %vm3845, %v3838, %v3842
      %v3847 = vand.u32 2147483647, %v3552
      %vm3848 = vcmp.eq.f32.partialorder %v3847, 8.507059e+37
      %v3849 = vand.u32 %v3552, 2147483648
      %v3850 = vor.u32 1.1754944e-38, %v3849
      %v3851 = vsel %vm3848, %v3850, %v3846
      %v3852 = vmul.f32 %v3471, %v3851
      %v3853 = vrcp.pop %v3555
      %v3854 = vmul.f32 %v3555, %v3853
      %v3855 = vsub.f32 1.0, %v3854
      %v3856 = vmul.f32 %v3853, %v3855
      %v3857 = vadd.f32 %v3853, %v3856
      %vm3858 = vweird.f32 %v3555
      %vm3859 = vweird.f32 %v3853
      %vm3860 = vmor %vm3858, %vm3859
      %v3861 = vsel %vm3860, %v3853, %v3857
      %v3862 = vand.u32 2147483647, %v3555
      %vm3863 = vcmp.eq.f32.partialorder %v3862, 8.507059e+37
      %v3864 = vand.u32 %v3555, 2147483648
      %v3865 = vor.u32 1.1754944e-38, %v3864
      %v3866 = vsel %vm3863, %v3865, %v3861
      %v3867 = vmul.f32 %v3473, %v3866
      %v3868 = vrcp.pop %v3558
      %v3869 = vmul.f32 %v3558, %v3868
      %v3870 = vsub.f32 1.0, %v3869
      %v3871 = vmul.f32 %v3868, %v3870
      %v3872 = vadd.f32 %v3868, %v3871
      %vm3873 = vweird.f32 %v3558
      %vm3874 = vweird.f32 %v3868
      %vm3875 = vmor %vm3873, %vm3874
      %v3876 = vsel %vm3875, %v3868, %v3872
      %v3877 = vand.u32 2147483647, %v3558
      %vm3878 = vcmp.eq.f32.partialorder %v3877, 8.507059e+37
      %v3879 = vand.u32 %v3558, 2147483648
      %v3880 = vor.u32 1.1754944e-38, %v3879
      %v3881 = vsel %vm3878, %v3880, %v3876
      %v3882 = vmul.f32 %v3475, %v3881
      %v3883 = vrcp.pop %v3561
      %v3884 = vmul.f32 %v3561, %v3883
      %v3885 = vsub.f32 1.0, %v3884
      %v3886 = vmul.f32 %v3883, %v3885
      %v3887 = vadd.f32 %v3883, %v3886
      %vm3888 = vweird.f32 %v3561
      %vm3889 = vweird.f32 %v3883
      %vm3890 = vmor %vm3888, %vm3889
      %v3891 = vsel %vm3890, %v3883, %v3887
      %v3892 = vand.u32 2147483647, %v3561
      %vm3893 = vcmp.eq.f32.partialorder %v3892, 8.507059e+37
      %v3894 = vand.u32 %v3561, 2147483648
      %v3895 = vor.u32 1.1754944e-38, %v3894
      %v3896 = vsel %vm3893, %v3895, %v3891
      %v3897 = vmul.f32 %v3477, %v3896
      %v3898 = vrcp.pop %v3564
      %v3899 = vmul.f32 %v3564, %v3898
      %v3900 = vsub.f32 1.0, %v3899
      %v3901 = vmul.f32 %v3898, %v3900
      %v3902 = vadd.f32 %v3898, %v3901
      %vm3903 = vweird.f32 %v3564
      %vm3904 = vweird.f32 %v3898
      %vm3905 = vmor %vm3903, %vm3904
      %v3906 = vsel %vm3905, %v3898, %v3902
      %v3907 = vand.u32 2147483647, %v3564
      %vm3908 = vcmp.eq.f32.partialorder %v3907, 8.507059e+37
      %v3909 = vand.u32 %v3564, 2147483648
      %v3910 = vor.u32 1.1754944e-38, %v3909
      %v3911 = vsel %vm3908, %v3910, %v3906
      %v3912 = vmul.f32 %v3479, %v3911
      %v3913 = vrcp.pop %v3567
      %v3914 = vmul.f32 %v3567, %v3913
      %v3915 = vsub.f32 1.0, %v3914
      %v3916 = vmul.f32 %v3913, %v3915
      %v3917 = vadd.f32 %v3913, %v3916
      %vm3918 = vweird.f32 %v3567
      %vm3919 = vweird.f32 %v3913
      %vm3920 = vmor %vm3918, %vm3919
      %v3921 = vsel %vm3920, %v3913, %v3917
      %v3922 = vand.u32 2147483647, %v3567
      %vm3923 = vcmp.eq.f32.partialorder %v3922, 8.507059e+37
      %v3924 = vand.u32 %v3567, 2147483648
      %v3925 = vor.u32 1.1754944e-38, %v3924
      %v3926 = vsel %vm3923, %v3925, %v3921
      %v3927 = vmul.f32 %v3481, %v3926
      %v3928 = vrcp.pop %v3570
      %v3929 = vmul.f32 %v3570, %v3928
      %v3930 = vsub.f32 1.0, %v3929
      %v3931 = vmul.f32 %v3928, %v3930
      %v3932 = vadd.f32 %v3928, %v3931
      %vm3933 = vweird.f32 %v3570
      %vm3934 = vweird.f32 %v3928
      %vm3935 = vmor %vm3933, %vm3934
      %v3936 = vsel %vm3935, %v3928, %v3932
      %v3937 = vand.u32 2147483647, %v3570
      %vm3938 = vcmp.eq.f32.partialorder %v3937, 8.507059e+37
      %v3939 = vand.u32 %v3570, 2147483648
      %v3940 = vor.u32 1.1754944e-38, %v3939
      %v3941 = vsel %vm3938, %v3940, %v3936
      %v3942 = vmul.f32 %v3483, %v3941
      %v3943 = vrcp.pop %v3573
      %v3944 = vmul.f32 %v3573, %v3943
      %v3945 = vsub.f32 1.0, %v3944
      %v3946 = vmul.f32 %v3943, %v3945
      %v3947 = vadd.f32 %v3943, %v3946
      %vm3948 = vweird.f32 %v3573
      %vm3949 = vweird.f32 %v3943
      %vm3950 = vmor %vm3948, %vm3949
      %v3951 = vsel %vm3950, %v3943, %v3947
      %v3952 = vand.u32 2147483647, %v3573
      %vm3953 = vcmp.eq.f32.partialorder %v3952, 8.507059e+37
      %v3954 = vand.u32 %v3573, 2147483648
      %v3955 = vor.u32 1.1754944e-38, %v3954
      %v3956 = vsel %vm3953, %v3955, %v3951
      %v3957 = vmul.f32 %v3485, %v3956
      %v3958 = vrcp.pop %v3576
      %v3959 = vmul.f32 %v3576, %v3958
      %v3960 = vsub.f32 1.0, %v3959
      %v3961 = vmul.f32 %v3958, %v3960
      %v3962 = vadd.f32 %v3958, %v3961
      %vm3963 = vweird.f32 %v3576
      %vm3964 = vweird.f32 %v3958
      %vm3965 = vmor %vm3963, %vm3964
      %v3966 = vsel %vm3965, %v3958, %v3962
      %v3967 = vand.u32 2147483647, %v3576
      %vm3968 = vcmp.eq.f32.partialorder %v3967, 8.507059e+37
      %v3969 = vand.u32 %v3576, 2147483648
      %v3970 = vor.u32 1.1754944e-38, %v3969
      %v3971 = vsel %vm3968, %v3970, %v3966
      %v3972 = vmul.f32 %v3487, %v3971
      %v3973 = vrcp.pop %v3579
      %v3974 = vmul.f32 %v3579, %v3973
      %v3975 = vsub.f32 1.0, %v3974
      %v3976 = vmul.f32 %v3973, %v3975
      %v3977 = vadd.f32 %v3973, %v3976
      %vm3978 = vweird.f32 %v3579
      %vm3979 = vweird.f32 %v3973
      %vm3980 = vmor %vm3978, %vm3979
      %v3981 = vsel %vm3980, %v3973, %v3977
      %v3982 = vand.u32 2147483647, %v3579
      %vm3983 = vcmp.eq.f32.partialorder %v3982, 8.507059e+37
      %v3984 = vand.u32 %v3579, 2147483648
      %v3985 = vor.u32 1.1754944e-38, %v3984
      %v3986 = vsel %vm3983, %v3985, %v3981
      %v3987 = vmul.f32 %v3489, %v3986
      %v3988 = vrcp.pop %v3582
      %v3989 = vmul.f32 %v3582, %v3988
      %v3990 = vsub.f32 1.0, %v3989
      %v3991 = vmul.f32 %v3988, %v3990
      %v3992 = vadd.f32 %v3988, %v3991
      %vm3993 = vweird.f32 %v3582
      %vm3994 = vweird.f32 %v3988
      %vm3995 = vmor %vm3993, %vm3994
      %v3996 = vsel %vm3995, %v3988, %v3992
      %v3997 = vand.u32 2147483647, %v3582
      %vm3998 = vcmp.eq.f32.partialorder %v3997, 8.507059e+37
      %v3999 = vand.u32 %v3582, 2147483648
      %v4000 = vor.u32 1.1754944e-38, %v3999
      %v4001 = vsel %vm3998, %v4000, %v3996
      %v4002 = vmul.f32 %v3491, %v4001
      %v4003 = vrcp.pop %v3585
      %v4004 = vmul.f32 %v3585, %v4003
      %v4005 = vsub.f32 1.0, %v4004
      %v4006 = vmul.f32 %v4003, %v4005
      %v4007 = vadd.f32 %v4003, %v4006
      %vm4008 = vweird.f32 %v3585
      %vm4009 = vweird.f32 %v4003
      %vm4010 = vmor %vm4008, %vm4009
      %v4011 = vsel %vm4010, %v4003, %v4007
      %v4012 = vand.u32 2147483647, %v3585
      %vm4013 = vcmp.eq.f32.partialorder %v4012, 8.507059e+37
      %v4014 = vand.u32 %v3585, 2147483648
      %v4015 = vor.u32 1.1754944e-38, %v4014
      %v4016 = vsel %vm4013, %v4015, %v4011
      %v4017 = vmul.f32 %v3493, %v4016
      %v4018 = vrcp.pop %v3588
      %v4019 = vmul.f32 %v3588, %v4018
      %v4020 = vsub.f32 1.0, %v4019
      %v4021 = vmul.f32 %v4018, %v4020
      %v4022 = vadd.f32 %v4018, %v4021
      %vm4023 = vweird.f32 %v3588
      %vm4024 = vweird.f32 %v4018
      %vm4025 = vmor %vm4023, %vm4024
      %v4026 = vsel %vm4025, %v4018, %v4022
      %v4027 = vand.u32 2147483647, %v3588
      %vm4028 = vcmp.eq.f32.partialorder %v4027, 8.507059e+37
      %v4029 = vand.u32 %v3588, 2147483648
      %v4030 = vor.u32 1.1754944e-38, %v4029
      %v4031 = vsel %vm4028, %v4030, %v4026
      %v4032 = vmul.f32 %v3495, %v4031
      %v4033 = vrcp.pop %v3591
      %v4034 = vmul.f32 %v3591, %v4033
      %v4035 = vsub.f32 1.0, %v4034
      %v4036 = vmul.f32 %v4033, %v4035
      %v4037 = vadd.f32 %v4033, %v4036
      %vm4038 = vweird.f32 %v3591
      %vm4039 = vweird.f32 %v4033
      %vm4040 = vmor %vm4038, %vm4039
      %v4041 = vsel %vm4040, %v4033, %v4037
      %v4042 = vand.u32 2147483647, %v3591
      %vm4043 = vcmp.eq.f32.partialorder %v4042, 8.507059e+37
      %v4044 = vand.u32 %v3591, 2147483648
      %v4045 = vor.u32 1.1754944e-38, %v4044
      %v4046 = vsel %vm4043, %v4045, %v4041
      %v4047 = vmul.f32 %v3497, %v4046
      %v4048 = vrcp.pop %v3594
      %v4049 = vmul.f32 %v3594, %v4048
      %v4050 = vsub.f32 1.0, %v4049
      %v4051 = vmul.f32 %v4048, %v4050
      %v4052 = vadd.f32 %v4048, %v4051
      %vm4053 = vweird.f32 %v3594
      %vm4054 = vweird.f32 %v4048
      %vm4055 = vmor %vm4053, %vm4054
      %v4056 = vsel %vm4055, %v4048, %v4052
      %v4057 = vand.u32 2147483647, %v3594
      %vm4058 = vcmp.eq.f32.partialorder %v4057, 8.507059e+37
      %v4059 = vand.u32 %v3594, 2147483648
      %v4060 = vor.u32 1.1754944e-38, %v4059
      %v4061 = vsel %vm4058, %v4060, %v4056
      %v4062 = vmul.f32 %v3499, %v4061
      %v4063 = vrcp.pop %v3597
      %v4064 = vmul.f32 %v3597, %v4063
      %v4065 = vsub.f32 1.0, %v4064
      %v4066 = vmul.f32 %v4063, %v4065
      %v4067 = vadd.f32 %v4063, %v4066
      %vm4068 = vweird.f32 %v3597
      %vm4069 = vweird.f32 %v4063
      %vm4070 = vmor %vm4068, %vm4069
      %v4071 = vsel %vm4070, %v4063, %v4067
      %v4072 = vand.u32 2147483647, %v3597
      %vm4073 = vcmp.eq.f32.partialorder %v4072, 8.507059e+37
      %v4074 = vand.u32 %v3597, 2147483648
      %v4075 = vor.u32 1.1754944e-38, %v4074
      %v4076 = vsel %vm4073, %v4075, %v4071
      %v4077 = vmul.f32 %v3501, %v4076
      %4086 = vrot.lane.b32.xlu0 %v1391, 120
      %v4087 = vpop.permute.xlu0 %4086
      %4088 = vrot.lane.b32.xlu0 %v1392, 120
      %v4089 = vpop.permute.xlu0 %4088
      %4090 = vrot.lane.b32.xlu0 %v1393, 120
      %v4091 = vpop.permute.xlu0 %4090
      %4092 = vrot.lane.b32.xlu0 %v1394, 120
      %v4093 = vpop.permute.xlu0 %4092
      %4094 = vrot.lane.b32.xlu0 %v1395, 120
      %v4095 = vpop.permute.xlu0 %4094
      %4096 = vrot.lane.b32.xlu0 %v1396, 120
      %v4097 = vpop.permute.xlu0 %4096
      %4098 = vrot.lane.b32.xlu0 %v1397, 120
      %v4099 = vpop.permute.xlu0 %4098
      %4100 = vrot.lane.b32.xlu0 %v1398, 120
      %v4101 = vpop.permute.xlu0 %4100
      %v4111 = vsel %vm1820, %v3612, 0
      %v4114 = vsel %vm1820, %v3627, 0
      %v4117 = vsel %vm1820, %v3642, 0
      %v4120 = vsel %vm1820, %v3657, 0
      %v4123 = vsel %vm1820, %v3672, 0
      %v4126 = vsel %vm1820, %v3687, 0
      %v4129 = vsel %vm1820, %v3702, 0
      %v4132 = vsel %vm1820, %v3717, 0
      %4134 = vmatpush.msra.mxu0 0.0
      %4135 = vmatpush.msra.mxu0 0.0
      %4136 = vmatpush.msra.mxu0 0.0
      %4137 = vmatpush.msra.mxu0 0.0
      %4138 = vmatpush.msra.mxu0 0.0
      %4139 = vmatpush.msra.mxu0 0.0
      %4140 = vmatpush.msra.mxu0 0.0
      %4141 = vmatpush.msra.mxu0 0.0
      %4142 = vmatpush.msra.mxu0 %v4101
      %4143 = vmatpush.msra.mxu0 %v4099
      %4144 = vmatpush.msra.mxu0 %v4097
      %4145 = vmatpush.msra.mxu0 %v4095
      %4146 = vmatpush.msra.mxu0 %v4093
      %4147 = vmatpush.msra.mxu0 %v4091
      %4148 = vmatpush.msra.mxu0 %v4089
      %4149 = vmatpush.msra.mxu0 %v4087
      %4150 = vmatmul.f32.gmra.mxu0 %v4111
      %v4151 = vpop.f32.mrf.mxu0
      %v4152 = vadd.f32 0.0, %v4151
      %4153 = vmatmul.f32.gmra.mxu0 %v4114
      %v4154 = vpop.f32.mrf.mxu0
      %v4155 = vadd.f32 0.0, %v4154
      %4156 = vmatmul.f32.gmra.mxu0 %v4117
      %v4157 = vpop.f32.mrf.mxu0
      %v4158 = vadd.f32 0.0, %v4157
      %4159 = vmatmul.f32.gmra.mxu0 %v4120
      %v4160 = vpop.f32.mrf.mxu0
      %v4161 = vadd.f32 0.0, %v4160
      %4162 = vmatmul.f32.gmra.mxu0 %v4123
      %v4163 = vpop.f32.mrf.mxu0
      %v4164 = vadd.f32 0.0, %v4163
      %4165 = vmatmul.f32.gmra.mxu0 %v4126
      %v4166 = vpop.f32.mrf.mxu0
      %v4167 = vadd.f32 0.0, %v4166
      %4168 = vmatmul.f32.gmra.mxu0 %v4129
      %v4169 = vpop.f32.mrf.mxu0
      %v4170 = vadd.f32 0.0, %v4169
      %4171 = vmatmul.f32.gmra.mxu0 %v4132
      %v4172 = vpop.f32.mrf.mxu0
      %v4173 = vadd.f32 0.0, %v4172
      %4174 = vdwg.mxu0
      %4183 = vrot.lane.b32.xlu0 %v1399, 120
      %v4184 = vpop.permute.xlu0 %4183
      %4185 = vrot.lane.b32.xlu0 %v1400, 120
      %v4186 = vpop.permute.xlu0 %4185
      %4187 = vrot.lane.b32.xlu0 %v1401, 120
      %v4188 = vpop.permute.xlu0 %4187
      %4189 = vrot.lane.b32.xlu0 %v1402, 120
      %v4190 = vpop.permute.xlu0 %4189
      %4191 = vrot.lane.b32.xlu0 %v1403, 120
      %v4192 = vpop.permute.xlu0 %4191
      %4193 = vrot.lane.b32.xlu0 %v1404, 120
      %v4194 = vpop.permute.xlu0 %4193
      %4195 = vrot.lane.b32.xlu0 %v1405, 120
      %v4196 = vpop.permute.xlu0 %4195
      %4197 = vrot.lane.b32.xlu0 %v1406, 120
      %v4198 = vpop.permute.xlu0 %4197
      %v4208 = vsel %vm1820, %v3732, 0
      %v4211 = vsel %vm1820, %v3747, 0
      %v4214 = vsel %vm1820, %v3762, 0
      %v4217 = vsel %vm1820, %v3777, 0
      %v4220 = vsel %vm1820, %v3792, 0
      %v4223 = vsel %vm1820, %v3807, 0
      %v4226 = vsel %vm1820, %v3822, 0
      %v4229 = vsel %vm1820, %v3837, 0
      %4231 = vmatpush.msra.mxu0 0.0
      %4232 = vmatpush.msra.mxu0 0.0
      %4233 = vmatpush.msra.mxu0 0.0
      %4234 = vmatpush.msra.mxu0 0.0
      %4235 = vmatpush.msra.mxu0 0.0
      %4236 = vmatpush.msra.mxu0 0.0
      %4237 = vmatpush.msra.mxu0 0.0
      %4238 = vmatpush.msra.mxu0 0.0
      %4239 = vmatpush.msra.mxu0 %v4198
      %4240 = vmatpush.msra.mxu0 %v4196
      %4241 = vmatpush.msra.mxu0 %v4194
      %4242 = vmatpush.msra.mxu0 %v4192
      %4243 = vmatpush.msra.mxu0 %v4190
      %4244 = vmatpush.msra.mxu0 %v4188
      %4245 = vmatpush.msra.mxu0 %v4186
      %4246 = vmatpush.msra.mxu0 %v4184
      %4247 = vmatmul.f32.gmra.mxu0 %v4208
      %v4248 = vpop.f32.mrf.mxu0
      %v4249 = vadd.f32 0.0, %v4248
      %4250 = vmatmul.f32.gmra.mxu0 %v4211
      %v4251 = vpop.f32.mrf.mxu0
      %v4252 = vadd.f32 0.0, %v4251
      %4253 = vmatmul.f32.gmra.mxu0 %v4214
      %v4254 = vpop.f32.mrf.mxu0
      %v4255 = vadd.f32 0.0, %v4254
      %4256 = vmatmul.f32.gmra.mxu0 %v4217
      %v4257 = vpop.f32.mrf.mxu0
      %v4258 = vadd.f32 0.0, %v4257
      %4259 = vmatmul.f32.gmra.mxu0 %v4220
      %v4260 = vpop.f32.mrf.mxu0
      %v4261 = vadd.f32 0.0, %v4260
      %4262 = vmatmul.f32.gmra.mxu0 %v4223
      %v4263 = vpop.f32.mrf.mxu0
      %v4264 = vadd.f32 0.0, %v4263
      %4265 = vmatmul.f32.gmra.mxu0 %v4226
      %v4266 = vpop.f32.mrf.mxu0
      %v4267 = vadd.f32 0.0, %v4266
      %4268 = vmatmul.f32.gmra.mxu0 %v4229
      %v4269 = vpop.f32.mrf.mxu0
      %v4270 = vadd.f32 0.0, %v4269
      %4271 = vdwg.mxu0
      %4280 = vrot.lane.b32.xlu0 %v1407, 120
      %v4281 = vpop.permute.xlu0 %4280
      %4282 = vrot.lane.b32.xlu0 %v1408, 120
      %v4283 = vpop.permute.xlu0 %4282
      %4284 = vrot.lane.b32.xlu0 %v1409, 120
      %v4285 = vpop.permute.xlu0 %4284
      %4286 = vrot.lane.b32.xlu0 %v1410, 120
      %v4287 = vpop.permute.xlu0 %4286
      %4288 = vrot.lane.b32.xlu0 %v1411, 120
      %v4289 = vpop.permute.xlu0 %4288
      %4290 = vrot.lane.b32.xlu0 %v1412, 120
      %v4291 = vpop.permute.xlu0 %4290
      %4292 = vrot.lane.b32.xlu0 %v1413, 120
      %v4293 = vpop.permute.xlu0 %4292
      %4294 = vrot.lane.b32.xlu0 %v1414, 120
      %v4295 = vpop.permute.xlu0 %4294
      %v4305 = vsel %vm1820, %v3852, 0
      %v4308 = vsel %vm1820, %v3867, 0
      %v4311 = vsel %vm1820, %v3882, 0
      %v4314 = vsel %vm1820, %v3897, 0
      %v4317 = vsel %vm1820, %v3912, 0
      %v4320 = vsel %vm1820, %v3927, 0
      %v4323 = vsel %vm1820, %v3942, 0
      %v4326 = vsel %vm1820, %v3957, 0
      %4328 = vmatpush.msra.mxu0 0.0
      %4329 = vmatpush.msra.mxu0 0.0
      %4330 = vmatpush.msra.mxu0 0.0
      %4331 = vmatpush.msra.mxu0 0.0
      %4332 = vmatpush.msra.mxu0 0.0
      %4333 = vmatpush.msra.mxu0 0.0
      %4334 = vmatpush.msra.mxu0 0.0
      %4335 = vmatpush.msra.mxu0 0.0
      %4336 = vmatpush.msra.mxu0 %v4295
      %4337 = vmatpush.msra.mxu0 %v4293
      %4338 = vmatpush.msra.mxu0 %v4291
      %4339 = vmatpush.msra.mxu0 %v4289
      %4340 = vmatpush.msra.mxu0 %v4287
      %4341 = vmatpush.msra.mxu0 %v4285
      %4342 = vmatpush.msra.mxu0 %v4283
      %4343 = vmatpush.msra.mxu0 %v4281
      %4344 = vmatmul.f32.gmra.mxu0 %v4305
      %v4345 = vpop.f32.mrf.mxu0
      %v4346 = vadd.f32 0.0, %v4345
      %4347 = vmatmul.f32.gmra.mxu0 %v4308
      %v4348 = vpop.f32.mrf.mxu0
      %v4349 = vadd.f32 0.0, %v4348
      %4350 = vmatmul.f32.gmra.mxu0 %v4311
      %v4351 = vpop.f32.mrf.mxu0
      %v4352 = vadd.f32 0.0, %v4351
      %4353 = vmatmul.f32.gmra.mxu0 %v4314
      %v4354 = vpop.f32.mrf.mxu0
      %v4355 = vadd.f32 0.0, %v4354
      %4356 = vmatmul.f32.gmra.mxu0 %v4317
      %v4357 = vpop.f32.mrf.mxu0
      %v4358 = vadd.f32 0.0, %v4357
      %4359 = vmatmul.f32.gmra.mxu0 %v4320
      %v4360 = vpop.f32.mrf.mxu0
      %v4361 = vadd.f32 0.0, %v4360
      %4362 = vmatmul.f32.gmra.mxu0 %v4323
      %v4363 = vpop.f32.mrf.mxu0
      %v4364 = vadd.f32 0.0, %v4363
      %4365 = vmatmul.f32.gmra.mxu0 %v4326
      %v4366 = vpop.f32.mrf.mxu0
      %v4367 = vadd.f32 0.0, %v4366
      %4368 = vdwg.mxu0
      %4377 = vrot.lane.b32.xlu0 %v1415, 120
      %v4378 = vpop.permute.xlu0 %4377
      %4379 = vrot.lane.b32.xlu0 %v1416, 120
      %v4380 = vpop.permute.xlu0 %4379
      %4381 = vrot.lane.b32.xlu0 %v1417, 120
      %v4382 = vpop.permute.xlu0 %4381
      %4383 = vrot.lane.b32.xlu0 %v1418, 120
      %v4384 = vpop.permute.xlu0 %4383
      %4385 = vrot.lane.b32.xlu0 %v1419, 120
      %v4386 = vpop.permute.xlu0 %4385
      %4387 = vrot.lane.b32.xlu0 %v1420, 120
      %v4388 = vpop.permute.xlu0 %4387
      %4389 = vrot.lane.b32.xlu0 %v1421, 120
      %v4390 = vpop.permute.xlu0 %4389
      %4391 = vrot.lane.b32.xlu0 %v1422, 120
      %v4392 = vpop.permute.xlu0 %4391
      %v4402 = vsel %vm1820, %v3972, 0
      %v4405 = vsel %vm1820, %v3987, 0
      %v4408 = vsel %vm1820, %v4002, 0
      %v4411 = vsel %vm1820, %v4017, 0
      %v4414 = vsel %vm1820, %v4032, 0
      %v4417 = vsel %vm1820, %v4047, 0
      %v4420 = vsel %vm1820, %v4062, 0
      %v4423 = vsel %vm1820, %v4077, 0
      %4425 = vmatpush.msra.mxu0 0.0
      %4426 = vmatpush.msra.mxu0 0.0
      %4427 = vmatpush.msra.mxu0 0.0
      %4428 = vmatpush.msra.mxu0 0.0
      %4429 = vmatpush.msra.mxu0 0.0
      %4430 = vmatpush.msra.mxu0 0.0
      %4431 = vmatpush.msra.mxu0 0.0
      %4432 = vmatpush.msra.mxu0 0.0
      %4433 = vmatpush.msra.mxu0 %v4392
      %4434 = vmatpush.msra.mxu0 %v4390
      %4435 = vmatpush.msra.mxu0 %v4388
      %4436 = vmatpush.msra.mxu0 %v4386
      %4437 = vmatpush.msra.mxu0 %v4384
      %4438 = vmatpush.msra.mxu0 %v4382
      %4439 = vmatpush.msra.mxu0 %v4380
      %4440 = vmatpush.msra.mxu0 %v4378
      %4441 = vmatmul.f32.gmra.mxu0 %v4402
      %v4442 = vpop.f32.mrf.mxu0
      %v4443 = vadd.f32 0.0, %v4442
      %4444 = vmatmul.f32.gmra.mxu0 %v4405
      %v4445 = vpop.f32.mrf.mxu0
      %v4446 = vadd.f32 0.0, %v4445
      %4447 = vmatmul.f32.gmra.mxu0 %v4408
      %v4448 = vpop.f32.mrf.mxu0
      %v4449 = vadd.f32 0.0, %v4448
      %4450 = vmatmul.f32.gmra.mxu0 %v4411
      %v4451 = vpop.f32.mrf.mxu0
      %v4452 = vadd.f32 0.0, %v4451
      %4453 = vmatmul.f32.gmra.mxu0 %v4414
      %v4454 = vpop.f32.mrf.mxu0
      %v4455 = vadd.f32 0.0, %v4454
      %4456 = vmatmul.f32.gmra.mxu0 %v4417
      %v4457 = vpop.f32.mrf.mxu0
      %v4458 = vadd.f32 0.0, %v4457
      %4459 = vmatmul.f32.gmra.mxu0 %v4420
      %v4460 = vpop.f32.mrf.mxu0
      %v4461 = vadd.f32 0.0, %v4460
      %4462 = vmatmul.f32.gmra.mxu0 %v4423
      %v4463 = vpop.f32.mrf.mxu0
      %v4464 = vadd.f32 0.0, %v4463
      %4465 = vdwg.mxu0
      %4498 = vrot.lane.b32.xlu0 %v4152, 8
      %v4499 = vpop.permute.xlu0 %4498
      %4500 = vrot.lane.b32.xlu0 %v4155, 8
      %v4501 = vpop.permute.xlu0 %4500
      %4502 = vrot.lane.b32.xlu0 %v4158, 8
      %v4503 = vpop.permute.xlu0 %4502
      %4504 = vrot.lane.b32.xlu0 %v4161, 8
      %v4505 = vpop.permute.xlu0 %4504
      %4506 = vrot.lane.b32.xlu0 %v4164, 8
      %v4507 = vpop.permute.xlu0 %4506
      %4508 = vrot.lane.b32.xlu0 %v4167, 8
      %v4509 = vpop.permute.xlu0 %4508
      %4510 = vrot.lane.b32.xlu0 %v4170, 8
      %v4511 = vpop.permute.xlu0 %4510
      %4512 = vrot.lane.b32.xlu0 %v4173, 8
      %v4513 = vpop.permute.xlu0 %4512
      %4514 = vrot.lane.b32.xlu0 %v4249, 8
      %v4515 = vpop.permute.xlu0 %4514
      %4516 = vrot.lane.b32.xlu0 %v4252, 8
      %v4517 = vpop.permute.xlu0 %4516
      %4518 = vrot.lane.b32.xlu0 %v4255, 8
      %v4519 = vpop.permute.xlu0 %4518
      %4520 = vrot.lane.b32.xlu0 %v4258, 8
      %v4521 = vpop.permute.xlu0 %4520
      %4522 = vrot.lane.b32.xlu0 %v4261, 8
      %v4523 = vpop.permute.xlu0 %4522
      %4524 = vrot.lane.b32.xlu0 %v4264, 8
      %v4525 = vpop.permute.xlu0 %4524
      %4526 = vrot.lane.b32.xlu0 %v4267, 8
      %v4527 = vpop.permute.xlu0 %4526
      %4528 = vrot.lane.b32.xlu0 %v4270, 8
      %v4529 = vpop.permute.xlu0 %4528
      %4530 = vrot.lane.b32.xlu0 %v4346, 8
      %v4531 = vpop.permute.xlu0 %4530
      %4532 = vrot.lane.b32.xlu0 %v4349, 8
      %v4533 = vpop.permute.xlu0 %4532
      %4534 = vrot.lane.b32.xlu0 %v4352, 8
      %v4535 = vpop.permute.xlu0 %4534
      %4536 = vrot.lane.b32.xlu0 %v4355, 8
      %v4537 = vpop.permute.xlu0 %4536
      %4538 = vrot.lane.b32.xlu0 %v4358, 8
      %v4539 = vpop.permute.xlu0 %4538
      %4540 = vrot.lane.b32.xlu0 %v4361, 8
      %v4541 = vpop.permute.xlu0 %4540
      %4542 = vrot.lane.b32.xlu0 %v4364, 8
      %v4543 = vpop.permute.xlu0 %4542
      %4544 = vrot.lane.b32.xlu0 %v4367, 8
      %v4545 = vpop.permute.xlu0 %4544
      %4546 = vrot.lane.b32.xlu0 %v4443, 8
      %v4547 = vpop.permute.xlu0 %4546
      %4548 = vrot.lane.b32.xlu0 %v4446, 8
      %v4549 = vpop.permute.xlu0 %4548
      %4550 = vrot.lane.b32.xlu0 %v4449, 8
      %v4551 = vpop.permute.xlu0 %4550
      %4552 = vrot.lane.b32.xlu0 %v4452, 8
      %v4553 = vpop.permute.xlu0 %4552
      %4554 = vrot.lane.b32.xlu0 %v4455, 8
      %v4555 = vpop.permute.xlu0 %4554
      %4556 = vrot.lane.b32.xlu0 %v4458, 8
      %v4557 = vpop.permute.xlu0 %4556
      %4558 = vrot.lane.b32.xlu0 %v4461, 8
      %v4559 = vpop.permute.xlu0 %4558
      %4560 = vrot.lane.b32.xlu0 %v4464, 8
      %v4561 = vpop.permute.xlu0 %4560
      %vm4594 = vcmask 130112
      %4595 = vst.msk [vmem:[#allocation2] sm:$0xff] %vm4594, %v4499
      %4596 = vst.msk [vmem:[#allocation2 + $0x8] sm:$0xff] %vm4594, %v4501
      %4597 = vst.msk [vmem:[#allocation2 + $0x10] sm:$0xff] %vm4594, %v4503
      %4598 = vst.msk [vmem:[#allocation2 + $0x18] sm:$0xff] %vm4594, %v4505
      %4599 = vst.msk [vmem:[#allocation2 + $0x20] sm:$0xff] %vm4594, %v4507
      %4600 = vst.msk [vmem:[#allocation2 + $0x28] sm:$0xff] %vm4594, %v4509
      %4601 = vst.msk [vmem:[#allocation2 + $0x30] sm:$0xff] %vm4594, %v4511
      %4602 = vst.msk [vmem:[#allocation2 + $0x38] sm:$0xff] %vm4594, %v4513
      %4603 = vst.msk [vmem:[#allocation2 + $0x40] sm:$0xff] %vm4594, %v4515
      %4604 = vst.msk [vmem:[#allocation2 + $0x48] sm:$0xff] %vm4594, %v4517
      %4605 = vst.msk [vmem:[#allocation2 + $0x50] sm:$0xff] %vm4594, %v4519
      %4606 = vst.msk [vmem:[#allocation2 + $0x58] sm:$0xff] %vm4594, %v4521
      %4607 = vst.msk [vmem:[#allocation2 + $0x60] sm:$0xff] %vm4594, %v4523
      %4608 = vst.msk [vmem:[#allocation2 + $0x68] sm:$0xff] %vm4594, %v4525
      %4609 = vst.msk [vmem:[#allocation2 + $0x70] sm:$0xff] %vm4594, %v4527
      %4610 = vst.msk [vmem:[#allocation2 + $0x78] sm:$0xff] %vm4594, %v4529
      %4611 = vst.msk [vmem:[#allocation2 + $0x80] sm:$0xff] %vm4594, %v4531
      %4612 = vst.msk [vmem:[#allocation2 + $0x88] sm:$0xff] %vm4594, %v4533
      %4613 = vst.msk [vmem:[#allocation2 + $0x90] sm:$0xff] %vm4594, %v4535
      %4614 = vst.msk [vmem:[#allocation2 + $0x98] sm:$0xff] %vm4594, %v4537
      %4615 = vst.msk [vmem:[#allocation2 + $0xa0] sm:$0xff] %vm4594, %v4539
      %4616 = vst.msk [vmem:[#allocation2 + $0xa8] sm:$0xff] %vm4594, %v4541
      %4617 = vst.msk [vmem:[#allocation2 + $0xb0] sm:$0xff] %vm4594, %v4543
      %4618 = vst.msk [vmem:[#allocation2 + $0xb8] sm:$0xff] %vm4594, %v4545
      %4619 = vst.msk [vmem:[#allocation2 + $0xc0] sm:$0xff] %vm4594, %v4547
      %4620 = vst.msk [vmem:[#allocation2 + $0xc8] sm:$0xff] %vm4594, %v4549
      %4621 = vst.msk [vmem:[#allocation2 + $0xd0] sm:$0xff] %vm4594, %v4551
      %4622 = vst.msk [vmem:[#allocation2 + $0xd8] sm:$0xff] %vm4594, %v4553
      %4623 = vst.msk [vmem:[#allocation2 + $0xe0] sm:$0xff] %vm4594, %v4555
      %4624 = vst.msk [vmem:[#allocation2 + $0xe8] sm:$0xff] %vm4594, %v4557
      %4625 = vst.msk [vmem:[#allocation2 + $0xf0] sm:$0xff] %vm4594, %v4559
      %4626 = vst.msk [vmem:[#allocation2 + $0xf8] sm:$0xff] %vm4594, %v4561
      %s4627 = scalar_lea.vmem %s2, 128
      %v4628 = vld [vmem:[%s4627] sm:$0xff]
      %v4629 = vld [vmem:[%s4627 + $0x8] sm:$0xff]
      %v4630 = vld [vmem:[%s4627 + $0x10] sm:$0xff]
      %v4631 = vld [vmem:[%s4627 + $0x18] sm:$0xff]
      %v4632 = vld [vmem:[%s4627 + $0x20] sm:$0xff]
      %v4633 = vld [vmem:[%s4627 + $0x28] sm:$0xff]
      %v4634 = vld [vmem:[%s4627 + $0x30] sm:$0xff]
      %v4635 = vld [vmem:[%s4627 + $0x38] sm:$0xff]
      %4636 = vrot.lane.b32.xlu0 %v1296, 112
      %v4637 = vpop.permute.xlu0 %4636
      %4638 = vrot.lane.b32.xlu0 %v1299, 112
      %v4639 = vpop.permute.xlu0 %4638
      %4640 = vrot.lane.b32.xlu0 %v1302, 112
      %v4641 = vpop.permute.xlu0 %4640
      %4642 = vrot.lane.b32.xlu0 %v1305, 112
      %v4643 = vpop.permute.xlu0 %4642
      %4644 = vrot.lane.b32.xlu0 %v1308, 112
      %v4645 = vpop.permute.xlu0 %4644
      %4646 = vrot.lane.b32.xlu0 %v1311, 112
      %v4647 = vpop.permute.xlu0 %4646
      %4648 = vrot.lane.b32.xlu0 %v1314, 112
      %v4649 = vpop.permute.xlu0 %4648
      %4650 = vrot.lane.b32.xlu0 %v1317, 112
      %v4651 = vpop.permute.xlu0 %4650
      %4652 = vrot.lane.b32.xlu0 %v1296, 80
      %v4653 = vpop.permute.xlu0 %4652
      %4654 = vrot.lane.b32.xlu0 %v1299, 80
      %v4655 = vpop.permute.xlu0 %4654
      %4656 = vrot.lane.b32.xlu0 %v1302, 80
      %v4657 = vpop.permute.xlu0 %4656
      %4658 = vrot.lane.b32.xlu0 %v1305, 80
      %v4659 = vpop.permute.xlu0 %4658
      %4660 = vrot.lane.b32.xlu0 %v1308, 80
      %v4661 = vpop.permute.xlu0 %4660
      %4662 = vrot.lane.b32.xlu0 %v1311, 80
      %v4663 = vpop.permute.xlu0 %4662
      %4664 = vrot.lane.b32.xlu0 %v1314, 80
      %v4665 = vpop.permute.xlu0 %4664
      %4666 = vrot.lane.b32.xlu0 %v1317, 80
      %v4667 = vpop.permute.xlu0 %4666
      %v4668 = vsel %vm1455, %v4637, 0
      %v4670 = vsel %vm1455, %v4639, 0
      %v4672 = vsel %vm1455, %v4641, 0
      %v4674 = vsel %vm1455, %v4643, 0
      %v4676 = vsel %vm1455, %v4645, 0
      %v4678 = vsel %vm1455, %v4647, 0
      %v4680 = vsel %vm1455, %v4649, 0
      %v4682 = vsel %vm1455, %v4651, 0
      %v4684 = vsel %vm1455, %v4653, 0
      %v4686 = vsel %vm1455, %v4655, 0
      %v4688 = vsel %vm1455, %v4657, 0
      %v4690 = vsel %vm1455, %v4659, 0
      %v4692 = vsel %vm1455, %v4661, 0
      %v4694 = vsel %vm1455, %v4663, 0
      %v4696 = vsel %vm1455, %v4665, 0
      %v4698 = vsel %vm1455, %v4667, 0
      %4700 = vmatpush.xpose.msra.mxu0 0.0
      %4701 = vmatpush.xpose.msra.mxu0 0.0
      %4702 = vmatpush.xpose.msra.mxu0 0.0
      %4703 = vmatpush.xpose.msra.mxu0 0.0
      %4704 = vmatpush.xpose.msra.mxu0 0.0
      %4705 = vmatpush.xpose.msra.mxu0 0.0
      %4706 = vmatpush.xpose.msra.mxu0 0.0
      %4707 = vmatpush.xpose.msra.mxu0 0.0
      %4708 = vmatpush.xpose.msra.mxu0 %v4698
      %4709 = vmatpush.xpose.msra.mxu0 %v4696
      %4710 = vmatpush.xpose.msra.mxu0 %v4694
      %4711 = vmatpush.xpose.msra.mxu0 %v4692
      %4712 = vmatpush.xpose.msra.mxu0 %v4690
      %4713 = vmatpush.xpose.msra.mxu0 %v4688
      %4714 = vmatpush.xpose.msra.mxu0 %v4686
      %4715 = vmatpush.xpose.msra.mxu0 %v4684
      %4716 = vmatmul.f32.gmra.mxu0 %v4668
      %v4717 = vpop.f32.mrf.mxu0
      %v4718 = vadd.f32 %v4628, %v4717
      %4719 = vmatmul.f32.gmra.mxu0 %v4670
      %v4720 = vpop.f32.mrf.mxu0
      %v4721 = vadd.f32 %v4629, %v4720
      %4722 = vmatmul.f32.gmra.mxu0 %v4672
      %v4723 = vpop.f32.mrf.mxu0
      %v4724 = vadd.f32 %v4630, %v4723
      %4725 = vmatmul.f32.gmra.mxu0 %v4674
      %v4726 = vpop.f32.mrf.mxu0
      %v4727 = vadd.f32 %v4631, %v4726
      %4728 = vmatmul.f32.gmra.mxu0 %v4676
      %v4729 = vpop.f32.mrf.mxu0
      %v4730 = vadd.f32 %v4632, %v4729
      %4731 = vmatmul.f32.gmra.mxu0 %v4678
      %v4732 = vpop.f32.mrf.mxu0
      %v4733 = vadd.f32 %v4633, %v4732
      %4734 = vmatmul.f32.gmra.mxu0 %v4680
      %v4735 = vpop.f32.mrf.mxu0
      %v4736 = vadd.f32 %v4634, %v4735
      %4737 = vmatmul.f32.gmra.mxu0 %v4682
      %v4738 = vpop.f32.mrf.mxu0
      %v4739 = vadd.f32 %v4635, %v4738
      %4740 = vdwg.mxu0
      %4741 = vrot.lane.b32.xlu0 %v1320, 112
      %v4742 = vpop.permute.xlu0 %4741
      %4743 = vrot.lane.b32.xlu0 %v1323, 112
      %v4744 = vpop.permute.xlu0 %4743
      %4745 = vrot.lane.b32.xlu0 %v1326, 112
      %v4746 = vpop.permute.xlu0 %4745
      %4747 = vrot.lane.b32.xlu0 %v1329, 112
      %v4748 = vpop.permute.xlu0 %4747
      %4749 = vrot.lane.b32.xlu0 %v1332, 112
      %v4750 = vpop.permute.xlu0 %4749
      %4751 = vrot.lane.b32.xlu0 %v1335, 112
      %v4752 = vpop.permute.xlu0 %4751
      %4753 = vrot.lane.b32.xlu0 %v1338, 112
      %v4754 = vpop.permute.xlu0 %4753
      %4755 = vrot.lane.b32.xlu0 %v1341, 112
      %v4756 = vpop.permute.xlu0 %4755
      %4757 = vrot.lane.b32.xlu0 %v1320, 80
      %v4758 = vpop.permute.xlu0 %4757
      %4759 = vrot.lane.b32.xlu0 %v1323, 80
      %v4760 = vpop.permute.xlu0 %4759
      %4761 = vrot.lane.b32.xlu0 %v1326, 80
      %v4762 = vpop.permute.xlu0 %4761
      %4763 = vrot.lane.b32.xlu0 %v1329, 80
      %v4764 = vpop.permute.xlu0 %4763
      %4765 = vrot.lane.b32.xlu0 %v1332, 80
      %v4766 = vpop.permute.xlu0 %4765
      %4767 = vrot.lane.b32.xlu0 %v1335, 80
      %v4768 = vpop.permute.xlu0 %4767
      %4769 = vrot.lane.b32.xlu0 %v1338, 80
      %v4770 = vpop.permute.xlu0 %4769
      %4771 = vrot.lane.b32.xlu0 %v1341, 80
      %v4772 = vpop.permute.xlu0 %4771
      %v4773 = vsel %vm1455, %v4742, 0
      %v4775 = vsel %vm1455, %v4744, 0
      %v4777 = vsel %vm1455, %v4746, 0
      %v4779 = vsel %vm1455, %v4748, 0
      %v4781 = vsel %vm1455, %v4750, 0
      %v4783 = vsel %vm1455, %v4752, 0
      %v4785 = vsel %vm1455, %v4754, 0
      %v4787 = vsel %vm1455, %v4756, 0
      %v4789 = vsel %vm1455, %v4758, 0
      %v4791 = vsel %vm1455, %v4760, 0
      %v4793 = vsel %vm1455, %v4762, 0
      %v4795 = vsel %vm1455, %v4764, 0
      %v4797 = vsel %vm1455, %v4766, 0
      %v4799 = vsel %vm1455, %v4768, 0
      %v4801 = vsel %vm1455, %v4770, 0
      %v4803 = vsel %vm1455, %v4772, 0
      %4805 = vmatpush.xpose.msra.mxu0 0.0
      %4806 = vmatpush.xpose.msra.mxu0 0.0
      %4807 = vmatpush.xpose.msra.mxu0 0.0
      %4808 = vmatpush.xpose.msra.mxu0 0.0
      %4809 = vmatpush.xpose.msra.mxu0 0.0
      %4810 = vmatpush.xpose.msra.mxu0 0.0
      %4811 = vmatpush.xpose.msra.mxu0 0.0
      %4812 = vmatpush.xpose.msra.mxu0 0.0
      %4813 = vmatpush.xpose.msra.mxu0 %v4803
      %4814 = vmatpush.xpose.msra.mxu0 %v4801
      %4815 = vmatpush.xpose.msra.mxu0 %v4799
      %4816 = vmatpush.xpose.msra.mxu0 %v4797
      %4817 = vmatpush.xpose.msra.mxu0 %v4795
      %4818 = vmatpush.xpose.msra.mxu0 %v4793
      %4819 = vmatpush.xpose.msra.mxu0 %v4791
      %4820 = vmatpush.xpose.msra.mxu0 %v4789
      %4821 = vmatmul.f32.gmra.mxu0 %v4773
      %v4822 = vpop.f32.mrf.mxu0
      %v4823 = vadd.f32 %v4628, %v4822
      %4824 = vmatmul.f32.gmra.mxu0 %v4775
      %v4825 = vpop.f32.mrf.mxu0
      %v4826 = vadd.f32 %v4629, %v4825
      %4827 = vmatmul.f32.gmra.mxu0 %v4777
      %v4828 = vpop.f32.mrf.mxu0
      %v4829 = vadd.f32 %v4630, %v4828
      %4830 = vmatmul.f32.gmra.mxu0 %v4779
      %v4831 = vpop.f32.mrf.mxu0
      %v4832 = vadd.f32 %v4631, %v4831
      %4833 = vmatmul.f32.gmra.mxu0 %v4781
      %v4834 = vpop.f32.mrf.mxu0
      %v4835 = vadd.f32 %v4632, %v4834
      %4836 = vmatmul.f32.gmra.mxu0 %v4783
      %v4837 = vpop.f32.mrf.mxu0
      %v4838 = vadd.f32 %v4633, %v4837
      %4839 = vmatmul.f32.gmra.mxu0 %v4785
      %v4840 = vpop.f32.mrf.mxu0
      %v4841 = vadd.f32 %v4634, %v4840
      %4842 = vmatmul.f32.gmra.mxu0 %v4787
      %v4843 = vpop.f32.mrf.mxu0
      %v4844 = vadd.f32 %v4635, %v4843
      %4845 = vdwg.mxu0
      %4846 = vrot.lane.b32.xlu0 %v1344, 112
      %v4847 = vpop.permute.xlu0 %4846
      %4848 = vrot.lane.b32.xlu0 %v1347, 112
      %v4849 = vpop.permute.xlu0 %4848
      %4850 = vrot.lane.b32.xlu0 %v1350, 112
      %v4851 = vpop.permute.xlu0 %4850
      %4852 = vrot.lane.b32.xlu0 %v1353, 112
      %v4853 = vpop.permute.xlu0 %4852
      %4854 = vrot.lane.b32.xlu0 %v1356, 112
      %v4855 = vpop.permute.xlu0 %4854
      %4856 = vrot.lane.b32.xlu0 %v1359, 112
      %v4857 = vpop.permute.xlu0 %4856
      %4858 = vrot.lane.b32.xlu0 %v1362, 112
      %v4859 = vpop.permute.xlu0 %4858
      %4860 = vrot.lane.b32.xlu0 %v1365, 112
      %v4861 = vpop.permute.xlu0 %4860
      %4862 = vrot.lane.b32.xlu0 %v1344, 80
      %v4863 = vpop.permute.xlu0 %4862
      %4864 = vrot.lane.b32.xlu0 %v1347, 80
      %v4865 = vpop.permute.xlu0 %4864
      %4866 = vrot.lane.b32.xlu0 %v1350, 80
      %v4867 = vpop.permute.xlu0 %4866
      %4868 = vrot.lane.b32.xlu0 %v1353, 80
      %v4869 = vpop.permute.xlu0 %4868
      %4870 = vrot.lane.b32.xlu0 %v1356, 80
      %v4871 = vpop.permute.xlu0 %4870
      %4872 = vrot.lane.b32.xlu0 %v1359, 80
      %v4873 = vpop.permute.xlu0 %4872
      %4874 = vrot.lane.b32.xlu0 %v1362, 80
      %v4875 = vpop.permute.xlu0 %4874
      %4876 = vrot.lane.b32.xlu0 %v1365, 80
      %v4877 = vpop.permute.xlu0 %4876
      %v4878 = vsel %vm1455, %v4847, 0
      %v4880 = vsel %vm1455, %v4849, 0
      %v4882 = vsel %vm1455, %v4851, 0
      %v4884 = vsel %vm1455, %v4853, 0
      %v4886 = vsel %vm1455, %v4855, 0
      %v4888 = vsel %vm1455, %v4857, 0
      %v4890 = vsel %vm1455, %v4859, 0
      %v4892 = vsel %vm1455, %v4861, 0
      %v4894 = vsel %vm1455, %v4863, 0
      %v4896 = vsel %vm1455, %v4865, 0
      %v4898 = vsel %vm1455, %v4867, 0
      %v4900 = vsel %vm1455, %v4869, 0
      %v4902 = vsel %vm1455, %v4871, 0
      %v4904 = vsel %vm1455, %v4873, 0
      %v4906 = vsel %vm1455, %v4875, 0
      %v4908 = vsel %vm1455, %v4877, 0
      %4910 = vmatpush.xpose.msra.mxu0 0.0
      %4911 = vmatpush.xpose.msra.mxu0 0.0
      %4912 = vmatpush.xpose.msra.mxu0 0.0
      %4913 = vmatpush.xpose.msra.mxu0 0.0
      %4914 = vmatpush.xpose.msra.mxu0 0.0
      %4915 = vmatpush.xpose.msra.mxu0 0.0
      %4916 = vmatpush.xpose.msra.mxu0 0.0
      %4917 = vmatpush.xpose.msra.mxu0 0.0
      %4918 = vmatpush.xpose.msra.mxu0 %v4908
      %4919 = vmatpush.xpose.msra.mxu0 %v4906
      %4920 = vmatpush.xpose.msra.mxu0 %v4904
      %4921 = vmatpush.xpose.msra.mxu0 %v4902
      %4922 = vmatpush.xpose.msra.mxu0 %v4900
      %4923 = vmatpush.xpose.msra.mxu0 %v4898
      %4924 = vmatpush.xpose.msra.mxu0 %v4896
      %4925 = vmatpush.xpose.msra.mxu0 %v4894
      %4926 = vmatmul.f32.gmra.mxu0 %v4878
      %v4927 = vpop.f32.mrf.mxu0
      %v4928 = vadd.f32 %v4628, %v4927
      %4929 = vmatmul.f32.gmra.mxu0 %v4880
      %v4930 = vpop.f32.mrf.mxu0
      %v4931 = vadd.f32 %v4629, %v4930
      %4932 = vmatmul.f32.gmra.mxu0 %v4882
      %v4933 = vpop.f32.mrf.mxu0
      %v4934 = vadd.f32 %v4630, %v4933
      %4935 = vmatmul.f32.gmra.mxu0 %v4884
      %v4936 = vpop.f32.mrf.mxu0
      %v4937 = vadd.f32 %v4631, %v4936
      %4938 = vmatmul.f32.gmra.mxu0 %v4886
      %v4939 = vpop.f32.mrf.mxu0
      %v4940 = vadd.f32 %v4632, %v4939
      %4941 = vmatmul.f32.gmra.mxu0 %v4888
      %v4942 = vpop.f32.mrf.mxu0
      %v4943 = vadd.f32 %v4633, %v4942
      %4944 = vmatmul.f32.gmra.mxu0 %v4890
      %v4945 = vpop.f32.mrf.mxu0
      %v4946 = vadd.f32 %v4634, %v4945
      %4947 = vmatmul.f32.gmra.mxu0 %v4892
      %v4948 = vpop.f32.mrf.mxu0
      %v4949 = vadd.f32 %v4635, %v4948
      %4950 = vdwg.mxu0
      %4951 = vrot.lane.b32.xlu0 %v1368, 112
      %v4952 = vpop.permute.xlu0 %4951
      %4953 = vrot.lane.b32.xlu0 %v1371, 112
      %v4954 = vpop.permute.xlu0 %4953
      %4955 = vrot.lane.b32.xlu0 %v1374, 112
      %v4956 = vpop.permute.xlu0 %4955
      %4957 = vrot.lane.b32.xlu0 %v1377, 112
      %v4958 = vpop.permute.xlu0 %4957
      %4959 = vrot.lane.b32.xlu0 %v1380, 112
      %v4960 = vpop.permute.xlu0 %4959
      %4961 = vrot.lane.b32.xlu0 %v1383, 112
      %v4962 = vpop.permute.xlu0 %4961
      %4963 = vrot.lane.b32.xlu0 %v1386, 112
      %v4964 = vpop.permute.xlu0 %4963
      %4965 = vrot.lane.b32.xlu0 %v1389, 112
      %v4966 = vpop.permute.xlu0 %4965
      %4967 = vrot.lane.b32.xlu0 %v1368, 80
      %v4968 = vpop.permute.xlu0 %4967
      %4969 = vrot.lane.b32.xlu0 %v1371, 80
      %v4970 = vpop.permute.xlu0 %4969
      %4971 = vrot.lane.b32.xlu0 %v1374, 80
      %v4972 = vpop.permute.xlu0 %4971
      %4973 = vrot.lane.b32.xlu0 %v1377, 80
      %v4974 = vpop.permute.xlu0 %4973
      %4975 = vrot.lane.b32.xlu0 %v1380, 80
      %v4976 = vpop.permute.xlu0 %4975
      %4977 = vrot.lane.b32.xlu0 %v1383, 80
      %v4978 = vpop.permute.xlu0 %4977
      %4979 = vrot.lane.b32.xlu0 %v1386, 80
      %v4980 = vpop.permute.xlu0 %4979
      %4981 = vrot.lane.b32.xlu0 %v1389, 80
      %v4982 = vpop.permute.xlu0 %4981
      %v4983 = vsel %vm1455, %v4952, 0
      %v4985 = vsel %vm1455, %v4954, 0
      %v4987 = vsel %vm1455, %v4956, 0
      %v4989 = vsel %vm1455, %v4958, 0
      %v4991 = vsel %vm1455, %v4960, 0
      %v4993 = vsel %vm1455, %v4962, 0
      %v4995 = vsel %vm1455, %v4964, 0
      %v4997 = vsel %vm1455, %v4966, 0
      %v4999 = vsel %vm1455, %v4968, 0
      %v5001 = vsel %vm1455, %v4970, 0
      %v5003 = vsel %vm1455, %v4972, 0
      %v5005 = vsel %vm1455, %v4974, 0
      %v5007 = vsel %vm1455, %v4976, 0
      %v5009 = vsel %vm1455, %v4978, 0
      %v5011 = vsel %vm1455, %v4980, 0
      %v5013 = vsel %vm1455, %v4982, 0
      %5015 = vmatpush.xpose.msra.mxu0 0.0
      %5016 = vmatpush.xpose.msra.mxu0 0.0
      %5017 = vmatpush.xpose.msra.mxu0 0.0
      %5018 = vmatpush.xpose.msra.mxu0 0.0
      %5019 = vmatpush.xpose.msra.mxu0 0.0
      %5020 = vmatpush.xpose.msra.mxu0 0.0
      %5021 = vmatpush.xpose.msra.mxu0 0.0
      %5022 = vmatpush.xpose.msra.mxu0 0.0
      %5023 = vmatpush.xpose.msra.mxu0 %v5013
      %5024 = vmatpush.xpose.msra.mxu0 %v5011
      %5025 = vmatpush.xpose.msra.mxu0 %v5009
      %5026 = vmatpush.xpose.msra.mxu0 %v5007
      %5027 = vmatpush.xpose.msra.mxu0 %v5005
      %5028 = vmatpush.xpose.msra.mxu0 %v5003
      %5029 = vmatpush.xpose.msra.mxu0 %v5001
      %5030 = vmatpush.xpose.msra.mxu0 %v4999
      %5031 = vmatmul.f32.gmra.mxu0 %v4983
      %v5032 = vpop.f32.mrf.mxu0
      %v5033 = vadd.f32 %v4628, %v5032
      %5034 = vmatmul.f32.gmra.mxu0 %v4985
      %v5035 = vpop.f32.mrf.mxu0
      %v5036 = vadd.f32 %v4629, %v5035
      %5037 = vmatmul.f32.gmra.mxu0 %v4987
      %v5038 = vpop.f32.mrf.mxu0
      %v5039 = vadd.f32 %v4630, %v5038
      %5040 = vmatmul.f32.gmra.mxu0 %v4989
      %v5041 = vpop.f32.mrf.mxu0
      %v5042 = vadd.f32 %v4631, %v5041
      %5043 = vmatmul.f32.gmra.mxu0 %v4991
      %v5044 = vpop.f32.mrf.mxu0
      %v5045 = vadd.f32 %v4632, %v5044
      %5046 = vmatmul.f32.gmra.mxu0 %v4993
      %v5047 = vpop.f32.mrf.mxu0
      %v5048 = vadd.f32 %v4633, %v5047
      %5049 = vmatmul.f32.gmra.mxu0 %v4995
      %v5050 = vpop.f32.mrf.mxu0
      %v5051 = vadd.f32 %v4634, %v5050
      %5052 = vmatmul.f32.gmra.mxu0 %v4997
      %v5053 = vpop.f32.mrf.mxu0
      %v5054 = vadd.f32 %v4635, %v5053
      %5055 = vdwg.mxu0
      %v5056 = vsel %vm1820, %v4718, -inf
      %5057 = vmax.xlane.f32.xlu0 %v5056
      %v5058 = vpop.xlane.xlu0 %5057
      %v5059 = vsel %vm1820, %v4721, -inf
      %5060 = vmax.xlane.f32.xlu0 %v5059
      %v5061 = vpop.xlane.xlu0 %5060
      %v5062 = vsel %vm1820, %v4724, -inf
      %5063 = vmax.xlane.f32.xlu0 %v5062
      %v5064 = vpop.xlane.xlu0 %5063
      %v5065 = vsel %vm1820, %v4727, -inf
      %5066 = vmax.xlane.f32.xlu0 %v5065
      %v5067 = vpop.xlane.xlu0 %5066
      %v5068 = vsel %vm1820, %v4730, -inf
      %5069 = vmax.xlane.f32.xlu0 %v5068
      %v5070 = vpop.xlane.xlu0 %5069
      %v5071 = vsel %vm1820, %v4733, -inf
      %5072 = vmax.xlane.f32.xlu0 %v5071
      %v5073 = vpop.xlane.xlu0 %5072
      %v5074 = vsel %vm1820, %v4736, -inf
      %5075 = vmax.xlane.f32.xlu0 %v5074
      %v5076 = vpop.xlane.xlu0 %5075
      %v5077 = vsel %vm1820, %v4739, -inf
      %5078 = vmax.xlane.f32.xlu0 %v5077
      %v5079 = vpop.xlane.xlu0 %5078
      %v5080 = vsel %vm1820, %v4823, -inf
      %5081 = vmax.xlane.f32.xlu0 %v5080
      %v5082 = vpop.xlane.xlu0 %5081
      %v5083 = vsel %vm1820, %v4826, -inf
      %5084 = vmax.xlane.f32.xlu0 %v5083
      %v5085 = vpop.xlane.xlu0 %5084
      %v5086 = vsel %vm1820, %v4829, -inf
      %5087 = vmax.xlane.f32.xlu0 %v5086
      %v5088 = vpop.xlane.xlu0 %5087
      %v5089 = vsel %vm1820, %v4832, -inf
      %5090 = vmax.xlane.f32.xlu0 %v5089
      %v5091 = vpop.xlane.xlu0 %5090
      %v5092 = vsel %vm1820, %v4835, -inf
      %5093 = vmax.xlane.f32.xlu0 %v5092
      %v5094 = vpop.xlane.xlu0 %5093
      %v5095 = vsel %vm1820, %v4838, -inf
      %5096 = vmax.xlane.f32.xlu0 %v5095
      %v5097 = vpop.xlane.xlu0 %5096
      %v5098 = vsel %vm1820, %v4841, -inf
      %5099 = vmax.xlane.f32.xlu0 %v5098
      %v5100 = vpop.xlane.xlu0 %5099
      %v5101 = vsel %vm1820, %v4844, -inf
      %5102 = vmax.xlane.f32.xlu0 %v5101
      %v5103 = vpop.xlane.xlu0 %5102
      %v5104 = vsel %vm1820, %v4928, -inf
      %5105 = vmax.xlane.f32.xlu0 %v5104
      %v5106 = vpop.xlane.xlu0 %5105
      %v5107 = vsel %vm1820, %v4931, -inf
      %5108 = vmax.xlane.f32.xlu0 %v5107
      %v5109 = vpop.xlane.xlu0 %5108
      %v5110 = vsel %vm1820, %v4934, -inf
      %5111 = vmax.xlane.f32.xlu0 %v5110
      %v5112 = vpop.xlane.xlu0 %5111
      %v5113 = vsel %vm1820, %v4937, -inf
      %5114 = vmax.xlane.f32.xlu0 %v5113
      %v5115 = vpop.xlane.xlu0 %5114
      %v5116 = vsel %vm1820, %v4940, -inf
      %5117 = vmax.xlane.f32.xlu0 %v5116
      %v5118 = vpop.xlane.xlu0 %5117
      %v5119 = vsel %vm1820, %v4943, -inf
      %5120 = vmax.xlane.f32.xlu0 %v5119
      %v5121 = vpop.xlane.xlu0 %5120
      %v5122 = vsel %vm1820, %v4946, -inf
      %5123 = vmax.xlane.f32.xlu0 %v5122
      %v5124 = vpop.xlane.xlu0 %5123
      %v5125 = vsel %vm1820, %v4949, -inf
      %5126 = vmax.xlane.f32.xlu0 %v5125
      %v5127 = vpop.xlane.xlu0 %5126
      %v5128 = vsel %vm1820, %v5033, -inf
      %5129 = vmax.xlane.f32.xlu0 %v5128
      %v5130 = vpop.xlane.xlu0 %5129
      %v5131 = vsel %vm1820, %v5036, -inf
      %5132 = vmax.xlane.f32.xlu0 %v5131
      %v5133 = vpop.xlane.xlu0 %5132
      %v5134 = vsel %vm1820, %v5039, -inf
      %5135 = vmax.xlane.f32.xlu0 %v5134
      %v5136 = vpop.xlane.xlu0 %5135
      %v5137 = vsel %vm1820, %v5042, -inf
      %5138 = vmax.xlane.f32.xlu0 %v5137
      %v5139 = vpop.xlane.xlu0 %5138
      %v5140 = vsel %vm1820, %v5045, -inf
      %5141 = vmax.xlane.f32.xlu0 %v5140
      %v5142 = vpop.xlane.xlu0 %5141
      %v5143 = vsel %vm1820, %v5048, -inf
      %5144 = vmax.xlane.f32.xlu0 %v5143
      %v5145 = vpop.xlane.xlu0 %5144
      %v5146 = vsel %vm1820, %v5051, -inf
      %5147 = vmax.xlane.f32.xlu0 %v5146
      %v5148 = vpop.xlane.xlu0 %5147
      %v5149 = vsel %vm1820, %v5054, -inf
      %5150 = vmax.xlane.f32.xlu0 %v5149
      %v5151 = vpop.xlane.xlu0 %5150
      %v5152 = vsub.f32 %v4718, %v5058
      %v5153 = vsub.f32 %v4721, %v5061
      %v5154 = vsub.f32 %v4724, %v5064
      %v5155 = vsub.f32 %v4727, %v5067
      %v5156 = vsub.f32 %v4730, %v5070
      %v5157 = vsub.f32 %v4733, %v5073
      %v5158 = vsub.f32 %v4736, %v5076
      %v5159 = vsub.f32 %v4739, %v5079
      %v5160 = vsub.f32 %v4823, %v5082
      %v5161 = vsub.f32 %v4826, %v5085
      %v5162 = vsub.f32 %v4829, %v5088
      %v5163 = vsub.f32 %v4832, %v5091
      %v5164 = vsub.f32 %v4835, %v5094
      %v5165 = vsub.f32 %v4838, %v5097
      %v5166 = vsub.f32 %v4841, %v5100
      %v5167 = vsub.f32 %v4844, %v5103
      %v5168 = vsub.f32 %v4928, %v5106
      %v5169 = vsub.f32 %v4931, %v5109
      %v5170 = vsub.f32 %v4934, %v5112
      %v5171 = vsub.f32 %v4937, %v5115
      %v5172 = vsub.f32 %v4940, %v5118
      %v5173 = vsub.f32 %v4943, %v5121
      %v5174 = vsub.f32 %v4946, %v5124
      %v5175 = vsub.f32 %v4949, %v5127
      %v5176 = vsub.f32 %v5033, %v5130
      %v5177 = vsub.f32 %v5036, %v5133
      %v5178 = vsub.f32 %v5039, %v5136
      %v5179 = vsub.f32 %v5042, %v5139
      %v5180 = vsub.f32 %v5045, %v5142
      %v5181 = vsub.f32 %v5048, %v5145
      %v5182 = vsub.f32 %v5051, %v5148
      %v5183 = vsub.f32 %v5054, %v5151
      %v5184 = vmul.f32 %v5152, 1.442695
      %v5185 = vpow.pop %v5184
      %v5186 = vmul.f32 %v5153, 1.442695
      %v5187 = vpow.pop %v5186
      %v5188 = vmul.f32 %v5154, 1.442695
      %v5189 = vpow.pop %v5188
      %v5190 = vmul.f32 %v5155, 1.442695
      %v5191 = vpow.pop %v5190
      %v5192 = vmul.f32 %v5156, 1.442695
      %v5193 = vpow.pop %v5192
      %v5194 = vmul.f32 %v5157, 1.442695
      %v5195 = vpow.pop %v5194
      %v5196 = vmul.f32 %v5158, 1.442695
      %v5197 = vpow.pop %v5196
      %v5198 = vmul.f32 %v5159, 1.442695
      %v5199 = vpow.pop %v5198
      %v5200 = vmul.f32 %v5160, 1.442695
      %v5201 = vpow.pop %v5200
      %v5202 = vmul.f32 %v5161, 1.442695
      %v5203 = vpow.pop %v5202
      %v5204 = vmul.f32 %v5162, 1.442695
      %v5205 = vpow.pop %v5204
      %v5206 = vmul.f32 %v5163, 1.442695
      %v5207 = vpow.pop %v5206
      %v5208 = vmul.f32 %v5164, 1.442695
      %v5209 = vpow.pop %v5208
      %v5210 = vmul.f32 %v5165, 1.442695
      %v5211 = vpow.pop %v5210
      %v5212 = vmul.f32 %v5166, 1.442695
      %v5213 = vpow.pop %v5212
      %v5214 = vmul.f32 %v5167, 1.442695
      %v5215 = vpow.pop %v5214
      %v5216 = vmul.f32 %v5168, 1.442695
      %v5217 = vpow.pop %v5216
      %v5218 = vmul.f32 %v5169, 1.442695
      %v5219 = vpow.pop %v5218
      %v5220 = vmul.f32 %v5170, 1.442695
      %v5221 = vpow.pop %v5220
      %v5222 = vmul.f32 %v5171, 1.442695
      %v5223 = vpow.pop %v5222
      %v5224 = vmul.f32 %v5172, 1.442695
      %v5225 = vpow.pop %v5224
      %v5226 = vmul.f32 %v5173, 1.442695
      %v5227 = vpow.pop %v5226
      %v5228 = vmul.f32 %v5174, 1.442695
      %v5229 = vpow.pop %v5228
      %v5230 = vmul.f32 %v5175, 1.442695
      %v5231 = vpow.pop %v5230
      %v5232 = vmul.f32 %v5176, 1.442695
      %v5233 = vpow.pop %v5232
      %v5234 = vmul.f32 %v5177, 1.442695
      %v5235 = vpow.pop %v5234
      %v5236 = vmul.f32 %v5178, 1.442695
      %v5237 = vpow.pop %v5236
      %v5238 = vmul.f32 %v5179, 1.442695
      %v5239 = vpow.pop %v5238
      %v5240 = vmul.f32 %v5180, 1.442695
      %v5241 = vpow.pop %v5240
      %v5242 = vmul.f32 %v5181, 1.442695
      %v5243 = vpow.pop %v5242
      %v5244 = vmul.f32 %v5182, 1.442695
      %v5245 = vpow.pop %v5244
      %v5246 = vmul.f32 %v5183, 1.442695
      %v5247 = vpow.pop %v5246
      %v5248 = vsel %vm1820, %v5185, 0.0
      %5249 = vadd.xlane.f32.xlu0 %v5248
      %v5250 = vpop.xlane.xlu0 %5249
      %v5251 = vsel %vm1820, %v5187, 0.0
      %5252 = vadd.xlane.f32.xlu0 %v5251
      %v5253 = vpop.xlane.xlu0 %5252
      %v5254 = vsel %vm1820, %v5189, 0.0
      %5255 = vadd.xlane.f32.xlu0 %v5254
      %v5256 = vpop.xlane.xlu0 %5255
      %v5257 = vsel %vm1820, %v5191, 0.0
      %5258 = vadd.xlane.f32.xlu0 %v5257
      %v5259 = vpop.xlane.xlu0 %5258
      %v5260 = vsel %vm1820, %v5193, 0.0
      %5261 = vadd.xlane.f32.xlu0 %v5260
      %v5262 = vpop.xlane.xlu0 %5261
      %v5263 = vsel %vm1820, %v5195, 0.0
      %5264 = vadd.xlane.f32.xlu0 %v5263
      %v5265 = vpop.xlane.xlu0 %5264
      %v5266 = vsel %vm1820, %v5197, 0.0
      %5267 = vadd.xlane.f32.xlu0 %v5266
      %v5268 = vpop.xlane.xlu0 %5267
      %v5269 = vsel %vm1820, %v5199, 0.0
      %5270 = vadd.xlane.f32.xlu0 %v5269
      %v5271 = vpop.xlane.xlu0 %5270
      %v5272 = vsel %vm1820, %v5201, 0.0
      %5273 = vadd.xlane.f32.xlu0 %v5272
      %v5274 = vpop.xlane.xlu0 %5273
      %v5275 = vsel %vm1820, %v5203, 0.0
      %5276 = vadd.xlane.f32.xlu0 %v5275
      %v5277 = vpop.xlane.xlu0 %5276
      %v5278 = vsel %vm1820, %v5205, 0.0
      %5279 = vadd.xlane.f32.xlu0 %v5278
      %v5280 = vpop.xlane.xlu0 %5279
      %v5281 = vsel %vm1820, %v5207, 0.0
      %5282 = vadd.xlane.f32.xlu0 %v5281
      %v5283 = vpop.xlane.xlu0 %5282
      %v5284 = vsel %vm1820, %v5209, 0.0
      %5285 = vadd.xlane.f32.xlu0 %v5284
      %v5286 = vpop.xlane.xlu0 %5285
      %v5287 = vsel %vm1820, %v5211, 0.0
      %5288 = vadd.xlane.f32.xlu0 %v5287
      %v5289 = vpop.xlane.xlu0 %5288
      %v5290 = vsel %vm1820, %v5213, 0.0
      %5291 = vadd.xlane.f32.xlu0 %v5290
      %v5292 = vpop.xlane.xlu0 %5291
      %v5293 = vsel %vm1820, %v5215, 0.0
      %5294 = vadd.xlane.f32.xlu0 %v5293
      %v5295 = vpop.xlane.xlu0 %5294
      %v5296 = vsel %vm1820, %v5217, 0.0
      %5297 = vadd.xlane.f32.xlu0 %v5296
      %v5298 = vpop.xlane.xlu0 %5297
      %v5299 = vsel %vm1820, %v5219, 0.0
      %5300 = vadd.xlane.f32.xlu0 %v5299
      %v5301 = vpop.xlane.xlu0 %5300
      %v5302 = vsel %vm1820, %v5221, 0.0
      %5303 = vadd.xlane.f32.xlu0 %v5302
      %v5304 = vpop.xlane.xlu0 %5303
      %v5305 = vsel %vm1820, %v5223, 0.0
      %5306 = vadd.xlane.f32.xlu0 %v5305
      %v5307 = vpop.xlane.xlu0 %5306
      %v5308 = vsel %vm1820, %v5225, 0.0
      %5309 = vadd.xlane.f32.xlu0 %v5308
      %v5310 = vpop.xlane.xlu0 %5309
      %v5311 = vsel %vm1820, %v5227, 0.0
      %5312 = vadd.xlane.f32.xlu0 %v5311
      %v5313 = vpop.xlane.xlu0 %5312
      %v5314 = vsel %vm1820, %v5229, 0.0
      %5315 = vadd.xlane.f32.xlu0 %v5314
      %v5316 = vpop.xlane.xlu0 %5315
      %v5317 = vsel %vm1820, %v5231, 0.0
      %5318 = vadd.xlane.f32.xlu0 %v5317
      %v5319 = vpop.xlane.xlu0 %5318
      %v5320 = vsel %vm1820, %v5233, 0.0
      %5321 = vadd.xlane.f32.xlu0 %v5320
      %v5322 = vpop.xlane.xlu0 %5321
      %v5323 = vsel %vm1820, %v5235, 0.0
      %5324 = vadd.xlane.f32.xlu0 %v5323
      %v5325 = vpop.xlane.xlu0 %5324
      %v5326 = vsel %vm1820, %v5237, 0.0
      %5327 = vadd.xlane.f32.xlu0 %v5326
      %v5328 = vpop.xlane.xlu0 %5327
      %v5329 = vsel %vm1820, %v5239, 0.0
      %5330 = vadd.xlane.f32.xlu0 %v5329
      %v5331 = vpop.xlane.xlu0 %5330
      %v5332 = vsel %vm1820, %v5241, 0.0
      %5333 = vadd.xlane.f32.xlu0 %v5332
      %v5334 = vpop.xlane.xlu0 %5333
      %v5335 = vsel %vm1820, %v5243, 0.0
      %5336 = vadd.xlane.f32.xlu0 %v5335
      %v5337 = vpop.xlane.xlu0 %5336
      %v5338 = vsel %vm1820, %v5245, 0.0
      %5339 = vadd.xlane.f32.xlu0 %v5338
      %v5340 = vpop.xlane.xlu0 %5339
      %v5341 = vsel %vm1820, %v5247, 0.0
      %5342 = vadd.xlane.f32.xlu0 %v5341
      %v5343 = vpop.xlane.xlu0 %5342
      %v5344 = vrcp.pop %v5250
      %v5345 = vmul.f32 %v5250, %v5344
      %v5346 = vsub.f32 1.0, %v5345
      %v5347 = vmul.f32 %v5344, %v5346
      %v5348 = vadd.f32 %v5344, %v5347
      %vm5349 = vweird.f32 %v5250
      %vm5350 = vweird.f32 %v5344
      %vm5351 = vmor %vm5349, %vm5350
      %v5352 = vsel %vm5351, %v5344, %v5348
      %v5353 = vand.u32 2147483647, %v5250
      %vm5354 = vcmp.eq.f32.partialorder %v5353, 8.507059e+37
      %v5355 = vand.u32 %v5250, 2147483648
      %v5356 = vor.u32 1.1754944e-38, %v5355
      %v5357 = vsel %vm5354, %v5356, %v5352
      %v5358 = vmul.f32 %v5185, %v5357
      %v5359 = vrcp.pop %v5253
      %v5360 = vmul.f32 %v5253, %v5359
      %v5361 = vsub.f32 1.0, %v5360
      %v5362 = vmul.f32 %v5359, %v5361
      %v5363 = vadd.f32 %v5359, %v5362
      %vm5364 = vweird.f32 %v5253
      %vm5365 = vweird.f32 %v5359
      %vm5366 = vmor %vm5364, %vm5365
      %v5367 = vsel %vm5366, %v5359, %v5363
      %v5368 = vand.u32 2147483647, %v5253
      %vm5369 = vcmp.eq.f32.partialorder %v5368, 8.507059e+37
      %v5370 = vand.u32 %v5253, 2147483648
      %v5371 = vor.u32 1.1754944e-38, %v5370
      %v5372 = vsel %vm5369, %v5371, %v5367
      %v5373 = vmul.f32 %v5187, %v5372
      %v5374 = vrcp.pop %v5256
      %v5375 = vmul.f32 %v5256, %v5374
      %v5376 = vsub.f32 1.0, %v5375
      %v5377 = vmul.f32 %v5374, %v5376
      %v5378 = vadd.f32 %v5374, %v5377
      %vm5379 = vweird.f32 %v5256
      %vm5380 = vweird.f32 %v5374
      %vm5381 = vmor %vm5379, %vm5380
      %v5382 = vsel %vm5381, %v5374, %v5378
      %v5383 = vand.u32 2147483647, %v5256
      %vm5384 = vcmp.eq.f32.partialorder %v5383, 8.507059e+37
      %v5385 = vand.u32 %v5256, 2147483648
      %v5386 = vor.u32 1.1754944e-38, %v5385
      %v5387 = vsel %vm5384, %v5386, %v5382
      %v5388 = vmul.f32 %v5189, %v5387
      %v5389 = vrcp.pop %v5259
      %v5390 = vmul.f32 %v5259, %v5389
      %v5391 = vsub.f32 1.0, %v5390
      %v5392 = vmul.f32 %v5389, %v5391
      %v5393 = vadd.f32 %v5389, %v5392
      %vm5394 = vweird.f32 %v5259
      %vm5395 = vweird.f32 %v5389
      %vm5396 = vmor %vm5394, %vm5395
      %v5397 = vsel %vm5396, %v5389, %v5393
      %v5398 = vand.u32 2147483647, %v5259
      %vm5399 = vcmp.eq.f32.partialorder %v5398, 8.507059e+37
      %v5400 = vand.u32 %v5259, 2147483648
      %v5401 = vor.u32 1.1754944e-38, %v5400
      %v5402 = vsel %vm5399, %v5401, %v5397
      %v5403 = vmul.f32 %v5191, %v5402
      %v5404 = vrcp.pop %v5262
      %v5405 = vmul.f32 %v5262, %v5404
      %v5406 = vsub.f32 1.0, %v5405
      %v5407 = vmul.f32 %v5404, %v5406
      %v5408 = vadd.f32 %v5404, %v5407
      %vm5409 = vweird.f32 %v5262
      %vm5410 = vweird.f32 %v5404
      %vm5411 = vmor %vm5409, %vm5410
      %v5412 = vsel %vm5411, %v5404, %v5408
      %v5413 = vand.u32 2147483647, %v5262
      %vm5414 = vcmp.eq.f32.partialorder %v5413, 8.507059e+37
      %v5415 = vand.u32 %v5262, 2147483648
      %v5416 = vor.u32 1.1754944e-38, %v5415
      %v5417 = vsel %vm5414, %v5416, %v5412
      %v5418 = vmul.f32 %v5193, %v5417
      %v5419 = vrcp.pop %v5265
      %v5420 = vmul.f32 %v5265, %v5419
      %v5421 = vsub.f32 1.0, %v5420
      %v5422 = vmul.f32 %v5419, %v5421
      %v5423 = vadd.f32 %v5419, %v5422
      %vm5424 = vweird.f32 %v5265
      %vm5425 = vweird.f32 %v5419
      %vm5426 = vmor %vm5424, %vm5425
      %v5427 = vsel %vm5426, %v5419, %v5423
      %v5428 = vand.u32 2147483647, %v5265
      %vm5429 = vcmp.eq.f32.partialorder %v5428, 8.507059e+37
      %v5430 = vand.u32 %v5265, 2147483648
      %v5431 = vor.u32 1.1754944e-38, %v5430
      %v5432 = vsel %vm5429, %v5431, %v5427
      %v5433 = vmul.f32 %v5195, %v5432
      %v5434 = vrcp.pop %v5268
      %v5435 = vmul.f32 %v5268, %v5434
      %v5436 = vsub.f32 1.0, %v5435
      %v5437 = vmul.f32 %v5434, %v5436
      %v5438 = vadd.f32 %v5434, %v5437
      %vm5439 = vweird.f32 %v5268
      %vm5440 = vweird.f32 %v5434
      %vm5441 = vmor %vm5439, %vm5440
      %v5442 = vsel %vm5441, %v5434, %v5438
      %v5443 = vand.u32 2147483647, %v5268
      %vm5444 = vcmp.eq.f32.partialorder %v5443, 8.507059e+37
      %v5445 = vand.u32 %v5268, 2147483648
      %v5446 = vor.u32 1.1754944e-38, %v5445
      %v5447 = vsel %vm5444, %v5446, %v5442
      %v5448 = vmul.f32 %v5197, %v5447
      %v5449 = vrcp.pop %v5271
      %v5450 = vmul.f32 %v5271, %v5449
      %v5451 = vsub.f32 1.0, %v5450
      %v5452 = vmul.f32 %v5449, %v5451
      %v5453 = vadd.f32 %v5449, %v5452
      %vm5454 = vweird.f32 %v5271
      %vm5455 = vweird.f32 %v5449
      %vm5456 = vmor %vm5454, %vm5455
      %v5457 = vsel %vm5456, %v5449, %v5453
      %v5458 = vand.u32 2147483647, %v5271
      %vm5459 = vcmp.eq.f32.partialorder %v5458, 8.507059e+37
      %v5460 = vand.u32 %v5271, 2147483648
      %v5461 = vor.u32 1.1754944e-38, %v5460
      %v5462 = vsel %vm5459, %v5461, %v5457
      %v5463 = vmul.f32 %v5199, %v5462
      %v5464 = vrcp.pop %v5274
      %v5465 = vmul.f32 %v5274, %v5464
      %v5466 = vsub.f32 1.0, %v5465
      %v5467 = vmul.f32 %v5464, %v5466
      %v5468 = vadd.f32 %v5464, %v5467
      %vm5469 = vweird.f32 %v5274
      %vm5470 = vweird.f32 %v5464
      %vm5471 = vmor %vm5469, %vm5470
      %v5472 = vsel %vm5471, %v5464, %v5468
      %v5473 = vand.u32 2147483647, %v5274
      %vm5474 = vcmp.eq.f32.partialorder %v5473, 8.507059e+37
      %v5475 = vand.u32 %v5274, 2147483648
      %v5476 = vor.u32 1.1754944e-38, %v5475
      %v5477 = vsel %vm5474, %v5476, %v5472
      %v5478 = vmul.f32 %v5201, %v5477
      %v5479 = vrcp.pop %v5277
      %v5480 = vmul.f32 %v5277, %v5479
      %v5481 = vsub.f32 1.0, %v5480
      %v5482 = vmul.f32 %v5479, %v5481
      %v5483 = vadd.f32 %v5479, %v5482
      %vm5484 = vweird.f32 %v5277
      %vm5485 = vweird.f32 %v5479
      %vm5486 = vmor %vm5484, %vm5485
      %v5487 = vsel %vm5486, %v5479, %v5483
      %v5488 = vand.u32 2147483647, %v5277
      %vm5489 = vcmp.eq.f32.partialorder %v5488, 8.507059e+37
      %v5490 = vand.u32 %v5277, 2147483648
      %v5491 = vor.u32 1.1754944e-38, %v5490
      %v5492 = vsel %vm5489, %v5491, %v5487
      %v5493 = vmul.f32 %v5203, %v5492
      %v5494 = vrcp.pop %v5280
      %v5495 = vmul.f32 %v5280, %v5494
      %v5496 = vsub.f32 1.0, %v5495
      %v5497 = vmul.f32 %v5494, %v5496
      %v5498 = vadd.f32 %v5494, %v5497
      %vm5499 = vweird.f32 %v5280
      %vm5500 = vweird.f32 %v5494
      %vm5501 = vmor %vm5499, %vm5500
      %v5502 = vsel %vm5501, %v5494, %v5498
      %v5503 = vand.u32 2147483647, %v5280
      %vm5504 = vcmp.eq.f32.partialorder %v5503, 8.507059e+37
      %v5505 = vand.u32 %v5280, 2147483648
      %v5506 = vor.u32 1.1754944e-38, %v5505
      %v5507 = vsel %vm5504, %v5506, %v5502
      %v5508 = vmul.f32 %v5205, %v5507
      %v5509 = vrcp.pop %v5283
      %v5510 = vmul.f32 %v5283, %v5509
      %v5511 = vsub.f32 1.0, %v5510
      %v5512 = vmul.f32 %v5509, %v5511
      %v5513 = vadd.f32 %v5509, %v5512
      %vm5514 = vweird.f32 %v5283
      %vm5515 = vweird.f32 %v5509
      %vm5516 = vmor %vm5514, %vm5515
      %v5517 = vsel %vm5516, %v5509, %v5513
      %v5518 = vand.u32 2147483647, %v5283
      %vm5519 = vcmp.eq.f32.partialorder %v5518, 8.507059e+37
      %v5520 = vand.u32 %v5283, 2147483648
      %v5521 = vor.u32 1.1754944e-38, %v5520
      %v5522 = vsel %vm5519, %v5521, %v5517
      %v5523 = vmul.f32 %v5207, %v5522
      %v5524 = vrcp.pop %v5286
      %v5525 = vmul.f32 %v5286, %v5524
      %v5526 = vsub.f32 1.0, %v5525
      %v5527 = vmul.f32 %v5524, %v5526
      %v5528 = vadd.f32 %v5524, %v5527
      %vm5529 = vweird.f32 %v5286
      %vm5530 = vweird.f32 %v5524
      %vm5531 = vmor %vm5529, %vm5530
      %v5532 = vsel %vm5531, %v5524, %v5528
      %v5533 = vand.u32 2147483647, %v5286
      %vm5534 = vcmp.eq.f32.partialorder %v5533, 8.507059e+37
      %v5535 = vand.u32 %v5286, 2147483648
      %v5536 = vor.u32 1.1754944e-38, %v5535
      %v5537 = vsel %vm5534, %v5536, %v5532
      %v5538 = vmul.f32 %v5209, %v5537
      %v5539 = vrcp.pop %v5289
      %v5540 = vmul.f32 %v5289, %v5539
      %v5541 = vsub.f32 1.0, %v5540
      %v5542 = vmul.f32 %v5539, %v5541
      %v5543 = vadd.f32 %v5539, %v5542
      %vm5544 = vweird.f32 %v5289
      %vm5545 = vweird.f32 %v5539
      %vm5546 = vmor %vm5544, %vm5545
      %v5547 = vsel %vm5546, %v5539, %v5543
      %v5548 = vand.u32 2147483647, %v5289
      %vm5549 = vcmp.eq.f32.partialorder %v5548, 8.507059e+37
      %v5550 = vand.u32 %v5289, 2147483648
      %v5551 = vor.u32 1.1754944e-38, %v5550
      %v5552 = vsel %vm5549, %v5551, %v5547
      %v5553 = vmul.f32 %v5211, %v5552
      %v5554 = vrcp.pop %v5292
      %v5555 = vmul.f32 %v5292, %v5554
      %v5556 = vsub.f32 1.0, %v5555
      %v5557 = vmul.f32 %v5554, %v5556
      %v5558 = vadd.f32 %v5554, %v5557
      %vm5559 = vweird.f32 %v5292
      %vm5560 = vweird.f32 %v5554
      %vm5561 = vmor %vm5559, %vm5560
      %v5562 = vsel %vm5561, %v5554, %v5558
      %v5563 = vand.u32 2147483647, %v5292
      %vm5564 = vcmp.eq.f32.partialorder %v5563, 8.507059e+37
      %v5565 = vand.u32 %v5292, 2147483648
      %v5566 = vor.u32 1.1754944e-38, %v5565
      %v5567 = vsel %vm5564, %v5566, %v5562
      %v5568 = vmul.f32 %v5213, %v5567
      %v5569 = vrcp.pop %v5295
      %v5570 = vmul.f32 %v5295, %v5569
      %v5571 = vsub.f32 1.0, %v5570
      %v5572 = vmul.f32 %v5569, %v5571
      %v5573 = vadd.f32 %v5569, %v5572
      %vm5574 = vweird.f32 %v5295
      %vm5575 = vweird.f32 %v5569
      %vm5576 = vmor %vm5574, %vm5575
      %v5577 = vsel %vm5576, %v5569, %v5573
      %v5578 = vand.u32 2147483647, %v5295
      %vm5579 = vcmp.eq.f32.partialorder %v5578, 8.507059e+37
      %v5580 = vand.u32 %v5295, 2147483648
      %v5581 = vor.u32 1.1754944e-38, %v5580
      %v5582 = vsel %vm5579, %v5581, %v5577
      %v5583 = vmul.f32 %v5215, %v5582
      %v5584 = vrcp.pop %v5298
      %v5585 = vmul.f32 %v5298, %v5584
      %v5586 = vsub.f32 1.0, %v5585
      %v5587 = vmul.f32 %v5584, %v5586
      %v5588 = vadd.f32 %v5584, %v5587
      %vm5589 = vweird.f32 %v5298
      %vm5590 = vweird.f32 %v5584
      %vm5591 = vmor %vm5589, %vm5590
      %v5592 = vsel %vm5591, %v5584, %v5588
      %v5593 = vand.u32 2147483647, %v5298
      %vm5594 = vcmp.eq.f32.partialorder %v5593, 8.507059e+37
      %v5595 = vand.u32 %v5298, 2147483648
      %v5596 = vor.u32 1.1754944e-38, %v5595
      %v5597 = vsel %vm5594, %v5596, %v5592
      %v5598 = vmul.f32 %v5217, %v5597
      %v5599 = vrcp.pop %v5301
      %v5600 = vmul.f32 %v5301, %v5599
      %v5601 = vsub.f32 1.0, %v5600
      %v5602 = vmul.f32 %v5599, %v5601
      %v5603 = vadd.f32 %v5599, %v5602
      %vm5604 = vweird.f32 %v5301
      %vm5605 = vweird.f32 %v5599
      %vm5606 = vmor %vm5604, %vm5605
      %v5607 = vsel %vm5606, %v5599, %v5603
      %v5608 = vand.u32 2147483647, %v5301
      %vm5609 = vcmp.eq.f32.partialorder %v5608, 8.507059e+37
      %v5610 = vand.u32 %v5301, 2147483648
      %v5611 = vor.u32 1.1754944e-38, %v5610
      %v5612 = vsel %vm5609, %v5611, %v5607
      %v5613 = vmul.f32 %v5219, %v5612
      %v5614 = vrcp.pop %v5304
      %v5615 = vmul.f32 %v5304, %v5614
      %v5616 = vsub.f32 1.0, %v5615
      %v5617 = vmul.f32 %v5614, %v5616
      %v5618 = vadd.f32 %v5614, %v5617
      %vm5619 = vweird.f32 %v5304
      %vm5620 = vweird.f32 %v5614
      %vm5621 = vmor %vm5619, %vm5620
      %v5622 = vsel %vm5621, %v5614, %v5618
      %v5623 = vand.u32 2147483647, %v5304
      %vm5624 = vcmp.eq.f32.partialorder %v5623, 8.507059e+37
      %v5625 = vand.u32 %v5304, 2147483648
      %v5626 = vor.u32 1.1754944e-38, %v5625
      %v5627 = vsel %vm5624, %v5626, %v5622
      %v5628 = vmul.f32 %v5221, %v5627
      %v5629 = vrcp.pop %v5307
      %v5630 = vmul.f32 %v5307, %v5629
      %v5631 = vsub.f32 1.0, %v5630
      %v5632 = vmul.f32 %v5629, %v5631
      %v5633 = vadd.f32 %v5629, %v5632
      %vm5634 = vweird.f32 %v5307
      %vm5635 = vweird.f32 %v5629
      %vm5636 = vmor %vm5634, %vm5635
      %v5637 = vsel %vm5636, %v5629, %v5633
      %v5638 = vand.u32 2147483647, %v5307
      %vm5639 = vcmp.eq.f32.partialorder %v5638, 8.507059e+37
      %v5640 = vand.u32 %v5307, 2147483648
      %v5641 = vor.u32 1.1754944e-38, %v5640
      %v5642 = vsel %vm5639, %v5641, %v5637
      %v5643 = vmul.f32 %v5223, %v5642
      %v5644 = vrcp.pop %v5310
      %v5645 = vmul.f32 %v5310, %v5644
      %v5646 = vsub.f32 1.0, %v5645
      %v5647 = vmul.f32 %v5644, %v5646
      %v5648 = vadd.f32 %v5644, %v5647
      %vm5649 = vweird.f32 %v5310
      %vm5650 = vweird.f32 %v5644
      %vm5651 = vmor %vm5649, %vm5650
      %v5652 = vsel %vm5651, %v5644, %v5648
      %v5653 = vand.u32 2147483647, %v5310
      %vm5654 = vcmp.eq.f32.partialorder %v5653, 8.507059e+37
      %v5655 = vand.u32 %v5310, 2147483648
      %v5656 = vor.u32 1.1754944e-38, %v5655
      %v5657 = vsel %vm5654, %v5656, %v5652
      %v5658 = vmul.f32 %v5225, %v5657
      %v5659 = vrcp.pop %v5313
      %v5660 = vmul.f32 %v5313, %v5659
      %v5661 = vsub.f32 1.0, %v5660
      %v5662 = vmul.f32 %v5659, %v5661
      %v5663 = vadd.f32 %v5659, %v5662
      %vm5664 = vweird.f32 %v5313
      %vm5665 = vweird.f32 %v5659
      %vm5666 = vmor %vm5664, %vm5665
      %v5667 = vsel %vm5666, %v5659, %v5663
      %v5668 = vand.u32 2147483647, %v5313
      %vm5669 = vcmp.eq.f32.partialorder %v5668, 8.507059e+37
      %v5670 = vand.u32 %v5313, 2147483648
      %v5671 = vor.u32 1.1754944e-38, %v5670
      %v5672 = vsel %vm5669, %v5671, %v5667
      %v5673 = vmul.f32 %v5227, %v5672
      %v5674 = vrcp.pop %v5316
      %v5675 = vmul.f32 %v5316, %v5674
      %v5676 = vsub.f32 1.0, %v5675
      %v5677 = vmul.f32 %v5674, %v5676
      %v5678 = vadd.f32 %v5674, %v5677
      %vm5679 = vweird.f32 %v5316
      %vm5680 = vweird.f32 %v5674
      %vm5681 = vmor %vm5679, %vm5680
      %v5682 = vsel %vm5681, %v5674, %v5678
      %v5683 = vand.u32 2147483647, %v5316
      %vm5684 = vcmp.eq.f32.partialorder %v5683, 8.507059e+37
      %v5685 = vand.u32 %v5316, 2147483648
      %v5686 = vor.u32 1.1754944e-38, %v5685
      %v5687 = vsel %vm5684, %v5686, %v5682
      %v5688 = vmul.f32 %v5229, %v5687
      %v5689 = vrcp.pop %v5319
      %v5690 = vmul.f32 %v5319, %v5689
      %v5691 = vsub.f32 1.0, %v5690
      %v5692 = vmul.f32 %v5689, %v5691
      %v5693 = vadd.f32 %v5689, %v5692
      %vm5694 = vweird.f32 %v5319
      %vm5695 = vweird.f32 %v5689
      %vm5696 = vmor %vm5694, %vm5695
      %v5697 = vsel %vm5696, %v5689, %v5693
      %v5698 = vand.u32 2147483647, %v5319
      %vm5699 = vcmp.eq.f32.partialorder %v5698, 8.507059e+37
      %v5700 = vand.u32 %v5319, 2147483648
      %v5701 = vor.u32 1.1754944e-38, %v5700
      %v5702 = vsel %vm5699, %v5701, %v5697
      %v5703 = vmul.f32 %v5231, %v5702
      %v5704 = vrcp.pop %v5322
      %v5705 = vmul.f32 %v5322, %v5704
      %v5706 = vsub.f32 1.0, %v5705
      %v5707 = vmul.f32 %v5704, %v5706
      %v5708 = vadd.f32 %v5704, %v5707
      %vm5709 = vweird.f32 %v5322
      %vm5710 = vweird.f32 %v5704
      %vm5711 = vmor %vm5709, %vm5710
      %v5712 = vsel %vm5711, %v5704, %v5708
      %v5713 = vand.u32 2147483647, %v5322
      %vm5714 = vcmp.eq.f32.partialorder %v5713, 8.507059e+37
      %v5715 = vand.u32 %v5322, 2147483648
      %v5716 = vor.u32 1.1754944e-38, %v5715
      %v5717 = vsel %vm5714, %v5716, %v5712
      %v5718 = vmul.f32 %v5233, %v5717
      %v5719 = vrcp.pop %v5325
      %v5720 = vmul.f32 %v5325, %v5719
      %v5721 = vsub.f32 1.0, %v5720
      %v5722 = vmul.f32 %v5719, %v5721
      %v5723 = vadd.f32 %v5719, %v5722
      %vm5724 = vweird.f32 %v5325
      %vm5725 = vweird.f32 %v5719
      %vm5726 = vmor %vm5724, %vm5725
      %v5727 = vsel %vm5726, %v5719, %v5723
      %v5728 = vand.u32 2147483647, %v5325
      %vm5729 = vcmp.eq.f32.partialorder %v5728, 8.507059e+37
      %v5730 = vand.u32 %v5325, 2147483648
      %v5731 = vor.u32 1.1754944e-38, %v5730
      %v5732 = vsel %vm5729, %v5731, %v5727
      %v5733 = vmul.f32 %v5235, %v5732
      %v5734 = vrcp.pop %v5328
      %v5735 = vmul.f32 %v5328, %v5734
      %v5736 = vsub.f32 1.0, %v5735
      %v5737 = vmul.f32 %v5734, %v5736
      %v5738 = vadd.f32 %v5734, %v5737
      %vm5739 = vweird.f32 %v5328
      %vm5740 = vweird.f32 %v5734
      %vm5741 = vmor %vm5739, %vm5740
      %v5742 = vsel %vm5741, %v5734, %v5738
      %v5743 = vand.u32 2147483647, %v5328
      %vm5744 = vcmp.eq.f32.partialorder %v5743, 8.507059e+37
      %v5745 = vand.u32 %v5328, 2147483648
      %v5746 = vor.u32 1.1754944e-38, %v5745
      %v5747 = vsel %vm5744, %v5746, %v5742
      %v5748 = vmul.f32 %v5237, %v5747
      %v5749 = vrcp.pop %v5331
      %v5750 = vmul.f32 %v5331, %v5749
      %v5751 = vsub.f32 1.0, %v5750
      %v5752 = vmul.f32 %v5749, %v5751
      %v5753 = vadd.f32 %v5749, %v5752
      %vm5754 = vweird.f32 %v5331
      %vm5755 = vweird.f32 %v5749
      %vm5756 = vmor %vm5754, %vm5755
      %v5757 = vsel %vm5756, %v5749, %v5753
      %v5758 = vand.u32 2147483647, %v5331
      %vm5759 = vcmp.eq.f32.partialorder %v5758, 8.507059e+37
      %v5760 = vand.u32 %v5331, 2147483648
      %v5761 = vor.u32 1.1754944e-38, %v5760
      %v5762 = vsel %vm5759, %v5761, %v5757
      %v5763 = vmul.f32 %v5239, %v5762
      %v5764 = vrcp.pop %v5334
      %v5765 = vmul.f32 %v5334, %v5764
      %v5766 = vsub.f32 1.0, %v5765
      %v5767 = vmul.f32 %v5764, %v5766
      %v5768 = vadd.f32 %v5764, %v5767
      %vm5769 = vweird.f32 %v5334
      %vm5770 = vweird.f32 %v5764
      %vm5771 = vmor %vm5769, %vm5770
      %v5772 = vsel %vm5771, %v5764, %v5768
      %v5773 = vand.u32 2147483647, %v5334
      %vm5774 = vcmp.eq.f32.partialorder %v5773, 8.507059e+37
      %v5775 = vand.u32 %v5334, 2147483648
      %v5776 = vor.u32 1.1754944e-38, %v5775
      %v5777 = vsel %vm5774, %v5776, %v5772
      %v5778 = vmul.f32 %v5241, %v5777
      %v5779 = vrcp.pop %v5337
      %v5780 = vmul.f32 %v5337, %v5779
      %v5781 = vsub.f32 1.0, %v5780
      %v5782 = vmul.f32 %v5779, %v5781
      %v5783 = vadd.f32 %v5779, %v5782
      %vm5784 = vweird.f32 %v5337
      %vm5785 = vweird.f32 %v5779
      %vm5786 = vmor %vm5784, %vm5785
      %v5787 = vsel %vm5786, %v5779, %v5783
      %v5788 = vand.u32 2147483647, %v5337
      %vm5789 = vcmp.eq.f32.partialorder %v5788, 8.507059e+37
      %v5790 = vand.u32 %v5337, 2147483648
      %v5791 = vor.u32 1.1754944e-38, %v5790
      %v5792 = vsel %vm5789, %v5791, %v5787
      %v5793 = vmul.f32 %v5243, %v5792
      %v5794 = vrcp.pop %v5340
      %v5795 = vmul.f32 %v5340, %v5794
      %v5796 = vsub.f32 1.0, %v5795
      %v5797 = vmul.f32 %v5794, %v5796
      %v5798 = vadd.f32 %v5794, %v5797
      %vm5799 = vweird.f32 %v5340
      %vm5800 = vweird.f32 %v5794
      %vm5801 = vmor %vm5799, %vm5800
      %v5802 = vsel %vm5801, %v5794, %v5798
      %v5803 = vand.u32 2147483647, %v5340
      %vm5804 = vcmp.eq.f32.partialorder %v5803, 8.507059e+37
      %v5805 = vand.u32 %v5340, 2147483648
      %v5806 = vor.u32 1.1754944e-38, %v5805
      %v5807 = vsel %vm5804, %v5806, %v5802
      %v5808 = vmul.f32 %v5245, %v5807
      %v5809 = vrcp.pop %v5343
      %v5810 = vmul.f32 %v5343, %v5809
      %v5811 = vsub.f32 1.0, %v5810
      %v5812 = vmul.f32 %v5809, %v5811
      %v5813 = vadd.f32 %v5809, %v5812
      %vm5814 = vweird.f32 %v5343
      %vm5815 = vweird.f32 %v5809
      %vm5816 = vmor %vm5814, %vm5815
      %v5817 = vsel %vm5816, %v5809, %v5813
      %v5818 = vand.u32 2147483647, %v5343
      %vm5819 = vcmp.eq.f32.partialorder %v5818, 8.507059e+37
      %v5820 = vand.u32 %v5343, 2147483648
      %v5821 = vor.u32 1.1754944e-38, %v5820
      %v5822 = vsel %vm5819, %v5821, %v5817
      %v5823 = vmul.f32 %v5247, %v5822
      %5824 = vrot.lane.b32.xlu0 %v1391, 112
      %v5825 = vpop.permute.xlu0 %5824
      %5826 = vrot.lane.b32.xlu0 %v1392, 112
      %v5827 = vpop.permute.xlu0 %5826
      %5828 = vrot.lane.b32.xlu0 %v1393, 112
      %v5829 = vpop.permute.xlu0 %5828
      %5830 = vrot.lane.b32.xlu0 %v1394, 112
      %v5831 = vpop.permute.xlu0 %5830
      %5832 = vrot.lane.b32.xlu0 %v1395, 112
      %v5833 = vpop.permute.xlu0 %5832
      %5834 = vrot.lane.b32.xlu0 %v1396, 112
      %v5835 = vpop.permute.xlu0 %5834
      %5836 = vrot.lane.b32.xlu0 %v1397, 112
      %v5837 = vpop.permute.xlu0 %5836
      %5838 = vrot.lane.b32.xlu0 %v1398, 112
      %v5839 = vpop.permute.xlu0 %5838
      %v5849 = vsel %vm1820, %v5358, 0
      %v5852 = vsel %vm1820, %v5373, 0
      %v5855 = vsel %vm1820, %v5388, 0
      %v5858 = vsel %vm1820, %v5403, 0
      %v5861 = vsel %vm1820, %v5418, 0
      %v5864 = vsel %vm1820, %v5433, 0
      %v5867 = vsel %vm1820, %v5448, 0
      %v5870 = vsel %vm1820, %v5463, 0
      %5872 = vmatpush.msra.mxu0 0.0
      %5873 = vmatpush.msra.mxu0 0.0
      %5874 = vmatpush.msra.mxu0 0.0
      %5875 = vmatpush.msra.mxu0 0.0
      %5876 = vmatpush.msra.mxu0 0.0
      %5877 = vmatpush.msra.mxu0 0.0
      %5878 = vmatpush.msra.mxu0 0.0
      %5879 = vmatpush.msra.mxu0 0.0
      %5880 = vmatpush.msra.mxu0 %v5839
      %5881 = vmatpush.msra.mxu0 %v5837
      %5882 = vmatpush.msra.mxu0 %v5835
      %5883 = vmatpush.msra.mxu0 %v5833
      %5884 = vmatpush.msra.mxu0 %v5831
      %5885 = vmatpush.msra.mxu0 %v5829
      %5886 = vmatpush.msra.mxu0 %v5827
      %5887 = vmatpush.msra.mxu0 %v5825
      %5888 = vmatmul.f32.gmra.mxu0 %v5849
      %v5889 = vpop.f32.mrf.mxu0
      %v5890 = vadd.f32 0.0, %v5889
      %5891 = vmatmul.f32.gmra.mxu0 %v5852
      %v5892 = vpop.f32.mrf.mxu0
      %v5893 = vadd.f32 0.0, %v5892
      %5894 = vmatmul.f32.gmra.mxu0 %v5855
      %v5895 = vpop.f32.mrf.mxu0
      %v5896 = vadd.f32 0.0, %v5895
      %5897 = vmatmul.f32.gmra.mxu0 %v5858
      %v5898 = vpop.f32.mrf.mxu0
      %v5899 = vadd.f32 0.0, %v5898
      %5900 = vmatmul.f32.gmra.mxu0 %v5861
      %v5901 = vpop.f32.mrf.mxu0
      %v5902 = vadd.f32 0.0, %v5901
      %5903 = vmatmul.f32.gmra.mxu0 %v5864
      %v5904 = vpop.f32.mrf.mxu0
      %v5905 = vadd.f32 0.0, %v5904
      %5906 = vmatmul.f32.gmra.mxu0 %v5867
      %v5907 = vpop.f32.mrf.mxu0
      %v5908 = vadd.f32 0.0, %v5907
      %5909 = vmatmul.f32.gmra.mxu0 %v5870
      %v5910 = vpop.f32.mrf.mxu0
      %v5911 = vadd.f32 0.0, %v5910
      %5912 = vdwg.mxu0
      %5913 = vrot.lane.b32.xlu0 %v1399, 112
      %v5914 = vpop.permute.xlu0 %5913
      %5915 = vrot.lane.b32.xlu0 %v1400, 112
      %v5916 = vpop.permute.xlu0 %5915
      %5917 = vrot.lane.b32.xlu0 %v1401, 112
      %v5918 = vpop.permute.xlu0 %5917
      %5919 = vrot.lane.b32.xlu0 %v1402, 112
      %v5920 = vpop.permute.xlu0 %5919
      %5921 = vrot.lane.b32.xlu0 %v1403, 112
      %v5922 = vpop.permute.xlu0 %5921
      %5923 = vrot.lane.b32.xlu0 %v1404, 112
      %v5924 = vpop.permute.xlu0 %5923
      %5925 = vrot.lane.b32.xlu0 %v1405, 112
      %v5926 = vpop.permute.xlu0 %5925
      %5927 = vrot.lane.b32.xlu0 %v1406, 112
      %v5928 = vpop.permute.xlu0 %5927
      %v5938 = vsel %vm1820, %v5478, 0
      %v5941 = vsel %vm1820, %v5493, 0
      %v5944 = vsel %vm1820, %v5508, 0
      %v5947 = vsel %vm1820, %v5523, 0
      %v5950 = vsel %vm1820, %v5538, 0
      %v5953 = vsel %vm1820, %v5553, 0
      %v5956 = vsel %vm1820, %v5568, 0
      %v5959 = vsel %vm1820, %v5583, 0
      %5961 = vmatpush.msra.mxu0 0.0
      %5962 = vmatpush.msra.mxu0 0.0
      %5963 = vmatpush.msra.mxu0 0.0
      %5964 = vmatpush.msra.mxu0 0.0
      %5965 = vmatpush.msra.mxu0 0.0
      %5966 = vmatpush.msra.mxu0 0.0
      %5967 = vmatpush.msra.mxu0 0.0
      %5968 = vmatpush.msra.mxu0 0.0
      %5969 = vmatpush.msra.mxu0 %v5928
      %5970 = vmatpush.msra.mxu0 %v5926
      %5971 = vmatpush.msra.mxu0 %v5924
      %5972 = vmatpush.msra.mxu0 %v5922
      %5973 = vmatpush.msra.mxu0 %v5920
      %5974 = vmatpush.msra.mxu0 %v5918
      %5975 = vmatpush.msra.mxu0 %v5916
      %5976 = vmatpush.msra.mxu0 %v5914
      %5977 = vmatmul.f32.gmra.mxu0 %v5938
      %v5978 = vpop.f32.mrf.mxu0
      %v5979 = vadd.f32 0.0, %v5978
      %5980 = vmatmul.f32.gmra.mxu0 %v5941
      %v5981 = vpop.f32.mrf.mxu0
      %v5982 = vadd.f32 0.0, %v5981
      %5983 = vmatmul.f32.gmra.mxu0 %v5944
      %v5984 = vpop.f32.mrf.mxu0
      %v5985 = vadd.f32 0.0, %v5984
      %5986 = vmatmul.f32.gmra.mxu0 %v5947
      %v5987 = vpop.f32.mrf.mxu0
      %v5988 = vadd.f32 0.0, %v5987
      %5989 = vmatmul.f32.gmra.mxu0 %v5950
      %v5990 = vpop.f32.mrf.mxu0
      %v5991 = vadd.f32 0.0, %v5990
      %5992 = vmatmul.f32.gmra.mxu0 %v5953
      %v5993 = vpop.f32.mrf.mxu0
      %v5994 = vadd.f32 0.0, %v5993
      %5995 = vmatmul.f32.gmra.mxu0 %v5956
      %v5996 = vpop.f32.mrf.mxu0
      %v5997 = vadd.f32 0.0, %v5996
      %5998 = vmatmul.f32.gmra.mxu0 %v5959
      %v5999 = vpop.f32.mrf.mxu0
      %v6000 = vadd.f32 0.0, %v5999
      %6001 = vdwg.mxu0
      %6002 = vrot.lane.b32.xlu0 %v1407, 112
      %v6003 = vpop.permute.xlu0 %6002
      %6004 = vrot.lane.b32.xlu0 %v1408, 112
      %v6005 = vpop.permute.xlu0 %6004
      %6006 = vrot.lane.b32.xlu0 %v1409, 112
      %v6007 = vpop.permute.xlu0 %6006
      %6008 = vrot.lane.b32.xlu0 %v1410, 112
      %v6009 = vpop.permute.xlu0 %6008
      %6010 = vrot.lane.b32.xlu0 %v1411, 112
      %v6011 = vpop.permute.xlu0 %6010
      %6012 = vrot.lane.b32.xlu0 %v1412, 112
      %v6013 = vpop.permute.xlu0 %6012
      %6014 = vrot.lane.b32.xlu0 %v1413, 112
      %v6015 = vpop.permute.xlu0 %6014
      %6016 = vrot.lane.b32.xlu0 %v1414, 112
      %v6017 = vpop.permute.xlu0 %6016
      %v6027 = vsel %vm1820, %v5598, 0
      %v6030 = vsel %vm1820, %v5613, 0
      %v6033 = vsel %vm1820, %v5628, 0
      %v6036 = vsel %vm1820, %v5643, 0
      %v6039 = vsel %vm1820, %v5658, 0
      %v6042 = vsel %vm1820, %v5673, 0
      %v6045 = vsel %vm1820, %v5688, 0
      %v6048 = vsel %vm1820, %v5703, 0
      %6050 = vmatpush.msra.mxu0 0.0
      %6051 = vmatpush.msra.mxu0 0.0
      %6052 = vmatpush.msra.mxu0 0.0
      %6053 = vmatpush.msra.mxu0 0.0
      %6054 = vmatpush.msra.mxu0 0.0
      %6055 = vmatpush.msra.mxu0 0.0
      %6056 = vmatpush.msra.mxu0 0.0
      %6057 = vmatpush.msra.mxu0 0.0
      %6058 = vmatpush.msra.mxu0 %v6017
      %6059 = vmatpush.msra.mxu0 %v6015
      %6060 = vmatpush.msra.mxu0 %v6013
      %6061 = vmatpush.msra.mxu0 %v6011
      %6062 = vmatpush.msra.mxu0 %v6009
      %6063 = vmatpush.msra.mxu0 %v6007
      %6064 = vmatpush.msra.mxu0 %v6005
      %6065 = vmatpush.msra.mxu0 %v6003
      %6066 = vmatmul.f32.gmra.mxu0 %v6027
      %v6067 = vpop.f32.mrf.mxu0
      %v6068 = vadd.f32 0.0, %v6067
      %6069 = vmatmul.f32.gmra.mxu0 %v6030
      %v6070 = vpop.f32.mrf.mxu0
      %v6071 = vadd.f32 0.0, %v6070
      %6072 = vmatmul.f32.gmra.mxu0 %v6033
      %v6073 = vpop.f32.mrf.mxu0
      %v6074 = vadd.f32 0.0, %v6073
      %6075 = vmatmul.f32.gmra.mxu0 %v6036
      %v6076 = vpop.f32.mrf.mxu0
      %v6077 = vadd.f32 0.0, %v6076
      %6078 = vmatmul.f32.gmra.mxu0 %v6039
      %v6079 = vpop.f32.mrf.mxu0
      %v6080 = vadd.f32 0.0, %v6079
      %6081 = vmatmul.f32.gmra.mxu0 %v6042
      %v6082 = vpop.f32.mrf.mxu0
      %v6083 = vadd.f32 0.0, %v6082
      %6084 = vmatmul.f32.gmra.mxu0 %v6045
      %v6085 = vpop.f32.mrf.mxu0
      %v6086 = vadd.f32 0.0, %v6085
      %6087 = vmatmul.f32.gmra.mxu0 %v6048
      %v6088 = vpop.f32.mrf.mxu0
      %v6089 = vadd.f32 0.0, %v6088
      %6090 = vdwg.mxu0
      %6091 = vrot.lane.b32.xlu0 %v1415, 112
      %v6092 = vpop.permute.xlu0 %6091
      %6093 = vrot.lane.b32.xlu0 %v1416, 112
      %v6094 = vpop.permute.xlu0 %6093
      %6095 = vrot.lane.b32.xlu0 %v1417, 112
      %v6096 = vpop.permute.xlu0 %6095
      %6097 = vrot.lane.b32.xlu0 %v1418, 112
      %v6098 = vpop.permute.xlu0 %6097
      %6099 = vrot.lane.b32.xlu0 %v1419, 112
      %v6100 = vpop.permute.xlu0 %6099
      %6101 = vrot.lane.b32.xlu0 %v1420, 112
      %v6102 = vpop.permute.xlu0 %6101
      %6103 = vrot.lane.b32.xlu0 %v1421, 112
      %v6104 = vpop.permute.xlu0 %6103
      %6105 = vrot.lane.b32.xlu0 %v1422, 112
      %v6106 = vpop.permute.xlu0 %6105
      %v6116 = vsel %vm1820, %v5718, 0
      %v6119 = vsel %vm1820, %v5733, 0
      %v6122 = vsel %vm1820, %v5748, 0
      %v6125 = vsel %vm1820, %v5763, 0
      %v6128 = vsel %vm1820, %v5778, 0
      %v6131 = vsel %vm1820, %v5793, 0
      %v6134 = vsel %vm1820, %v5808, 0
      %v6137 = vsel %vm1820, %v5823, 0
      %6139 = vmatpush.msra.mxu0 0.0
      %6140 = vmatpush.msra.mxu0 0.0
      %6141 = vmatpush.msra.mxu0 0.0
      %6142 = vmatpush.msra.mxu0 0.0
      %6143 = vmatpush.msra.mxu0 0.0
      %6144 = vmatpush.msra.mxu0 0.0
      %6145 = vmatpush.msra.mxu0 0.0
      %6146 = vmatpush.msra.mxu0 0.0
      %6147 = vmatpush.msra.mxu0 %v6106
      %6148 = vmatpush.msra.mxu0 %v6104
      %6149 = vmatpush.msra.mxu0 %v6102
      %6150 = vmatpush.msra.mxu0 %v6100
      %6151 = vmatpush.msra.mxu0 %v6098
      %6152 = vmatpush.msra.mxu0 %v6096
      %6153 = vmatpush.msra.mxu0 %v6094
      %6154 = vmatpush.msra.mxu0 %v6092
      %6155 = vmatmul.f32.gmra.mxu0 %v6116
      %v6156 = vpop.f32.mrf.mxu0
      %v6157 = vadd.f32 0.0, %v6156
      %6158 = vmatmul.f32.gmra.mxu0 %v6119
      %v6159 = vpop.f32.mrf.mxu0
      %v6160 = vadd.f32 0.0, %v6159
      %6161 = vmatmul.f32.gmra.mxu0 %v6122
      %v6162 = vpop.f32.mrf.mxu0
      %v6163 = vadd.f32 0.0, %v6162
      %6164 = vmatmul.f32.gmra.mxu0 %v6125
      %v6165 = vpop.f32.mrf.mxu0
      %v6166 = vadd.f32 0.0, %v6165
      %6167 = vmatmul.f32.gmra.mxu0 %v6128
      %v6168 = vpop.f32.mrf.mxu0
      %v6169 = vadd.f32 0.0, %v6168
      %6170 = vmatmul.f32.gmra.mxu0 %v6131
      %v6171 = vpop.f32.mrf.mxu0
      %v6172 = vadd.f32 0.0, %v6171
      %6173 = vmatmul.f32.gmra.mxu0 %v6134
      %v6174 = vpop.f32.mrf.mxu0
      %v6175 = vadd.f32 0.0, %v6174
      %6176 = vmatmul.f32.gmra.mxu0 %v6137
      %v6177 = vpop.f32.mrf.mxu0
      %v6178 = vadd.f32 0.0, %v6177
      %6179 = vdwg.mxu0
      %6212 = vrot.lane.b32.xlu0 %v5890, 16
      %v6213 = vpop.permute.xlu0 %6212
      %6214 = vrot.lane.b32.xlu0 %v5893, 16
      %v6215 = vpop.permute.xlu0 %6214
      %6216 = vrot.lane.b32.xlu0 %v5896, 16
      %v6217 = vpop.permute.xlu0 %6216
      %6218 = vrot.lane.b32.xlu0 %v5899, 16
      %v6219 = vpop.permute.xlu0 %6218
      %6220 = vrot.lane.b32.xlu0 %v5902, 16
      %v6221 = vpop.permute.xlu0 %6220
      %6222 = vrot.lane.b32.xlu0 %v5905, 16
      %v6223 = vpop.permute.xlu0 %6222
      %6224 = vrot.lane.b32.xlu0 %v5908, 16
      %v6225 = vpop.permute.xlu0 %6224
      %6226 = vrot.lane.b32.xlu0 %v5911, 16
      %v6227 = vpop.permute.xlu0 %6226
      %6228 = vrot.lane.b32.xlu0 %v5979, 16
      %v6229 = vpop.permute.xlu0 %6228
      %6230 = vrot.lane.b32.xlu0 %v5982, 16
      %v6231 = vpop.permute.xlu0 %6230
      %6232 = vrot.lane.b32.xlu0 %v5985, 16
      %v6233 = vpop.permute.xlu0 %6232
      %6234 = vrot.lane.b32.xlu0 %v5988, 16
      %v6235 = vpop.permute.xlu0 %6234
      %6236 = vrot.lane.b32.xlu0 %v5991, 16
      %v6237 = vpop.permute.xlu0 %6236
      %6238 = vrot.lane.b32.xlu0 %v5994, 16
      %v6239 = vpop.permute.xlu0 %6238
      %6240 = vrot.lane.b32.xlu0 %v5997, 16
      %v6241 = vpop.permute.xlu0 %6240
      %6242 = vrot.lane.b32.xlu0 %v6000, 16
      %v6243 = vpop.permute.xlu0 %6242
      %6244 = vrot.lane.b32.xlu0 %v6068, 16
      %v6245 = vpop.permute.xlu0 %6244
      %6246 = vrot.lane.b32.xlu0 %v6071, 16
      %v6247 = vpop.permute.xlu0 %6246
      %6248 = vrot.lane.b32.xlu0 %v6074, 16
      %v6249 = vpop.permute.xlu0 %6248
      %6250 = vrot.lane.b32.xlu0 %v6077, 16
      %v6251 = vpop.permute.xlu0 %6250
      %6252 = vrot.lane.b32.xlu0 %v6080, 16
      %v6253 = vpop.permute.xlu0 %6252
      %6254 = vrot.lane.b32.xlu0 %v6083, 16
      %v6255 = vpop.permute.xlu0 %6254
      %6256 = vrot.lane.b32.xlu0 %v6086, 16
      %v6257 = vpop.permute.xlu0 %6256
      %6258 = vrot.lane.b32.xlu0 %v6089, 16
      %v6259 = vpop.permute.xlu0 %6258
      %6260 = vrot.lane.b32.xlu0 %v6157, 16
      %v6261 = vpop.permute.xlu0 %6260
      %6262 = vrot.lane.b32.xlu0 %v6160, 16
      %v6263 = vpop.permute.xlu0 %6262
      %6264 = vrot.lane.b32.xlu0 %v6163, 16
      %v6265 = vpop.permute.xlu0 %6264
      %6266 = vrot.lane.b32.xlu0 %v6166, 16
      %v6267 = vpop.permute.xlu0 %6266
      %6268 = vrot.lane.b32.xlu0 %v6169, 16
      %v6269 = vpop.permute.xlu0 %6268
      %6270 = vrot.lane.b32.xlu0 %v6172, 16
      %v6271 = vpop.permute.xlu0 %6270
      %6272 = vrot.lane.b32.xlu0 %v6175, 16
      %v6273 = vpop.permute.xlu0 %6272
      %6274 = vrot.lane.b32.xlu0 %v6178, 16
      %v6275 = vpop.permute.xlu0 %6274
      %vm6308 = vcmask 195712
      %6309 = vst.msk [vmem:[#allocation2] sm:$0xff] %vm6308, %v6213
      %6310 = vst.msk [vmem:[#allocation2 + $0x8] sm:$0xff] %vm6308, %v6215
      %6311 = vst.msk [vmem:[#allocation2 + $0x10] sm:$0xff] %vm6308, %v6217
      %6312 = vst.msk [vmem:[#allocation2 + $0x18] sm:$0xff] %vm6308, %v6219
      %6313 = vst.msk [vmem:[#allocation2 + $0x20] sm:$0xff] %vm6308, %v6221
      %6314 = vst.msk [vmem:[#allocation2 + $0x28] sm:$0xff] %vm6308, %v6223
      %6315 = vst.msk [vmem:[#allocation2 + $0x30] sm:$0xff] %vm6308, %v6225
      %6316 = vst.msk [vmem:[#allocation2 + $0x38] sm:$0xff] %vm6308, %v6227
      %6317 = vst.msk [vmem:[#allocation2 + $0x40] sm:$0xff] %vm6308, %v6229
      %6318 = vst.msk [vmem:[#allocation2 + $0x48] sm:$0xff] %vm6308, %v6231
      %6319 = vst.msk [vmem:[#allocation2 + $0x50] sm:$0xff] %vm6308, %v6233
      %6320 = vst.msk [vmem:[#allocation2 + $0x58] sm:$0xff] %vm6308, %v6235
      %6321 = vst.msk [vmem:[#allocation2 + $0x60] sm:$0xff] %vm6308, %v6237
      %6322 = vst.msk [vmem:[#allocation2 + $0x68] sm:$0xff] %vm6308, %v6239
      %6323 = vst.msk [vmem:[#allocation2 + $0x70] sm:$0xff] %vm6308, %v6241
      %6324 = vst.msk [vmem:[#allocation2 + $0x78] sm:$0xff] %vm6308, %v6243
      %6325 = vst.msk [vmem:[#allocation2 + $0x80] sm:$0xff] %vm6308, %v6245
      %6326 = vst.msk [vmem:[#allocation2 + $0x88] sm:$0xff] %vm6308, %v6247
      %6327 = vst.msk [vmem:[#allocation2 + $0x90] sm:$0xff] %vm6308, %v6249
      %6328 = vst.msk [vmem:[#allocation2 + $0x98] sm:$0xff] %vm6308, %v6251
      %6329 = vst.msk [vmem:[#allocation2 + $0xa0] sm:$0xff] %vm6308, %v6253
      %6330 = vst.msk [vmem:[#allocation2 + $0xa8] sm:$0xff] %vm6308, %v6255
      %6331 = vst.msk [vmem:[#allocation2 + $0xb0] sm:$0xff] %vm6308, %v6257
      %6332 = vst.msk [vmem:[#allocation2 + $0xb8] sm:$0xff] %vm6308, %v6259
      %6333 = vst.msk [vmem:[#allocation2 + $0xc0] sm:$0xff] %vm6308, %v6261
      %6334 = vst.msk [vmem:[#allocation2 + $0xc8] sm:$0xff] %vm6308, %v6263
      %6335 = vst.msk [vmem:[#allocation2 + $0xd0] sm:$0xff] %vm6308, %v6265
      %6336 = vst.msk [vmem:[#allocation2 + $0xd8] sm:$0xff] %vm6308, %v6267
      %6337 = vst.msk [vmem:[#allocation2 + $0xe0] sm:$0xff] %vm6308, %v6269
      %6338 = vst.msk [vmem:[#allocation2 + $0xe8] sm:$0xff] %vm6308, %v6271
      %6339 = vst.msk [vmem:[#allocation2 + $0xf0] sm:$0xff] %vm6308, %v6273
      %6340 = vst.msk [vmem:[#allocation2 + $0xf8] sm:$0xff] %vm6308, %v6275
      %s6341 = scalar_lea.vmem %s2, 192
      %v6342 = vld [vmem:[%s6341] sm:$0xff]
      %v6343 = vld [vmem:[%s6341 + $0x8] sm:$0xff]
      %v6344 = vld [vmem:[%s6341 + $0x10] sm:$0xff]
      %v6345 = vld [vmem:[%s6341 + $0x18] sm:$0xff]
      %v6346 = vld [vmem:[%s6341 + $0x20] sm:$0xff]
      %v6347 = vld [vmem:[%s6341 + $0x28] sm:$0xff]
      %v6348 = vld [vmem:[%s6341 + $0x30] sm:$0xff]
      %v6349 = vld [vmem:[%s6341 + $0x38] sm:$0xff]
      %6350 = vrot.lane.b32.xlu0 %v1296, 104
      %v6351 = vpop.permute.xlu0 %6350
      %6352 = vrot.lane.b32.xlu0 %v1299, 104
      %v6353 = vpop.permute.xlu0 %6352
      %6354 = vrot.lane.b32.xlu0 %v1302, 104
      %v6355 = vpop.permute.xlu0 %6354
      %6356 = vrot.lane.b32.xlu0 %v1305, 104
      %v6357 = vpop.permute.xlu0 %6356
      %6358 = vrot.lane.b32.xlu0 %v1308, 104
      %v6359 = vpop.permute.xlu0 %6358
      %6360 = vrot.lane.b32.xlu0 %v1311, 104
      %v6361 = vpop.permute.xlu0 %6360
      %6362 = vrot.lane.b32.xlu0 %v1314, 104
      %v6363 = vpop.permute.xlu0 %6362
      %6364 = vrot.lane.b32.xlu0 %v1317, 104
      %v6365 = vpop.permute.xlu0 %6364
      %6366 = vrot.lane.b32.xlu0 %v1296, 72
      %v6367 = vpop.permute.xlu0 %6366
      %6368 = vrot.lane.b32.xlu0 %v1299, 72
      %v6369 = vpop.permute.xlu0 %6368
      %6370 = vrot.lane.b32.xlu0 %v1302, 72
      %v6371 = vpop.permute.xlu0 %6370
      %6372 = vrot.lane.b32.xlu0 %v1305, 72
      %v6373 = vpop.permute.xlu0 %6372
      %6374 = vrot.lane.b32.xlu0 %v1308, 72
      %v6375 = vpop.permute.xlu0 %6374
      %6376 = vrot.lane.b32.xlu0 %v1311, 72
      %v6377 = vpop.permute.xlu0 %6376
      %6378 = vrot.lane.b32.xlu0 %v1314, 72
      %v6379 = vpop.permute.xlu0 %6378
      %6380 = vrot.lane.b32.xlu0 %v1317, 72
      %v6381 = vpop.permute.xlu0 %6380
      %v6382 = vsel %vm1455, %v6351, 0
      %v6384 = vsel %vm1455, %v6353, 0
      %v6386 = vsel %vm1455, %v6355, 0
      %v6388 = vsel %vm1455, %v6357, 0
      %v6390 = vsel %vm1455, %v6359, 0
      %v6392 = vsel %vm1455, %v6361, 0
      %v6394 = vsel %vm1455, %v6363, 0
      %v6396 = vsel %vm1455, %v6365, 0
      %v6398 = vsel %vm1455, %v6367, 0
      %v6400 = vsel %vm1455, %v6369, 0
      %v6402 = vsel %vm1455, %v6371, 0
      %v6404 = vsel %vm1455, %v6373, 0
      %v6406 = vsel %vm1455, %v6375, 0
      %v6408 = vsel %vm1455, %v6377, 0
      %v6410 = vsel %vm1455, %v6379, 0
      %v6412 = vsel %vm1455, %v6381, 0
      %6414 = vmatpush.xpose.msra.mxu0 0.0
      %6415 = vmatpush.xpose.msra.mxu0 0.0
      %6416 = vmatpush.xpose.msra.mxu0 0.0
      %6417 = vmatpush.xpose.msra.mxu0 0.0
      %6418 = vmatpush.xpose.msra.mxu0 0.0
      %6419 = vmatpush.xpose.msra.mxu0 0.0
      %6420 = vmatpush.xpose.msra.mxu0 0.0
      %6421 = vmatpush.xpose.msra.mxu0 0.0
      %6422 = vmatpush.xpose.msra.mxu0 %v6412
      %6423 = vmatpush.xpose.msra.mxu0 %v6410
      %6424 = vmatpush.xpose.msra.mxu0 %v6408
      %6425 = vmatpush.xpose.msra.mxu0 %v6406
      %6426 = vmatpush.xpose.msra.mxu0 %v6404
      %6427 = vmatpush.xpose.msra.mxu0 %v6402
      %6428 = vmatpush.xpose.msra.mxu0 %v6400
      %6429 = vmatpush.xpose.msra.mxu0 %v6398
      %6430 = vmatmul.f32.gmra.mxu0 %v6382
      %v6431 = vpop.f32.mrf.mxu0
      %v6432 = vadd.f32 %v6342, %v6431
      %6433 = vmatmul.f32.gmra.mxu0 %v6384
      %v6434 = vpop.f32.mrf.mxu0
      %v6435 = vadd.f32 %v6343, %v6434
      %6436 = vmatmul.f32.gmra.mxu0 %v6386
      %v6437 = vpop.f32.mrf.mxu0
      %v6438 = vadd.f32 %v6344, %v6437
      %6439 = vmatmul.f32.gmra.mxu0 %v6388
      %v6440 = vpop.f32.mrf.mxu0
      %v6441 = vadd.f32 %v6345, %v6440
      %6442 = vmatmul.f32.gmra.mxu0 %v6390
      %v6443 = vpop.f32.mrf.mxu0
      %v6444 = vadd.f32 %v6346, %v6443
      %6445 = vmatmul.f32.gmra.mxu0 %v6392
      %v6446 = vpop.f32.mrf.mxu0
      %v6447 = vadd.f32 %v6347, %v6446
      %6448 = vmatmul.f32.gmra.mxu0 %v6394
      %v6449 = vpop.f32.mrf.mxu0
      %v6450 = vadd.f32 %v6348, %v6449
      %6451 = vmatmul.f32.gmra.mxu0 %v6396
      %v6452 = vpop.f32.mrf.mxu0
      %v6453 = vadd.f32 %v6349, %v6452
      %6454 = vdwg.mxu0
      %6455 = vrot.lane.b32.xlu0 %v1320, 104
      %v6456 = vpop.permute.xlu0 %6455
      %6457 = vrot.lane.b32.xlu0 %v1323, 104
      %v6458 = vpop.permute.xlu0 %6457
      %6459 = vrot.lane.b32.xlu0 %v1326, 104
      %v6460 = vpop.permute.xlu0 %6459
      %6461 = vrot.lane.b32.xlu0 %v1329, 104
      %v6462 = vpop.permute.xlu0 %6461
      %6463 = vrot.lane.b32.xlu0 %v1332, 104
      %v6464 = vpop.permute.xlu0 %6463
      %6465 = vrot.lane.b32.xlu0 %v1335, 104
      %v6466 = vpop.permute.xlu0 %6465
      %6467 = vrot.lane.b32.xlu0 %v1338, 104
      %v6468 = vpop.permute.xlu0 %6467
      %6469 = vrot.lane.b32.xlu0 %v1341, 104
      %v6470 = vpop.permute.xlu0 %6469
      %6471 = vrot.lane.b32.xlu0 %v1320, 72
      %v6472 = vpop.permute.xlu0 %6471
      %6473 = vrot.lane.b32.xlu0 %v1323, 72
      %v6474 = vpop.permute.xlu0 %6473
      %6475 = vrot.lane.b32.xlu0 %v1326, 72
      %v6476 = vpop.permute.xlu0 %6475
      %6477 = vrot.lane.b32.xlu0 %v1329, 72
      %v6478 = vpop.permute.xlu0 %6477
      %6479 = vrot.lane.b32.xlu0 %v1332, 72
      %v6480 = vpop.permute.xlu0 %6479
      %6481 = vrot.lane.b32.xlu0 %v1335, 72
      %v6482 = vpop.permute.xlu0 %6481
      %6483 = vrot.lane.b32.xlu0 %v1338, 72
      %v6484 = vpop.permute.xlu0 %6483
      %6485 = vrot.lane.b32.xlu0 %v1341, 72
      %v6486 = vpop.permute.xlu0 %6485
      %v6487 = vsel %vm1455, %v6456, 0
      %v6489 = vsel %vm1455, %v6458, 0
      %v6491 = vsel %vm1455, %v6460, 0
      %v6493 = vsel %vm1455, %v6462, 0
      %v6495 = vsel %vm1455, %v6464, 0
      %v6497 = vsel %vm1455, %v6466, 0
      %v6499 = vsel %vm1455, %v6468, 0
      %v6501 = vsel %vm1455, %v6470, 0
      %v6503 = vsel %vm1455, %v6472, 0
      %v6505 = vsel %vm1455, %v6474, 0
      %v6507 = vsel %vm1455, %v6476, 0
      %v6509 = vsel %vm1455, %v6478, 0
      %v6511 = vsel %vm1455, %v6480, 0
      %v6513 = vsel %vm1455, %v6482, 0
      %v6515 = vsel %vm1455, %v6484, 0
      %v6517 = vsel %vm1455, %v6486, 0
      %6519 = vmatpush.xpose.msra.mxu0 0.0
      %6520 = vmatpush.xpose.msra.mxu0 0.0
      %6521 = vmatpush.xpose.msra.mxu0 0.0
      %6522 = vmatpush.xpose.msra.mxu0 0.0
      %6523 = vmatpush.xpose.msra.mxu0 0.0
      %6524 = vmatpush.xpose.msra.mxu0 0.0
      %6525 = vmatpush.xpose.msra.mxu0 0.0
      %6526 = vmatpush.xpose.msra.mxu0 0.0
      %6527 = vmatpush.xpose.msra.mxu0 %v6517
      %6528 = vmatpush.xpose.msra.mxu0 %v6515
      %6529 = vmatpush.xpose.msra.mxu0 %v6513
      %6530 = vmatpush.xpose.msra.mxu0 %v6511
      %6531 = vmatpush.xpose.msra.mxu0 %v6509
      %6532 = vmatpush.xpose.msra.mxu0 %v6507
      %6533 = vmatpush.xpose.msra.mxu0 %v6505
      %6534 = vmatpush.xpose.msra.mxu0 %v6503
      %6535 = vmatmul.f32.gmra.mxu0 %v6487
      %v6536 = vpop.f32.mrf.mxu0
      %v6537 = vadd.f32 %v6342, %v6536
      %6538 = vmatmul.f32.gmra.mxu0 %v6489
      %v6539 = vpop.f32.mrf.mxu0
      %v6540 = vadd.f32 %v6343, %v6539
      %6541 = vmatmul.f32.gmra.mxu0 %v6491
      %v6542 = vpop.f32.mrf.mxu0
      %v6543 = vadd.f32 %v6344, %v6542
      %6544 = vmatmul.f32.gmra.mxu0 %v6493
      %v6545 = vpop.f32.mrf.mxu0
      %v6546 = vadd.f32 %v6345, %v6545
      %6547 = vmatmul.f32.gmra.mxu0 %v6495
      %v6548 = vpop.f32.mrf.mxu0
      %v6549 = vadd.f32 %v6346, %v6548
      %6550 = vmatmul.f32.gmra.mxu0 %v6497
      %v6551 = vpop.f32.mrf.mxu0
      %v6552 = vadd.f32 %v6347, %v6551
      %6553 = vmatmul.f32.gmra.mxu0 %v6499
      %v6554 = vpop.f32.mrf.mxu0
      %v6555 = vadd.f32 %v6348, %v6554
      %6556 = vmatmul.f32.gmra.mxu0 %v6501
      %v6557 = vpop.f32.mrf.mxu0
      %v6558 = vadd.f32 %v6349, %v6557
      %6559 = vdwg.mxu0
      %6560 = vrot.lane.b32.xlu0 %v1344, 104
      %v6561 = vpop.permute.xlu0 %6560
      %6562 = vrot.lane.b32.xlu0 %v1347, 104
      %v6563 = vpop.permute.xlu0 %6562
      %6564 = vrot.lane.b32.xlu0 %v1350, 104
      %v6565 = vpop.permute.xlu0 %6564
      %6566 = vrot.lane.b32.xlu0 %v1353, 104
      %v6567 = vpop.permute.xlu0 %6566
      %6568 = vrot.lane.b32.xlu0 %v1356, 104
      %v6569 = vpop.permute.xlu0 %6568
      %6570 = vrot.lane.b32.xlu0 %v1359, 104
      %v6571 = vpop.permute.xlu0 %6570
      %6572 = vrot.lane.b32.xlu0 %v1362, 104
      %v6573 = vpop.permute.xlu0 %6572
      %6574 = vrot.lane.b32.xlu0 %v1365, 104
      %v6575 = vpop.permute.xlu0 %6574
      %6576 = vrot.lane.b32.xlu0 %v1344, 72
      %v6577 = vpop.permute.xlu0 %6576
      %6578 = vrot.lane.b32.xlu0 %v1347, 72
      %v6579 = vpop.permute.xlu0 %6578
      %6580 = vrot.lane.b32.xlu0 %v1350, 72
      %v6581 = vpop.permute.xlu0 %6580
      %6582 = vrot.lane.b32.xlu0 %v1353, 72
      %v6583 = vpop.permute.xlu0 %6582
      %6584 = vrot.lane.b32.xlu0 %v1356, 72
      %v6585 = vpop.permute.xlu0 %6584
      %6586 = vrot.lane.b32.xlu0 %v1359, 72
      %v6587 = vpop.permute.xlu0 %6586
      %6588 = vrot.lane.b32.xlu0 %v1362, 72
      %v6589 = vpop.permute.xlu0 %6588
      %6590 = vrot.lane.b32.xlu0 %v1365, 72
      %v6591 = vpop.permute.xlu0 %6590
      %v6592 = vsel %vm1455, %v6561, 0
      %v6594 = vsel %vm1455, %v6563, 0
      %v6596 = vsel %vm1455, %v6565, 0
      %v6598 = vsel %vm1455, %v6567, 0
      %v6600 = vsel %vm1455, %v6569, 0
      %v6602 = vsel %vm1455, %v6571, 0
      %v6604 = vsel %vm1455, %v6573, 0
      %v6606 = vsel %vm1455, %v6575, 0
      %v6608 = vsel %vm1455, %v6577, 0
      %v6610 = vsel %vm1455, %v6579, 0
      %v6612 = vsel %vm1455, %v6581, 0
      %v6614 = vsel %vm1455, %v6583, 0
      %v6616 = vsel %vm1455, %v6585, 0
      %v6618 = vsel %vm1455, %v6587, 0
      %v6620 = vsel %vm1455, %v6589, 0
      %v6622 = vsel %vm1455, %v6591, 0
      %6624 = vmatpush.xpose.msra.mxu0 0.0
      %6625 = vmatpush.xpose.msra.mxu0 0.0
      %6626 = vmatpush.xpose.msra.mxu0 0.0
      %6627 = vmatpush.xpose.msra.mxu0 0.0
      %6628 = vmatpush.xpose.msra.mxu0 0.0
      %6629 = vmatpush.xpose.msra.mxu0 0.0
      %6630 = vmatpush.xpose.msra.mxu0 0.0
      %6631 = vmatpush.xpose.msra.mxu0 0.0
      %6632 = vmatpush.xpose.msra.mxu0 %v6622
      %6633 = vmatpush.xpose.msra.mxu0 %v6620
      %6634 = vmatpush.xpose.msra.mxu0 %v6618
      %6635 = vmatpush.xpose.msra.mxu0 %v6616
      %6636 = vmatpush.xpose.msra.mxu0 %v6614
      %6637 = vmatpush.xpose.msra.mxu0 %v6612
      %6638 = vmatpush.xpose.msra.mxu0 %v6610
      %6639 = vmatpush.xpose.msra.mxu0 %v6608
      %6640 = vmatmul.f32.gmra.mxu0 %v6592
      %v6641 = vpop.f32.mrf.mxu0
      %v6642 = vadd.f32 %v6342, %v6641
      %6643 = vmatmul.f32.gmra.mxu0 %v6594
      %v6644 = vpop.f32.mrf.mxu0
      %v6645 = vadd.f32 %v6343, %v6644
      %6646 = vmatmul.f32.gmra.mxu0 %v6596
      %v6647 = vpop.f32.mrf.mxu0
      %v6648 = vadd.f32 %v6344, %v6647
      %6649 = vmatmul.f32.gmra.mxu0 %v6598
      %v6650 = vpop.f32.mrf.mxu0
      %v6651 = vadd.f32 %v6345, %v6650
      %6652 = vmatmul.f32.gmra.mxu0 %v6600
      %v6653 = vpop.f32.mrf.mxu0
      %v6654 = vadd.f32 %v6346, %v6653
      %6655 = vmatmul.f32.gmra.mxu0 %v6602
      %v6656 = vpop.f32.mrf.mxu0
      %v6657 = vadd.f32 %v6347, %v6656
      %6658 = vmatmul.f32.gmra.mxu0 %v6604
      %v6659 = vpop.f32.mrf.mxu0
      %v6660 = vadd.f32 %v6348, %v6659
      %6661 = vmatmul.f32.gmra.mxu0 %v6606
      %v6662 = vpop.f32.mrf.mxu0
      %v6663 = vadd.f32 %v6349, %v6662
      %6664 = vdwg.mxu0
      %6665 = vrot.lane.b32.xlu0 %v1368, 104
      %v6666 = vpop.permute.xlu0 %6665
      %6667 = vrot.lane.b32.xlu0 %v1371, 104
      %v6668 = vpop.permute.xlu0 %6667
      %6669 = vrot.lane.b32.xlu0 %v1374, 104
      %v6670 = vpop.permute.xlu0 %6669
      %6671 = vrot.lane.b32.xlu0 %v1377, 104
      %v6672 = vpop.permute.xlu0 %6671
      %6673 = vrot.lane.b32.xlu0 %v1380, 104
      %v6674 = vpop.permute.xlu0 %6673
      %6675 = vrot.lane.b32.xlu0 %v1383, 104
      %v6676 = vpop.permute.xlu0 %6675
      %6677 = vrot.lane.b32.xlu0 %v1386, 104
      %v6678 = vpop.permute.xlu0 %6677
      %6679 = vrot.lane.b32.xlu0 %v1389, 104
      %v6680 = vpop.permute.xlu0 %6679
      %6681 = vrot.lane.b32.xlu0 %v1368, 72
      %v6682 = vpop.permute.xlu0 %6681
      %6683 = vrot.lane.b32.xlu0 %v1371, 72
      %v6684 = vpop.permute.xlu0 %6683
      %6685 = vrot.lane.b32.xlu0 %v1374, 72
      %v6686 = vpop.permute.xlu0 %6685
      %6687 = vrot.lane.b32.xlu0 %v1377, 72
      %v6688 = vpop.permute.xlu0 %6687
      %6689 = vrot.lane.b32.xlu0 %v1380, 72
      %v6690 = vpop.permute.xlu0 %6689
      %6691 = vrot.lane.b32.xlu0 %v1383, 72
      %v6692 = vpop.permute.xlu0 %6691
      %6693 = vrot.lane.b32.xlu0 %v1386, 72
      %v6694 = vpop.permute.xlu0 %6693
      %6695 = vrot.lane.b32.xlu0 %v1389, 72
      %v6696 = vpop.permute.xlu0 %6695
      %v6697 = vsel %vm1455, %v6666, 0
      %v6699 = vsel %vm1455, %v6668, 0
      %v6701 = vsel %vm1455, %v6670, 0
      %v6703 = vsel %vm1455, %v6672, 0
      %v6705 = vsel %vm1455, %v6674, 0
      %v6707 = vsel %vm1455, %v6676, 0
      %v6709 = vsel %vm1455, %v6678, 0
      %v6711 = vsel %vm1455, %v6680, 0
      %v6713 = vsel %vm1455, %v6682, 0
      %v6715 = vsel %vm1455, %v6684, 0
      %v6717 = vsel %vm1455, %v6686, 0
      %v6719 = vsel %vm1455, %v6688, 0
      %v6721 = vsel %vm1455, %v6690, 0
      %v6723 = vsel %vm1455, %v6692, 0
      %v6725 = vsel %vm1455, %v6694, 0
      %v6727 = vsel %vm1455, %v6696, 0
      %6729 = vmatpush.xpose.msra.mxu0 0.0
      %6730 = vmatpush.xpose.msra.mxu0 0.0
      %6731 = vmatpush.xpose.msra.mxu0 0.0
      %6732 = vmatpush.xpose.msra.mxu0 0.0
      %6733 = vmatpush.xpose.msra.mxu0 0.0
      %6734 = vmatpush.xpose.msra.mxu0 0.0
      %6735 = vmatpush.xpose.msra.mxu0 0.0
      %6736 = vmatpush.xpose.msra.mxu0 0.0
      %6737 = vmatpush.xpose.msra.mxu0 %v6727
      %6738 = vmatpush.xpose.msra.mxu0 %v6725
      %6739 = vmatpush.xpose.msra.mxu0 %v6723
      %6740 = vmatpush.xpose.msra.mxu0 %v6721
      %6741 = vmatpush.xpose.msra.mxu0 %v6719
      %6742 = vmatpush.xpose.msra.mxu0 %v6717
      %6743 = vmatpush.xpose.msra.mxu0 %v6715
      %6744 = vmatpush.xpose.msra.mxu0 %v6713
      %6745 = vmatmul.f32.gmra.mxu0 %v6697
      %v6746 = vpop.f32.mrf.mxu0
      %v6747 = vadd.f32 %v6342, %v6746
      %6748 = vmatmul.f32.gmra.mxu0 %v6699
      %v6749 = vpop.f32.mrf.mxu0
      %v6750 = vadd.f32 %v6343, %v6749
      %6751 = vmatmul.f32.gmra.mxu0 %v6701
      %v6752 = vpop.f32.mrf.mxu0
      %v6753 = vadd.f32 %v6344, %v6752
      %6754 = vmatmul.f32.gmra.mxu0 %v6703
      %v6755 = vpop.f32.mrf.mxu0
      %v6756 = vadd.f32 %v6345, %v6755
      %6757 = vmatmul.f32.gmra.mxu0 %v6705
      %v6758 = vpop.f32.mrf.mxu0
      %v6759 = vadd.f32 %v6346, %v6758
      %6760 = vmatmul.f32.gmra.mxu0 %v6707
      %v6761 = vpop.f32.mrf.mxu0
      %v6762 = vadd.f32 %v6347, %v6761
      %6763 = vmatmul.f32.gmra.mxu0 %v6709
      %v6764 = vpop.f32.mrf.mxu0
      %v6765 = vadd.f32 %v6348, %v6764
      %6766 = vmatmul.f32.gmra.mxu0 %v6711
      %v6767 = vpop.f32.mrf.mxu0
      %v6768 = vadd.f32 %v6349, %v6767
      %6769 = vdwg.mxu0
      %v6770 = vsel %vm1820, %v6432, -inf
      %6771 = vmax.xlane.f32.xlu0 %v6770
      %v6772 = vpop.xlane.xlu0 %6771
      %v6773 = vsel %vm1820, %v6435, -inf
      %6774 = vmax.xlane.f32.xlu0 %v6773
      %v6775 = vpop.xlane.xlu0 %6774
      %v6776 = vsel %vm1820, %v6438, -inf
      %6777 = vmax.xlane.f32.xlu0 %v6776
      %v6778 = vpop.xlane.xlu0 %6777
      %v6779 = vsel %vm1820, %v6441, -inf
      %6780 = vmax.xlane.f32.xlu0 %v6779
      %v6781 = vpop.xlane.xlu0 %6780
      %v6782 = vsel %vm1820, %v6444, -inf
      %6783 = vmax.xlane.f32.xlu0 %v6782
      %v6784 = vpop.xlane.xlu0 %6783
      %v6785 = vsel %vm1820, %v6447, -inf
      %6786 = vmax.xlane.f32.xlu0 %v6785
      %v6787 = vpop.xlane.xlu0 %6786
      %v6788 = vsel %vm1820, %v6450, -inf
      %6789 = vmax.xlane.f32.xlu0 %v6788
      %v6790 = vpop.xlane.xlu0 %6789
      %v6791 = vsel %vm1820, %v6453, -inf
      %6792 = vmax.xlane.f32.xlu0 %v6791
      %v6793 = vpop.xlane.xlu0 %6792
      %v6794 = vsel %vm1820, %v6537, -inf
      %6795 = vmax.xlane.f32.xlu0 %v6794
      %v6796 = vpop.xlane.xlu0 %6795
      %v6797 = vsel %vm1820, %v6540, -inf
      %6798 = vmax.xlane.f32.xlu0 %v6797
      %v6799 = vpop.xlane.xlu0 %6798
      %v6800 = vsel %vm1820, %v6543, -inf
      %6801 = vmax.xlane.f32.xlu0 %v6800
      %v6802 = vpop.xlane.xlu0 %6801
      %v6803 = vsel %vm1820, %v6546, -inf
      %6804 = vmax.xlane.f32.xlu0 %v6803
      %v6805 = vpop.xlane.xlu0 %6804
      %v6806 = vsel %vm1820, %v6549, -inf
      %6807 = vmax.xlane.f32.xlu0 %v6806
      %v6808 = vpop.xlane.xlu0 %6807
      %v6809 = vsel %vm1820, %v6552, -inf
      %6810 = vmax.xlane.f32.xlu0 %v6809
      %v6811 = vpop.xlane.xlu0 %6810
      %v6812 = vsel %vm1820, %v6555, -inf
      %6813 = vmax.xlane.f32.xlu0 %v6812
      %v6814 = vpop.xlane.xlu0 %6813
      %v6815 = vsel %vm1820, %v6558, -inf
      %6816 = vmax.xlane.f32.xlu0 %v6815
      %v6817 = vpop.xlane.xlu0 %6816
      %v6818 = vsel %vm1820, %v6642, -inf
      %6819 = vmax.xlane.f32.xlu0 %v6818
      %v6820 = vpop.xlane.xlu0 %6819
      %v6821 = vsel %vm1820, %v6645, -inf
      %6822 = vmax.xlane.f32.xlu0 %v6821
      %v6823 = vpop.xlane.xlu0 %6822
      %v6824 = vsel %vm1820, %v6648, -inf
      %6825 = vmax.xlane.f32.xlu0 %v6824
      %v6826 = vpop.xlane.xlu0 %6825
      %v6827 = vsel %vm1820, %v6651, -inf
      %6828 = vmax.xlane.f32.xlu0 %v6827
      %v6829 = vpop.xlane.xlu0 %6828
      %v6830 = vsel %vm1820, %v6654, -inf
      %6831 = vmax.xlane.f32.xlu0 %v6830
      %v6832 = vpop.xlane.xlu0 %6831
      %v6833 = vsel %vm1820, %v6657, -inf
      %6834 = vmax.xlane.f32.xlu0 %v6833
      %v6835 = vpop.xlane.xlu0 %6834
      %v6836 = vsel %vm1820, %v6660, -inf
      %6837 = vmax.xlane.f32.xlu0 %v6836
      %v6838 = vpop.xlane.xlu0 %6837
      %v6839 = vsel %vm1820, %v6663, -inf
      %6840 = vmax.xlane.f32.xlu0 %v6839
      %v6841 = vpop.xlane.xlu0 %6840
      %v6842 = vsel %vm1820, %v6747, -inf
      %6843 = vmax.xlane.f32.xlu0 %v6842
      %v6844 = vpop.xlane.xlu0 %6843
      %v6845 = vsel %vm1820, %v6750, -inf
      %6846 = vmax.xlane.f32.xlu0 %v6845
      %v6847 = vpop.xlane.xlu0 %6846
      %v6848 = vsel %vm1820, %v6753, -inf
      %6849 = vmax.xlane.f32.xlu0 %v6848
      %v6850 = vpop.xlane.xlu0 %6849
      %v6851 = vsel %vm1820, %v6756, -inf
      %6852 = vmax.xlane.f32.xlu0 %v6851
      %v6853 = vpop.xlane.xlu0 %6852
      %v6854 = vsel %vm1820, %v6759, -inf
      %6855 = vmax.xlane.f32.xlu0 %v6854
      %v6856 = vpop.xlane.xlu0 %6855
      %v6857 = vsel %vm1820, %v6762, -inf
      %6858 = vmax.xlane.f32.xlu0 %v6857
      %v6859 = vpop.xlane.xlu0 %6858
      %v6860 = vsel %vm1820, %v6765, -inf
      %6861 = vmax.xlane.f32.xlu0 %v6860
      %v6862 = vpop.xlane.xlu0 %6861
      %v6863 = vsel %vm1820, %v6768, -inf
      %6864 = vmax.xlane.f32.xlu0 %v6863
      %v6865 = vpop.xlane.xlu0 %6864
      %v6866 = vsub.f32 %v6432, %v6772
      %v6867 = vsub.f32 %v6435, %v6775
      %v6868 = vsub.f32 %v6438, %v6778
      %v6869 = vsub.f32 %v6441, %v6781
      %v6870 = vsub.f32 %v6444, %v6784
      %v6871 = vsub.f32 %v6447, %v6787
      %v6872 = vsub.f32 %v6450, %v6790
      %v6873 = vsub.f32 %v6453, %v6793
      %v6874 = vsub.f32 %v6537, %v6796
      %v6875 = vsub.f32 %v6540, %v6799
      %v6876 = vsub.f32 %v6543, %v6802
      %v6877 = vsub.f32 %v6546, %v6805
      %v6878 = vsub.f32 %v6549, %v6808
      %v6879 = vsub.f32 %v6552, %v6811
      %v6880 = vsub.f32 %v6555, %v6814
      %v6881 = vsub.f32 %v6558, %v6817
      %v6882 = vsub.f32 %v6642, %v6820
      %v6883 = vsub.f32 %v6645, %v6823
      %v6884 = vsub.f32 %v6648, %v6826
      %v6885 = vsub.f32 %v6651, %v6829
      %v6886 = vsub.f32 %v6654, %v6832
      %v6887 = vsub.f32 %v6657, %v6835
      %v6888 = vsub.f32 %v6660, %v6838
      %v6889 = vsub.f32 %v6663, %v6841
      %v6890 = vsub.f32 %v6747, %v6844
      %v6891 = vsub.f32 %v6750, %v6847
      %v6892 = vsub.f32 %v6753, %v6850
      %v6893 = vsub.f32 %v6756, %v6853
      %v6894 = vsub.f32 %v6759, %v6856
      %v6895 = vsub.f32 %v6762, %v6859
      %v6896 = vsub.f32 %v6765, %v6862
      %v6897 = vsub.f32 %v6768, %v6865
      %v6898 = vmul.f32 %v6866, 1.442695
      %v6899 = vpow.pop %v6898
      %v6900 = vmul.f32 %v6867, 1.442695
      %v6901 = vpow.pop %v6900
      %v6902 = vmul.f32 %v6868, 1.442695
      %v6903 = vpow.pop %v6902
      %v6904 = vmul.f32 %v6869, 1.442695
      %v6905 = vpow.pop %v6904
      %v6906 = vmul.f32 %v6870, 1.442695
      %v6907 = vpow.pop %v6906
      %v6908 = vmul.f32 %v6871, 1.442695
      %v6909 = vpow.pop %v6908
      %v6910 = vmul.f32 %v6872, 1.442695
      %v6911 = vpow.pop %v6910
      %v6912 = vmul.f32 %v6873, 1.442695
      %v6913 = vpow.pop %v6912
      %v6914 = vmul.f32 %v6874, 1.442695
      %v6915 = vpow.pop %v6914
      %v6916 = vmul.f32 %v6875, 1.442695
      %v6917 = vpow.pop %v6916
      %v6918 = vmul.f32 %v6876, 1.442695
      %v6919 = vpow.pop %v6918
      %v6920 = vmul.f32 %v6877, 1.442695
      %v6921 = vpow.pop %v6920
      %v6922 = vmul.f32 %v6878, 1.442695
      %v6923 = vpow.pop %v6922
      %v6924 = vmul.f32 %v6879, 1.442695
      %v6925 = vpow.pop %v6924
      %v6926 = vmul.f32 %v6880, 1.442695
      %v6927 = vpow.pop %v6926
      %v6928 = vmul.f32 %v6881, 1.442695
      %v6929 = vpow.pop %v6928
      %v6930 = vmul.f32 %v6882, 1.442695
      %v6931 = vpow.pop %v6930
      %v6932 = vmul.f32 %v6883, 1.442695
      %v6933 = vpow.pop %v6932
      %v6934 = vmul.f32 %v6884, 1.442695
      %v6935 = vpow.pop %v6934
      %v6936 = vmul.f32 %v6885, 1.442695
      %v6937 = vpow.pop %v6936
      %v6938 = vmul.f32 %v6886, 1.442695
      %v6939 = vpow.pop %v6938
      %v6940 = vmul.f32 %v6887, 1.442695
      %v6941 = vpow.pop %v6940
      %v6942 = vmul.f32 %v6888, 1.442695
      %v6943 = vpow.pop %v6942
      %v6944 = vmul.f32 %v6889, 1.442695
      %v6945 = vpow.pop %v6944
      %v6946 = vmul.f32 %v6890, 1.442695
      %v6947 = vpow.pop %v6946
      %v6948 = vmul.f32 %v6891, 1.442695
      %v6949 = vpow.pop %v6948
      %v6950 = vmul.f32 %v6892, 1.442695
      %v6951 = vpow.pop %v6950
      %v6952 = vmul.f32 %v6893, 1.442695
      %v6953 = vpow.pop %v6952
      %v6954 = vmul.f32 %v6894, 1.442695
      %v6955 = vpow.pop %v6954
      %v6956 = vmul.f32 %v6895, 1.442695
      %v6957 = vpow.pop %v6956
      %v6958 = vmul.f32 %v6896, 1.442695
      %v6959 = vpow.pop %v6958
      %v6960 = vmul.f32 %v6897, 1.442695
      %v6961 = vpow.pop %v6960
      %v6962 = vsel %vm1820, %v6899, 0.0
      %6963 = vadd.xlane.f32.xlu0 %v6962
      %v6964 = vpop.xlane.xlu0 %6963
      %v6965 = vsel %vm1820, %v6901, 0.0
      %6966 = vadd.xlane.f32.xlu0 %v6965
      %v6967 = vpop.xlane.xlu0 %6966
      %v6968 = vsel %vm1820, %v6903, 0.0
      %6969 = vadd.xlane.f32.xlu0 %v6968
      %v6970 = vpop.xlane.xlu0 %6969
      %v6971 = vsel %vm1820, %v6905, 0.0
      %6972 = vadd.xlane.f32.xlu0 %v6971
      %v6973 = vpop.xlane.xlu0 %6972
      %v6974 = vsel %vm1820, %v6907, 0.0
      %6975 = vadd.xlane.f32.xlu0 %v6974
      %v6976 = vpop.xlane.xlu0 %6975
      %v6977 = vsel %vm1820, %v6909, 0.0
      %6978 = vadd.xlane.f32.xlu0 %v6977
      %v6979 = vpop.xlane.xlu0 %6978
      %v6980 = vsel %vm1820, %v6911, 0.0
      %6981 = vadd.xlane.f32.xlu0 %v6980
      %v6982 = vpop.xlane.xlu0 %6981
      %v6983 = vsel %vm1820, %v6913, 0.0
      %6984 = vadd.xlane.f32.xlu0 %v6983
      %v6985 = vpop.xlane.xlu0 %6984
      %v6986 = vsel %vm1820, %v6915, 0.0
      %6987 = vadd.xlane.f32.xlu0 %v6986
      %v6988 = vpop.xlane.xlu0 %6987
      %v6989 = vsel %vm1820, %v6917, 0.0
      %6990 = vadd.xlane.f32.xlu0 %v6989
      %v6991 = vpop.xlane.xlu0 %6990
      %v6992 = vsel %vm1820, %v6919, 0.0
      %6993 = vadd.xlane.f32.xlu0 %v6992
      %v6994 = vpop.xlane.xlu0 %6993
      %v6995 = vsel %vm1820, %v6921, 0.0
      %6996 = vadd.xlane.f32.xlu0 %v6995
      %v6997 = vpop.xlane.xlu0 %6996
      %v6998 = vsel %vm1820, %v6923, 0.0
      %6999 = vadd.xlane.f32.xlu0 %v6998
      %v7000 = vpop.xlane.xlu0 %6999
      %v7001 = vsel %vm1820, %v6925, 0.0
      %7002 = vadd.xlane.f32.xlu0 %v7001
      %v7003 = vpop.xlane.xlu0 %7002
      %v7004 = vsel %vm1820, %v6927, 0.0
      %7005 = vadd.xlane.f32.xlu0 %v7004
      %v7006 = vpop.xlane.xlu0 %7005
      %v7007 = vsel %vm1820, %v6929, 0.0
      %7008 = vadd.xlane.f32.xlu0 %v7007
      %v7009 = vpop.xlane.xlu0 %7008
      %v7010 = vsel %vm1820, %v6931, 0.0
      %7011 = vadd.xlane.f32.xlu0 %v7010
      %v7012 = vpop.xlane.xlu0 %7011
      %v7013 = vsel %vm1820, %v6933, 0.0
      %7014 = vadd.xlane.f32.xlu0 %v7013
      %v7015 = vpop.xlane.xlu0 %7014
      %v7016 = vsel %vm1820, %v6935, 0.0
      %7017 = vadd.xlane.f32.xlu0 %v7016
      %v7018 = vpop.xlane.xlu0 %7017
      %v7019 = vsel %vm1820, %v6937, 0.0
      %7020 = vadd.xlane.f32.xlu0 %v7019
      %v7021 = vpop.xlane.xlu0 %7020
      %v7022 = vsel %vm1820, %v6939, 0.0
      %7023 = vadd.xlane.f32.xlu0 %v7022
      %v7024 = vpop.xlane.xlu0 %7023
      %v7025 = vsel %vm1820, %v6941, 0.0
      %7026 = vadd.xlane.f32.xlu0 %v7025
      %v7027 = vpop.xlane.xlu0 %7026
      %v7028 = vsel %vm1820, %v6943, 0.0
      %7029 = vadd.xlane.f32.xlu0 %v7028
      %v7030 = vpop.xlane.xlu0 %7029
      %v7031 = vsel %vm1820, %v6945, 0.0
      %7032 = vadd.xlane.f32.xlu0 %v7031
      %v7033 = vpop.xlane.xlu0 %7032
      %v7034 = vsel %vm1820, %v6947, 0.0
      %7035 = vadd.xlane.f32.xlu0 %v7034
      %v7036 = vpop.xlane.xlu0 %7035
      %v7037 = vsel %vm1820, %v6949, 0.0
      %7038 = vadd.xlane.f32.xlu0 %v7037
      %v7039 = vpop.xlane.xlu0 %7038
      %v7040 = vsel %vm1820, %v6951, 0.0
      %7041 = vadd.xlane.f32.xlu0 %v7040
      %v7042 = vpop.xlane.xlu0 %7041
      %v7043 = vsel %vm1820, %v6953, 0.0
      %7044 = vadd.xlane.f32.xlu0 %v7043
      %v7045 = vpop.xlane.xlu0 %7044
      %v7046 = vsel %vm1820, %v6955, 0.0
      %7047 = vadd.xlane.f32.xlu0 %v7046
      %v7048 = vpop.xlane.xlu0 %7047
      %v7049 = vsel %vm1820, %v6957, 0.0
      %7050 = vadd.xlane.f32.xlu0 %v7049
      %v7051 = vpop.xlane.xlu0 %7050
      %v7052 = vsel %vm1820, %v6959, 0.0
      %7053 = vadd.xlane.f32.xlu0 %v7052
      %v7054 = vpop.xlane.xlu0 %7053
      %v7055 = vsel %vm1820, %v6961, 0.0
      %7056 = vadd.xlane.f32.xlu0 %v7055
      %v7057 = vpop.xlane.xlu0 %7056
      %v7058 = vrcp.pop %v6964
      %v7059 = vmul.f32 %v6964, %v7058
      %v7060 = vsub.f32 1.0, %v7059
      %v7061 = vmul.f32 %v7058, %v7060
      %v7062 = vadd.f32 %v7058, %v7061
      %vm7063 = vweird.f32 %v6964
      %vm7064 = vweird.f32 %v7058
      %vm7065 = vmor %vm7063, %vm7064
      %v7066 = vsel %vm7065, %v7058, %v7062
      %v7067 = vand.u32 2147483647, %v6964
      %vm7068 = vcmp.eq.f32.partialorder %v7067, 8.507059e+37
      %v7069 = vand.u32 %v6964, 2147483648
      %v7070 = vor.u32 1.1754944e-38, %v7069
      %v7071 = vsel %vm7068, %v7070, %v7066
      %v7072 = vmul.f32 %v6899, %v7071
      %v7073 = vrcp.pop %v6967
      %v7074 = vmul.f32 %v6967, %v7073
      %v7075 = vsub.f32 1.0, %v7074
      %v7076 = vmul.f32 %v7073, %v7075
      %v7077 = vadd.f32 %v7073, %v7076
      %vm7078 = vweird.f32 %v6967
      %vm7079 = vweird.f32 %v7073
      %vm7080 = vmor %vm7078, %vm7079
      %v7081 = vsel %vm7080, %v7073, %v7077
      %v7082 = vand.u32 2147483647, %v6967
      %vm7083 = vcmp.eq.f32.partialorder %v7082, 8.507059e+37
      %v7084 = vand.u32 %v6967, 2147483648
      %v7085 = vor.u32 1.1754944e-38, %v7084
      %v7086 = vsel %vm7083, %v7085, %v7081
      %v7087 = vmul.f32 %v6901, %v7086
      %v7088 = vrcp.pop %v6970
      %v7089 = vmul.f32 %v6970, %v7088
      %v7090 = vsub.f32 1.0, %v7089
      %v7091 = vmul.f32 %v7088, %v7090
      %v7092 = vadd.f32 %v7088, %v7091
      %vm7093 = vweird.f32 %v6970
      %vm7094 = vweird.f32 %v7088
      %vm7095 = vmor %vm7093, %vm7094
      %v7096 = vsel %vm7095, %v7088, %v7092
      %v7097 = vand.u32 2147483647, %v6970
      %vm7098 = vcmp.eq.f32.partialorder %v7097, 8.507059e+37
      %v7099 = vand.u32 %v6970, 2147483648
      %v7100 = vor.u32 1.1754944e-38, %v7099
      %v7101 = vsel %vm7098, %v7100, %v7096
      %v7102 = vmul.f32 %v6903, %v7101
      %v7103 = vrcp.pop %v6973
      %v7104 = vmul.f32 %v6973, %v7103
      %v7105 = vsub.f32 1.0, %v7104
      %v7106 = vmul.f32 %v7103, %v7105
      %v7107 = vadd.f32 %v7103, %v7106
      %vm7108 = vweird.f32 %v6973
      %vm7109 = vweird.f32 %v7103
      %vm7110 = vmor %vm7108, %vm7109
      %v7111 = vsel %vm7110, %v7103, %v7107
      %v7112 = vand.u32 2147483647, %v6973
      %vm7113 = vcmp.eq.f32.partialorder %v7112, 8.507059e+37
      %v7114 = vand.u32 %v6973, 2147483648
      %v7115 = vor.u32 1.1754944e-38, %v7114
      %v7116 = vsel %vm7113, %v7115, %v7111
      %v7117 = vmul.f32 %v6905, %v7116
      %v7118 = vrcp.pop %v6976
      %v7119 = vmul.f32 %v6976, %v7118
      %v7120 = vsub.f32 1.0, %v7119
      %v7121 = vmul.f32 %v7118, %v7120
      %v7122 = vadd.f32 %v7118, %v7121
      %vm7123 = vweird.f32 %v6976
      %vm7124 = vweird.f32 %v7118
      %vm7125 = vmor %vm7123, %vm7124
      %v7126 = vsel %vm7125, %v7118, %v7122
      %v7127 = vand.u32 2147483647, %v6976
      %vm7128 = vcmp.eq.f32.partialorder %v7127, 8.507059e+37
      %v7129 = vand.u32 %v6976, 2147483648
      %v7130 = vor.u32 1.1754944e-38, %v7129
      %v7131 = vsel %vm7128, %v7130, %v7126
      %v7132 = vmul.f32 %v6907, %v7131
      %v7133 = vrcp.pop %v6979
      %v7134 = vmul.f32 %v6979, %v7133
      %v7135 = vsub.f32 1.0, %v7134
      %v7136 = vmul.f32 %v7133, %v7135
      %v7137 = vadd.f32 %v7133, %v7136
      %vm7138 = vweird.f32 %v6979
      %vm7139 = vweird.f32 %v7133
      %vm7140 = vmor %vm7138, %vm7139
      %v7141 = vsel %vm7140, %v7133, %v7137
      %v7142 = vand.u32 2147483647, %v6979
      %vm7143 = vcmp.eq.f32.partialorder %v7142, 8.507059e+37
      %v7144 = vand.u32 %v6979, 2147483648
      %v7145 = vor.u32 1.1754944e-38, %v7144
      %v7146 = vsel %vm7143, %v7145, %v7141
      %v7147 = vmul.f32 %v6909, %v7146
      %v7148 = vrcp.pop %v6982
      %v7149 = vmul.f32 %v6982, %v7148
      %v7150 = vsub.f32 1.0, %v7149
      %v7151 = vmul.f32 %v7148, %v7150
      %v7152 = vadd.f32 %v7148, %v7151
      %vm7153 = vweird.f32 %v6982
      %vm7154 = vweird.f32 %v7148
      %vm7155 = vmor %vm7153, %vm7154
      %v7156 = vsel %vm7155, %v7148, %v7152
      %v7157 = vand.u32 2147483647, %v6982
      %vm7158 = vcmp.eq.f32.partialorder %v7157, 8.507059e+37
      %v7159 = vand.u32 %v6982, 2147483648
      %v7160 = vor.u32 1.1754944e-38, %v7159
      %v7161 = vsel %vm7158, %v7160, %v7156
      %v7162 = vmul.f32 %v6911, %v7161
      %v7163 = vrcp.pop %v6985
      %v7164 = vmul.f32 %v6985, %v7163
      %v7165 = vsub.f32 1.0, %v7164
      %v7166 = vmul.f32 %v7163, %v7165
      %v7167 = vadd.f32 %v7163, %v7166
      %vm7168 = vweird.f32 %v6985
      %vm7169 = vweird.f32 %v7163
      %vm7170 = vmor %vm7168, %vm7169
      %v7171 = vsel %vm7170, %v7163, %v7167
      %v7172 = vand.u32 2147483647, %v6985
      %vm7173 = vcmp.eq.f32.partialorder %v7172, 8.507059e+37
      %v7174 = vand.u32 %v6985, 2147483648
      %v7175 = vor.u32 1.1754944e-38, %v7174
      %v7176 = vsel %vm7173, %v7175, %v7171
      %v7177 = vmul.f32 %v6913, %v7176
      %v7178 = vrcp.pop %v6988
      %v7179 = vmul.f32 %v6988, %v7178
      %v7180 = vsub.f32 1.0, %v7179
      %v7181 = vmul.f32 %v7178, %v7180
      %v7182 = vadd.f32 %v7178, %v7181
      %vm7183 = vweird.f32 %v6988
      %vm7184 = vweird.f32 %v7178
      %vm7185 = vmor %vm7183, %vm7184
      %v7186 = vsel %vm7185, %v7178, %v7182
      %v7187 = vand.u32 2147483647, %v6988
      %vm7188 = vcmp.eq.f32.partialorder %v7187, 8.507059e+37
      %v7189 = vand.u32 %v6988, 2147483648
      %v7190 = vor.u32 1.1754944e-38, %v7189
      %v7191 = vsel %vm7188, %v7190, %v7186
      %v7192 = vmul.f32 %v6915, %v7191
      %v7193 = vrcp.pop %v6991
      %v7194 = vmul.f32 %v6991, %v7193
      %v7195 = vsub.f32 1.0, %v7194
      %v7196 = vmul.f32 %v7193, %v7195
      %v7197 = vadd.f32 %v7193, %v7196
      %vm7198 = vweird.f32 %v6991
      %vm7199 = vweird.f32 %v7193
      %vm7200 = vmor %vm7198, %vm7199
      %v7201 = vsel %vm7200, %v7193, %v7197
      %v7202 = vand.u32 2147483647, %v6991
      %vm7203 = vcmp.eq.f32.partialorder %v7202, 8.507059e+37
      %v7204 = vand.u32 %v6991, 2147483648
      %v7205 = vor.u32 1.1754944e-38, %v7204
      %v7206 = vsel %vm7203, %v7205, %v7201
      %v7207 = vmul.f32 %v6917, %v7206
      %v7208 = vrcp.pop %v6994
      %v7209 = vmul.f32 %v6994, %v7208
      %v7210 = vsub.f32 1.0, %v7209
      %v7211 = vmul.f32 %v7208, %v7210
      %v7212 = vadd.f32 %v7208, %v7211
      %vm7213 = vweird.f32 %v6994
      %vm7214 = vweird.f32 %v7208
      %vm7215 = vmor %vm7213, %vm7214
      %v7216 = vsel %vm7215, %v7208, %v7212
      %v7217 = vand.u32 2147483647, %v6994
      %vm7218 = vcmp.eq.f32.partialorder %v7217, 8.507059e+37
      %v7219 = vand.u32 %v6994, 2147483648
      %v7220 = vor.u32 1.1754944e-38, %v7219
      %v7221 = vsel %vm7218, %v7220, %v7216
      %v7222 = vmul.f32 %v6919, %v7221
      %v7223 = vrcp.pop %v6997
      %v7224 = vmul.f32 %v6997, %v7223
      %v7225 = vsub.f32 1.0, %v7224
      %v7226 = vmul.f32 %v7223, %v7225
      %v7227 = vadd.f32 %v7223, %v7226
      %vm7228 = vweird.f32 %v6997
      %vm7229 = vweird.f32 %v7223
      %vm7230 = vmor %vm7228, %vm7229
      %v7231 = vsel %vm7230, %v7223, %v7227
      %v7232 = vand.u32 2147483647, %v6997
      %vm7233 = vcmp.eq.f32.partialorder %v7232, 8.507059e+37
      %v7234 = vand.u32 %v6997, 2147483648
      %v7235 = vor.u32 1.1754944e-38, %v7234
      %v7236 = vsel %vm7233, %v7235, %v7231
      %v7237 = vmul.f32 %v6921, %v7236
      %v7238 = vrcp.pop %v7000
      %v7239 = vmul.f32 %v7000, %v7238
      %v7240 = vsub.f32 1.0, %v7239
      %v7241 = vmul.f32 %v7238, %v7240
      %v7242 = vadd.f32 %v7238, %v7241
      %vm7243 = vweird.f32 %v7000
      %vm7244 = vweird.f32 %v7238
      %vm7245 = vmor %vm7243, %vm7244
      %v7246 = vsel %vm7245, %v7238, %v7242
      %v7247 = vand.u32 2147483647, %v7000
      %vm7248 = vcmp.eq.f32.partialorder %v7247, 8.507059e+37
      %v7249 = vand.u32 %v7000, 2147483648
      %v7250 = vor.u32 1.1754944e-38, %v7249
      %v7251 = vsel %vm7248, %v7250, %v7246
      %v7252 = vmul.f32 %v6923, %v7251
      %v7253 = vrcp.pop %v7003
      %v7254 = vmul.f32 %v7003, %v7253
      %v7255 = vsub.f32 1.0, %v7254
      %v7256 = vmul.f32 %v7253, %v7255
      %v7257 = vadd.f32 %v7253, %v7256
      %vm7258 = vweird.f32 %v7003
      %vm7259 = vweird.f32 %v7253
      %vm7260 = vmor %vm7258, %vm7259
      %v7261 = vsel %vm7260, %v7253, %v7257
      %v7262 = vand.u32 2147483647, %v7003
      %vm7263 = vcmp.eq.f32.partialorder %v7262, 8.507059e+37
      %v7264 = vand.u32 %v7003, 2147483648
      %v7265 = vor.u32 1.1754944e-38, %v7264
      %v7266 = vsel %vm7263, %v7265, %v7261
      %v7267 = vmul.f32 %v6925, %v7266
      %v7268 = vrcp.pop %v7006
      %v7269 = vmul.f32 %v7006, %v7268
      %v7270 = vsub.f32 1.0, %v7269
      %v7271 = vmul.f32 %v7268, %v7270
      %v7272 = vadd.f32 %v7268, %v7271
      %vm7273 = vweird.f32 %v7006
      %vm7274 = vweird.f32 %v7268
      %vm7275 = vmor %vm7273, %vm7274
      %v7276 = vsel %vm7275, %v7268, %v7272
      %v7277 = vand.u32 2147483647, %v7006
      %vm7278 = vcmp.eq.f32.partialorder %v7277, 8.507059e+37
      %v7279 = vand.u32 %v7006, 2147483648
      %v7280 = vor.u32 1.1754944e-38, %v7279
      %v7281 = vsel %vm7278, %v7280, %v7276
      %v7282 = vmul.f32 %v6927, %v7281
      %v7283 = vrcp.pop %v7009
      %v7284 = vmul.f32 %v7009, %v7283
      %v7285 = vsub.f32 1.0, %v7284
      %v7286 = vmul.f32 %v7283, %v7285
      %v7287 = vadd.f32 %v7283, %v7286
      %vm7288 = vweird.f32 %v7009
      %vm7289 = vweird.f32 %v7283
      %vm7290 = vmor %vm7288, %vm7289
      %v7291 = vsel %vm7290, %v7283, %v7287
      %v7292 = vand.u32 2147483647, %v7009
      %vm7293 = vcmp.eq.f32.partialorder %v7292, 8.507059e+37
      %v7294 = vand.u32 %v7009, 2147483648
      %v7295 = vor.u32 1.1754944e-38, %v7294
      %v7296 = vsel %vm7293, %v7295, %v7291
      %v7297 = vmul.f32 %v6929, %v7296
      %v7298 = vrcp.pop %v7012
      %v7299 = vmul.f32 %v7012, %v7298
      %v7300 = vsub.f32 1.0, %v7299
      %v7301 = vmul.f32 %v7298, %v7300
      %v7302 = vadd.f32 %v7298, %v7301
      %vm7303 = vweird.f32 %v7012
      %vm7304 = vweird.f32 %v7298
      %vm7305 = vmor %vm7303, %vm7304
      %v7306 = vsel %vm7305, %v7298, %v7302
      %v7307 = vand.u32 2147483647, %v7012
      %vm7308 = vcmp.eq.f32.partialorder %v7307, 8.507059e+37
      %v7309 = vand.u32 %v7012, 2147483648
      %v7310 = vor.u32 1.1754944e-38, %v7309
      %v7311 = vsel %vm7308, %v7310, %v7306
      %v7312 = vmul.f32 %v6931, %v7311
      %v7313 = vrcp.pop %v7015
      %v7314 = vmul.f32 %v7015, %v7313
      %v7315 = vsub.f32 1.0, %v7314
      %v7316 = vmul.f32 %v7313, %v7315
      %v7317 = vadd.f32 %v7313, %v7316
      %vm7318 = vweird.f32 %v7015
      %vm7319 = vweird.f32 %v7313
      %vm7320 = vmor %vm7318, %vm7319
      %v7321 = vsel %vm7320, %v7313, %v7317
      %v7322 = vand.u32 2147483647, %v7015
      %vm7323 = vcmp.eq.f32.partialorder %v7322, 8.507059e+37
      %v7324 = vand.u32 %v7015, 2147483648
      %v7325 = vor.u32 1.1754944e-38, %v7324
      %v7326 = vsel %vm7323, %v7325, %v7321
      %v7327 = vmul.f32 %v6933, %v7326
      %v7328 = vrcp.pop %v7018
      %v7329 = vmul.f32 %v7018, %v7328
      %v7330 = vsub.f32 1.0, %v7329
      %v7331 = vmul.f32 %v7328, %v7330
      %v7332 = vadd.f32 %v7328, %v7331
      %vm7333 = vweird.f32 %v7018
      %vm7334 = vweird.f32 %v7328
      %vm7335 = vmor %vm7333, %vm7334
      %v7336 = vsel %vm7335, %v7328, %v7332
      %v7337 = vand.u32 2147483647, %v7018
      %vm7338 = vcmp.eq.f32.partialorder %v7337, 8.507059e+37
      %v7339 = vand.u32 %v7018, 2147483648
      %v7340 = vor.u32 1.1754944e-38, %v7339
      %v7341 = vsel %vm7338, %v7340, %v7336
      %v7342 = vmul.f32 %v6935, %v7341
      %v7343 = vrcp.pop %v7021
      %v7344 = vmul.f32 %v7021, %v7343
      %v7345 = vsub.f32 1.0, %v7344
      %v7346 = vmul.f32 %v7343, %v7345
      %v7347 = vadd.f32 %v7343, %v7346
      %vm7348 = vweird.f32 %v7021
      %vm7349 = vweird.f32 %v7343
      %vm7350 = vmor %vm7348, %vm7349
      %v7351 = vsel %vm7350, %v7343, %v7347
      %v7352 = vand.u32 2147483647, %v7021
      %vm7353 = vcmp.eq.f32.partialorder %v7352, 8.507059e+37
      %v7354 = vand.u32 %v7021, 2147483648
      %v7355 = vor.u32 1.1754944e-38, %v7354
      %v7356 = vsel %vm7353, %v7355, %v7351
      %v7357 = vmul.f32 %v6937, %v7356
      %v7358 = vrcp.pop %v7024
      %v7359 = vmul.f32 %v7024, %v7358
      %v7360 = vsub.f32 1.0, %v7359
      %v7361 = vmul.f32 %v7358, %v7360
      %v7362 = vadd.f32 %v7358, %v7361
      %vm7363 = vweird.f32 %v7024
      %vm7364 = vweird.f32 %v7358
      %vm7365 = vmor %vm7363, %vm7364
      %v7366 = vsel %vm7365, %v7358, %v7362
      %v7367 = vand.u32 2147483647, %v7024
      %vm7368 = vcmp.eq.f32.partialorder %v7367, 8.507059e+37
      %v7369 = vand.u32 %v7024, 2147483648
      %v7370 = vor.u32 1.1754944e-38, %v7369
      %v7371 = vsel %vm7368, %v7370, %v7366
      %v7372 = vmul.f32 %v6939, %v7371
      %v7373 = vrcp.pop %v7027
      %v7374 = vmul.f32 %v7027, %v7373
      %v7375 = vsub.f32 1.0, %v7374
      %v7376 = vmul.f32 %v7373, %v7375
      %v7377 = vadd.f32 %v7373, %v7376
      %vm7378 = vweird.f32 %v7027
      %vm7379 = vweird.f32 %v7373
      %vm7380 = vmor %vm7378, %vm7379
      %v7381 = vsel %vm7380, %v7373, %v7377
      %v7382 = vand.u32 2147483647, %v7027
      %vm7383 = vcmp.eq.f32.partialorder %v7382, 8.507059e+37
      %v7384 = vand.u32 %v7027, 2147483648
      %v7385 = vor.u32 1.1754944e-38, %v7384
      %v7386 = vsel %vm7383, %v7385, %v7381
      %v7387 = vmul.f32 %v6941, %v7386
      %v7388 = vrcp.pop %v7030
      %v7389 = vmul.f32 %v7030, %v7388
      %v7390 = vsub.f32 1.0, %v7389
      %v7391 = vmul.f32 %v7388, %v7390
      %v7392 = vadd.f32 %v7388, %v7391
      %vm7393 = vweird.f32 %v7030
      %vm7394 = vweird.f32 %v7388
      %vm7395 = vmor %vm7393, %vm7394
      %v7396 = vsel %vm7395, %v7388, %v7392
      %v7397 = vand.u32 2147483647, %v7030
      %vm7398 = vcmp.eq.f32.partialorder %v7397, 8.507059e+37
      %v7399 = vand.u32 %v7030, 2147483648
      %v7400 = vor.u32 1.1754944e-38, %v7399
      %v7401 = vsel %vm7398, %v7400, %v7396
      %v7402 = vmul.f32 %v6943, %v7401
      %v7403 = vrcp.pop %v7033
      %v7404 = vmul.f32 %v7033, %v7403
      %v7405 = vsub.f32 1.0, %v7404
      %v7406 = vmul.f32 %v7403, %v7405
      %v7407 = vadd.f32 %v7403, %v7406
      %vm7408 = vweird.f32 %v7033
      %vm7409 = vweird.f32 %v7403
      %vm7410 = vmor %vm7408, %vm7409
      %v7411 = vsel %vm7410, %v7403, %v7407
      %v7412 = vand.u32 2147483647, %v7033
      %vm7413 = vcmp.eq.f32.partialorder %v7412, 8.507059e+37
      %v7414 = vand.u32 %v7033, 2147483648
      %v7415 = vor.u32 1.1754944e-38, %v7414
      %v7416 = vsel %vm7413, %v7415, %v7411
      %v7417 = vmul.f32 %v6945, %v7416
      %v7418 = vrcp.pop %v7036
      %v7419 = vmul.f32 %v7036, %v7418
      %v7420 = vsub.f32 1.0, %v7419
      %v7421 = vmul.f32 %v7418, %v7420
      %v7422 = vadd.f32 %v7418, %v7421
      %vm7423 = vweird.f32 %v7036
      %vm7424 = vweird.f32 %v7418
      %vm7425 = vmor %vm7423, %vm7424
      %v7426 = vsel %vm7425, %v7418, %v7422
      %v7427 = vand.u32 2147483647, %v7036
      %vm7428 = vcmp.eq.f32.partialorder %v7427, 8.507059e+37
      %v7429 = vand.u32 %v7036, 2147483648
      %v7430 = vor.u32 1.1754944e-38, %v7429
      %v7431 = vsel %vm7428, %v7430, %v7426
      %v7432 = vmul.f32 %v6947, %v7431
      %v7433 = vrcp.pop %v7039
      %v7434 = vmul.f32 %v7039, %v7433
      %v7435 = vsub.f32 1.0, %v7434
      %v7436 = vmul.f32 %v7433, %v7435
      %v7437 = vadd.f32 %v7433, %v7436
      %vm7438 = vweird.f32 %v7039
      %vm7439 = vweird.f32 %v7433
      %vm7440 = vmor %vm7438, %vm7439
      %v7441 = vsel %vm7440, %v7433, %v7437
      %v7442 = vand.u32 2147483647, %v7039
      %vm7443 = vcmp.eq.f32.partialorder %v7442, 8.507059e+37
      %v7444 = vand.u32 %v7039, 2147483648
      %v7445 = vor.u32 1.1754944e-38, %v7444
      %v7446 = vsel %vm7443, %v7445, %v7441
      %v7447 = vmul.f32 %v6949, %v7446
      %v7448 = vrcp.pop %v7042
      %v7449 = vmul.f32 %v7042, %v7448
      %v7450 = vsub.f32 1.0, %v7449
      %v7451 = vmul.f32 %v7448, %v7450
      %v7452 = vadd.f32 %v7448, %v7451
      %vm7453 = vweird.f32 %v7042
      %vm7454 = vweird.f32 %v7448
      %vm7455 = vmor %vm7453, %vm7454
      %v7456 = vsel %vm7455, %v7448, %v7452
      %v7457 = vand.u32 2147483647, %v7042
      %vm7458 = vcmp.eq.f32.partialorder %v7457, 8.507059e+37
      %v7459 = vand.u32 %v7042, 2147483648
      %v7460 = vor.u32 1.1754944e-38, %v7459
      %v7461 = vsel %vm7458, %v7460, %v7456
      %v7462 = vmul.f32 %v6951, %v7461
      %v7463 = vrcp.pop %v7045
      %v7464 = vmul.f32 %v7045, %v7463
      %v7465 = vsub.f32 1.0, %v7464
      %v7466 = vmul.f32 %v7463, %v7465
      %v7467 = vadd.f32 %v7463, %v7466
      %vm7468 = vweird.f32 %v7045
      %vm7469 = vweird.f32 %v7463
      %vm7470 = vmor %vm7468, %vm7469
      %v7471 = vsel %vm7470, %v7463, %v7467
      %v7472 = vand.u32 2147483647, %v7045
      %vm7473 = vcmp.eq.f32.partialorder %v7472, 8.507059e+37
      %v7474 = vand.u32 %v7045, 2147483648
      %v7475 = vor.u32 1.1754944e-38, %v7474
      %v7476 = vsel %vm7473, %v7475, %v7471
      %v7477 = vmul.f32 %v6953, %v7476
      %v7478 = vrcp.pop %v7048
      %v7479 = vmul.f32 %v7048, %v7478
      %v7480 = vsub.f32 1.0, %v7479
      %v7481 = vmul.f32 %v7478, %v7480
      %v7482 = vadd.f32 %v7478, %v7481
      %vm7483 = vweird.f32 %v7048
      %vm7484 = vweird.f32 %v7478
      %vm7485 = vmor %vm7483, %vm7484
      %v7486 = vsel %vm7485, %v7478, %v7482
      %v7487 = vand.u32 2147483647, %v7048
      %vm7488 = vcmp.eq.f32.partialorder %v7487, 8.507059e+37
      %v7489 = vand.u32 %v7048, 2147483648
      %v7490 = vor.u32 1.1754944e-38, %v7489
      %v7491 = vsel %vm7488, %v7490, %v7486
      %v7492 = vmul.f32 %v6955, %v7491
      %v7493 = vrcp.pop %v7051
      %v7494 = vmul.f32 %v7051, %v7493
      %v7495 = vsub.f32 1.0, %v7494
      %v7496 = vmul.f32 %v7493, %v7495
      %v7497 = vadd.f32 %v7493, %v7496
      %vm7498 = vweird.f32 %v7051
      %vm7499 = vweird.f32 %v7493
      %vm7500 = vmor %vm7498, %vm7499
      %v7501 = vsel %vm7500, %v7493, %v7497
      %v7502 = vand.u32 2147483647, %v7051
      %vm7503 = vcmp.eq.f32.partialorder %v7502, 8.507059e+37
      %v7504 = vand.u32 %v7051, 2147483648
      %v7505 = vor.u32 1.1754944e-38, %v7504
      %v7506 = vsel %vm7503, %v7505, %v7501
      %v7507 = vmul.f32 %v6957, %v7506
      %v7508 = vrcp.pop %v7054
      %v7509 = vmul.f32 %v7054, %v7508
      %v7510 = vsub.f32 1.0, %v7509
      %v7511 = vmul.f32 %v7508, %v7510
      %v7512 = vadd.f32 %v7508, %v7511
      %vm7513 = vweird.f32 %v7054
      %vm7514 = vweird.f32 %v7508
      %vm7515 = vmor %vm7513, %vm7514
      %v7516 = vsel %vm7515, %v7508, %v7512
      %v7517 = vand.u32 2147483647, %v7054
      %vm7518 = vcmp.eq.f32.partialorder %v7517, 8.507059e+37
      %v7519 = vand.u32 %v7054, 2147483648
      %v7520 = vor.u32 1.1754944e-38, %v7519
      %v7521 = vsel %vm7518, %v7520, %v7516
      %v7522 = vmul.f32 %v6959, %v7521
      %v7523 = vrcp.pop %v7057
      %v7524 = vmul.f32 %v7057, %v7523
      %v7525 = vsub.f32 1.0, %v7524
      %v7526 = vmul.f32 %v7523, %v7525
      %v7527 = vadd.f32 %v7523, %v7526
      %vm7528 = vweird.f32 %v7057
      %vm7529 = vweird.f32 %v7523
      %vm7530 = vmor %vm7528, %vm7529
      %v7531 = vsel %vm7530, %v7523, %v7527
      %v7532 = vand.u32 2147483647, %v7057
      %vm7533 = vcmp.eq.f32.partialorder %v7532, 8.507059e+37
      %v7534 = vand.u32 %v7057, 2147483648
      %v7535 = vor.u32 1.1754944e-38, %v7534
      %v7536 = vsel %vm7533, %v7535, %v7531
      %v7537 = vmul.f32 %v6961, %v7536
      %7538 = vrot.lane.b32.xlu0 %v1391, 104
      %v7539 = vpop.permute.xlu0 %7538
      %7540 = vrot.lane.b32.xlu0 %v1392, 104
      %v7541 = vpop.permute.xlu0 %7540
      %7542 = vrot.lane.b32.xlu0 %v1393, 104
      %v7543 = vpop.permute.xlu0 %7542
      %7544 = vrot.lane.b32.xlu0 %v1394, 104
      %v7545 = vpop.permute.xlu0 %7544
      %7546 = vrot.lane.b32.xlu0 %v1395, 104
      %v7547 = vpop.permute.xlu0 %7546
      %7548 = vrot.lane.b32.xlu0 %v1396, 104
      %v7549 = vpop.permute.xlu0 %7548
      %7550 = vrot.lane.b32.xlu0 %v1397, 104
      %v7551 = vpop.permute.xlu0 %7550
      %7552 = vrot.lane.b32.xlu0 %v1398, 104
      %v7553 = vpop.permute.xlu0 %7552
      %v7563 = vsel %vm1820, %v7072, 0
      %v7566 = vsel %vm1820, %v7087, 0
      %v7569 = vsel %vm1820, %v7102, 0
      %v7572 = vsel %vm1820, %v7117, 0
      %v7575 = vsel %vm1820, %v7132, 0
      %v7578 = vsel %vm1820, %v7147, 0
      %v7581 = vsel %vm1820, %v7162, 0
      %v7584 = vsel %vm1820, %v7177, 0
      %7586 = vmatpush.msra.mxu0 0.0
      %7587 = vmatpush.msra.mxu0 0.0
      %7588 = vmatpush.msra.mxu0 0.0
      %7589 = vmatpush.msra.mxu0 0.0
      %7590 = vmatpush.msra.mxu0 0.0
      %7591 = vmatpush.msra.mxu0 0.0
      %7592 = vmatpush.msra.mxu0 0.0
      %7593 = vmatpush.msra.mxu0 0.0
      %7594 = vmatpush.msra.mxu0 %v7553
      %7595 = vmatpush.msra.mxu0 %v7551
      %7596 = vmatpush.msra.mxu0 %v7549
      %7597 = vmatpush.msra.mxu0 %v7547
      %7598 = vmatpush.msra.mxu0 %v7545
      %7599 = vmatpush.msra.mxu0 %v7543
      %7600 = vmatpush.msra.mxu0 %v7541
      %7601 = vmatpush.msra.mxu0 %v7539
      %7602 = vmatmul.f32.gmra.mxu0 %v7563
      %v7603 = vpop.f32.mrf.mxu0
      %v7604 = vadd.f32 0.0, %v7603
      %7605 = vmatmul.f32.gmra.mxu0 %v7566
      %v7606 = vpop.f32.mrf.mxu0
      %v7607 = vadd.f32 0.0, %v7606
      %7608 = vmatmul.f32.gmra.mxu0 %v7569
      %v7609 = vpop.f32.mrf.mxu0
      %v7610 = vadd.f32 0.0, %v7609
      %7611 = vmatmul.f32.gmra.mxu0 %v7572
      %v7612 = vpop.f32.mrf.mxu0
      %v7613 = vadd.f32 0.0, %v7612
      %7614 = vmatmul.f32.gmra.mxu0 %v7575
      %v7615 = vpop.f32.mrf.mxu0
      %v7616 = vadd.f32 0.0, %v7615
      %7617 = vmatmul.f32.gmra.mxu0 %v7578
      %v7618 = vpop.f32.mrf.mxu0
      %v7619 = vadd.f32 0.0, %v7618
      %7620 = vmatmul.f32.gmra.mxu0 %v7581
      %v7621 = vpop.f32.mrf.mxu0
      %v7622 = vadd.f32 0.0, %v7621
      %7623 = vmatmul.f32.gmra.mxu0 %v7584
      %v7624 = vpop.f32.mrf.mxu0
      %v7625 = vadd.f32 0.0, %v7624
      %7626 = vdwg.mxu0
      %7627 = vrot.lane.b32.xlu0 %v1399, 104
      %v7628 = vpop.permute.xlu0 %7627
      %7629 = vrot.lane.b32.xlu0 %v1400, 104
      %v7630 = vpop.permute.xlu0 %7629
      %7631 = vrot.lane.b32.xlu0 %v1401, 104
      %v7632 = vpop.permute.xlu0 %7631
      %7633 = vrot.lane.b32.xlu0 %v1402, 104
      %v7634 = vpop.permute.xlu0 %7633
      %7635 = vrot.lane.b32.xlu0 %v1403, 104
      %v7636 = vpop.permute.xlu0 %7635
      %7637 = vrot.lane.b32.xlu0 %v1404, 104
      %v7638 = vpop.permute.xlu0 %7637
      %7639 = vrot.lane.b32.xlu0 %v1405, 104
      %v7640 = vpop.permute.xlu0 %7639
      %7641 = vrot.lane.b32.xlu0 %v1406, 104
      %v7642 = vpop.permute.xlu0 %7641
      %v7652 = vsel %vm1820, %v7192, 0
      %v7655 = vsel %vm1820, %v7207, 0
      %v7658 = vsel %vm1820, %v7222, 0
      %v7661 = vsel %vm1820, %v7237, 0
      %v7664 = vsel %vm1820, %v7252, 0
      %v7667 = vsel %vm1820, %v7267, 0
      %v7670 = vsel %vm1820, %v7282, 0
      %v7673 = vsel %vm1820, %v7297, 0
      %7675 = vmatpush.msra.mxu0 0.0
      %7676 = vmatpush.msra.mxu0 0.0
      %7677 = vmatpush.msra.mxu0 0.0
      %7678 = vmatpush.msra.mxu0 0.0
      %7679 = vmatpush.msra.mxu0 0.0
      %7680 = vmatpush.msra.mxu0 0.0
      %7681 = vmatpush.msra.mxu0 0.0
      %7682 = vmatpush.msra.mxu0 0.0
      %7683 = vmatpush.msra.mxu0 %v7642
      %7684 = vmatpush.msra.mxu0 %v7640
      %7685 = vmatpush.msra.mxu0 %v7638
      %7686 = vmatpush.msra.mxu0 %v7636
      %7687 = vmatpush.msra.mxu0 %v7634
      %7688 = vmatpush.msra.mxu0 %v7632
      %7689 = vmatpush.msra.mxu0 %v7630
      %7690 = vmatpush.msra.mxu0 %v7628
      %7691 = vmatmul.f32.gmra.mxu0 %v7652
      %v7692 = vpop.f32.mrf.mxu0
      %v7693 = vadd.f32 0.0, %v7692
      %7694 = vmatmul.f32.gmra.mxu0 %v7655
      %v7695 = vpop.f32.mrf.mxu0
      %v7696 = vadd.f32 0.0, %v7695
      %7697 = vmatmul.f32.gmra.mxu0 %v7658
      %v7698 = vpop.f32.mrf.mxu0
      %v7699 = vadd.f32 0.0, %v7698
      %7700 = vmatmul.f32.gmra.mxu0 %v7661
      %v7701 = vpop.f32.mrf.mxu0
      %v7702 = vadd.f32 0.0, %v7701
      %7703 = vmatmul.f32.gmra.mxu0 %v7664
      %v7704 = vpop.f32.mrf.mxu0
      %v7705 = vadd.f32 0.0, %v7704
      %7706 = vmatmul.f32.gmra.mxu0 %v7667
      %v7707 = vpop.f32.mrf.mxu0
      %v7708 = vadd.f32 0.0, %v7707
      %7709 = vmatmul.f32.gmra.mxu0 %v7670
      %v7710 = vpop.f32.mrf.mxu0
      %v7711 = vadd.f32 0.0, %v7710
      %7712 = vmatmul.f32.gmra.mxu0 %v7673
      %v7713 = vpop.f32.mrf.mxu0
      %v7714 = vadd.f32 0.0, %v7713
      %7715 = vdwg.mxu0
      %7716 = vrot.lane.b32.xlu0 %v1407, 104
      %v7717 = vpop.permute.xlu0 %7716
      %7718 = vrot.lane.b32.xlu0 %v1408, 104
      %v7719 = vpop.permute.xlu0 %7718
      %7720 = vrot.lane.b32.xlu0 %v1409, 104
      %v7721 = vpop.permute.xlu0 %7720
      %7722 = vrot.lane.b32.xlu0 %v1410, 104
      %v7723 = vpop.permute.xlu0 %7722
      %7724 = vrot.lane.b32.xlu0 %v1411, 104
      %v7725 = vpop.permute.xlu0 %7724
      %7726 = vrot.lane.b32.xlu0 %v1412, 104
      %v7727 = vpop.permute.xlu0 %7726
      %7728 = vrot.lane.b32.xlu0 %v1413, 104
      %v7729 = vpop.permute.xlu0 %7728
      %7730 = vrot.lane.b32.xlu0 %v1414, 104
      %v7731 = vpop.permute.xlu0 %7730
      %v7741 = vsel %vm1820, %v7312, 0
      %v7744 = vsel %vm1820, %v7327, 0
      %v7747 = vsel %vm1820, %v7342, 0
      %v7750 = vsel %vm1820, %v7357, 0
      %v7753 = vsel %vm1820, %v7372, 0
      %v7756 = vsel %vm1820, %v7387, 0
      %v7759 = vsel %vm1820, %v7402, 0
      %v7762 = vsel %vm1820, %v7417, 0
      %7764 = vmatpush.msra.mxu0 0.0
      %7765 = vmatpush.msra.mxu0 0.0
      %7766 = vmatpush.msra.mxu0 0.0
      %7767 = vmatpush.msra.mxu0 0.0
      %7768 = vmatpush.msra.mxu0 0.0
      %7769 = vmatpush.msra.mxu0 0.0
      %7770 = vmatpush.msra.mxu0 0.0
      %7771 = vmatpush.msra.mxu0 0.0
      %7772 = vmatpush.msra.mxu0 %v7731
      %7773 = vmatpush.msra.mxu0 %v7729
      %7774 = vmatpush.msra.mxu0 %v7727
      %7775 = vmatpush.msra.mxu0 %v7725
      %7776 = vmatpush.msra.mxu0 %v7723
      %7777 = vmatpush.msra.mxu0 %v7721
      %7778 = vmatpush.msra.mxu0 %v7719
      %7779 = vmatpush.msra.mxu0 %v7717
      %7780 = vmatmul.f32.gmra.mxu0 %v7741
      %v7781 = vpop.f32.mrf.mxu0
      %v7782 = vadd.f32 0.0, %v7781
      %7783 = vmatmul.f32.gmra.mxu0 %v7744
      %v7784 = vpop.f32.mrf.mxu0
      %v7785 = vadd.f32 0.0, %v7784
      %7786 = vmatmul.f32.gmra.mxu0 %v7747
      %v7787 = vpop.f32.mrf.mxu0
      %v7788 = vadd.f32 0.0, %v7787
      %7789 = vmatmul.f32.gmra.mxu0 %v7750
      %v7790 = vpop.f32.mrf.mxu0
      %v7791 = vadd.f32 0.0, %v7790
      %7792 = vmatmul.f32.gmra.mxu0 %v7753
      %v7793 = vpop.f32.mrf.mxu0
      %v7794 = vadd.f32 0.0, %v7793
      %7795 = vmatmul.f32.gmra.mxu0 %v7756
      %v7796 = vpop.f32.mrf.mxu0
      %v7797 = vadd.f32 0.0, %v7796
      %7798 = vmatmul.f32.gmra.mxu0 %v7759
      %v7799 = vpop.f32.mrf.mxu0
      %v7800 = vadd.f32 0.0, %v7799
      %7801 = vmatmul.f32.gmra.mxu0 %v7762
      %v7802 = vpop.f32.mrf.mxu0
      %v7803 = vadd.f32 0.0, %v7802
      %7804 = vdwg.mxu0
      %7805 = vrot.lane.b32.xlu0 %v1415, 104
      %v7806 = vpop.permute.xlu0 %7805
      %7807 = vrot.lane.b32.xlu0 %v1416, 104
      %v7808 = vpop.permute.xlu0 %7807
      %7809 = vrot.lane.b32.xlu0 %v1417, 104
      %v7810 = vpop.permute.xlu0 %7809
      %7811 = vrot.lane.b32.xlu0 %v1418, 104
      %v7812 = vpop.permute.xlu0 %7811
      %7813 = vrot.lane.b32.xlu0 %v1419, 104
      %v7814 = vpop.permute.xlu0 %7813
      %7815 = vrot.lane.b32.xlu0 %v1420, 104
      %v7816 = vpop.permute.xlu0 %7815
      %7817 = vrot.lane.b32.xlu0 %v1421, 104
      %v7818 = vpop.permute.xlu0 %7817
      %7819 = vrot.lane.b32.xlu0 %v1422, 104
      %v7820 = vpop.permute.xlu0 %7819
      %v7830 = vsel %vm1820, %v7432, 0
      %v7833 = vsel %vm1820, %v7447, 0
      %v7836 = vsel %vm1820, %v7462, 0
      %v7839 = vsel %vm1820, %v7477, 0
      %v7842 = vsel %vm1820, %v7492, 0
      %v7845 = vsel %vm1820, %v7507, 0
      %v7848 = vsel %vm1820, %v7522, 0
      %v7851 = vsel %vm1820, %v7537, 0
      %7853 = vmatpush.msra.mxu0 0.0
      %7854 = vmatpush.msra.mxu0 0.0
      %7855 = vmatpush.msra.mxu0 0.0
      %7856 = vmatpush.msra.mxu0 0.0
      %7857 = vmatpush.msra.mxu0 0.0
      %7858 = vmatpush.msra.mxu0 0.0
      %7859 = vmatpush.msra.mxu0 0.0
      %7860 = vmatpush.msra.mxu0 0.0
      %7861 = vmatpush.msra.mxu0 %v7820
      %7862 = vmatpush.msra.mxu0 %v7818
      %7863 = vmatpush.msra.mxu0 %v7816
      %7864 = vmatpush.msra.mxu0 %v7814
      %7865 = vmatpush.msra.mxu0 %v7812
      %7866 = vmatpush.msra.mxu0 %v7810
      %7867 = vmatpush.msra.mxu0 %v7808
      %7868 = vmatpush.msra.mxu0 %v7806
      %7869 = vmatmul.f32.gmra.mxu0 %v7830
      %v7870 = vpop.f32.mrf.mxu0
      %v7871 = vadd.f32 0.0, %v7870
      %7872 = vmatmul.f32.gmra.mxu0 %v7833
      %v7873 = vpop.f32.mrf.mxu0
      %v7874 = vadd.f32 0.0, %v7873
      %7875 = vmatmul.f32.gmra.mxu0 %v7836
      %v7876 = vpop.f32.mrf.mxu0
      %v7877 = vadd.f32 0.0, %v7876
      %7878 = vmatmul.f32.gmra.mxu0 %v7839
      %v7879 = vpop.f32.mrf.mxu0
      %v7880 = vadd.f32 0.0, %v7879
      %7881 = vmatmul.f32.gmra.mxu0 %v7842
      %v7882 = vpop.f32.mrf.mxu0
      %v7883 = vadd.f32 0.0, %v7882
      %7884 = vmatmul.f32.gmra.mxu0 %v7845
      %v7885 = vpop.f32.mrf.mxu0
      %v7886 = vadd.f32 0.0, %v7885
      %7887 = vmatmul.f32.gmra.mxu0 %v7848
      %v7888 = vpop.f32.mrf.mxu0
      %v7889 = vadd.f32 0.0, %v7888
      %7890 = vmatmul.f32.gmra.mxu0 %v7851
      %v7891 = vpop.f32.mrf.mxu0
      %v7892 = vadd.f32 0.0, %v7891
      %7893 = vdwg.mxu0
      %7926 = vrot.lane.b32.xlu0 %v7604, 24
      %v7927 = vpop.permute.xlu0 %7926
      %7928 = vrot.lane.b32.xlu0 %v7607, 24
      %v7929 = vpop.permute.xlu0 %7928
      %7930 = vrot.lane.b32.xlu0 %v7610, 24
      %v7931 = vpop.permute.xlu0 %7930
      %7932 = vrot.lane.b32.xlu0 %v7613, 24
      %v7933 = vpop.permute.xlu0 %7932
      %7934 = vrot.lane.b32.xlu0 %v7616, 24
      %v7935 = vpop.permute.xlu0 %7934
      %7936 = vrot.lane.b32.xlu0 %v7619, 24
      %v7937 = vpop.permute.xlu0 %7936
      %7938 = vrot.lane.b32.xlu0 %v7622, 24
      %v7939 = vpop.permute.xlu0 %7938
      %7940 = vrot.lane.b32.xlu0 %v7625, 24
      %v7941 = vpop.permute.xlu0 %7940
      %7942 = vrot.lane.b32.xlu0 %v7693, 24
      %v7943 = vpop.permute.xlu0 %7942
      %7944 = vrot.lane.b32.xlu0 %v7696, 24
      %v7945 = vpop.permute.xlu0 %7944
      %7946 = vrot.lane.b32.xlu0 %v7699, 24
      %v7947 = vpop.permute.xlu0 %7946
      %7948 = vrot.lane.b32.xlu0 %v7702, 24
      %v7949 = vpop.permute.xlu0 %7948
      %7950 = vrot.lane.b32.xlu0 %v7705, 24
      %v7951 = vpop.permute.xlu0 %7950
      %7952 = vrot.lane.b32.xlu0 %v7708, 24
      %v7953 = vpop.permute.xlu0 %7952
      %7954 = vrot.lane.b32.xlu0 %v7711, 24
      %v7955 = vpop.permute.xlu0 %7954
      %7956 = vrot.lane.b32.xlu0 %v7714, 24
      %v7957 = vpop.permute.xlu0 %7956
      %7958 = vrot.lane.b32.xlu0 %v7782, 24
      %v7959 = vpop.permute.xlu0 %7958
      %7960 = vrot.lane.b32.xlu0 %v7785, 24
      %v7961 = vpop.permute.xlu0 %7960
      %7962 = vrot.lane.b32.xlu0 %v7788, 24
      %v7963 = vpop.permute.xlu0 %7962
      %7964 = vrot.lane.b32.xlu0 %v7791, 24
      %v7965 = vpop.permute.xlu0 %7964
      %7966 = vrot.lane.b32.xlu0 %v7794, 24
      %v7967 = vpop.permute.xlu0 %7966
      %7968 = vrot.lane.b32.xlu0 %v7797, 24
      %v7969 = vpop.permute.xlu0 %7968
      %7970 = vrot.lane.b32.xlu0 %v7800, 24
      %v7971 = vpop.permute.xlu0 %7970
      %7972 = vrot.lane.b32.xlu0 %v7803, 24
      %v7973 = vpop.permute.xlu0 %7972
      %7974 = vrot.lane.b32.xlu0 %v7871, 24
      %v7975 = vpop.permute.xlu0 %7974
      %7976 = vrot.lane.b32.xlu0 %v7874, 24
      %v7977 = vpop.permute.xlu0 %7976
      %7978 = vrot.lane.b32.xlu0 %v7877, 24
      %v7979 = vpop.permute.xlu0 %7978
      %7980 = vrot.lane.b32.xlu0 %v7880, 24
      %v7981 = vpop.permute.xlu0 %7980
      %7982 = vrot.lane.b32.xlu0 %v7883, 24
      %v7983 = vpop.permute.xlu0 %7982
      %7984 = vrot.lane.b32.xlu0 %v7886, 24
      %v7985 = vpop.permute.xlu0 %7984
      %7986 = vrot.lane.b32.xlu0 %v7889, 24
      %v7987 = vpop.permute.xlu0 %7986
      %7988 = vrot.lane.b32.xlu0 %v7892, 24
      %v7989 = vpop.permute.xlu0 %7988
      %vm8022 = vcmask 261312
      %8023 = vst.msk [vmem:[#allocation2] sm:$0xff] %vm8022, %v7927
      %8024 = vst.msk [vmem:[#allocation2 + $0x8] sm:$0xff] %vm8022, %v7929
      %8025 = vst.msk [vmem:[#allocation2 + $0x10] sm:$0xff] %vm8022, %v7931
      %8026 = vst.msk [vmem:[#allocation2 + $0x18] sm:$0xff] %vm8022, %v7933
      %8027 = vst.msk [vmem:[#allocation2 + $0x20] sm:$0xff] %vm8022, %v7935
      %8028 = vst.msk [vmem:[#allocation2 + $0x28] sm:$0xff] %vm8022, %v7937
      %8029 = vst.msk [vmem:[#allocation2 + $0x30] sm:$0xff] %vm8022, %v7939
      %8030 = vst.msk [vmem:[#allocation2 + $0x38] sm:$0xff] %vm8022, %v7941
      %8031 = vst.msk [vmem:[#allocation2 + $0x40] sm:$0xff] %vm8022, %v7943
      %8032 = vst.msk [vmem:[#allocation2 + $0x48] sm:$0xff] %vm8022, %v7945
      %8033 = vst.msk [vmem:[#allocation2 + $0x50] sm:$0xff] %vm8022, %v7947
      %8034 = vst.msk [vmem:[#allocation2 + $0x58] sm:$0xff] %vm8022, %v7949
      %8035 = vst.msk [vmem:[#allocation2 + $0x60] sm:$0xff] %vm8022, %v7951
      %8036 = vst.msk [vmem:[#allocation2 + $0x68] sm:$0xff] %vm8022, %v7953
      %8037 = vst.msk [vmem:[#allocation2 + $0x70] sm:$0xff] %vm8022, %v7955
      %8038 = vst.msk [vmem:[#allocation2 + $0x78] sm:$0xff] %vm8022, %v7957
      %8039 = vst.msk [vmem:[#allocation2 + $0x80] sm:$0xff] %vm8022, %v7959
      %8040 = vst.msk [vmem:[#allocation2 + $0x88] sm:$0xff] %vm8022, %v7961
      %8041 = vst.msk [vmem:[#allocation2 + $0x90] sm:$0xff] %vm8022, %v7963
      %8042 = vst.msk [vmem:[#allocation2 + $0x98] sm:$0xff] %vm8022, %v7965
      %8043 = vst.msk [vmem:[#allocation2 + $0xa0] sm:$0xff] %vm8022, %v7967
      %8044 = vst.msk [vmem:[#allocation2 + $0xa8] sm:$0xff] %vm8022, %v7969
      %8045 = vst.msk [vmem:[#allocation2 + $0xb0] sm:$0xff] %vm8022, %v7971
      %8046 = vst.msk [vmem:[#allocation2 + $0xb8] sm:$0xff] %vm8022, %v7973
      %8047 = vst.msk [vmem:[#allocation2 + $0xc0] sm:$0xff] %vm8022, %v7975
      %8048 = vst.msk [vmem:[#allocation2 + $0xc8] sm:$0xff] %vm8022, %v7977
      %8049 = vst.msk [vmem:[#allocation2 + $0xd0] sm:$0xff] %vm8022, %v7979
      %8050 = vst.msk [vmem:[#allocation2 + $0xd8] sm:$0xff] %vm8022, %v7981
      %8051 = vst.msk [vmem:[#allocation2 + $0xe0] sm:$0xff] %vm8022, %v7983
      %8052 = vst.msk [vmem:[#allocation2 + $0xe8] sm:$0xff] %vm8022, %v7985
      %8053 = vst.msk [vmem:[#allocation2 + $0xf0] sm:$0xff] %vm8022, %v7987
      %8054 = vst.msk [vmem:[#allocation2 + $0xf8] sm:$0xff] %vm8022, %v7989
      %v8055 = vld [vmem:[#allocation2] sm:$0xff]
      %v8056 = vld [vmem:[#allocation2 + $0x8] sm:$0xff]
      %v8057 = vld [vmem:[#allocation2 + $0x10] sm:$0xff]
      %v8058 = vld [vmem:[#allocation2 + $0x18] sm:$0xff]
      %v8059 = vld [vmem:[#allocation2 + $0x20] sm:$0xff]
      %v8060 = vld [vmem:[#allocation2 + $0x28] sm:$0xff]
      %v8061 = vld [vmem:[#allocation2 + $0x30] sm:$0xff]
      %v8062 = vld [vmem:[#allocation2 + $0x38] sm:$0xff]
      %v8063 = vld [vmem:[#allocation2 + $0x40] sm:$0xff]
      %v8064 = vld [vmem:[#allocation2 + $0x48] sm:$0xff]
      %v8065 = vld [vmem:[#allocation2 + $0x50] sm:$0xff]
      %v8066 = vld [vmem:[#allocation2 + $0x58] sm:$0xff]
      %v8067 = vld [vmem:[#allocation2 + $0x60] sm:$0xff]
      %v8068 = vld [vmem:[#allocation2 + $0x68] sm:$0xff]
      %v8069 = vld [vmem:[#allocation2 + $0x70] sm:$0xff]
      %v8070 = vld [vmem:[#allocation2 + $0x78] sm:$0xff]
      %v8071 = vld [vmem:[#allocation2 + $0x80] sm:$0xff]
      %v8072 = vld [vmem:[#allocation2 + $0x88] sm:$0xff]
      %v8073 = vld [vmem:[#allocation2 + $0x90] sm:$0xff]
      %v8074 = vld [vmem:[#allocation2 + $0x98] sm:$0xff]
      %v8075 = vld [vmem:[#allocation2 + $0xa0] sm:$0xff]
      %v8076 = vld [vmem:[#allocation2 + $0xa8] sm:$0xff]
      %v8077 = vld [vmem:[#allocation2 + $0xb0] sm:$0xff]
      %v8078 = vld [vmem:[#allocation2 + $0xb8] sm:$0xff]
      %v8079 = vld [vmem:[#allocation2 + $0xc0] sm:$0xff]
      %v8080 = vld [vmem:[#allocation2 + $0xc8] sm:$0xff]
      %v8081 = vld [vmem:[#allocation2 + $0xd0] sm:$0xff]
      %v8082 = vld [vmem:[#allocation2 + $0xd8] sm:$0xff]
      %v8083 = vld [vmem:[#allocation2 + $0xe0] sm:$0xff]
      %v8084 = vld [vmem:[#allocation2 + $0xe8] sm:$0xff]
      %v8085 = vld [vmem:[#allocation2 + $0xf0] sm:$0xff]
      %v8086 = vld [vmem:[#allocation2 + $0xf8] sm:$0xff]
      %v8087 = vld [vmem:[%s7] sm:$0xff]
      %v8088 = vld [vmem:[%s7 + $0x8] sm:$0xff]
      %v8089 = vld [vmem:[%s7 + $0x10] sm:$0xff]
      %v8090 = vld [vmem:[%s7 + $0x18] sm:$0xff]
      %v8091 = vld [vmem:[%s8] sm:$0x1]
      %v8093 = vperm.slane %v8091, 0
      %v8096 = vsel %vm390, %v8055, 0
      %v8099 = vsel %vm390, %v8056, 0
      %v8102 = vsel %vm390, %v8057, 0
      %v8105 = vsel %vm390, %v8058, 0
      %v8108 = vsel %vm390, %v8059, 0
      %v8111 = vsel %vm390, %v8060, 0
      %v8114 = vsel %vm390, %v8061, 0
      %v8117 = vsel %vm390, %v8062, 0
      %v8120 = vsel %vm390, %v8063, 0
      %v8123 = vsel %vm390, %v8064, 0
      %v8126 = vsel %vm390, %v8065, 0
      %v8129 = vsel %vm390, %v8066, 0
      %v8132 = vsel %vm390, %v8067, 0
      %v8135 = vsel %vm390, %v8068, 0
      %v8138 = vsel %vm390, %v8069, 0
      %v8141 = vsel %vm390, %v8070, 0
      %v8144 = vsel %vm390, %v8071, 0
      %v8147 = vsel %vm390, %v8072, 0
      %v8150 = vsel %vm390, %v8073, 0
      %v8153 = vsel %vm390, %v8074, 0
      %v8156 = vsel %vm390, %v8075, 0
      %v8159 = vsel %vm390, %v8076, 0
      %v8162 = vsel %vm390, %v8077, 0
      %v8165 = vsel %vm390, %v8078, 0
      %v8168 = vsel %vm390, %v8079, 0
      %v8171 = vsel %vm390, %v8080, 0
      %v8174 = vsel %vm390, %v8081, 0
      %v8177 = vsel %vm390, %v8082, 0
      %v8180 = vsel %vm390, %v8083, 0
      %v8183 = vsel %vm390, %v8084, 0
      %v8186 = vsel %vm390, %v8085, 0
      %v8189 = vsel %vm390, %v8086, 0
      %8191 = vmatpush.msra.mxu0 0.0
      %8192 = vmatpush.msra.mxu0 0.0
      %8193 = vmatpush.msra.mxu0 0.0
      %8194 = vmatpush.msra.mxu0 0.0
      %8195 = vmatpush.msra.mxu0 0.0
      %8196 = vmatpush.msra.mxu0 0.0
      %8197 = vmatpush.msra.mxu0 0.0
      %8198 = vmatpush.msra.mxu0 0.0
      %8199 = vmatpush.msra.mxu0 0.0
      %8200 = vmatpush.msra.mxu0 0.0
      %8201 = vmatpush.msra.mxu0 0.0
      %8202 = vmatpush.msra.mxu0 0.0
      %8203 = vmatpush.msra.mxu0 %v8090
      %8204 = vmatpush.msra.mxu0 %v8089
      %8205 = vmatpush.msra.mxu0 %v8088
      %8206 = vmatpush.msra.mxu0 %v8087
      %8207 = vmatmul.f32.gmra.mxu0 %v8096
      %v8208 = vpop.f32.mrf.mxu0
      %v8209 = vadd.f32 %v8093, %v8208
      %8210 = vmatmul.f32.gmra.mxu0 %v8099
      %v8211 = vpop.f32.mrf.mxu0
      %v8212 = vadd.f32 %v8093, %v8211
      %8213 = vmatmul.f32.gmra.mxu0 %v8102
      %v8214 = vpop.f32.mrf.mxu0
      %v8215 = vadd.f32 %v8093, %v8214
      %8216 = vmatmul.f32.gmra.mxu0 %v8105
      %v8217 = vpop.f32.mrf.mxu0
      %v8218 = vadd.f32 %v8093, %v8217
      %8219 = vmatmul.f32.gmra.mxu0 %v8108
      %v8220 = vpop.f32.mrf.mxu0
      %v8221 = vadd.f32 %v8093, %v8220
      %8222 = vmatmul.f32.gmra.mxu0 %v8111
      %v8223 = vpop.f32.mrf.mxu0
      %v8224 = vadd.f32 %v8093, %v8223
      %8225 = vmatmul.f32.gmra.mxu0 %v8114
      %v8226 = vpop.f32.mrf.mxu0
      %v8227 = vadd.f32 %v8093, %v8226
      %8228 = vmatmul.f32.gmra.mxu0 %v8117
      %v8229 = vpop.f32.mrf.mxu0
      %v8230 = vadd.f32 %v8093, %v8229
      %8231 = vmatmul.f32.gmra.mxu0 %v8120
      %v8232 = vpop.f32.mrf.mxu0
      %v8233 = vadd.f32 %v8093, %v8232
      %8234 = vmatmul.f32.gmra.mxu0 %v8123
      %v8235 = vpop.f32.mrf.mxu0
      %v8236 = vadd.f32 %v8093, %v8235
      %8237 = vmatmul.f32.gmra.mxu0 %v8126
      %v8238 = vpop.f32.mrf.mxu0
      %v8239 = vadd.f32 %v8093, %v8238
      %8240 = vmatmul.f32.gmra.mxu0 %v8129
      %v8241 = vpop.f32.mrf.mxu0
      %v8242 = vadd.f32 %v8093, %v8241
      %8243 = vmatmul.f32.gmra.mxu0 %v8132
      %v8244 = vpop.f32.mrf.mxu0
      %v8245 = vadd.f32 %v8093, %v8244
      %8246 = vmatmul.f32.gmra.mxu0 %v8135
      %v8247 = vpop.f32.mrf.mxu0
      %v8248 = vadd.f32 %v8093, %v8247
      %8249 = vmatmul.f32.gmra.mxu0 %v8138
      %v8250 = vpop.f32.mrf.mxu0
      %v8251 = vadd.f32 %v8093, %v8250
      %8252 = vmatmul.f32.gmra.mxu0 %v8141
      %v8253 = vpop.f32.mrf.mxu0
      %v8254 = vadd.f32 %v8093, %v8253
      %8255 = vmatmul.f32.gmra.mxu0 %v8144
      %v8256 = vpop.f32.mrf.mxu0
      %v8257 = vadd.f32 %v8093, %v8256
      %8258 = vmatmul.f32.gmra.mxu0 %v8147
      %v8259 = vpop.f32.mrf.mxu0
      %v8260 = vadd.f32 %v8093, %v8259
      %8261 = vmatmul.f32.gmra.mxu0 %v8150
      %v8262 = vpop.f32.mrf.mxu0
      %v8263 = vadd.f32 %v8093, %v8262
      %8264 = vmatmul.f32.gmra.mxu0 %v8153
      %v8265 = vpop.f32.mrf.mxu0
      %v8266 = vadd.f32 %v8093, %v8265
      %8267 = vmatmul.f32.gmra.mxu0 %v8156
      %v8268 = vpop.f32.mrf.mxu0
      %v8269 = vadd.f32 %v8093, %v8268
      %8270 = vmatmul.f32.gmra.mxu0 %v8159
      %v8271 = vpop.f32.mrf.mxu0
      %v8272 = vadd.f32 %v8093, %v8271
      %8273 = vmatmul.f32.gmra.mxu0 %v8162
      %v8274 = vpop.f32.mrf.mxu0
      %v8275 = vadd.f32 %v8093, %v8274
      %8276 = vmatmul.f32.gmra.mxu0 %v8165
      %v8277 = vpop.f32.mrf.mxu0
      %v8278 = vadd.f32 %v8093, %v8277
      %8279 = vmatmul.f32.gmra.mxu0 %v8168
      %v8280 = vpop.f32.mrf.mxu0
      %v8281 = vadd.f32 %v8093, %v8280
      %8282 = vmatmul.f32.gmra.mxu0 %v8171
      %v8283 = vpop.f32.mrf.mxu0
      %v8284 = vadd.f32 %v8093, %v8283
      %8285 = vmatmul.f32.gmra.mxu0 %v8174
      %v8286 = vpop.f32.mrf.mxu0
      %v8287 = vadd.f32 %v8093, %v8286
      %8288 = vmatmul.f32.gmra.mxu0 %v8177
      %v8289 = vpop.f32.mrf.mxu0
      %v8290 = vadd.f32 %v8093, %v8289
      %8291 = vmatmul.f32.gmra.mxu0 %v8180
      %v8292 = vpop.f32.mrf.mxu0
      %v8293 = vadd.f32 %v8093, %v8292
      %8294 = vmatmul.f32.gmra.mxu0 %v8183
      %v8295 = vpop.f32.mrf.mxu0
      %v8296 = vadd.f32 %v8093, %v8295
      %8297 = vmatmul.f32.gmra.mxu0 %v8186
      %v8298 = vpop.f32.mrf.mxu0
      %v8299 = vadd.f32 %v8093, %v8298
      %8300 = vmatmul.f32.gmra.mxu0 %v8189
      %v8301 = vpop.f32.mrf.mxu0
      %v8302 = vadd.f32 %v8093, %v8301
      %8303 = vdwg.mxu0
      %8304 = vst.msk [vmem:[%s356] sm:$0xff] %vm390, %v8209
      %8305 = vst.msk [vmem:[%s356 + $0x8] sm:$0xff] %vm390, %v8212
      %8306 = vst.msk [vmem:[%s356 + $0x10] sm:$0xff] %vm390, %v8215
      %8307 = vst.msk [vmem:[%s356 + $0x18] sm:$0xff] %vm390, %v8218
      %8308 = vst.msk [vmem:[%s356 + $0x20] sm:$0xff] %vm390, %v8221
      %8309 = vst.msk [vmem:[%s356 + $0x28] sm:$0xff] %vm390, %v8224
      %8310 = vst.msk [vmem:[%s356 + $0x30] sm:$0xff] %vm390, %v8227
      %8311 = vst.msk [vmem:[%s356 + $0x38] sm:$0xff] %vm390, %v8230
      %8312 = vst.msk [vmem:[%s356 + $0x40] sm:$0xff] %vm390, %v8233
      %8313 = vst.msk [vmem:[%s356 + $0x48] sm:$0xff] %vm390, %v8236
      %8314 = vst.msk [vmem:[%s356 + $0x50] sm:$0xff] %vm390, %v8239
      %8315 = vst.msk [vmem:[%s356 + $0x58] sm:$0xff] %vm390, %v8242
      %8316 = vst.msk [vmem:[%s356 + $0x60] sm:$0xff] %vm390, %v8245
      %8317 = vst.msk [vmem:[%s356 + $0x68] sm:$0xff] %vm390, %v8248
      %8318 = vst.msk [vmem:[%s356 + $0x70] sm:$0xff] %vm390, %v8251
      %8319 = vst.msk [vmem:[%s356 + $0x78] sm:$0xff] %vm390, %v8254
      %8320 = vst.msk [vmem:[%s356 + $0x80] sm:$0xff] %vm390, %v8257
      %8321 = vst.msk [vmem:[%s356 + $0x88] sm:$0xff] %vm390, %v8260
      %8322 = vst.msk [vmem:[%s356 + $0x90] sm:$0xff] %vm390, %v8263
      %8323 = vst.msk [vmem:[%s356 + $0x98] sm:$0xff] %vm390, %v8266
      %8324 = vst.msk [vmem:[%s356 + $0xa0] sm:$0xff] %vm390, %v8269
      %8325 = vst.msk [vmem:[%s356 + $0xa8] sm:$0xff] %vm390, %v8272
      %8326 = vst.msk [vmem:[%s356 + $0xb0] sm:$0xff] %vm390, %v8275
      %8327 = vst.msk [vmem:[%s356 + $0xb8] sm:$0xff] %vm390, %v8278
      %8328 = vst.msk [vmem:[%s356 + $0xc0] sm:$0xff] %vm390, %v8281
      %8329 = vst.msk [vmem:[%s356 + $0xc8] sm:$0xff] %vm390, %v8284
      %8330 = vst.msk [vmem:[%s356 + $0xd0] sm:$0xff] %vm390, %v8287
      %8331 = vst.msk [vmem:[%s356 + $0xd8] sm:$0xff] %vm390, %v8290
      %8332 = vst.msk [vmem:[%s356 + $0xe0] sm:$0xff] %vm390, %v8293
      %8333 = vst.msk [vmem:[%s356 + $0xe8] sm:$0xff] %vm390, %v8296
      %8334 = vst.msk [vmem:[%s356 + $0xf0] sm:$0xff] %vm390, %v8299
      %8335 = vst.msk [vmem:[%s356 + $0xf8] sm:$0xff] %vm390, %v8302
      %s8336 = smul.u32 32, %s20
      %p8337 = scmp.lt.s32.totalorder %s8336, 63
      %s8338 = scalar_select %p8337, %s8336, 63
      %s8339 = smul.addr %s8338, 8
      %s8340 = scalar_lea.vmem %s9, %s8339
      // Predicated region
      $region57: #{crf_block_forward.2} parent=55 // pred_check
        %p8341 = pneg %p237
      $region58: #{crf_block_forward.2} parent=55 // pred_check_branch
        %8343 = sbr.rel (%p8341) target = $region60
      $region59: #{crf_block_forward.2} parent=55 // pred_region
        %s8344 = smul.u32 32, %s20
      $region60: #{crf_block_forward.2} parent=55 // pred_fallthru
        _
    $region56: #{crf_block_forward.2} parent=5 // pred_fallthru
      _
    %p8345 = scmp.le.s32.totalorder 2, %s15
    // Predicated region
    $region61: #{crf_block_forward.2} parent=5 // pred_check
      %p8346 = pneg %p8345
    $region62: #{crf_block_forward.2} parent=5 // pred_check_branch
      %8348 = sbr.rel (%p8346) target = $region64
    $region63: #{crf_block_forward.2} parent=5 // pred_region
      %s8349 = ssub.s32 %s15, 2
      // Predicated region
      $region65: #{crf_block_forward.2} parent=63 // pred_check
        %p8350 = pneg %p243
      $region66: #{crf_block_forward.2} parent=63 // pred_check_branch
        %8352 = sbr.rel (%p8350) target = $region68
      $region67: #{crf_block_forward.2} parent=63 // pred_region
        %s8353 = smul.u32 32, %s21
        %p8354 = scmp.lt.s32.totalorder %s8353, 63
        %s8355 = scalar_select %p8354, %s8353, 63
        %s8356 = smul.addr %s8355, 8
        %s8357 = scalar_lea.vmem %s9, %s8356
      $region68: #{crf_block_forward.2} parent=63 // pred_fallthru
        _
    $region64: #{crf_block_forward.2} parent=5 // pred_fallthru
      _
  $region6: #{crf_block_forward.2} parent=0 // loop_footer
    %s19 = sadd.s32 1, %s15
  $region7: #{crf_block_forward.2} parent=0 // loop_footer_branch
    %14 = sbr.rel target = $region3
  $region8: #{crf_block_forward.2} parent=0 // loop_exit
    _

</llo_original>
